<compile_context>
chip_gen: v5e
topology: v5e:2x2
jax: 0.10.0
libtpu: 0.0.40
codegen_flags: <defaults>
</compile_context>

<pallas_src>
import functools
import math

import numpy as np
import jax
import jax.numpy as jnp
from jax.experimental import pallas as pl
from jax.experimental.pallas import tpu as pltpu

_EPS = 1e-5
_VMEM_LIMIT = 32 * 1024 * 1024


# ----------------------------------------------------------------------------
# In-kernel helpers (pure jnp on loaded values, all shapes static)
# ----------------------------------------------------------------------------
def _norm_prelu(y, gamma, beta, alpha, eps=_EPS):
    """Per-channel (lane) instance-style norm over the rows of one batch block,
    two-pass variance, channel affine and single-alpha PReLU.  y: (T, C) f32."""
    inv_t = 1.0 / y.shape[0]
    mu = jnp.sum(y, axis=0, keepdims=True) * inv_t
    d = y - mu
    var = jnp.sum(d * d, axis=0, keepdims=True) * inv_t
    out = d * jax.lax.rsqrt(var + eps) * gamma + beta
    return jnp.where(out >= 0.0, out, alpha * out)


def _causal_taps(x, n_taps, dilation, t_len):
    """x: (T, C).  Returns (T, n_taps*C): lane-concat of causally shifted copies
    x[t - (n_taps-1-j)*dilation] (zero filled), tap-major / channel-minor.
    Pure data movement (sublane shift + lane concat) — no MXU, no BTxBT masks."""
    if n_taps == 1:
        return x
    max_s = (n_taps - 1) * dilation
    xp = jnp.concatenate([jnp.zeros((max_s, x.shape[-1]), x.dtype), x], axis=0)
    taps = []
    for j in range(n_taps):
        start = max_s - (n_taps - 1 - j) * dilation
        taps.append(xp[start:start + t_len, :])
    return jnp.concatenate(taps, axis=-1)


# ----------------------------------------------------------------------------
# Fused conv2d layer: one lane-dense matmul + bias + iLN + PReLU per batch
# ----------------------------------------------------------------------------
def _conv_layer_kernel(*refs, n_in, kt, t_len, k_out, cout, apply_act, eps):
    x_refs = refs[:n_in]
    w_refs = refs[n_in:2 * n_in]
    b_ref, g_ref, be_ref, a_ref, o_ref = refs[2 * n_in:]

    y = None
    for xr, wr in zip(x_refs, w_refs):
        xin = _causal_taps(xr[...], kt, 1, t_len)          # (T, kt*K*Cin_i)
        term = jnp.dot(xin.astype(jnp.bfloat16), wr[...],  # bf16 MXU, f32 acc
                       preferred_element_type=jnp.float32)
        y = term if y is None else y + term
    y = y + b_ref[...]                                     # (T, k_out*cout)

    if apply_act:
        # per-(batch, cout) stats over (T, k_out); lanes are kout-major/cout-minor
        def per_cout_mean(v):
            s = jnp.sum(v, axis=0, keepdims=True)          # (1, k_out*cout)
            acc = s[:, 0:cout]
            for ko in range(1, k_out):
                acc = acc + s[:, ko * cout:(ko + 1) * cout]
            m = acc * (1.0 / (t_len * k_out))              # (1, cout)
            return jnp.concatenate([m] * k_out, axis=-1)   # back to (1, k_out*cout)

        mu = per_cout_mean(y)
        d = y - mu
        var = per_cout_mean(d * d)                         # two-pass variance
        out = d * jax.lax.rsqrt(var + eps) * g_ref[...] + be_ref[...]
        y = jnp.where(out >= 0.0, out, a_ref[...] * out)
    o_ref[...] = y


def _freq_tap_mask(kf, k_in, stride_f, pad_f, transposed):
    """0/1 selector S[f, k_in, k_out]: which input freq feeds which output freq
    for freq-tap f.  `transposed` folds the x2 zero-insertion upsample
    (polyphase) into the weight instead of multiplying explicit zeros."""
    if transposed:
        k_out = 2 * k_in
    else:
        k_out = (k_in + 2 * pad_f - kf) // stride_f + 1
    s = np.zeros((kf, k_in, k_out), np.float32)
    for o in range(k_out):
        for f in range(kf):
            if transposed:
                j = o - pad_f + f
                if j < 0 or j >= 2 * k_in or (j % 2) != 0:
                    continue
                k = j // 2
            else:
                k = o * stride_f - pad_f + f
                if k < 0 or k >= k_in:
                    continue
            s[f, k, o] = 1.0
    return s, k_out


def _pack_conv_weight(w, k_in, stride_f, pad_f, transposed):
    """torch conv weight (Cout, Cin, kt, kf) -> banded (kt*K*Cin, Kout*Cout)
    bf16 matrix; rows ordered (t, k, cin), cols ordered (kout, cout)."""
    cout, cin, kt, kf = w.shape
    s_mask, k_out = _freq_tap_mask(kf, k_in, stride_f, pad_f, transposed)
    wm = jnp.einsum("fko,citf->tkioc", s_mask, w.astype(jnp.float32))
    return wm.reshape(kt * k_in * cin, k_out * cout).astype(jnp.bfloat16), k_out


def fused_conv2d_layer(xs, k_in, lyr, *, stride_f, pad_f, transposed, apply_act):
    """xs: list of (B, T, k_in*Cin_i) flat-NHWC inputs.  The decoder's channel
    'cat' is realised as separate matmuls against split weights (no HBM concat).
    One pallas_call, grid over batch ("parallel")."""
    b, t_len, _ = xs[0].shape
    w = lyr["w"]
    cout, cin_total, kt, _kf = w.shape
    cins = [x.shape[-1] // k_in for x in xs]
    assert sum(cins) == cin_total

    w_parts, k_out, off = [], None, 0
    for ci in cins:
        wp, k_out = _pack_conv_weight(w[:, off:off + ci], k_in, stride_f, pad_f,
                                      transposed)
        w_parts.append(wp)
        off += ci
    l_out = k_out * cout

    bias = jnp.tile(lyr["b"].reshape(1, cout), (1, k_out)).astype(jnp.float32)
    if apply_act:
        gamma = jnp.tile(lyr["gamma"].reshape(1, cout), (1, k_out)).astype(jnp.float32)
        beta = jnp.tile(lyr["beta"].reshape(1, cout), (1, k_out)).astype(jnp.float32)
        alpha = lyr["alpha"].reshape(1, 1).astype(jnp.float32)
    else:
        gamma = jnp.ones((1, l_out), jnp.float32)
        beta = jnp.zeros((1, l_out), jnp.float32)
        alpha = jnp.zeros((1, 1), jnp.float32)

    kern = functools.partial(_conv_layer_kernel, n_in=len(xs), kt=kt, t_len=t_len,
                             k_out=k_out, cout=cout, apply_act=apply_act, eps=_EPS)
    in_specs = (
        [pl.BlockSpec((None, t_len, x.shape[-1]), lambda i: (i, 0, 0)) for x in xs]
        + [pl.BlockSpec(wp.shape, lambda i: (0, 0)) for wp in w_parts]
        + [pl.BlockSpec((1, l_out), lambda i: (0, 0))] * 3
        + [pl.BlockSpec((1, 1), lambda i: (0, 0))]
    )
    out = pl.pallas_call(
        kern,
        out_shape=jax.ShapeDtypeStruct((b, t_len, l_out), jnp.float32),
        grid=(b,),
        in_specs=in_specs,
        out_specs=pl.BlockSpec((None, t_len, l_out), lambda i: (i, 0, 0)),
        compiler_params=pltpu.CompilerParams(
            dimension_semantics=("parallel",), vmem_limit_bytes=_VMEM_LIMIT),
    )(*xs, *w_parts, bias, gamma, beta, alpha)
    return out, k_out


# ----------------------------------------------------------------------------
# Fused TCM stack kernel: all groups / blocks in one pallas_call, grid over B
# ----------------------------------------------------------------------------
def _tcm_stack_kernel(x_ref, inw_ref, inb_ref, g1_ref, b1_ref, dw_ref, db_ref,
                      g2_ref, b2_ref, ow_ref, ob_ref, a1_ref, a2_ref, o_ref, *,
                      t_len, kd, dilations, group_num, eps):
    x = x_ref[...]                                  # (T, d_feat) f32, one batch
    acc = jnp.zeros_like(x)
    blk = 0
    for _ in range(group_num):
        for d in dilations:
            resid = x
            # pointwise in
            y = jnp.dot(x.astype(jnp.bfloat16), inw_ref[blk],
                        preferred_element_type=jnp.float32) + inb_ref[blk]
            y = _norm_prelu(y, g1_ref[blk], b1_ref[blk], a1_ref[blk], eps)
            # dilated causal conv: shifted copies (no MXU) + ONE fused tap matmul
            ycat = _causal_taps(y, kd, d, t_len)    # (T, kd*cd1)
            z = jnp.dot(ycat.astype(jnp.bfloat16), dw_ref[blk],
                        preferred_element_type=jnp.float32) + db_ref[blk]
            z = _norm_prelu(z, g2_ref[blk], b2_ref[blk], a2_ref[blk], eps)
            # pointwise out + residual
            x = resid + jnp.dot(z.astype(jnp.bfloat16), ow_ref[blk],
                                preferred_element_type=jnp.float32) + ob_ref[blk]
            blk += 1
        acc = acc + x                               # per-group accumulation
    o_ref[...] = acc


def tcm_stack(x, stcns, *, dilations, group_num, k_last, c_ch):
    """x: (B, T, d_feat) flat features in (k-major, c-minor) lane order.  The
    reference's (B,T,K,C)->(B,C*K,T) permutation is folded into the pointwise
    weights so no HBM transposes are needed around the stack."""
    b, t_len, d_feat = x.shape
    assert k_last * c_ch == d_feat
    blocks = [bk for grp in stcns for bk in grp]
    n_blk = len(blocks)
    assert n_blk == group_num * len(dilations)
    cd1 = blocks[0]["in_w"].shape[0]
    kd = blocks[0]["d_w"].shape[2]

    perm = jnp.asarray([c * k_last + k for k in range(k_last) for c in range(c_ch)],
                       jnp.int32)
    in_w = jnp.stack([jnp.take(jnp.transpose(bk["in_w"][:, :, 0]), perm, axis=0)
                      for bk in blocks]).astype(jnp.bfloat16)
    in_b = jnp.stack([bk["in_b"].reshape(1, cd1) for bk in blocks])
    g1 = jnp.stack([bk["gamma1"].reshape(1, cd1) for bk in blocks])
    b1 = jnp.stack([bk["beta1"].reshape(1, cd1) for bk in blocks])
    dw = jnp.stack([jnp.transpose(bk["d_w"], (2, 1, 0)).reshape(kd * cd1, cd1)
                    for bk in blocks]).astype(jnp.bfloat16)
    db = jnp.stack([bk["d_b"].reshape(1, cd1) for bk in blocks])
    g2 = jnp.stack([bk["gamma2"].reshape(1, cd1) for bk in blocks])
    b2 = jnp.stack([bk["beta2"].reshape(1, cd1) for bk in blocks])
    ow = jnp.stack([jnp.take(jnp.transpose(bk["out_w"][:, :, 0]), perm, axis=1)
                    for bk in blocks]).astype(jnp.bfloat16)
    ob = jnp.stack([jnp.take(bk["out_b"], perm).reshape(1, d_feat) for bk in blocks])
    a1 = jnp.stack([bk["alpha1"].reshape(1, 1) for bk in blocks])
    a2 = jnp.stack([bk["alpha2"].reshape(1, 1) for bk in blocks])

    kern = functools.partial(_tcm_stack_kernel, t_len=t_len, kd=kd,
                             dilations=tuple(dilations), group_num=group_num,
                             eps=_EPS)

    def fixed(shape):
        nd = len(shape)
        return pl.BlockSpec(shape, lambda i: (0,) * nd)

    in_specs = [pl.BlockSpec((None, t_len, d_feat), lambda i: (i, 0, 0)),
                fixed(in_w.shape), fixed(in_b.shape), fixed(g1.shape), fixed(b1.shape),
                fixed(dw.shape), fixed(db.shape), fixed(g2.shape), fixed(b2.shape),
                fixed(ow.shape), fixed(ob.shape), fixed(a1.shape), fixed(a2.shape)]
    return pl.pallas_call(
        kern,
        out_shape=jax.ShapeDtypeStruct((b, t_len, d_feat), jnp.float32),
        grid=(b,),
        in_specs=in_specs,
        out_specs=pl.BlockSpec((None, t_len, d_feat), lambda i: (i, 0, 0)),
        compiler_params=pltpu.CompilerParams(
            dimension_semantics=("parallel",), vmem_limit_bytes=_VMEM_LIMIT),
    )(x, in_w, in_b, g1, b1, dw, db, g2, b2, ow, ob, a1, a2)


# ----------------------------------------------------------------------------
# TCNN forward
# ----------------------------------------------------------------------------
def tcnn_forward(inpt, params, cfg):
    """inpt: (B, T, K) or (B, C, T, K) -> (B, T, K)."""
    dilations = tuple(cfg["dilations"])
    group_num = cfg["group_num"]
    c = cfg["c"]

    if inpt.ndim == 3:
        x = inpt                                          # (B, T, K), cin = 1
        k_cur = inpt.shape[-1]
    else:                                                 # (B, C, T, K) NCHW
        bb, cc, tt, kk = inpt.shape
        x = jnp.transpose(inpt, (0, 2, 3, 1)).reshape(bb, tt, kk * cc)
        k_cur = kk

    # ---- FrameUNetEncoder: fused causal conv + iLN + PReLU, one call per layer
    en_list = []
    for lyr in params["encoder"]:
        x, k_cur = fused_conv2d_layer([x], k_cur, lyr, stride_f=2, pad_f=1,
                                      transposed=False, apply_act=True)
        en_list.append((x, k_cur))

    # ---- TCM stack: all group_num x len(dilations) blocks in one fused kernel
    x = tcm_stack(x, params["stcns"], dilations=dilations, group_num=group_num,
                  k_last=k_cur, c_ch=c)

    # ---- FrameUNetDecoder: 'cat' skip via split-weight matmuls, polyphase
    #      transposed conv folded into the packed weights
    n_dec = len(params["decoder"])
    for i, lyr in enumerate(params["decoder"]):
        skip, _ks = en_list[-(i + 1)]
        x, k_cur = fused_conv2d_layer([x, skip], k_cur, lyr, stride_f=1, pad_f=1,
                                      transposed=True, apply_act=(i != n_dec - 1))

    # is_dual_rnn=False path: embed_dim == 1 -> output is already (B, T, K).
    # TODO(synk): InterIntraRNN (dual-path LSTM) not implemented; unused here.
    return x


# ----------------------------------------------------------------------------
# Deterministic parameter init (torch-default-like uniform(-1/sqrt(fan_in)))
# ----------------------------------------------------------------------------
def _uniform(key, shape, fan_in):
    bound = 1.0 / math.sqrt(fan_in)
    return jax.random.uniform(key, shape, jnp.float32, -bound, bound)


def init_params(key, cfg):
    c, cin = cfg["c"], cfg["cin"]
    kt, kf = cfg["k1"]
    cd1, d_feat, kd1 = cfg["cd1"], cfg["d_feat"], cfg["kd1"]
    keys = iter(jax.random.split(key, 256))

    def conv2d_p(ci, co, act=True):
        p = {"w": _uniform(next(keys), (co, ci, kt, kf), ci * kt * kf),
             "b": _uniform(next(keys), (co,), ci * kt * kf)}
        if act:
            p["gamma"] = jnp.ones((co,), jnp.float32)
            p["beta"] = jnp.zeros((co,), jnp.float32)
            p["alpha"] = jnp.full((1,), 0.25, jnp.float32)
        return p

    def conv1d_p(prefix, ci, co, k):
        return {prefix + "w": _uniform(next(keys), (co, ci, k), ci * k),
                prefix + "b": _uniform(next(keys), (co,), ci * k)}

    # 3 encoder layers: K 16 -> 8 -> 4 -> 2, so d_feat == c * 2
    enc = [conv2d_p(cin, c), conv2d_p(c, c), conv2d_p(c, c)]
    dec = [conv2d_p(2 * c, c), conv2d_p(2 * c, c),
           conv2d_p(2 * c, cfg["embed_dim"], act=False)]

    stcns = []
    for _ in range(cfg["group_num"]):
        group = []
        for _d in cfg["dilations"]:
            blk = {}
            blk.update(conv1d_p("in_", d_feat, cd1, 1))
            blk["gamma1"] = jnp.ones((cd1,), jnp.float32)
            blk["beta1"] = jnp.zeros((cd1,), jnp.float32)
            blk["alpha1"] = jnp.full((1,), 0.25, jnp.float32)
            blk.update(conv1d_p("d_", cd1, cd1, kd1))
            blk["gamma2"] = jnp.ones((cd1,), jnp.float32)
            blk["beta2"] = jnp.zeros((cd1,), jnp.float32)
            blk["alpha2"] = jnp.full((1,), 0.25, jnp.float32)
            blk.update(conv1d_p("out_", cd1, d_feat, 1))
            group.append(blk)
        stcns.append(group)
    return {"encoder": enc, "decoder": dec, "stcns": stcns}


# ----------------------------------------------------------------------------
if __name__ == "__main__":
    cfg = dict(
        cin=1, k1=(2, 3), c=8, embed_dim=1, kd1=3, cd1=16, d_feat=16,
        hidden_dim=32, hidden_num=1, group_num=2, dilations=(1, 2, 4),
        inter_connect="cat", norm_type="iLN", rnn_type="LSTM",
        is_dual_rnn=False, is_causal=True,
    )
    params = init_params(jax.random.PRNGKey(42), cfg)

    # inpt: (B, T, K) = (2, 8, 16)
    x = jax.random.normal(jax.random.PRNGKey(0), (2, 8, 16), dtype=jnp.float32)

    fwd = jax.jit(functools.partial(tcnn_forward, params=params, cfg=cfg))
    y = fwd(x)
    jax.block_until_ready(y)
    assert y.shape == (2, 8, 16), y.shape
    assert jnp.all(jnp.isfinite(y))
    print("KERNEL_OK")
</pallas_src>

<mosaic_0001>
module attributes {stable_mosaic.version = 11 : i64} {
  func.func @_conv_layer_kernel(%arg0: i32, %arg1: memref<1x8x16xf32, #tpu.memory_space<vmem>>, %arg2: memref<32x64xbf16, #tpu.memory_space<vmem>>, %arg3: memref<1x64xf32, #tpu.memory_space<vmem>>, %arg4: memref<1x64xf32, #tpu.memory_space<vmem>>, %arg5: memref<1x64xf32, #tpu.memory_space<vmem>>, %arg6: memref<1x1xf32, #tpu.memory_space<vmem>>, %arg7: memref<1x8x64xf32, #tpu.memory_space<vmem>>) attributes {dimension_semantics = [#tpu.dimension_semantics<parallel>], iteration_bounds = array<i64: 2>, scalar_prefetch = 0 : i64, scratch_operands = 0 : i64, tpu.core_type = #tpu.core_type<tc>, window_params = [{transform_indices = @transform_0, window_bounds = array<i64: 1, 8, 16>}, {pipeline_mode = #tpu.pipeline_mode<synchronous>, transform_indices = @transform_1, window_bounds = array<i64: 32, 64>}, {pipeline_mode = #tpu.pipeline_mode<synchronous>, transform_indices = @transform_2, window_bounds = array<i64: 1, 64>}, {pipeline_mode = #tpu.pipeline_mode<synchronous>, transform_indices = @transform_3, window_bounds = array<i64: 1, 64>}, {pipeline_mode = #tpu.pipeline_mode<synchronous>, transform_indices = @transform_4, window_bounds = array<i64: 1, 64>}, {pipeline_mode = #tpu.pipeline_mode<synchronous>, transform_indices = @transform_5, window_bounds = array<i64: 1, 1>}, {transform_indices = @transform_6, window_bounds = array<i64: 1, 8, 64>}]} {
    %c0 = arith.constant 0 : index
    %c0_0 = arith.constant 0 : index
    %c0_1 = arith.constant 0 : index
    %0 = vector.load %arg1[%c0, %c0_0, %c0_1] : memref<1x8x16xf32, #tpu.memory_space<vmem>>, vector<1x8x16xf32>
    %1 = vector.shape_cast %0 : vector<1x8x16xf32> to vector<8x16xf32>
    %cst = arith.constant 0.000000e+00 : f32
    %2 = vector.broadcast %cst : f32 to vector<1x16xf32>
    %3 = tpu.concatenate %2, %1 in 0 : vector<1x16xf32>, vector<8x16xf32> -> vector<9x16xf32>
    %4 = vector.extract_strided_slice %3 {offsets = [0, 0], sizes = [8, 16], strides = [1, 1]} : vector<9x16xf32> to vector<8x16xf32>
    %5 = vector.extract_strided_slice %3 {offsets = [1, 0], sizes = [8, 16], strides = [1, 1]} : vector<9x16xf32> to vector<8x16xf32>
    %6 = tpu.concatenate %4, %5 in 1 : vector<8x16xf32>, vector<8x16xf32> -> vector<8x32xf32>
    %7 = arith.truncf %6 : vector<8x32xf32> to vector<8x32xbf16>
    %c0_2 = arith.constant 0 : index
    %c0_3 = arith.constant 0 : index
    %8 = vector.load %arg2[%c0_2, %c0_3] : memref<32x64xbf16, #tpu.memory_space<vmem>>, vector<32x64xbf16>
    %cst_4 = arith.constant dense<0.000000e+00> : vector<8x64xf32>
    %9 = tpu.matmul %7, %8, %cst_4 {dimension_numbers = #tpu.dot_dimension_numbers<[1], [0], [0], [1], [0, 0, 1, 1], [], []>} : vector<8x32xbf16>, vector<32x64xbf16>, vector<8x64xf32> -> vector<8x64xf32>
    %c0_5 = arith.constant 0 : index
    %c0_6 = arith.constant 0 : index
    %10 = vector.load %arg3[%c0_5, %c0_6] : memref<1x64xf32, #tpu.memory_space<vmem>>, vector<1x64xf32>
    %11 = vector.broadcast %10 : vector<1x64xf32> to vector<8x64xf32>
    %12 = arith.addf %9, %11 : vector<8x64xf32>
    %cst_7 = arith.constant dense<0.000000e+00> : vector<64xf32>
    %13 = vector.multi_reduction <add>, %12, %cst_7 [0] : vector<8x64xf32> to vector<64xf32>
    %14 = vector.shape_cast %13 : vector<64xf32> to vector<1x64xf32>
    %15 = vector.extract_strided_slice %14 {offsets = [0, 0], sizes = [1, 8], strides = [1, 1]} : vector<1x64xf32> to vector<1x8xf32>
    %16 = vector.extract_strided_slice %14 {offsets = [0, 8], sizes = [1, 8], strides = [1, 1]} : vector<1x64xf32> to vector<1x8xf32>
    %17 = arith.addf %15, %16 : vector<1x8xf32>
    %18 = vector.extract_strided_slice %14 {offsets = [0, 16], sizes = [1, 8], strides = [1, 1]} : vector<1x64xf32> to vector<1x8xf32>
    %19 = arith.addf %17, %18 : vector<1x8xf32>
    %20 = vector.extract_strided_slice %14 {offsets = [0, 24], sizes = [1, 8], strides = [1, 1]} : vector<1x64xf32> to vector<1x8xf32>
    %21 = arith.addf %19, %20 : vector<1x8xf32>
    %22 = vector.extract_strided_slice %14 {offsets = [0, 32], sizes = [1, 8], strides = [1, 1]} : vector<1x64xf32> to vector<1x8xf32>
    %23 = arith.addf %21, %22 : vector<1x8xf32>
    %24 = vector.extract_strided_slice %14 {offsets = [0, 40], sizes = [1, 8], strides = [1, 1]} : vector<1x64xf32> to vector<1x8xf32>
    %25 = arith.addf %23, %24 : vector<1x8xf32>
    %26 = vector.extract_strided_slice %14 {offsets = [0, 48], sizes = [1, 8], strides = [1, 1]} : vector<1x64xf32> to vector<1x8xf32>
    %27 = arith.addf %25, %26 : vector<1x8xf32>
    %28 = vector.extract_strided_slice %14 {offsets = [0, 56], sizes = [1, 8], strides = [1, 1]} : vector<1x64xf32> to vector<1x8xf32>
    %29 = arith.addf %27, %28 : vector<1x8xf32>
    %cst_8 = arith.constant 1.562500e-02 : f32
    %30 = vector.broadcast %cst_8 : f32 to vector<1x8xf32>
    %31 = arith.mulf %29, %30 : vector<1x8xf32>
    %32 = tpu.concatenate %31, %31, %31, %31, %31, %31, %31, %31 in 1 : vector<1x8xf32>, vector<1x8xf32>, vector<1x8xf32>, vector<1x8xf32>, vector<1x8xf32>, vector<1x8xf32>, vector<1x8xf32>, vector<1x8xf32> -> vector<1x64xf32>
    %33 = vector.broadcast %32 : vector<1x64xf32> to vector<8x64xf32>
    %34 = arith.subf %12, %33 : vector<8x64xf32>
    %35 = arith.mulf %34, %34 : vector<8x64xf32>
    %cst_9 = arith.constant dense<0.000000e+00> : vector<64xf32>
    %36 = vector.multi_reduction <add>, %35, %cst_9 [0] : vector<8x64xf32> to vector<64xf32>
    %37 = vector.shape_cast %36 : vector<64xf32> to vector<1x64xf32>
    %38 = vector.extract_strided_slice %37 {offsets = [0, 0], sizes = [1, 8], strides = [1, 1]} : vector<1x64xf32> to vector<1x8xf32>
    %39 = vector.extract_strided_slice %37 {offsets = [0, 8], sizes = [1, 8], strides = [1, 1]} : vector<1x64xf32> to vector<1x8xf32>
    %40 = arith.addf %38, %39 : vector<1x8xf32>
    %41 = vector.extract_strided_slice %37 {offsets = [0, 16], sizes = [1, 8], strides = [1, 1]} : vector<1x64xf32> to vector<1x8xf32>
    %42 = arith.addf %40, %41 : vector<1x8xf32>
    %43 = vector.extract_strided_slice %37 {offsets = [0, 24], sizes = [1, 8], strides = [1, 1]} : vector<1x64xf32> to vector<1x8xf32>
    %44 = arith.addf %42, %43 : vector<1x8xf32>
    %45 = vector.extract_strided_slice %37 {offsets = [0, 32], sizes = [1, 8], strides = [1, 1]} : vector<1x64xf32> to vector<1x8xf32>
    %46 = arith.addf %44, %45 : vector<1x8xf32>
    %47 = vector.extract_strided_slice %37 {offsets = [0, 40], sizes = [1, 8], strides = [1, 1]} : vector<1x64xf32> to vector<1x8xf32>
    %48 = arith.addf %46, %47 : vector<1x8xf32>
    %49 = vector.extract_strided_slice %37 {offsets = [0, 48], sizes = [1, 8], strides = [1, 1]} : vector<1x64xf32> to vector<1x8xf32>
    %50 = arith.addf %48, %49 : vector<1x8xf32>
    %51 = vector.extract_strided_slice %37 {offsets = [0, 56], sizes = [1, 8], strides = [1, 1]} : vector<1x64xf32> to vector<1x8xf32>
    %52 = arith.addf %50, %51 : vector<1x8xf32>
    %cst_10 = arith.constant 1.562500e-02 : f32
    %53 = vector.broadcast %cst_10 : f32 to vector<1x8xf32>
    %54 = arith.mulf %52, %53 : vector<1x8xf32>
    %55 = tpu.concatenate %54, %54, %54, %54, %54, %54, %54, %54 in 1 : vector<1x8xf32>, vector<1x8xf32>, vector<1x8xf32>, vector<1x8xf32>, vector<1x8xf32>, vector<1x8xf32>, vector<1x8xf32>, vector<1x8xf32> -> vector<1x64xf32>
    %cst_11 = arith.constant 9.99999974E-6 : f32
    %56 = vector.broadcast %cst_11 : f32 to vector<1x64xf32>
    %57 = arith.addf %55, %56 : vector<1x64xf32>
    %58 = math.rsqrt %57 : vector<1x64xf32>
    %59 = vector.broadcast %58 : vector<1x64xf32> to vector<8x64xf32>
    %60 = arith.mulf %34, %59 : vector<8x64xf32>
    %c0_12 = arith.constant 0 : index
    %c0_13 = arith.constant 0 : index
    %61 = vector.load %arg4[%c0_12, %c0_13] : memref<1x64xf32, #tpu.memory_space<vmem>>, vector<1x64xf32>
    %62 = vector.broadcast %61 : vector<1x64xf32> to vector<8x64xf32>
    %63 = arith.mulf %60, %62 : vector<8x64xf32>
    %c0_14 = arith.constant 0 : index
    %c0_15 = arith.constant 0 : index
    %64 = vector.load %arg5[%c0_14, %c0_15] : memref<1x64xf32, #tpu.memory_space<vmem>>, vector<1x64xf32>
    %65 = vector.broadcast %64 : vector<1x64xf32> to vector<8x64xf32>
    %66 = arith.addf %63, %65 : vector<8x64xf32>
    %cst_16 = arith.constant 0.000000e+00 : f32
    %67 = vector.broadcast %cst_16 : f32 to vector<8x64xf32>
    %68 = arith.cmpf oge, %66, %67 : vector<8x64xf32>
    %c0_17 = arith.constant 0 : index
    %c0_18 = arith.constant 0 : index
    %69 = vector.load %arg6[%c0_17, %c0_18] : memref<1x1xf32, #tpu.memory_space<vmem>>, vector<1x1xf32>
    %70 = vector.broadcast %69 : vector<1x1xf32> to vector<8x64xf32>
    %71 = arith.mulf %70, %66 : vector<8x64xf32>
    %72 = arith.select %68, %66, %71 : vector<8x64xi1>, vector<8x64xf32>
    %c0_19 = arith.constant 0 : index
    %c0_20 = arith.constant 0 : index
    %c0_21 = arith.constant 0 : index
    %73 = vector.load %arg7[%c0_19, %c0_20, %c0_21] : memref<1x8x64xf32, #tpu.memory_space<vmem>>, vector<1x8x64xf32>
    %74 = vector.shape_cast %73 : vector<1x8x64xf32> to vector<8x64xf32>
    %75 = vector.shape_cast %72 : vector<8x64xf32> to vector<1x8x64xf32>
    tpu.vector_store %arg7[%c0_19, %c0_20, %c0_21], %75 {strides = array<i32>} : memref<1x8x64xf32, #tpu.memory_space<vmem>>, vector<1x8x64xf32>,
    return
  }
  func.func @transform_0(%arg0: i32) -> (i32, i32, i32) {
    %c0_i32 = arith.constant 0 : i32
    %c0_i32_0 = arith.constant 0 : i32
    %c0_i32_1 = arith.constant 0 : i32
    return %arg0, %c0_i32, %c0_i32_0 : i32, i32, i32
  }
  func.func @transform_1(%arg0: i32) -> (i32, i32) {
    %c0_i32 = arith.constant 0 : i32
    %c0_i32_0 = arith.constant 0 : i32
    %c0_i32_1 = arith.constant 0 : i32
    return %c0_i32, %c0_i32_0 : i32, i32
  }
  func.func @transform_2(%arg0: i32) -> (i32, i32) {
    %c0_i32 = arith.constant 0 : i32
    %c0_i32_0 = arith.constant 0 : i32
    %c0_i32_1 = arith.constant 0 : i32
    return %c0_i32, %c0_i32_0 : i32, i32
  }
  func.func @transform_3(%arg0: i32) -> (i32, i32) {
    %c0_i32 = arith.constant 0 : i32
    %c0_i32_0 = arith.constant 0 : i32
    %c0_i32_1 = arith.constant 0 : i32
    return %c0_i32, %c0_i32_0 : i32, i32
  }
  func.func @transform_4(%arg0: i32) -> (i32, i32) {
    %c0_i32 = arith.constant 0 : i32
    %c0_i32_0 = arith.constant 0 : i32
    %c0_i32_1 = arith.constant 0 : i32
    return %c0_i32, %c0_i32_0 : i32, i32
  }
  func.func @transform_5(%arg0: i32) -> (i32, i32) {
    %c0_i32 = arith.constant 0 : i32
    %c0_i32_0 = arith.constant 0 : i32
    %c0_i32_1 = arith.constant 0 : i32
    return %c0_i32, %c0_i32_0 : i32, i32
  }
  func.func @transform_6(%arg0: i32) -> (i32, i32, i32) {
    %c0_i32 = arith.constant 0 : i32
    %c0_i32_0 = arith.constant 0 : i32
    %c0_i32_1 = arith.constant 0 : i32
    return %arg0, %c0_i32, %c0_i32_0 : i32, i32, i32
  }
}

module attributes {stable_mosaic.version = 11 : i64} {
  func.func @_conv_layer_kernel(%arg0: i32, %arg1: memref<1x8x64xf32, #tpu.memory_space<vmem>>, %arg2: memref<128x32xbf16, #tpu.memory_space<vmem>>, %arg3: memref<1x32xf32, #tpu.memory_space<vmem>>, %arg4: memref<1x32xf32, #tpu.memory_space<vmem>>, %arg5: memref<1x32xf32, #tpu.memory_space<vmem>>, %arg6: memref<1x1xf32, #tpu.memory_space<vmem>>, %arg7: memref<1x8x32xf32, #tpu.memory_space<vmem>>) attributes {dimension_semantics = [#tpu.dimension_semantics<parallel>], iteration_bounds = array<i64: 2>, scalar_prefetch = 0 : i64, scratch_operands = 0 : i64, tpu.core_type = #tpu.core_type<tc>, window_params = [{transform_indices = @transform_0, window_bounds = array<i64: 1, 8, 64>}, {pipeline_mode = #tpu.pipeline_mode<synchronous>, transform_indices = @transform_1, window_bounds = array<i64: 128, 32>}, {pipeline_mode = #tpu.pipeline_mode<synchronous>, transform_indices = @transform_2, window_bounds = array<i64: 1, 32>}, {pipeline_mode = #tpu.pipeline_mode<synchronous>, transform_indices = @transform_3, window_bounds = array<i64: 1, 32>}, {pipeline_mode = #tpu.pipeline_mode<synchronous>, transform_indices = @transform_4, window_bounds = array<i64: 1, 32>}, {pipeline_mode = #tpu.pipeline_mode<synchronous>, transform_indices = @transform_5, window_bounds = array<i64: 1, 1>}, {transform_indices = @transform_6, window_bounds = array<i64: 1, 8, 32>}]} {
    %c0 = arith.constant 0 : index
    %c0_0 = arith.constant 0 : index
    %c0_1 = arith.constant 0 : index
    %0 = vector.load %arg1[%c0, %c0_0, %c0_1] : memref<1x8x64xf32, #tpu.memory_space<vmem>>, vector<1x8x64xf32>
    %1 = vector.shape_cast %0 : vector<1x8x64xf32> to vector<8x64xf32>
    %cst = arith.constant 0.000000e+00 : f32
    %2 = vector.broadcast %cst : f32 to vector<1x64xf32>
    %3 = tpu.concatenate %2, %1 in 0 : vector<1x64xf32>, vector<8x64xf32> -> vector<9x64xf32>
    %4 = vector.extract_strided_slice %3 {offsets = [0, 0], sizes = [8, 64], strides = [1, 1]} : vector<9x64xf32> to vector<8x64xf32>
    %5 = vector.extract_strided_slice %3 {offsets = [1, 0], sizes = [8, 64], strides = [1, 1]} : vector<9x64xf32> to vector<8x64xf32>
    %6 = tpu.concatenate %4, %5 in 1 : vector<8x64xf32>, vector<8x64xf32> -> vector<8x128xf32>
    %7 = arith.truncf %6 : vector<8x128xf32> to vector<8x128xbf16>
    %c0_2 = arith.constant 0 : index
    %c0_3 = arith.constant 0 : index
    %8 = vector.load %arg2[%c0_2, %c0_3] : memref<128x32xbf16, #tpu.memory_space<vmem>>, vector<128x32xbf16>
    %cst_4 = arith.constant dense<0.000000e+00> : vector<8x32xf32>
    %9 = tpu.matmul %7, %8, %cst_4 {dimension_numbers = #tpu.dot_dimension_numbers<[1], [0], [0], [1], [0, 0, 1, 1], [], []>} : vector<8x128xbf16>, vector<128x32xbf16>, vector<8x32xf32> -> vector<8x32xf32>
    %c0_5 = arith.constant 0 : index
    %c0_6 = arith.constant 0 : index
    %10 = vector.load %arg3[%c0_5, %c0_6] : memref<1x32xf32, #tpu.memory_space<vmem>>, vector<1x32xf32>
    %11 = vector.broadcast %10 : vector<1x32xf32> to vector<8x32xf32>
    %12 = arith.addf %9, %11 : vector<8x32xf32>
    %cst_7 = arith.constant dense<0.000000e+00> : vector<32xf32>
    %13 = vector.multi_reduction <add>, %12, %cst_7 [0] : vector<8x32xf32> to vector<32xf32>
    %14 = vector.shape_cast %13 : vector<32xf32> to vector<1x32xf32>
    %15 = vector.extract_strided_slice %14 {offsets = [0, 0], sizes = [1, 8], strides = [1, 1]} : vector<1x32xf32> to vector<1x8xf32>
    %16 = vector.extract_strided_slice %14 {offsets = [0, 8], sizes = [1, 8], strides = [1, 1]} : vector<1x32xf32> to vector<1x8xf32>
    %17 = arith.addf %15, %16 : vector<1x8xf32>
    %18 = vector.extract_strided_slice %14 {offsets = [0, 16], sizes = [1, 8], strides = [1, 1]} : vector<1x32xf32> to vector<1x8xf32>
    %19 = arith.addf %17, %18 : vector<1x8xf32>
    %20 = vector.extract_strided_slice %14 {offsets = [0, 24], sizes = [1, 8], strides = [1, 1]} : vector<1x32xf32> to vector<1x8xf32>
    %21 = arith.addf %19, %20 : vector<1x8xf32>
    %cst_8 = arith.constant 3.125000e-02 : f32
    %22 = vector.broadcast %cst_8 : f32 to vector<1x8xf32>
    %23 = arith.mulf %21, %22 : vector<1x8xf32>
    %24 = tpu.concatenate %23, %23, %23, %23 in 1 : vector<1x8xf32>, vector<1x8xf32>, vector<1x8xf32>, vector<1x8xf32> -> vector<1x32xf32>
    %25 = vector.broadcast %24 : vector<1x32xf32> to vector<8x32xf32>
    %26 = arith.subf %12, %25 : vector<8x32xf32>
    %27 = arith.mulf %26, %26 : vector<8x32xf32>
    %cst_9 = arith.constant dense<0.000000e+00> : vector<32xf32>
    %28 = vector.multi_reduction <add>, %27, %cst_9 [0] : vector<8x32xf32> to vector<32xf32>
    %29 = vector.shape_cast %28 : vector<32xf32> to vector<1x32xf32>
    %30 = vector.extract_strided_slice %29 {offsets = [0, 0], sizes = [1, 8], strides = [1, 1]} : vector<1x32xf32> to vector<1x8xf32>
    %31 = vector.extract_strided_slice %29 {offsets = [0, 8], sizes = [1, 8], strides = [1, 1]} : vector<1x32xf32> to vector<1x8xf32>
    %32 = arith.addf %30, %31 : vector<1x8xf32>
    %33 = vector.extract_strided_slice %29 {offsets = [0, 16], sizes = [1, 8], strides = [1, 1]} : vector<1x32xf32> to vector<1x8xf32>
    %34 = arith.addf %32, %33 : vector<1x8xf32>
    %35 = vector.extract_strided_slice %29 {offsets = [0, 24], sizes = [1, 8], strides = [1, 1]} : vector<1x32xf32> to vector<1x8xf32>
    %36 = arith.addf %34, %35 : vector<1x8xf32>
    %cst_10 = arith.constant 3.125000e-02 : f32
    %37 = vector.broadcast %cst_10 : f32 to vector<1x8xf32>
    %38 = arith.mulf %36, %37 : vector<1x8xf32>
    %39 = tpu.concatenate %38, %38, %38, %38 in 1 : vector<1x8xf32>, vector<1x8xf32>, vector<1x8xf32>, vector<1x8xf32> -> vector<1x32xf32>
    %cst_11 = arith.constant 9.99999974E-6 : f32
    %40 = vector.broadcast %cst_11 : f32 to vector<1x32xf32>
    %41 = arith.addf %39, %40 : vector<1x32xf32>
    %42 = math.rsqrt %41 : vector<1x32xf32>
    %43 = vector.broadcast %42 : vector<1x32xf32> to vector<8x32xf32>
    %44 = arith.mulf %26, %43 : vector<8x32xf32>
    %c0_12 = arith.constant 0 : index
    %c0_13 = arith.constant 0 : index
    %45 = vector.load %arg4[%c0_12, %c0_13] : memref<1x32xf32, #tpu.memory_space<vmem>>, vector<1x32xf32>
    %46 = vector.broadcast %45 : vector<1x32xf32> to vector<8x32xf32>
    %47 = arith.mulf %44, %46 : vector<8x32xf32>
    %c0_14 = arith.constant 0 : index
    %c0_15 = arith.constant 0 : index
    %48 = vector.load %arg5[%c0_14, %c0_15] : memref<1x32xf32, #tpu.memory_space<vmem>>, vector<1x32xf32>
    %49 = vector.broadcast %48 : vector<1x32xf32> to vector<8x32xf32>
    %50 = arith.addf %47, %49 : vector<8x32xf32>
    %cst_16 = arith.constant 0.000000e+00 : f32
    %51 = vector.broadcast %cst_16 : f32 to vector<8x32xf32>
    %52 = arith.cmpf oge, %50, %51 : vector<8x32xf32>
    %c0_17 = arith.constant 0 : index
    %c0_18 = arith.constant 0 : index
    %53 = vector.load %arg6[%c0_17, %c0_18] : memref<1x1xf32, #tpu.memory_space<vmem>>, vector<1x1xf32>
    %54 = vector.broadcast %53 : vector<1x1xf32> to vector<8x32xf32>
    %55 = arith.mulf %54, %50 : vector<8x32xf32>
    %56 = arith.select %52, %50, %55 : vector<8x32xi1>, vector<8x32xf32>
    %c0_19 = arith.constant 0 : index
    %c0_20 = arith.constant 0 : index
    %c0_21 = arith.constant 0 : index
    %57 = vector.load %arg7[%c0_19, %c0_20, %c0_21] : memref<1x8x32xf32, #tpu.memory_space<vmem>>, vector<1x8x32xf32>
    %58 = vector.shape_cast %57 : vector<1x8x32xf32> to vector<8x32xf32>
    %59 = vector.shape_cast %56 : vector<8x32xf32> to vector<1x8x32xf32>
    tpu.vector_store %arg7[%c0_19, %c0_20, %c0_21], %59 {strides = array<i32>} : memref<1x8x32xf32, #tpu.memory_space<vmem>>, vector<1x8x32xf32>,
    return
  }
  func.func @transform_0(%arg0: i32) -> (i32, i32, i32) {
    %c0_i32 = arith.constant 0 : i32
    %c0_i32_0 = arith.constant 0 : i32
    %c0_i32_1 = arith.constant 0 : i32
    return %arg0, %c0_i32, %c0_i32_0 : i32, i32, i32
  }
  func.func @transform_1(%arg0: i32) -> (i32, i32) {
    %c0_i32 = arith.constant 0 : i32
    %c0_i32_0 = arith.constant 0 : i32
    %c0_i32_1 = arith.constant 0 : i32
    return %c0_i32, %c0_i32_0 : i32, i32
  }
  func.func @transform_2(%arg0: i32) -> (i32, i32) {
    %c0_i32 = arith.constant 0 : i32
    %c0_i32_0 = arith.constant 0 : i32
    %c0_i32_1 = arith.constant 0 : i32
    return %c0_i32, %c0_i32_0 : i32, i32
  }
  func.func @transform_3(%arg0: i32) -> (i32, i32) {
    %c0_i32 = arith.constant 0 : i32
    %c0_i32_0 = arith.constant 0 : i32
    %c0_i32_1 = arith.constant 0 : i32
    return %c0_i32, %c0_i32_0 : i32, i32
  }
  func.func @transform_4(%arg0: i32) -> (i32, i32) {
    %c0_i32 = arith.constant 0 : i32
    %c0_i32_0 = arith.constant 0 : i32
    %c0_i32_1 = arith.constant 0 : i32
    return %c0_i32, %c0_i32_0 : i32, i32
  }
  func.func @transform_5(%arg0: i32) -> (i32, i32) {
    %c0_i32 = arith.constant 0 : i32
    %c0_i32_0 = arith.constant 0 : i32
    %c0_i32_1 = arith.constant 0 : i32
    return %c0_i32, %c0_i32_0 : i32, i32
  }
  func.func @transform_6(%arg0: i32) -> (i32, i32, i32) {
    %c0_i32 = arith.constant 0 : i32
    %c0_i32_0 = arith.constant 0 : i32
    %c0_i32_1 = arith.constant 0 : i32
    return %arg0, %c0_i32, %c0_i32_0 : i32, i32, i32
  }
}

module attributes {stable_mosaic.version = 11 : i64} {
  func.func @_conv_layer_kernel(%arg0: i32, %arg1: memref<1x8x32xf32, #tpu.memory_space<vmem>>, %arg2: memref<64x16xbf16, #tpu.memory_space<vmem>>, %arg3: memref<1x16xf32, #tpu.memory_space<vmem>>, %arg4: memref<1x16xf32, #tpu.memory_space<vmem>>, %arg5: memref<1x16xf32, #tpu.memory_space<vmem>>, %arg6: memref<1x1xf32, #tpu.memory_space<vmem>>, %arg7: memref<1x8x16xf32, #tpu.memory_space<vmem>>) attributes {dimension_semantics = [#tpu.dimension_semantics<parallel>], iteration_bounds = array<i64: 2>, scalar_prefetch = 0 : i64, scratch_operands = 0 : i64, tpu.core_type = #tpu.core_type<tc>, window_params = [{transform_indices = @transform_0, window_bounds = array<i64: 1, 8, 32>}, {pipeline_mode = #tpu.pipeline_mode<synchronous>, transform_indices = @transform_1, window_bounds = array<i64: 64, 16>}, {pipeline_mode = #tpu.pipeline_mode<synchronous>, transform_indices = @transform_2, window_bounds = array<i64: 1, 16>}, {pipeline_mode = #tpu.pipeline_mode<synchronous>, transform_indices = @transform_3, window_bounds = array<i64: 1, 16>}, {pipeline_mode = #tpu.pipeline_mode<synchronous>, transform_indices = @transform_4, window_bounds = array<i64: 1, 16>}, {pipeline_mode = #tpu.pipeline_mode<synchronous>, transform_indices = @transform_5, window_bounds = array<i64: 1, 1>}, {transform_indices = @transform_6, window_bounds = array<i64: 1, 8, 16>}]} {
    %c0 = arith.constant 0 : index
    %c0_0 = arith.constant 0 : index
    %c0_1 = arith.constant 0 : index
    %0 = vector.load %arg1[%c0, %c0_0, %c0_1] : memref<1x8x32xf32, #tpu.memory_space<vmem>>, vector<1x8x32xf32>
    %1 = vector.shape_cast %0 : vector<1x8x32xf32> to vector<8x32xf32>
    %cst = arith.constant 0.000000e+00 : f32
    %2 = vector.broadcast %cst : f32 to vector<1x32xf32>
    %3 = tpu.concatenate %2, %1 in 0 : vector<1x32xf32>, vector<8x32xf32> -> vector<9x32xf32>
    %4 = vector.extract_strided_slice %3 {offsets = [0, 0], sizes = [8, 32], strides = [1, 1]} : vector<9x32xf32> to vector<8x32xf32>
    %5 = vector.extract_strided_slice %3 {offsets = [1, 0], sizes = [8, 32], strides = [1, 1]} : vector<9x32xf32> to vector<8x32xf32>
    %6 = tpu.concatenate %4, %5 in 1 : vector<8x32xf32>, vector<8x32xf32> -> vector<8x64xf32>
    %7 = arith.truncf %6 : vector<8x64xf32> to vector<8x64xbf16>
    %c0_2 = arith.constant 0 : index
    %c0_3 = arith.constant 0 : index
    %8 = vector.load %arg2[%c0_2, %c0_3] : memref<64x16xbf16, #tpu.memory_space<vmem>>, vector<64x16xbf16>
    %cst_4 = arith.constant dense<0.000000e+00> : vector<8x16xf32>
    %9 = tpu.matmul %7, %8, %cst_4 {dimension_numbers = #tpu.dot_dimension_numbers<[1], [0], [0], [1], [0, 0, 1, 1], [], []>} : vector<8x64xbf16>, vector<64x16xbf16>, vector<8x16xf32> -> vector<8x16xf32>
    %c0_5 = arith.constant 0 : index
    %c0_6 = arith.constant 0 : index
    %10 = vector.load %arg3[%c0_5, %c0_6] : memref<1x16xf32, #tpu.memory_space<vmem>>, vector<1x16xf32>
    %11 = vector.broadcast %10 : vector<1x16xf32> to vector<8x16xf32>
    %12 = arith.addf %9, %11 : vector<8x16xf32>
    %cst_7 = arith.constant dense<0.000000e+00> : vector<16xf32>
    %13 = vector.multi_reduction <add>, %12, %cst_7 [0] : vector<8x16xf32> to vector<16xf32>
    %14 = vector.shape_cast %13 : vector<16xf32> to vector<1x16xf32>
    %15 = vector.extract_strided_slice %14 {offsets = [0, 0], sizes = [1, 8], strides = [1, 1]} : vector<1x16xf32> to vector<1x8xf32>
    %16 = vector.extract_strided_slice %14 {offsets = [0, 8], sizes = [1, 8], strides = [1, 1]} : vector<1x16xf32> to vector<1x8xf32>
    %17 = arith.addf %15, %16 : vector<1x8xf32>
    %cst_8 = arith.constant 6.250000e-02 : f32
    %18 = vector.broadcast %cst_8 : f32 to vector<1x8xf32>
    %19 = arith.mulf %17, %18 : vector<1x8xf32>
    %20 = tpu.concatenate %19, %19 in 1 : vector<1x8xf32>, vector<1x8xf32> -> vector<1x16xf32>
    %21 = vector.broadcast %20 : vector<1x16xf32> to vector<8x16xf32>
    %22 = arith.subf %12, %21 : vector<8x16xf32>
    %23 = arith.mulf %22, %22 : vector<8x16xf32>
    %cst_9 = arith.constant dense<0.000000e+00> : vector<16xf32>
    %24 = vector.multi_reduction <add>, %23, %cst_9 [0] : vector<8x16xf32> to vector<16xf32>
    %25 = vector.shape_cast %24 : vector<16xf32> to vector<1x16xf32>
    %26 = vector.extract_strided_slice %25 {offsets = [0, 0], sizes = [1, 8], strides = [1, 1]} : vector<1x16xf32> to vector<1x8xf32>
    %27 = vector.extract_strided_slice %25 {offsets = [0, 8], sizes = [1, 8], strides = [1, 1]} : vector<1x16xf32> to vector<1x8xf32>
    %28 = arith.addf %26, %27 : vector<1x8xf32>
    %cst_10 = arith.constant 6.250000e-02 : f32
    %29 = vector.broadcast %cst_10 : f32 to vector<1x8xf32>
    %30 = arith.mulf %28, %29 : vector<1x8xf32>
    %31 = tpu.concatenate %30, %30 in 1 : vector<1x8xf32>, vector<1x8xf32> -> vector<1x16xf32>
    %cst_11 = arith.constant 9.99999974E-6 : f32
    %32 = vector.broadcast %cst_11 : f32 to vector<1x16xf32>
    %33 = arith.addf %31, %32 : vector<1x16xf32>
    %34 = math.rsqrt %33 : vector<1x16xf32>
    %35 = vector.broadcast %34 : vector<1x16xf32> to vector<8x16xf32>
    %36 = arith.mulf %22, %35 : vector<8x16xf32>
    %c0_12 = arith.constant 0 : index
    %c0_13 = arith.constant 0 : index
    %37 = vector.load %arg4[%c0_12, %c0_13] : memref<1x16xf32, #tpu.memory_space<vmem>>, vector<1x16xf32>
    %38 = vector.broadcast %37 : vector<1x16xf32> to vector<8x16xf32>
    %39 = arith.mulf %36, %38 : vector<8x16xf32>
    %c0_14 = arith.constant 0 : index
    %c0_15 = arith.constant 0 : index
    %40 = vector.load %arg5[%c0_14, %c0_15] : memref<1x16xf32, #tpu.memory_space<vmem>>, vector<1x16xf32>
    %41 = vector.broadcast %40 : vector<1x16xf32> to vector<8x16xf32>
    %42 = arith.addf %39, %41 : vector<8x16xf32>
    %cst_16 = arith.constant 0.000000e+00 : f32
    %43 = vector.broadcast %cst_16 : f32 to vector<8x16xf32>
    %44 = arith.cmpf oge, %42, %43 : vector<8x16xf32>
    %c0_17 = arith.constant 0 : index
    %c0_18 = arith.constant 0 : index
    %45 = vector.load %arg6[%c0_17, %c0_18] : memref<1x1xf32, #tpu.memory_space<vmem>>, vector<1x1xf32>
    %46 = vector.broadcast %45 : vector<1x1xf32> to vector<8x16xf32>
    %47 = arith.mulf %46, %42 : vector<8x16xf32>
    %48 = arith.select %44, %42, %47 : vector<8x16xi1>, vector<8x16xf32>
    %c0_19 = arith.constant 0 : index
    %c0_20 = arith.constant 0 : index
    %c0_21 = arith.constant 0 : index
    %49 = vector.load %arg7[%c0_19, %c0_20, %c0_21] : memref<1x8x16xf32, #tpu.memory_space<vmem>>, vector<1x8x16xf32>
    %50 = vector.shape_cast %49 : vector<1x8x16xf32> to vector<8x16xf32>
    %51 = vector.shape_cast %48 : vector<8x16xf32> to vector<1x8x16xf32>
    tpu.vector_store %arg7[%c0_19, %c0_20, %c0_21], %51 {strides = array<i32>} : memref<1x8x16xf32, #tpu.memory_space<vmem>>, vector<1x8x16xf32>,
    return
  }
  func.func @transform_0(%arg0: i32) -> (i32, i32, i32) {
    %c0_i32 = arith.constant 0 : i32
    %c0_i32_0 = arith.constant 0 : i32
    %c0_i32_1 = arith.constant 0 : i32
    return %arg0, %c0_i32, %c0_i32_0 : i32, i32, i32
  }
  func.func @transform_1(%arg0: i32) -> (i32, i32) {
    %c0_i32 = arith.constant 0 : i32
    %c0_i32_0 = arith.constant 0 : i32
    %c0_i32_1 = arith.constant 0 : i32
    return %c0_i32, %c0_i32_0 : i32, i32
  }
  func.func @transform_2(%arg0: i32) -> (i32, i32) {
    %c0_i32 = arith.constant 0 : i32
    %c0_i32_0 = arith.constant 0 : i32
    %c0_i32_1 = arith.constant 0 : i32
    return %c0_i32, %c0_i32_0 : i32, i32
  }
  func.func @transform_3(%arg0: i32) -> (i32, i32) {
    %c0_i32 = arith.constant 0 : i32
    %c0_i32_0 = arith.constant 0 : i32
    %c0_i32_1 = arith.constant 0 : i32
    return %c0_i32, %c0_i32_0 : i32, i32
  }
  func.func @transform_4(%arg0: i32) -> (i32, i32) {
    %c0_i32 = arith.constant 0 : i32
    %c0_i32_0 = arith.constant 0 : i32
    %c0_i32_1 = arith.constant 0 : i32
    return %c0_i32, %c0_i32_0 : i32, i32
  }
  func.func @transform_5(%arg0: i32) -> (i32, i32) {
    %c0_i32 = arith.constant 0 : i32
    %c0_i32_0 = arith.constant 0 : i32
    %c0_i32_1 = arith.constant 0 : i32
    return %c0_i32, %c0_i32_0 : i32, i32
  }
  func.func @transform_6(%arg0: i32) -> (i32, i32, i32) {
    %c0_i32 = arith.constant 0 : i32
    %c0_i32_0 = arith.constant 0 : i32
    %c0_i32_1 = arith.constant 0 : i32
    return %arg0, %c0_i32, %c0_i32_0 : i32, i32, i32
  }
}

module attributes {stable_mosaic.version = 11 : i64} {
  func.func @_tcm_stack_kernel(%arg0: i32, %arg1: memref<1x8x16xf32, #tpu.memory_space<vmem>>, %arg2: memref<6x16x16xbf16, #tpu.memory_space<vmem>>, %arg3: memref<6x1x16xf32, #tpu.memory_space<vmem>>, %arg4: memref<6x1x16xf32, #tpu.memory_space<vmem>>, %arg5: memref<6x1x16xf32, #tpu.memory_space<vmem>>, %arg6: memref<6x48x16xbf16, #tpu.memory_space<vmem>>, %arg7: memref<6x1x16xf32, #tpu.memory_space<vmem>>, %arg8: memref<6x1x16xf32, #tpu.memory_space<vmem>>, %arg9: memref<6x1x16xf32, #tpu.memory_space<vmem>>, %arg10: memref<6x16x16xbf16, #tpu.memory_space<vmem>>, %arg11: memref<6x1x16xf32, #tpu.memory_space<vmem>>, %arg12: memref<6x1x1xf32, #tpu.memory_space<vmem>>, %arg13: memref<6x1x1xf32, #tpu.memory_space<vmem>>, %arg14: memref<1x8x16xf32, #tpu.memory_space<vmem>>) attributes {dimension_semantics = [#tpu.dimension_semantics<parallel>], iteration_bounds = array<i64: 2>, scalar_prefetch = 0 : i64, scratch_operands = 0 : i64, tpu.core_type = #tpu.core_type<tc>, window_params = [{transform_indices = @transform_0, window_bounds = array<i64: 1, 8, 16>}, {pipeline_mode = #tpu.pipeline_mode<synchronous>, transform_indices = @transform_1, window_bounds = array<i64: 6, 16, 16>}, {pipeline_mode = #tpu.pipeline_mode<synchronous>, transform_indices = @transform_2, window_bounds = array<i64: 6, 1, 16>}, {pipeline_mode = #tpu.pipeline_mode<synchronous>, transform_indices = @transform_3, window_bounds = array<i64: 6, 1, 16>}, {pipeline_mode = #tpu.pipeline_mode<synchronous>, transform_indices = @transform_4, window_bounds = array<i64: 6, 1, 16>}, {pipeline_mode = #tpu.pipeline_mode<synchronous>, transform_indices = @transform_5, window_bounds = array<i64: 6, 48, 16>}, {pipeline_mode = #tpu.pipeline_mode<synchronous>, transform_indices = @transform_6, window_bounds = array<i64: 6, 1, 16>}, {pipeline_mode = #tpu.pipeline_mode<synchronous>, transform_indices = @transform_7, window_bounds = array<i64: 6, 1, 16>}, {pipeline_mode = #tpu.pipeline_mode<synchronous>, transform_indices = @transform_8, window_bounds = array<i64: 6, 1, 16>}, {pipeline_mode = #tpu.pipeline_mode<synchronous>, transform_indices = @transform_9, window_bounds = array<i64: 6, 16, 16>}, {pipeline_mode = #tpu.pipeline_mode<synchronous>, transform_indices = @transform_10, window_bounds = array<i64: 6, 1, 16>}, {pipeline_mode = #tpu.pipeline_mode<synchronous>, transform_indices = @transform_11, window_bounds = array<i64: 6, 1, 1>}, {pipeline_mode = #tpu.pipeline_mode<synchronous>, transform_indices = @transform_12, window_bounds = array<i64: 6, 1, 1>}, {transform_indices = @transform_13, window_bounds = array<i64: 1, 8, 16>}]} {
    %c0 = arith.constant 0 : index
    %c0_0 = arith.constant 0 : index
    %c0_1 = arith.constant 0 : index
    %0 = vector.load %arg1[%c0, %c0_0, %c0_1] : memref<1x8x16xf32, #tpu.memory_space<vmem>>, vector<1x8x16xf32>
    %1 = vector.shape_cast %0 : vector<1x8x16xf32> to vector<8x16xf32>
    %cst = arith.constant 0.000000e+00 : f32
    %2 = vector.broadcast %cst : f32 to vector<8x16xf32>
    %3 = arith.truncf %1 : vector<8x16xf32> to vector<8x16xbf16>
    %c0_2 = arith.constant 0 : index
    %c0_3 = arith.constant 0 : index
    %c0_4 = arith.constant 0 : index
    %4 = vector.load %arg2[%c0_2, %c0_3, %c0_4] : memref<6x16x16xbf16, #tpu.memory_space<vmem>>, vector<1x16x16xbf16>
    %5 = vector.shape_cast %4 : vector<1x16x16xbf16> to vector<16x16xbf16>
    %cst_5 = arith.constant dense<0.000000e+00> : vector<8x16xf32>
    %6 = tpu.matmul %3, %5, %cst_5 {dimension_numbers = #tpu.dot_dimension_numbers<[1], [0], [0], [1], [0, 0, 1, 1], [], []>} : vector<8x16xbf16>, vector<16x16xbf16>, vector<8x16xf32> -> vector<8x16xf32>
    %c0_6 = arith.constant 0 : index
    %c0_7 = arith.constant 0 : index
    %c0_8 = arith.constant 0 : index
    %7 = vector.load %arg3[%c0_6, %c0_7, %c0_8] : memref<6x1x16xf32, #tpu.memory_space<vmem>>, vector<1x1x16xf32>
    %8 = vector.shape_cast %7 : vector<1x1x16xf32> to vector<1x16xf32>
    %9 = vector.broadcast %8 : vector<1x16xf32> to vector<8x16xf32>
    %10 = arith.addf %6, %9 : vector<8x16xf32>
    %c0_9 = arith.constant 0 : index
    %c0_10 = arith.constant 0 : index
    %c0_11 = arith.constant 0 : index
    %11 = vector.load %arg4[%c0_9, %c0_10, %c0_11] : memref<6x1x16xf32, #tpu.memory_space<vmem>>, vector<1x1x16xf32>
    %12 = vector.shape_cast %11 : vector<1x1x16xf32> to vector<1x16xf32>
    %c0_12 = arith.constant 0 : index
    %c0_13 = arith.constant 0 : index
    %c0_14 = arith.constant 0 : index
    %13 = vector.load %arg5[%c0_12, %c0_13, %c0_14] : memref<6x1x16xf32, #tpu.memory_space<vmem>>, vector<1x1x16xf32>
    %14 = vector.shape_cast %13 : vector<1x1x16xf32> to vector<1x16xf32>
    %c0_15 = arith.constant 0 : index
    %c0_16 = arith.constant 0 : index
    %c0_17 = arith.constant 0 : index
    %15 = vector.load %arg12[%c0_15, %c0_16, %c0_17] : memref<6x1x1xf32, #tpu.memory_space<vmem>>, vector<1x1x1xf32>
    %16 = vector.shape_cast %15 : vector<1x1x1xf32> to vector<1x1xf32>
    %cst_18 = arith.constant dense<0.000000e+00> : vector<16xf32>
    %17 = vector.multi_reduction <add>, %10, %cst_18 [0] : vector<8x16xf32> to vector<16xf32>
    %18 = vector.shape_cast %17 : vector<16xf32> to vector<1x16xf32>
    %cst_19 = arith.constant 1.250000e-01 : f32
    %19 = vector.broadcast %cst_19 : f32 to vector<1x16xf32>
    %20 = arith.mulf %18, %19 : vector<1x16xf32>
    %21 = vector.broadcast %20 : vector<1x16xf32> to vector<8x16xf32>
    %22 = arith.subf %10, %21 : vector<8x16xf32>
    %23 = arith.mulf %22, %22 : vector<8x16xf32>
    %cst_20 = arith.constant dense<0.000000e+00> : vector<16xf32>
    %24 = vector.multi_reduction <add>, %23, %cst_20 [0] : vector<8x16xf32> to vector<16xf32>
    %25 = vector.shape_cast %24 : vector<16xf32> to vector<1x16xf32>
    %cst_21 = arith.constant 1.250000e-01 : f32
    %26 = vector.broadcast %cst_21 : f32 to vector<1x16xf32>
    %27 = arith.mulf %25, %26 : vector<1x16xf32>
    %cst_22 = arith.constant 9.99999974E-6 : f32
    %28 = vector.broadcast %cst_22 : f32 to vector<1x16xf32>
    %29 = arith.addf %27, %28 : vector<1x16xf32>
    %30 = math.rsqrt %29 : vector<1x16xf32>
    %31 = vector.broadcast %30 : vector<1x16xf32> to vector<8x16xf32>
    %32 = arith.mulf %22, %31 : vector<8x16xf32>
    %33 = vector.broadcast %12 : vector<1x16xf32> to vector<8x16xf32>
    %34 = arith.mulf %32, %33 : vector<8x16xf32>
    %35 = vector.broadcast %14 : vector<1x16xf32> to vector<8x16xf32>
    %36 = arith.addf %34, %35 : vector<8x16xf32>
    %cst_23 = arith.constant 0.000000e+00 : f32
    %37 = vector.broadcast %cst_23 : f32 to vector<8x16xf32>
    %38 = arith.cmpf oge, %36, %37 : vector<8x16xf32>
    %39 = vector.broadcast %16 : vector<1x1xf32> to vector<8x16xf32>
    %40 = arith.mulf %39, %36 : vector<8x16xf32>
    %41 = arith.select %38, %36, %40 : vector<8x16xi1>, vector<8x16xf32>
    %cst_24 = arith.constant 0.000000e+00 : f32
    %42 = vector.broadcast %cst_24 : f32 to vector<2x16xf32>
    %43 = tpu.concatenate %42, %41 in 0 : vector<2x16xf32>, vector<8x16xf32> -> vector<10x16xf32>
    %44 = vector.extract_strided_slice %43 {offsets = [0, 0], sizes = [8, 16], strides = [1, 1]} : vector<10x16xf32> to vector<8x16xf32>
    %45 = vector.extract_strided_slice %43 {offsets = [1, 0], sizes = [8, 16], strides = [1, 1]} : vector<10x16xf32> to vector<8x16xf32>
    %46 = vector.extract_strided_slice %43 {offsets = [2, 0], sizes = [8, 16], strides = [1, 1]} : vector<10x16xf32> to vector<8x16xf32>
    %47 = tpu.concatenate %44, %45, %46 in 1 : vector<8x16xf32>, vector<8x16xf32>, vector<8x16xf32> -> vector<8x48xf32>
    %48 = arith.truncf %47 : vector<8x48xf32> to vector<8x48xbf16>
    %c0_25 = arith.constant 0 : index
    %c0_26 = arith.constant 0 : index
    %c0_27 = arith.constant 0 : index
    %49 = vector.load %arg6[%c0_25, %c0_26, %c0_27] : memref<6x48x16xbf16, #tpu.memory_space<vmem>>, vector<1x48x16xbf16>
    %50 = vector.shape_cast %49 : vector<1x48x16xbf16> to vector<48x16xbf16>
    %cst_28 = arith.constant dense<0.000000e+00> : vector<8x16xf32>
    %51 = tpu.matmul %48, %50, %cst_28 {dimension_numbers = #tpu.dot_dimension_numbers<[1], [0], [0], [1], [0, 0, 1, 1], [], []>} : vector<8x48xbf16>, vector<48x16xbf16>, vector<8x16xf32> -> vector<8x16xf32>
    %c0_29 = arith.constant 0 : index
    %c0_30 = arith.constant 0 : index
    %c0_31 = arith.constant 0 : index
    %52 = vector.load %arg7[%c0_29, %c0_30, %c0_31] : memref<6x1x16xf32, #tpu.memory_space<vmem>>, vector<1x1x16xf32>
    %53 = vector.shape_cast %52 : vector<1x1x16xf32> to vector<1x16xf32>
    %54 = vector.broadcast %53 : vector<1x16xf32> to vector<8x16xf32>
    %55 = arith.addf %51, %54 : vector<8x16xf32>
    %c0_32 = arith.constant 0 : index
    %c0_33 = arith.constant 0 : index
    %c0_34 = arith.constant 0 : index
    %56 = vector.load %arg8[%c0_32, %c0_33, %c0_34] : memref<6x1x16xf32, #tpu.memory_space<vmem>>, vector<1x1x16xf32>
    %57 = vector.shape_cast %56 : vector<1x1x16xf32> to vector<1x16xf32>
    %c0_35 = arith.constant 0 : index
    %c0_36 = arith.constant 0 : index
    %c0_37 = arith.constant 0 : index
    %58 = vector.load %arg9[%c0_35, %c0_36, %c0_37] : memref<6x1x16xf32, #tpu.memory_space<vmem>>, vector<1x1x16xf32>
    %59 = vector.shape_cast %58 : vector<1x1x16xf32> to vector<1x16xf32>
    %c0_38 = arith.constant 0 : index
    %c0_39 = arith.constant 0 : index
    %c0_40 = arith.constant 0 : index
    %60 = vector.load %arg13[%c0_38, %c0_39, %c0_40] : memref<6x1x1xf32, #tpu.memory_space<vmem>>, vector<1x1x1xf32>
    %61 = vector.shape_cast %60 : vector<1x1x1xf32> to vector<1x1xf32>
    %cst_41 = arith.constant dense<0.000000e+00> : vector<16xf32>
    %62 = vector.multi_reduction <add>, %55, %cst_41 [0] : vector<8x16xf32> to vector<16xf32>
    %63 = vector.shape_cast %62 : vector<16xf32> to vector<1x16xf32>
    %cst_42 = arith.constant 1.250000e-01 : f32
    %64 = vector.broadcast %cst_42 : f32 to vector<1x16xf32>
    %65 = arith.mulf %63, %64 : vector<1x16xf32>
    %66 = vector.broadcast %65 : vector<1x16xf32> to vector<8x16xf32>
    %67 = arith.subf %55, %66 : vector<8x16xf32>
    %68 = arith.mulf %67, %67 : vector<8x16xf32>
    %cst_43 = arith.constant dense<0.000000e+00> : vector<16xf32>
    %69 = vector.multi_reduction <add>, %68, %cst_43 [0] : vector<8x16xf32> to vector<16xf32>
    %70 = vector.shape_cast %69 : vector<16xf32> to vector<1x16xf32>
    %cst_44 = arith.constant 1.250000e-01 : f32
    %71 = vector.broadcast %cst_44 : f32 to vector<1x16xf32>
    %72 = arith.mulf %70, %71 : vector<1x16xf32>
    %cst_45 = arith.constant 9.99999974E-6 : f32
    %73 = vector.broadcast %cst_45 : f32 to vector<1x16xf32>
    %74 = arith.addf %72, %73 : vector<1x16xf32>
    %75 = math.rsqrt %74 : vector<1x16xf32>
    %76 = vector.broadcast %75 : vector<1x16xf32> to vector<8x16xf32>
    %77 = arith.mulf %67, %76 : vector<8x16xf32>
    %78 = vector.broadcast %57 : vector<1x16xf32> to vector<8x16xf32>
    %79 = arith.mulf %77, %78 : vector<8x16xf32>
    %80 = vector.broadcast %59 : vector<1x16xf32> to vector<8x16xf32>
    %81 = arith.addf %79, %80 : vector<8x16xf32>
    %cst_46 = arith.constant 0.000000e+00 : f32
    %82 = vector.broadcast %cst_46 : f32 to vector<8x16xf32>
    %83 = arith.cmpf oge, %81, %82 : vector<8x16xf32>
    %84 = vector.broadcast %61 : vector<1x1xf32> to vector<8x16xf32>
    %85 = arith.mulf %84, %81 : vector<8x16xf32>
    %86 = arith.select %83, %81, %85 : vector<8x16xi1>, vector<8x16xf32>
    %87 = arith.truncf %86 : vector<8x16xf32> to vector<8x16xbf16>
    %c0_47 = arith.constant 0 : index
    %c0_48 = arith.constant 0 : index
    %c0_49 = arith.constant 0 : index
    %88 = vector.load %arg10[%c0_47, %c0_48, %c0_49] : memref<6x16x16xbf16, #tpu.memory_space<vmem>>, vector<1x16x16xbf16>
    %89 = vector.shape_cast %88 : vector<1x16x16xbf16> to vector<16x16xbf16>
    %cst_50 = arith.constant dense<0.000000e+00> : vector<8x16xf32>
    %90 = tpu.matmul %87, %89, %cst_50 {dimension_numbers = #tpu.dot_dimension_numbers<[1], [0], [0], [1], [0, 0, 1, 1], [], []>} : vector<8x16xbf16>, vector<16x16xbf16>, vector<8x16xf32> -> vector<8x16xf32>
    %91 = arith.addf %1, %90 : vector<8x16xf32>
    %c0_51 = arith.constant 0 : index
    %c0_52 = arith.constant 0 : index
    %c0_53 = arith.constant 0 : index
    %92 = vector.load %arg11[%c0_51, %c0_52, %c0_53] : memref<6x1x16xf32, #tpu.memory_space<vmem>>, vector<1x1x16xf32>
    %93 = vector.shape_cast %92 : vector<1x1x16xf32> to vector<1x16xf32>
    %94 = vector.broadcast %93 : vector<1x16xf32> to vector<8x16xf32>
    %95 = arith.addf %91, %94 : vector<8x16xf32>
    %96 = arith.truncf %95 : vector<8x16xf32> to vector<8x16xbf16>
    %c1 = arith.constant 1 : index
    %c0_54 = arith.constant 0 : index
    %c0_55 = arith.constant 0 : index
    %97 = vector.load %arg2[%c1, %c0_54, %c0_55] : memref<6x16x16xbf16, #tpu.memory_space<vmem>>, vector<1x16x16xbf16>
    %98 = vector.shape_cast %97 : vector<1x16x16xbf16> to vector<16x16xbf16>
    %cst_56 = arith.constant dense<0.000000e+00> : vector<8x16xf32>
    %99 = tpu.matmul %96, %98, %cst_56 {dimension_numbers = #tpu.dot_dimension_numbers<[1], [0], [0], [1], [0, 0, 1, 1], [], []>} : vector<8x16xbf16>, vector<16x16xbf16>, vector<8x16xf32> -> vector<8x16xf32>
    %c1_57 = arith.constant 1 : index
    %c0_58 = arith.constant 0 : index
    %c0_59 = arith.constant 0 : index
    %100 = vector.load %arg3[%c1_57, %c0_58, %c0_59] : memref<6x1x16xf32, #tpu.memory_space<vmem>>, vector<1x1x16xf32>
    %101 = vector.shape_cast %100 : vector<1x1x16xf32> to vector<1x16xf32>
    %102 = vector.broadcast %101 : vector<1x16xf32> to vector<8x16xf32>
    %103 = arith.addf %99, %102 : vector<8x16xf32>
    %c1_60 = arith.constant 1 : index
    %c0_61 = arith.constant 0 : index
    %c0_62 = arith.constant 0 : index
    %104 = vector.load %arg4[%c1_60, %c0_61, %c0_62] : memref<6x1x16xf32, #tpu.memory_space<vmem>>, vector<1x1x16xf32>
    %105 = vector.shape_cast %104 : vector<1x1x16xf32> to vector<1x16xf32>
    %c1_63 = arith.constant 1 : index
    %c0_64 = arith.constant 0 : index
    %c0_65 = arith.constant 0 : index
    %106 = vector.load %arg5[%c1_63, %c0_64, %c0_65] : memref<6x1x16xf32, #tpu.memory_space<vmem>>, vector<1x1x16xf32>
    %107 = vector.shape_cast %106 : vector<1x1x16xf32> to vector<1x16xf32>
    %c1_66 = arith.constant 1 : index
    %c0_67 = arith.constant 0 : index
    %c0_68 = arith.constant 0 : index
    %108 = vector.load %arg12[%c1_66, %c0_67, %c0_68] : memref<6x1x1xf32, #tpu.memory_space<vmem>>, vector<1x1x1xf32>
    %109 = vector.shape_cast %108 : vector<1x1x1xf32> to vector<1x1xf32>
    %cst_69 = arith.constant dense<0.000000e+00> : vector<16xf32>
    %110 = vector.multi_reduction <add>, %103, %cst_69 [0] : vector<8x16xf32> to vector<16xf32>
    %111 = vector.shape_cast %110 : vector<16xf32> to vector<1x16xf32>
    %cst_70 = arith.constant 1.250000e-01 : f32
    %112 = vector.broadcast %cst_70 : f32 to vector<1x16xf32>
    %113 = arith.mulf %111, %112 : vector<1x16xf32>
    %114 = vector.broadcast %113 : vector<1x16xf32> to vector<8x16xf32>
    %115 = arith.subf %103, %114 : vector<8x16xf32>
    %116 = arith.mulf %115, %115 : vector<8x16xf32>
    %cst_71 = arith.constant dense<0.000000e+00> : vector<16xf32>
    %117 = vector.multi_reduction <add>, %116, %cst_71 [0] : vector<8x16xf32> to vector<16xf32>
    %118 = vector.shape_cast %117 : vector<16xf32> to vector<1x16xf32>
    %cst_72 = arith.constant 1.250000e-01 : f32
    %119 = vector.broadcast %cst_72 : f32 to vector<1x16xf32>
    %120 = arith.mulf %118, %119 : vector<1x16xf32>
    %cst_73 = arith.constant 9.99999974E-6 : f32
    %121 = vector.broadcast %cst_73 : f32 to vector<1x16xf32>
    %122 = arith.addf %120, %121 : vector<1x16xf32>
    %123 = math.rsqrt %122 : vector<1x16xf32>
    %124 = vector.broadcast %123 : vector<1x16xf32> to vector<8x16xf32>
    %125 = arith.mulf %115, %124 : vector<8x16xf32>
    %126 = vector.broadcast %105 : vector<1x16xf32> to vector<8x16xf32>
    %127 = arith.mulf %125, %126 : vector<8x16xf32>
    %128 = vector.broadcast %107 : vector<1x16xf32> to vector<8x16xf32>
    %129 = arith.addf %127, %128 : vector<8x16xf32>
    %cst_74 = arith.constant 0.000000e+00 : f32
    %130 = vector.broadcast %cst_74 : f32 to vector<8x16xf32>
    %131 = arith.cmpf oge, %129, %130 : vector<8x16xf32>
    %132 = vector.broadcast %109 : vector<1x1xf32> to vector<8x16xf32>
    %133 = arith.mulf %132, %129 : vector<8x16xf32>
    %134 = arith.select %131, %129, %133 : vector<8x16xi1>, vector<8x16xf32>
    %cst_75 = arith.constant 0.000000e+00 : f32
    %135 = vector.broadcast %cst_75 : f32 to vector<4x16xf32>
    %136 = tpu.concatenate %135, %134 in 0 : vector<4x16xf32>, vector<8x16xf32> -> vector<12x16xf32>
    %137 = vector.extract_strided_slice %136 {offsets = [0, 0], sizes = [8, 16], strides = [1, 1]} : vector<12x16xf32> to vector<8x16xf32>
    %138 = vector.extract_strided_slice %136 {offsets = [2, 0], sizes = [8, 16], strides = [1, 1]} : vector<12x16xf32> to vector<8x16xf32>
    %139 = vector.extract_strided_slice %136 {offsets = [4, 0], sizes = [8, 16], strides = [1, 1]} : vector<12x16xf32> to vector<8x16xf32>
    %140 = tpu.concatenate %137, %138, %139 in 1 : vector<8x16xf32>, vector<8x16xf32>, vector<8x16xf32> -> vector<8x48xf32>
    %141 = arith.truncf %140 : vector<8x48xf32> to vector<8x48xbf16>
    %c1_76 = arith.constant 1 : index
    %c0_77 = arith.constant 0 : index
    %c0_78 = arith.constant 0 : index
    %142 = vector.load %arg6[%c1_76, %c0_77, %c0_78] : memref<6x48x16xbf16, #tpu.memory_space<vmem>>, vector<1x48x16xbf16>
    %143 = vector.shape_cast %142 : vector<1x48x16xbf16> to vector<48x16xbf16>
    %cst_79 = arith.constant dense<0.000000e+00> : vector<8x16xf32>
    %144 = tpu.matmul %141, %143, %cst_79 {dimension_numbers = #tpu.dot_dimension_numbers<[1], [0], [0], [1], [0, 0, 1, 1], [], []>} : vector<8x48xbf16>, vector<48x16xbf16>, vector<8x16xf32> -> vector<8x16xf32>
    %c1_80 = arith.constant 1 : index
    %c0_81 = arith.constant 0 : index
    %c0_82 = arith.constant 0 : index
    %145 = vector.load %arg7[%c1_80, %c0_81, %c0_82] : memref<6x1x16xf32, #tpu.memory_space<vmem>>, vector<1x1x16xf32>
    %146 = vector.shape_cast %145 : vector<1x1x16xf32> to vector<1x16xf32>
    %147 = vector.broadcast %146 : vector<1x16xf32> to vector<8x16xf32>
    %148 = arith.addf %144, %147 : vector<8x16xf32>
    %c1_83 = arith.constant 1 : index
    %c0_84 = arith.constant 0 : index
    %c0_85 = arith.constant 0 : index
    %149 = vector.load %arg8[%c1_83, %c0_84, %c0_85] : memref<6x1x16xf32, #tpu.memory_space<vmem>>, vector<1x1x16xf32>
    %150 = vector.shape_cast %149 : vector<1x1x16xf32> to vector<1x16xf32>
    %c1_86 = arith.constant 1 : index
    %c0_87 = arith.constant 0 : index
    %c0_88 = arith.constant 0 : index
    %151 = vector.load %arg9[%c1_86, %c0_87, %c0_88] : memref<6x1x16xf32, #tpu.memory_space<vmem>>, vector<1x1x16xf32>
    %152 = vector.shape_cast %151 : vector<1x1x16xf32> to vector<1x16xf32>
    %c1_89 = arith.constant 1 : index
    %c0_90 = arith.constant 0 : index
    %c0_91 = arith.constant 0 : index
    %153 = vector.load %arg13[%c1_89, %c0_90, %c0_91] : memref<6x1x1xf32, #tpu.memory_space<vmem>>, vector<1x1x1xf32>
    %154 = vector.shape_cast %153 : vector<1x1x1xf32> to vector<1x1xf32>
    %cst_92 = arith.constant dense<0.000000e+00> : vector<16xf32>
    %155 = vector.multi_reduction <add>, %148, %cst_92 [0] : vector<8x16xf32> to vector<16xf32>
    %156 = vector.shape_cast %155 : vector<16xf32> to vector<1x16xf32>
    %cst_93 = arith.constant 1.250000e-01 : f32
    %157 = vector.broadcast %cst_93 : f32 to vector<1x16xf32>
    %158 = arith.mulf %156, %157 : vector<1x16xf32>
    %159 = vector.broadcast %158 : vector<1x16xf32> to vector<8x16xf32>
    %160 = arith.subf %148, %159 : vector<8x16xf32>
    %161 = arith.mulf %160, %160 : vector<8x16xf32>
    %cst_94 = arith.constant dense<0.000000e+00> : vector<16xf32>
    %162 = vector.multi_reduction <add>, %161, %cst_94 [0] : vector<8x16xf32> to vector<16xf32>
    %163 = vector.shape_cast %162 : vector<16xf32> to vector<1x16xf32>
    %cst_95 = arith.constant 1.250000e-01 : f32
    %164 = vector.broadcast %cst_95 : f32 to vector<1x16xf32>
    %165 = arith.mulf %163, %164 : vector<1x16xf32>
    %cst_96 = arith.constant 9.99999974E-6 : f32
    %166 = vector.broadcast %cst_96 : f32 to vector<1x16xf32>
    %167 = arith.addf %165, %166 : vector<1x16xf32>
    %168 = math.rsqrt %167 : vector<1x16xf32>
    %169 = vector.broadcast %168 : vector<1x16xf32> to vector<8x16xf32>
    %170 = arith.mulf %160, %169 : vector<8x16xf32>
    %171 = vector.broadcast %150 : vector<1x16xf32> to vector<8x16xf32>
    %172 = arith.mulf %170, %171 : vector<8x16xf32>
    %173 = vector.broadcast %152 : vector<1x16xf32> to vector<8x16xf32>
    %174 = arith.addf %172, %173 : vector<8x16xf32>
    %cst_97 = arith.constant 0.000000e+00 : f32
    %175 = vector.broadcast %cst_97 : f32 to vector<8x16xf32>
    %176 = arith.cmpf oge, %174, %175 : vector<8x16xf32>
    %177 = vector.broadcast %154 : vector<1x1xf32> to vector<8x16xf32>
    %178 = arith.mulf %177, %174 : vector<8x16xf32>
    %179 = arith.select %176, %174, %178 : vector<8x16xi1>, vector<8x16xf32>
    %180 = arith.truncf %179 : vector<8x16xf32> to vector<8x16xbf16>
    %c1_98 = arith.constant 1 : index
    %c0_99 = arith.constant 0 : index
    %c0_100 = arith.constant 0 : index
    %181 = vector.load %arg10[%c1_98, %c0_99, %c0_100] : memref<6x16x16xbf16, #tpu.memory_space<vmem>>, vector<1x16x16xbf16>
    %182 = vector.shape_cast %181 : vector<1x16x16xbf16> to vector<16x16xbf16>
    %cst_101 = arith.constant dense<0.000000e+00> : vector<8x16xf32>
    %183 = tpu.matmul %180, %182, %cst_101 {dimension_numbers = #tpu.dot_dimension_numbers<[1], [0], [0], [1], [0, 0, 1, 1], [], []>} : vector<8x16xbf16>, vector<16x16xbf16>, vector<8x16xf32> -> vector<8x16xf32>
    %184 = arith.addf %95, %183 : vector<8x16xf32>
    %c1_102 = arith.constant 1 : index
    %c0_103 = arith.constant 0 : index
    %c0_104 = arith.constant 0 : index
    %185 = vector.load %arg11[%c1_102, %c0_103, %c0_104] : memref<6x1x16xf32, #tpu.memory_space<vmem>>, vector<1x1x16xf32>
    %186 = vector.shape_cast %185 : vector<1x1x16xf32> to vector<1x16xf32>
    %187 = vector.broadcast %186 : vector<1x16xf32> to vector<8x16xf32>
    %188 = arith.addf %184, %187 : vector<8x16xf32>
    %189 = arith.truncf %188 : vector<8x16xf32> to vector<8x16xbf16>
    %c2 = arith.constant 2 : index
    %c0_105 = arith.constant 0 : index
    %c0_106 = arith.constant 0 : index
    %190 = vector.load %arg2[%c2, %c0_105, %c0_106] : memref<6x16x16xbf16, #tpu.memory_space<vmem>>, vector<1x16x16xbf16>
    %191 = vector.shape_cast %190 : vector<1x16x16xbf16> to vector<16x16xbf16>
    %cst_107 = arith.constant dense<0.000000e+00> : vector<8x16xf32>
    %192 = tpu.matmul %189, %191, %cst_107 {dimension_numbers = #tpu.dot_dimension_numbers<[1], [0], [0], [1], [0, 0, 1, 1], [], []>} : vector<8x16xbf16>, vector<16x16xbf16>, vector<8x16xf32> -> vector<8x16xf32>
    %c2_108 = arith.constant 2 : index
    %c0_109 = arith.constant 0 : index
    %c0_110 = arith.constant 0 : index
    %193 = vector.load %arg3[%c2_108, %c0_109, %c0_110] : memref<6x1x16xf32, #tpu.memory_space<vmem>>, vector<1x1x16xf32>
    %194 = vector.shape_cast %193 : vector<1x1x16xf32> to vector<1x16xf32>
    %195 = vector.broadcast %194 : vector<1x16xf32> to vector<8x16xf32>
    %196 = arith.addf %192, %195 : vector<8x16xf32>
    %c2_111 = arith.constant 2 : index
    %c0_112 = arith.constant 0 : index
    %c0_113 = arith.constant 0 : index
    %197 = vector.load %arg4[%c2_111, %c0_112, %c0_113] : memref<6x1x16xf32, #tpu.memory_space<vmem>>, vector<1x1x16xf32>
    %198 = vector.shape_cast %197 : vector<1x1x16xf32> to vector<1x16xf32>
    %c2_114 = arith.constant 2 : index
    %c0_115 = arith.constant 0 : index
    %c0_116 = arith.constant 0 : index
    %199 = vector.load %arg5[%c2_114, %c0_115, %c0_116] : memref<6x1x16xf32, #tpu.memory_space<vmem>>, vector<1x1x16xf32>
    %200 = vector.shape_cast %199 : vector<1x1x16xf32> to vector<1x16xf32>
    %c2_117 = arith.constant 2 : index
    %c0_118 = arith.constant 0 : index
    %c0_119 = arith.constant 0 : index
    %201 = vector.load %arg12[%c2_117, %c0_118, %c0_119] : memref<6x1x1xf32, #tpu.memory_space<vmem>>, vector<1x1x1xf32>
    %202 = vector.shape_cast %201 : vector<1x1x1xf32> to vector<1x1xf32>
    %cst_120 = arith.constant dense<0.000000e+00> : vector<16xf32>
    %203 = vector.multi_reduction <add>, %196, %cst_120 [0] : vector<8x16xf32> to vector<16xf32>
    %204 = vector.shape_cast %203 : vector<16xf32> to vector<1x16xf32>
    %cst_121 = arith.constant 1.250000e-01 : f32
    %205 = vector.broadcast %cst_121 : f32 to vector<1x16xf32>
    %206 = arith.mulf %204, %205 : vector<1x16xf32>
    %207 = vector.broadcast %206 : vector<1x16xf32> to vector<8x16xf32>
    %208 = arith.subf %196, %207 : vector<8x16xf32>
    %209 = arith.mulf %208, %208 : vector<8x16xf32>
    %cst_122 = arith.constant dense<0.000000e+00> : vector<16xf32>
    %210 = vector.multi_reduction <add>, %209, %cst_122 [0] : vector<8x16xf32> to vector<16xf32>
    %211 = vector.shape_cast %210 : vector<16xf32> to vector<1x16xf32>
    %cst_123 = arith.constant 1.250000e-01 : f32
    %212 = vector.broadcast %cst_123 : f32 to vector<1x16xf32>
    %213 = arith.mulf %211, %212 : vector<1x16xf32>
    %cst_124 = arith.constant 9.99999974E-6 : f32
    %214 = vector.broadcast %cst_124 : f32 to vector<1x16xf32>
    %215 = arith.addf %213, %214 : vector<1x16xf32>
    %216 = math.rsqrt %215 : vector<1x16xf32>
    %217 = vector.broadcast %216 : vector<1x16xf32> to vector<8x16xf32>
    %218 = arith.mulf %208, %217 : vector<8x16xf32>
    %219 = vector.broadcast %198 : vector<1x16xf32> to vector<8x16xf32>
    %220 = arith.mulf %218, %219 : vector<8x16xf32>
    %221 = vector.broadcast %200 : vector<1x16xf32> to vector<8x16xf32>
    %222 = arith.addf %220, %221 : vector<8x16xf32>
    %cst_125 = arith.constant 0.000000e+00 : f32
    %223 = vector.broadcast %cst_125 : f32 to vector<8x16xf32>
    %224 = arith.cmpf oge, %222, %223 : vector<8x16xf32>
    %225 = vector.broadcast %202 : vector<1x1xf32> to vector<8x16xf32>
    %226 = arith.mulf %225, %222 : vector<8x16xf32>
    %227 = arith.select %224, %222, %226 : vector<8x16xi1>, vector<8x16xf32>
    %cst_126 = arith.constant 0.000000e+00 : f32
    %228 = vector.broadcast %cst_126 : f32 to vector<8x16xf32>
    %229 = tpu.concatenate %228, %227 in 0 : vector<8x16xf32>, vector<8x16xf32> -> vector<16x16xf32>
    %230 = vector.extract_strided_slice %229 {offsets = [0, 0], sizes = [8, 16], strides = [1, 1]} : vector<16x16xf32> to vector<8x16xf32>
    %231 = vector.extract_strided_slice %229 {offsets = [4, 0], sizes = [8, 16], strides = [1, 1]} : vector<16x16xf32> to vector<8x16xf32>
    %232 = vector.extract_strided_slice %229 {offsets = [8, 0], sizes = [8, 16], strides = [1, 1]} : vector<16x16xf32> to vector<8x16xf32>
    %233 = tpu.concatenate %230, %231, %232 in 1 : vector<8x16xf32>, vector<8x16xf32>, vector<8x16xf32> -> vector<8x48xf32>
    %234 = arith.truncf %233 : vector<8x48xf32> to vector<8x48xbf16>
    %c2_127 = arith.constant 2 : index
    %c0_128 = arith.constant 0 : index
    %c0_129 = arith.constant 0 : index
    %235 = vector.load %arg6[%c2_127, %c0_128, %c0_129] : memref<6x48x16xbf16, #tpu.memory_space<vmem>>, vector<1x48x16xbf16>
    %236 = vector.shape_cast %235 : vector<1x48x16xbf16> to vector<48x16xbf16>
    %cst_130 = arith.constant dense<0.000000e+00> : vector<8x16xf32>
    %237 = tpu.matmul %234, %236, %cst_130 {dimension_numbers = #tpu.dot_dimension_numbers<[1], [0], [0], [1], [0, 0, 1, 1], [], []>} : vector<8x48xbf16>, vector<48x16xbf16>, vector<8x16xf32> -> vector<8x16xf32>
    %c2_131 = arith.constant 2 : index
    %c0_132 = arith.constant 0 : index
    %c0_133 = arith.constant 0 : index
    %238 = vector.load %arg7[%c2_131, %c0_132, %c0_133] : memref<6x1x16xf32, #tpu.memory_space<vmem>>, vector<1x1x16xf32>
    %239 = vector.shape_cast %238 : vector<1x1x16xf32> to vector<1x16xf32>
    %240 = vector.broadcast %239 : vector<1x16xf32> to vector<8x16xf32>
    %241 = arith.addf %237, %240 : vector<8x16xf32>
    %c2_134 = arith.constant 2 : index
    %c0_135 = arith.constant 0 : index
    %c0_136 = arith.constant 0 : index
    %242 = vector.load %arg8[%c2_134, %c0_135, %c0_136] : memref<6x1x16xf32, #tpu.memory_space<vmem>>, vector<1x1x16xf32>
    %243 = vector.shape_cast %242 : vector<1x1x16xf32> to vector<1x16xf32>
    %c2_137 = arith.constant 2 : index
    %c0_138 = arith.constant 0 : index
    %c0_139 = arith.constant 0 : index
    %244 = vector.load %arg9[%c2_137, %c0_138, %c0_139] : memref<6x1x16xf32, #tpu.memory_space<vmem>>, vector<1x1x16xf32>
    %245 = vector.shape_cast %244 : vector<1x1x16xf32> to vector<1x16xf32>
    %c2_140 = arith.constant 2 : index
    %c0_141 = arith.constant 0 : index
    %c0_142 = arith.constant 0 : index
    %246 = vector.load %arg13[%c2_140, %c0_141, %c0_142] : memref<6x1x1xf32, #tpu.memory_space<vmem>>, vector<1x1x1xf32>
    %247 = vector.shape_cast %246 : vector<1x1x1xf32> to vector<1x1xf32>
    %cst_143 = arith.constant dense<0.000000e+00> : vector<16xf32>
    %248 = vector.multi_reduction <add>, %241, %cst_143 [0] : vector<8x16xf32> to vector<16xf32>
    %249 = vector.shape_cast %248 : vector<16xf32> to vector<1x16xf32>
    %cst_144 = arith.constant 1.250000e-01 : f32
    %250 = vector.broadcast %cst_144 : f32 to vector<1x16xf32>
    %251 = arith.mulf %249, %250 : vector<1x16xf32>
    %252 = vector.broadcast %251 : vector<1x16xf32> to vector<8x16xf32>
    %253 = arith.subf %241, %252 : vector<8x16xf32>
    %254 = arith.mulf %253, %253 : vector<8x16xf32>
    %cst_145 = arith.constant dense<0.000000e+00> : vector<16xf32>
    %255 = vector.multi_reduction <add>, %254, %cst_145 [0] : vector<8x16xf32> to vector<16xf32>
    %256 = vector.shape_cast %255 : vector<16xf32> to vector<1x16xf32>
    %cst_146 = arith.constant 1.250000e-01 : f32
    %257 = vector.broadcast %cst_146 : f32 to vector<1x16xf32>
    %258 = arith.mulf %256, %257 : vector<1x16xf32>
    %cst_147 = arith.constant 9.99999974E-6 : f32
    %259 = vector.broadcast %cst_147 : f32 to vector<1x16xf32>
    %260 = arith.addf %258, %259 : vector<1x16xf32>
    %261 = math.rsqrt %260 : vector<1x16xf32>
    %262 = vector.broadcast %261 : vector<1x16xf32> to vector<8x16xf32>
    %263 = arith.mulf %253, %262 : vector<8x16xf32>
    %264 = vector.broadcast %243 : vector<1x16xf32> to vector<8x16xf32>
    %265 = arith.mulf %263, %264 : vector<8x16xf32>
    %266 = vector.broadcast %245 : vector<1x16xf32> to vector<8x16xf32>
    %267 = arith.addf %265, %266 : vector<8x16xf32>
    %cst_148 = arith.constant 0.000000e+00 : f32
    %268 = vector.broadcast %cst_148 : f32 to vector<8x16xf32>
    %269 = arith.cmpf oge, %267, %268 : vector<8x16xf32>
    %270 = vector.broadcast %247 : vector<1x1xf32> to vector<8x16xf32>
    %271 = arith.mulf %270, %267 : vector<8x16xf32>
    %272 = arith.select %269, %267, %271 : vector<8x16xi1>, vector<8x16xf32>
    %273 = arith.truncf %272 : vector<8x16xf32> to vector<8x16xbf16>
    %c2_149 = arith.constant 2 : index
    %c0_150 = arith.constant 0 : index
    %c0_151 = arith.constant 0 : index
    %274 = vector.load %arg10[%c2_149, %c0_150, %c0_151] : memref<6x16x16xbf16, #tpu.memory_space<vmem>>, vector<1x16x16xbf16>
    %275 = vector.shape_cast %274 : vector<1x16x16xbf16> to vector<16x16xbf16>
    %cst_152 = arith.constant dense<0.000000e+00> : vector<8x16xf32>
    %276 = tpu.matmul %273, %275, %cst_152 {dimension_numbers = #tpu.dot_dimension_numbers<[1], [0], [0], [1], [0, 0, 1, 1], [], []>} : vector<8x16xbf16>, vector<16x16xbf16>, vector<8x16xf32> -> vector<8x16xf32>
    %277 = arith.addf %188, %276 : vector<8x16xf32>
    %c2_153 = arith.constant 2 : index
    %c0_154 = arith.constant 0 : index
    %c0_155 = arith.constant 0 : index
    %278 = vector.load %arg11[%c2_153, %c0_154, %c0_155] : memref<6x1x16xf32, #tpu.memory_space<vmem>>, vector<1x1x16xf32>
    %279 = vector.shape_cast %278 : vector<1x1x16xf32> to vector<1x16xf32>
    %280 = vector.broadcast %279 : vector<1x16xf32> to vector<8x16xf32>
    %281 = arith.addf %277, %280 : vector<8x16xf32>
    %282 = arith.addf %2, %281 : vector<8x16xf32>
    %283 = arith.truncf %281 : vector<8x16xf32> to vector<8x16xbf16>
    %c3 = arith.constant 3 : index
    %c0_156 = arith.constant 0 : index
    %c0_157 = arith.constant 0 : index
    %284 = vector.load %arg2[%c3, %c0_156, %c0_157] : memref<6x16x16xbf16, #tpu.memory_space<vmem>>, vector<1x16x16xbf16>
    %285 = vector.shape_cast %284 : vector<1x16x16xbf16> to vector<16x16xbf16>
    %cst_158 = arith.constant dense<0.000000e+00> : vector<8x16xf32>
    %286 = tpu.matmul %283, %285, %cst_158 {dimension_numbers = #tpu.dot_dimension_numbers<[1], [0], [0], [1], [0, 0, 1, 1], [], []>} : vector<8x16xbf16>, vector<16x16xbf16>, vector<8x16xf32> -> vector<8x16xf32>
    %c3_159 = arith.constant 3 : index
    %c0_160 = arith.constant 0 : index
    %c0_161 = arith.constant 0 : index
    %287 = vector.load %arg3[%c3_159, %c0_160, %c0_161] : memref<6x1x16xf32, #tpu.memory_space<vmem>>, vector<1x1x16xf32>
    %288 = vector.shape_cast %287 : vector<1x1x16xf32> to vector<1x16xf32>
    %289 = vector.broadcast %288 : vector<1x16xf32> to vector<8x16xf32>
    %290 = arith.addf %286, %289 : vector<8x16xf32>
    %c3_162 = arith.constant 3 : index
    %c0_163 = arith.constant 0 : index
    %c0_164 = arith.constant 0 : index
    %291 = vector.load %arg4[%c3_162, %c0_163, %c0_164] : memref<6x1x16xf32, #tpu.memory_space<vmem>>, vector<1x1x16xf32>
    %292 = vector.shape_cast %291 : vector<1x1x16xf32> to vector<1x16xf32>
    %c3_165 = arith.constant 3 : index
    %c0_166 = arith.constant 0 : index
    %c0_167 = arith.constant 0 : index
    %293 = vector.load %arg5[%c3_165, %c0_166, %c0_167] : memref<6x1x16xf32, #tpu.memory_space<vmem>>, vector<1x1x16xf32>
    %294 = vector.shape_cast %293 : vector<1x1x16xf32> to vector<1x16xf32>
    %c3_168 = arith.constant 3 : index
    %c0_169 = arith.constant 0 : index
    %c0_170 = arith.constant 0 : index
    %295 = vector.load %arg12[%c3_168, %c0_169, %c0_170] : memref<6x1x1xf32, #tpu.memory_space<vmem>>, vector<1x1x1xf32>
    %296 = vector.shape_cast %295 : vector<1x1x1xf32> to vector<1x1xf32>
    %cst_171 = arith.constant dense<0.000000e+00> : vector<16xf32>
    %297 = vector.multi_reduction <add>, %290, %cst_171 [0] : vector<8x16xf32> to vector<16xf32>
    %298 = vector.shape_cast %297 : vector<16xf32> to vector<1x16xf32>
    %cst_172 = arith.constant 1.250000e-01 : f32
    %299 = vector.broadcast %cst_172 : f32 to vector<1x16xf32>
    %300 = arith.mulf %298, %299 : vector<1x16xf32>
    %301 = vector.broadcast %300 : vector<1x16xf32> to vector<8x16xf32>
    %302 = arith.subf %290, %301 : vector<8x16xf32>
    %303 = arith.mulf %302, %302 : vector<8x16xf32>
    %cst_173 = arith.constant dense<0.000000e+00> : vector<16xf32>
    %304 = vector.multi_reduction <add>, %303, %cst_173 [0] : vector<8x16xf32> to vector<16xf32>
    %305 = vector.shape_cast %304 : vector<16xf32> to vector<1x16xf32>
    %cst_174 = arith.constant 1.250000e-01 : f32
    %306 = vector.broadcast %cst_174 : f32 to vector<1x16xf32>
    %307 = arith.mulf %305, %306 : vector<1x16xf32>
    %cst_175 = arith.constant 9.99999974E-6 : f32
    %308 = vector.broadcast %cst_175 : f32 to vector<1x16xf32>
    %309 = arith.addf %307, %308 : vector<1x16xf32>
    %310 = math.rsqrt %309 : vector<1x16xf32>
    %311 = vector.broadcast %310 : vector<1x16xf32> to vector<8x16xf32>
    %312 = arith.mulf %302, %311 : vector<8x16xf32>
    %313 = vector.broadcast %292 : vector<1x16xf32> to vector<8x16xf32>
    %314 = arith.mulf %312, %313 : vector<8x16xf32>
    %315 = vector.broadcast %294 : vector<1x16xf32> to vector<8x16xf32>
    %316 = arith.addf %314, %315 : vector<8x16xf32>
    %cst_176 = arith.constant 0.000000e+00 : f32
    %317 = vector.broadcast %cst_176 : f32 to vector<8x16xf32>
    %318 = arith.cmpf oge, %316, %317 : vector<8x16xf32>
    %319 = vector.broadcast %296 : vector<1x1xf32> to vector<8x16xf32>
    %320 = arith.mulf %319, %316 : vector<8x16xf32>
    %321 = arith.select %318, %316, %320 : vector<8x16xi1>, vector<8x16xf32>
    %cst_177 = arith.constant 0.000000e+00 : f32
    %322 = vector.broadcast %cst_177 : f32 to vector<2x16xf32>
    %323 = tpu.concatenate %322, %321 in 0 : vector<2x16xf32>, vector<8x16xf32> -> vector<10x16xf32>
    %324 = vector.extract_strided_slice %323 {offsets = [0, 0], sizes = [8, 16], strides = [1, 1]} : vector<10x16xf32> to vector<8x16xf32>
    %325 = vector.extract_strided_slice %323 {offsets = [1, 0], sizes = [8, 16], strides = [1, 1]} : vector<10x16xf32> to vector<8x16xf32>
    %326 = vector.extract_strided_slice %323 {offsets = [2, 0], sizes = [8, 16], strides = [1, 1]} : vector<10x16xf32> to vector<8x16xf32>
    %327 = tpu.concatenate %324, %325, %326 in 1 : vector<8x16xf32>, vector<8x16xf32>, vector<8x16xf32> -> vector<8x48xf32>
    %328 = arith.truncf %327 : vector<8x48xf32> to vector<8x48xbf16>
    %c3_178 = arith.constant 3 : index
    %c0_179 = arith.constant 0 : index
    %c0_180 = arith.constant 0 : index
    %329 = vector.load %arg6[%c3_178, %c0_179, %c0_180] : memref<6x48x16xbf16, #tpu.memory_space<vmem>>, vector<1x48x16xbf16>
    %330 = vector.shape_cast %329 : vector<1x48x16xbf16> to vector<48x16xbf16>
    %cst_181 = arith.constant dense<0.000000e+00> : vector<8x16xf32>
    %331 = tpu.matmul %328, %330, %cst_181 {dimension_numbers = #tpu.dot_dimension_numbers<[1], [0], [0], [1], [0, 0, 1, 1], [], []>} : vector<8x48xbf16>, vector<48x16xbf16>, vector<8x16xf32> -> vector<8x16xf32>
    %c3_182 = arith.constant 3 : index
    %c0_183 = arith.constant 0 : index
    %c0_184 = arith.constant 0 : index
    %332 = vector.load %arg7[%c3_182, %c0_183, %c0_184] : memref<6x1x16xf32, #tpu.memory_space<vmem>>, vector<1x1x16xf32>
    %333 = vector.shape_cast %332 : vector<1x1x16xf32> to vector<1x16xf32>
    %334 = vector.broadcast %333 : vector<1x16xf32> to vector<8x16xf32>
    %335 = arith.addf %331, %334 : vector<8x16xf32>
    %c3_185 = arith.constant 3 : index
    %c0_186 = arith.constant 0 : index
    %c0_187 = arith.constant 0 : index
    %336 = vector.load %arg8[%c3_185, %c0_186, %c0_187] : memref<6x1x16xf32, #tpu.memory_space<vmem>>, vector<1x1x16xf32>
    %337 = vector.shape_cast %336 : vector<1x1x16xf32> to vector<1x16xf32>
    %c3_188 = arith.constant 3 : index
    %c0_189 = arith.constant 0 : index
    %c0_190 = arith.constant 0 : index
    %338 = vector.load %arg9[%c3_188, %c0_189, %c0_190] : memref<6x1x16xf32, #tpu.memory_space<vmem>>, vector<1x1x16xf32>
    %339 = vector.shape_cast %338 : vector<1x1x16xf32> to vector<1x16xf32>
    %c3_191 = arith.constant 3 : index
    %c0_192 = arith.constant 0 : index
    %c0_193 = arith.constant 0 : index
    %340 = vector.load %arg13[%c3_191, %c0_192, %c0_193] : memref<6x1x1xf32, #tpu.memory_space<vmem>>, vector<1x1x1xf32>
    %341 = vector.shape_cast %340 : vector<1x1x1xf32> to vector<1x1xf32>
    %cst_194 = arith.constant dense<0.000000e+00> : vector<16xf32>
    %342 = vector.multi_reduction <add>, %335, %cst_194 [0] : vector<8x16xf32> to vector<16xf32>
    %343 = vector.shape_cast %342 : vector<16xf32> to vector<1x16xf32>
    %cst_195 = arith.constant 1.250000e-01 : f32
    %344 = vector.broadcast %cst_195 : f32 to vector<1x16xf32>
    %345 = arith.mulf %343, %344 : vector<1x16xf32>
    %346 = vector.broadcast %345 : vector<1x16xf32> to vector<8x16xf32>
    %347 = arith.subf %335, %346 : vector<8x16xf32>
    %348 = arith.mulf %347, %347 : vector<8x16xf32>
    %cst_196 = arith.constant dense<0.000000e+00> : vector<16xf32>
    %349 = vector.multi_reduction <add>, %348, %cst_196 [0] : vector<8x16xf32> to vector<16xf32>
    %350 = vector.shape_cast %349 : vector<16xf32> to vector<1x16xf32>
    %cst_197 = arith.constant 1.250000e-01 : f32
    %351 = vector.broadcast %cst_197 : f32 to vector<1x16xf32>
    %352 = arith.mulf %350, %351 : vector<1x16xf32>
    %cst_198 = arith.constant 9.99999974E-6 : f32
    %353 = vector.broadcast %cst_198 : f32 to vector<1x16xf32>
    %354 = arith.addf %352, %353 : vector<1x16xf32>
    %355 = math.rsqrt %354 : vector<1x16xf32>
    %356 = vector.broadcast %355 : vector<1x16xf32> to vector<8x16xf32>
    %357 = arith.mulf %347, %356 : vector<8x16xf32>
    %358 = vector.broadcast %337 : vector<1x16xf32> to vector<8x16xf32>
    %359 = arith.mulf %357, %358 : vector<8x16xf32>
    %360 = vector.broadcast %339 : vector<1x16xf32> to vector<8x16xf32>
    %361 = arith.addf %359, %360 : vector<8x16xf32>
    %cst_199 = arith.constant 0.000000e+00 : f32
    %362 = vector.broadcast %cst_199 : f32 to vector<8x16xf32>
    %363 = arith.cmpf oge, %361, %362 : vector<8x16xf32>
    %364 = vector.broadcast %341 : vector<1x1xf32> to vector<8x16xf32>
    %365 = arith.mulf %364, %361 : vector<8x16xf32>
    %366 = arith.select %363, %361, %365 : vector<8x16xi1>, vector<8x16xf32>
    %367 = arith.truncf %366 : vector<8x16xf32> to vector<8x16xbf16>
    %c3_200 = arith.constant 3 : index
    %c0_201 = arith.constant 0 : index
    %c0_202 = arith.constant 0 : index
    %368 = vector.load %arg10[%c3_200, %c0_201, %c0_202] : memref<6x16x16xbf16, #tpu.memory_space<vmem>>, vector<1x16x16xbf16>
    %369 = vector.shape_cast %368 : vector<1x16x16xbf16> to vector<16x16xbf16>
    %cst_203 = arith.constant dense<0.000000e+00> : vector<8x16xf32>
    %370 = tpu.matmul %367, %369, %cst_203 {dimension_numbers = #tpu.dot_dimension_numbers<[1], [0], [0], [1], [0, 0, 1, 1], [], []>} : vector<8x16xbf16>, vector<16x16xbf16>, vector<8x16xf32> -> vector<8x16xf32>
    %371 = arith.addf %281, %370 : vector<8x16xf32>
    %c3_204 = arith.constant 3 : index
    %c0_205 = arith.constant 0 : index
    %c0_206 = arith.constant 0 : index
    %372 = vector.load %arg11[%c3_204, %c0_205, %c0_206] : memref<6x1x16xf32, #tpu.memory_space<vmem>>, vector<1x1x16xf32>
    %373 = vector.shape_cast %372 : vector<1x1x16xf32> to vector<1x16xf32>
    %374 = vector.broadcast %373 : vector<1x16xf32> to vector<8x16xf32>
    %375 = arith.addf %371, %374 : vector<8x16xf32>
    %376 = arith.truncf %375 : vector<8x16xf32> to vector<8x16xbf16>
    %c4 = arith.constant 4 : index
    %c0_207 = arith.constant 0 : index
    %c0_208 = arith.constant 0 : index
    %377 = vector.load %arg2[%c4, %c0_207, %c0_208] : memref<6x16x16xbf16, #tpu.memory_space<vmem>>, vector<1x16x16xbf16>
    %378 = vector.shape_cast %377 : vector<1x16x16xbf16> to vector<16x16xbf16>
    %cst_209 = arith.constant dense<0.000000e+00> : vector<8x16xf32>
    %379 = tpu.matmul %376, %378, %cst_209 {dimension_numbers = #tpu.dot_dimension_numbers<[1], [0], [0], [1], [0, 0, 1, 1], [], []>} : vector<8x16xbf16>, vector<16x16xbf16>, vector<8x16xf32> -> vector<8x16xf32>
    %c4_210 = arith.constant 4 : index
    %c0_211 = arith.constant 0 : index
    %c0_212 = arith.constant 0 : index
    %380 = vector.load %arg3[%c4_210, %c0_211, %c0_212] : memref<6x1x16xf32, #tpu.memory_space<vmem>>, vector<1x1x16xf32>
    %381 = vector.shape_cast %380 : vector<1x1x16xf32> to vector<1x16xf32>
    %382 = vector.broadcast %381 : vector<1x16xf32> to vector<8x16xf32>
    %383 = arith.addf %379, %382 : vector<8x16xf32>
    %c4_213 = arith.constant 4 : index
    %c0_214 = arith.constant 0 : index
    %c0_215 = arith.constant 0 : index
    %384 = vector.load %arg4[%c4_213, %c0_214, %c0_215] : memref<6x1x16xf32, #tpu.memory_space<vmem>>, vector<1x1x16xf32>
    %385 = vector.shape_cast %384 : vector<1x1x16xf32> to vector<1x16xf32>
    %c4_216 = arith.constant 4 : index
    %c0_217 = arith.constant 0 : index
    %c0_218 = arith.constant 0 : index
    %386 = vector.load %arg5[%c4_216, %c0_217, %c0_218] : memref<6x1x16xf32, #tpu.memory_space<vmem>>, vector<1x1x16xf32>
    %387 = vector.shape_cast %386 : vector<1x1x16xf32> to vector<1x16xf32>
    %c4_219 = arith.constant 4 : index
    %c0_220 = arith.constant 0 : index
    %c0_221 = arith.constant 0 : index
    %388 = vector.load %arg12[%c4_219, %c0_220, %c0_221] : memref<6x1x1xf32, #tpu.memory_space<vmem>>, vector<1x1x1xf32>
    %389 = vector.shape_cast %388 : vector<1x1x1xf32> to vector<1x1xf32>
    %cst_222 = arith.constant dense<0.000000e+00> : vector<16xf32>
    %390 = vector.multi_reduction <add>, %383, %cst_222 [0] : vector<8x16xf32> to vector<16xf32>
    %391 = vector.shape_cast %390 : vector<16xf32> to vector<1x16xf32>
    %cst_223 = arith.constant 1.250000e-01 : f32
    %392 = vector.broadcast %cst_223 : f32 to vector<1x16xf32>
    %393 = arith.mulf %391, %392 : vector<1x16xf32>
    %394 = vector.broadcast %393 : vector<1x16xf32> to vector<8x16xf32>
    %395 = arith.subf %383, %394 : vector<8x16xf32>
    %396 = arith.mulf %395, %395 : vector<8x16xf32>
    %cst_224 = arith.constant dense<0.000000e+00> : vector<16xf32>
    %397 = vector.multi_reduction <add>, %396, %cst_224 [0] : vector<8x16xf32> to vector<16xf32>
    %398 = vector.shape_cast %397 : vector<16xf32> to vector<1x16xf32>
    %cst_225 = arith.constant 1.250000e-01 : f32
    %399 = vector.broadcast %cst_225 : f32 to vector<1x16xf32>
    %400 = arith.mulf %398, %399 : vector<1x16xf32>
    %cst_226 = arith.constant 9.99999974E-6 : f32
    %401 = vector.broadcast %cst_226 : f32 to vector<1x16xf32>
    %402 = arith.addf %400, %401 : vector<1x16xf32>
    %403 = math.rsqrt %402 : vector<1x16xf32>
    %404 = vector.broadcast %403 : vector<1x16xf32> to vector<8x16xf32>
    %405 = arith.mulf %395, %404 : vector<8x16xf32>
    %406 = vector.broadcast %385 : vector<1x16xf32> to vector<8x16xf32>
    %407 = arith.mulf %405, %406 : vector<8x16xf32>
    %408 = vector.broadcast %387 : vector<1x16xf32> to vector<8x16xf32>
    %409 = arith.addf %407, %408 : vector<8x16xf32>
    %cst_227 = arith.constant 0.000000e+00 : f32
    %410 = vector.broadcast %cst_227 : f32 to vector<8x16xf32>
    %411 = arith.cmpf oge, %409, %410 : vector<8x16xf32>
    %412 = vector.broadcast %389 : vector<1x1xf32> to vector<8x16xf32>
    %413 = arith.mulf %412, %409 : vector<8x16xf32>
    %414 = arith.select %411, %409, %413 : vector<8x16xi1>, vector<8x16xf32>
    %cst_228 = arith.constant 0.000000e+00 : f32
    %415 = vector.broadcast %cst_228 : f32 to vector<4x16xf32>
    %416 = tpu.concatenate %415, %414 in 0 : vector<4x16xf32>, vector<8x16xf32> -> vector<12x16xf32>
    %417 = vector.extract_strided_slice %416 {offsets = [0, 0], sizes = [8, 16], strides = [1, 1]} : vector<12x16xf32> to vector<8x16xf32>
    %418 = vector.extract_strided_slice %416 {offsets = [2, 0], sizes = [8, 16], strides = [1, 1]} : vector<12x16xf32> to vector<8x16xf32>
    %419 = vector.extract_strided_slice %416 {offsets = [4, 0], sizes = [8, 16], strides = [1, 1]} : vector<12x16xf32> to vector<8x16xf32>
    %420 = tpu.concatenate %417, %418, %419 in 1 : vector<8x16xf32>, vector<8x16xf32>, vector<8x16xf32> -> vector<8x48xf32>
    %421 = arith.truncf %420 : vector<8x48xf32> to vector<8x48xbf16>
    %c4_229 = arith.constant 4 : index
    %c0_230 = arith.constant 0 : index
    %c0_231 = arith.constant 0 : index
    %422 = vector.load %arg6[%c4_229, %c0_230, %c0_231] : memref<6x48x16xbf16, #tpu.memory_space<vmem>>, vector<1x48x16xbf16>
    %423 = vector.shape_cast %422 : vector<1x48x16xbf16> to vector<48x16xbf16>
    %cst_232 = arith.constant dense<0.000000e+00> : vector<8x16xf32>
    %424 = tpu.matmul %421, %423, %cst_232 {dimension_numbers = #tpu.dot_dimension_numbers<[1], [0], [0], [1], [0, 0, 1, 1], [], []>} : vector<8x48xbf16>, vector<48x16xbf16>, vector<8x16xf32> -> vector<8x16xf32>
    %c4_233 = arith.constant 4 : index
    %c0_234 = arith.constant 0 : index
    %c0_235 = arith.constant 0 : index
    %425 = vector.load %arg7[%c4_233, %c0_234, %c0_235] : memref<6x1x16xf32, #tpu.memory_space<vmem>>, vector<1x1x16xf32>
    %426 = vector.shape_cast %425 : vector<1x1x16xf32> to vector<1x16xf32>
    %427 = vector.broadcast %426 : vector<1x16xf32> to vector<8x16xf32>
    %428 = arith.addf %424, %427 : vector<8x16xf32>
    %c4_236 = arith.constant 4 : index
    %c0_237 = arith.constant 0 : index
    %c0_238 = arith.constant 0 : index
    %429 = vector.load %arg8[%c4_236, %c0_237, %c0_238] : memref<6x1x16xf32, #tpu.memory_space<vmem>>, vector<1x1x16xf32>
    %430 = vector.shape_cast %429 : vector<1x1x16xf32> to vector<1x16xf32>
    %c4_239 = arith.constant 4 : index
    %c0_240 = arith.constant 0 : index
    %c0_241 = arith.constant 0 : index
    %431 = vector.load %arg9[%c4_239, %c0_240, %c0_241] : memref<6x1x16xf32, #tpu.memory_space<vmem>>, vector<1x1x16xf32>
    %432 = vector.shape_cast %431 : vector<1x1x16xf32> to vector<1x16xf32>
    %c4_242 = arith.constant 4 : index
    %c0_243 = arith.constant 0 : index
    %c0_244 = arith.constant 0 : index
    %433 = vector.load %arg13[%c4_242, %c0_243, %c0_244] : memref<6x1x1xf32, #tpu.memory_space<vmem>>, vector<1x1x1xf32>
    %434 = vector.shape_cast %433 : vector<1x1x1xf32> to vector<1x1xf32>
    %cst_245 = arith.constant dense<0.000000e+00> : vector<16xf32>
    %435 = vector.multi_reduction <add>, %428, %cst_245 [0] : vector<8x16xf32> to vector<16xf32>
    %436 = vector.shape_cast %435 : vector<16xf32> to vector<1x16xf32>
    %cst_246 = arith.constant 1.250000e-01 : f32
    %437 = vector.broadcast %cst_246 : f32 to vector<1x16xf32>
    %438 = arith.mulf %436, %437 : vector<1x16xf32>
    %439 = vector.broadcast %438 : vector<1x16xf32> to vector<8x16xf32>
    %440 = arith.subf %428, %439 : vector<8x16xf32>
    %441 = arith.mulf %440, %440 : vector<8x16xf32>
    %cst_247 = arith.constant dense<0.000000e+00> : vector<16xf32>
    %442 = vector.multi_reduction <add>, %441, %cst_247 [0] : vector<8x16xf32> to vector<16xf32>
    %443 = vector.shape_cast %442 : vector<16xf32> to vector<1x16xf32>
    %cst_248 = arith.constant 1.250000e-01 : f32
    %444 = vector.broadcast %cst_248 : f32 to vector<1x16xf32>
    %445 = arith.mulf %443, %444 : vector<1x16xf32>
    %cst_249 = arith.constant 9.99999974E-6 : f32
    %446 = vector.broadcast %cst_249 : f32 to vector<1x16xf32>
    %447 = arith.addf %445, %446 : vector<1x16xf32>
    %448 = math.rsqrt %447 : vector<1x16xf32>
    %449 = vector.broadcast %448 : vector<1x16xf32> to vector<8x16xf32>
    %450 = arith.mulf %440, %449 : vector<8x16xf32>
    %451 = vector.broadcast %430 : vector<1x16xf32> to vector<8x16xf32>
    %452 = arith.mulf %450, %451 : vector<8x16xf32>
    %453 = vector.broadcast %432 : vector<1x16xf32> to vector<8x16xf32>
    %454 = arith.addf %452, %453 : vector<8x16xf32>
    %cst_250 = arith.constant 0.000000e+00 : f32
    %455 = vector.broadcast %cst_250 : f32 to vector<8x16xf32>
    %456 = arith.cmpf oge, %454, %455 : vector<8x16xf32>
    %457 = vector.broadcast %434 : vector<1x1xf32> to vector<8x16xf32>
    %458 = arith.mulf %457, %454 : vector<8x16xf32>
    %459 = arith.select %456, %454, %458 : vector<8x16xi1>, vector<8x16xf32>
    %460 = arith.truncf %459 : vector<8x16xf32> to vector<8x16xbf16>
    %c4_251 = arith.constant 4 : index
    %c0_252 = arith.constant 0 : index
    %c0_253 = arith.constant 0 : index
    %461 = vector.load %arg10[%c4_251, %c0_252, %c0_253] : memref<6x16x16xbf16, #tpu.memory_space<vmem>>, vector<1x16x16xbf16>
    %462 = vector.shape_cast %461 : vector<1x16x16xbf16> to vector<16x16xbf16>
    %cst_254 = arith.constant dense<0.000000e+00> : vector<8x16xf32>
    %463 = tpu.matmul %460, %462, %cst_254 {dimension_numbers = #tpu.dot_dimension_numbers<[1], [0], [0], [1], [0, 0, 1, 1], [], []>} : vector<8x16xbf16>, vector<16x16xbf16>, vector<8x16xf32> -> vector<8x16xf32>
    %464 = arith.addf %375, %463 : vector<8x16xf32>
    %c4_255 = arith.constant 4 : index
    %c0_256 = arith.constant 0 : index
    %c0_257 = arith.constant 0 : index
    %465 = vector.load %arg11[%c4_255, %c0_256, %c0_257] : memref<6x1x16xf32, #tpu.memory_space<vmem>>, vector<1x1x16xf32>
    %466 = vector.shape_cast %465 : vector<1x1x16xf32> to vector<1x16xf32>
    %467 = vector.broadcast %466 : vector<1x16xf32> to vector<8x16xf32>
    %468 = arith.addf %464, %467 : vector<8x16xf32>
    %469 = arith.truncf %468 : vector<8x16xf32> to vector<8x16xbf16>
    %c5 = arith.constant 5 : index
    %c0_258 = arith.constant 0 : index
    %c0_259 = arith.constant 0 : index
    %470 = vector.load %arg2[%c5, %c0_258, %c0_259] : memref<6x16x16xbf16, #tpu.memory_space<vmem>>, vector<1x16x16xbf16>
    %471 = vector.shape_cast %470 : vector<1x16x16xbf16> to vector<16x16xbf16>
    %cst_260 = arith.constant dense<0.000000e+00> : vector<8x16xf32>
    %472 = tpu.matmul %469, %471, %cst_260 {dimension_numbers = #tpu.dot_dimension_numbers<[1], [0], [0], [1], [0, 0, 1, 1], [], []>} : vector<8x16xbf16>, vector<16x16xbf16>, vector<8x16xf32> -> vector<8x16xf32>
    %c5_261 = arith.constant 5 : index
    %c0_262 = arith.constant 0 : index
    %c0_263 = arith.constant 0 : index
    %473 = vector.load %arg3[%c5_261, %c0_262, %c0_263] : memref<6x1x16xf32, #tpu.memory_space<vmem>>, vector<1x1x16xf32>
    %474 = vector.shape_cast %473 : vector<1x1x16xf32> to vector<1x16xf32>
    %475 = vector.broadcast %474 : vector<1x16xf32> to vector<8x16xf32>
    %476 = arith.addf %472, %475 : vector<8x16xf32>
    %c5_264 = arith.constant 5 : index
    %c0_265 = arith.constant 0 : index
    %c0_266 = arith.constant 0 : index
    %477 = vector.load %arg4[%c5_264, %c0_265, %c0_266] : memref<6x1x16xf32, #tpu.memory_space<vmem>>, vector<1x1x16xf32>
    %478 = vector.shape_cast %477 : vector<1x1x16xf32> to vector<1x16xf32>
    %c5_267 = arith.constant 5 : index
    %c0_268 = arith.constant 0 : index
    %c0_269 = arith.constant 0 : index
    %479 = vector.load %arg5[%c5_267, %c0_268, %c0_269] : memref<6x1x16xf32, #tpu.memory_space<vmem>>, vector<1x1x16xf32>
    %480 = vector.shape_cast %479 : vector<1x1x16xf32> to vector<1x16xf32>
    %c5_270 = arith.constant 5 : index
    %c0_271 = arith.constant 0 : index
    %c0_272 = arith.constant 0 : index
    %481 = vector.load %arg12[%c5_270, %c0_271, %c0_272] : memref<6x1x1xf32, #tpu.memory_space<vmem>>, vector<1x1x1xf32>
    %482 = vector.shape_cast %481 : vector<1x1x1xf32> to vector<1x1xf32>
    %cst_273 = arith.constant dense<0.000000e+00> : vector<16xf32>
    %483 = vector.multi_reduction <add>, %476, %cst_273 [0] : vector<8x16xf32> to vector<16xf32>
    %484 = vector.shape_cast %483 : vector<16xf32> to vector<1x16xf32>
    %cst_274 = arith.constant 1.250000e-01 : f32
    %485 = vector.broadcast %cst_274 : f32 to vector<1x16xf32>
    %486 = arith.mulf %484, %485 : vector<1x16xf32>
    %487 = vector.broadcast %486 : vector<1x16xf32> to vector<8x16xf32>
    %488 = arith.subf %476, %487 : vector<8x16xf32>
    %489 = arith.mulf %488, %488 : vector<8x16xf32>
    %cst_275 = arith.constant dense<0.000000e+00> : vector<16xf32>
    %490 = vector.multi_reduction <add>, %489, %cst_275 [0] : vector<8x16xf32> to vector<16xf32>
    %491 = vector.shape_cast %490 : vector<16xf32> to vector<1x16xf32>
    %cst_276 = arith.constant 1.250000e-01 : f32
    %492 = vector.broadcast %cst_276 : f32 to vector<1x16xf32>
    %493 = arith.mulf %491, %492 : vector<1x16xf32>
    %cst_277 = arith.constant 9.99999974E-6 : f32
    %494 = vector.broadcast %cst_277 : f32 to vector<1x16xf32>
    %495 = arith.addf %493, %494 : vector<1x16xf32>
    %496 = math.rsqrt %495 : vector<1x16xf32>
    %497 = vector.broadcast %496 : vector<1x16xf32> to vector<8x16xf32>
    %498 = arith.mulf %488, %497 : vector<8x16xf32>
    %499 = vector.broadcast %478 : vector<1x16xf32> to vector<8x16xf32>
    %500 = arith.mulf %498, %499 : vector<8x16xf32>
    %501 = vector.broadcast %480 : vector<1x16xf32> to vector<8x16xf32>
    %502 = arith.addf %500, %501 : vector<8x16xf32>
    %cst_278 = arith.constant 0.000000e+00 : f32
    %503 = vector.broadcast %cst_278 : f32 to vector<8x16xf32>
    %504 = arith.cmpf oge, %502, %503 : vector<8x16xf32>
    %505 = vector.broadcast %482 : vector<1x1xf32> to vector<8x16xf32>
    %506 = arith.mulf %505, %502 : vector<8x16xf32>
    %507 = arith.select %504, %502, %506 : vector<8x16xi1>, vector<8x16xf32>
    %cst_279 = arith.constant 0.000000e+00 : f32
    %508 = vector.broadcast %cst_279 : f32 to vector<8x16xf32>
    %509 = tpu.concatenate %508, %507 in 0 : vector<8x16xf32>, vector<8x16xf32> -> vector<16x16xf32>
    %510 = vector.extract_strided_slice %509 {offsets = [0, 0], sizes = [8, 16], strides = [1, 1]} : vector<16x16xf32> to vector<8x16xf32>
    %511 = vector.extract_strided_slice %509 {offsets = [4, 0], sizes = [8, 16], strides = [1, 1]} : vector<16x16xf32> to vector<8x16xf32>
    %512 = vector.extract_strided_slice %509 {offsets = [8, 0], sizes = [8, 16], strides = [1, 1]} : vector<16x16xf32> to vector<8x16xf32>
    %513 = tpu.concatenate %510, %511, %512 in 1 : vector<8x16xf32>, vector<8x16xf32>, vector<8x16xf32> -> vector<8x48xf32>
    %514 = arith.truncf %513 : vector<8x48xf32> to vector<8x48xbf16>
    %c5_280 = arith.constant 5 : index
    %c0_281 = arith.constant 0 : index
    %c0_282 = arith.constant 0 : index
    %515 = vector.load %arg6[%c5_280, %c0_281, %c0_282] : memref<6x48x16xbf16, #tpu.memory_space<vmem>>, vector<1x48x16xbf16>
    %516 = vector.shape_cast %515 : vector<1x48x16xbf16> to vector<48x16xbf16>
    %cst_283 = arith.constant dense<0.000000e+00> : vector<8x16xf32>
    %517 = tpu.matmul %514, %516, %cst_283 {dimension_numbers = #tpu.dot_dimension_numbers<[1], [0], [0], [1], [0, 0, 1, 1], [], []>} : vector<8x48xbf16>, vector<48x16xbf16>, vector<8x16xf32> -> vector<8x16xf32>
    %c5_284 = arith.constant 5 : index
    %c0_285 = arith.constant 0 : index
    %c0_286 = arith.constant 0 : index
    %518 = vector.load %arg7[%c5_284, %c0_285, %c0_286] : memref<6x1x16xf32, #tpu.memory_space<vmem>>, vector<1x1x16xf32>
    %519 = vector.shape_cast %518 : vector<1x1x16xf32> to vector<1x16xf32>
    %520 = vector.broadcast %519 : vector<1x16xf32> to vector<8x16xf32>
    %521 = arith.addf %517, %520 : vector<8x16xf32>
    %c5_287 = arith.constant 5 : index
    %c0_288 = arith.constant 0 : index
    %c0_289 = arith.constant 0 : index
    %522 = vector.load %arg8[%c5_287, %c0_288, %c0_289] : memref<6x1x16xf32, #tpu.memory_space<vmem>>, vector<1x1x16xf32>
    %523 = vector.shape_cast %522 : vector<1x1x16xf32> to vector<1x16xf32>
    %c5_290 = arith.constant 5 : index
    %c0_291 = arith.constant 0 : index
    %c0_292 = arith.constant 0 : index
    %524 = vector.load %arg9[%c5_290, %c0_291, %c0_292] : memref<6x1x16xf32, #tpu.memory_space<vmem>>, vector<1x1x16xf32>
    %525 = vector.shape_cast %524 : vector<1x1x16xf32> to vector<1x16xf32>
    %c5_293 = arith.constant 5 : index
    %c0_294 = arith.constant 0 : index
    %c0_295 = arith.constant 0 : index
    %526 = vector.load %arg13[%c5_293, %c0_294, %c0_295] : memref<6x1x1xf32, #tpu.memory_space<vmem>>, vector<1x1x1xf32>
    %527 = vector.shape_cast %526 : vector<1x1x1xf32> to vector<1x1xf32>
    %cst_296 = arith.constant dense<0.000000e+00> : vector<16xf32>
    %528 = vector.multi_reduction <add>, %521, %cst_296 [0] : vector<8x16xf32> to vector<16xf32>
    %529 = vector.shape_cast %528 : vector<16xf32> to vector<1x16xf32>
    %cst_297 = arith.constant 1.250000e-01 : f32
    %530 = vector.broadcast %cst_297 : f32 to vector<1x16xf32>
    %531 = arith.mulf %529, %530 : vector<1x16xf32>
    %532 = vector.broadcast %531 : vector<1x16xf32> to vector<8x16xf32>
    %533 = arith.subf %521, %532 : vector<8x16xf32>
    %534 = arith.mulf %533, %533 : vector<8x16xf32>
    %cst_298 = arith.constant dense<0.000000e+00> : vector<16xf32>
    %535 = vector.multi_reduction <add>, %534, %cst_298 [0] : vector<8x16xf32> to vector<16xf32>
    %536 = vector.shape_cast %535 : vector<16xf32> to vector<1x16xf32>
    %cst_299 = arith.constant 1.250000e-01 : f32
    %537 = vector.broadcast %cst_299 : f32 to vector<1x16xf32>
    %538 = arith.mulf %536, %537 : vector<1x16xf32>
    %cst_300 = arith.constant 9.99999974E-6 : f32
    %539 = vector.broadcast %cst_300 : f32 to vector<1x16xf32>
    %540 = arith.addf %538, %539 : vector<1x16xf32>
    %541 = math.rsqrt %540 : vector<1x16xf32>
    %542 = vector.broadcast %541 : vector<1x16xf32> to vector<8x16xf32>
    %543 = arith.mulf %533, %542 : vector<8x16xf32>
    %544 = vector.broadcast %523 : vector<1x16xf32> to vector<8x16xf32>
    %545 = arith.mulf %543, %544 : vector<8x16xf32>
    %546 = vector.broadcast %525 : vector<1x16xf32> to vector<8x16xf32>
    %547 = arith.addf %545, %546 : vector<8x16xf32>
    %cst_301 = arith.constant 0.000000e+00 : f32
    %548 = vector.broadcast %cst_301 : f32 to vector<8x16xf32>
    %549 = arith.cmpf oge, %547, %548 : vector<8x16xf32>
    %550 = vector.broadcast %527 : vector<1x1xf32> to vector<8x16xf32>
    %551 = arith.mulf %550, %547 : vector<8x16xf32>
    %552 = arith.select %549, %547, %551 : vector<8x16xi1>, vector<8x16xf32>
    %553 = arith.truncf %552 : vector<8x16xf32> to vector<8x16xbf16>
    %c5_302 = arith.constant 5 : index
    %c0_303 = arith.constant 0 : index
    %c0_304 = arith.constant 0 : index
    %554 = vector.load %arg10[%c5_302, %c0_303, %c0_304] : memref<6x16x16xbf16, #tpu.memory_space<vmem>>, vector<1x16x16xbf16>
    %555 = vector.shape_cast %554 : vector<1x16x16xbf16> to vector<16x16xbf16>
    %cst_305 = arith.constant dense<0.000000e+00> : vector<8x16xf32>
    %556 = tpu.matmul %553, %555, %cst_305 {dimension_numbers = #tpu.dot_dimension_numbers<[1], [0], [0], [1], [0, 0, 1, 1], [], []>} : vector<8x16xbf16>, vector<16x16xbf16>, vector<8x16xf32> -> vector<8x16xf32>
    %557 = arith.addf %468, %556 : vector<8x16xf32>
    %c5_306 = arith.constant 5 : index
    %c0_307 = arith.constant 0 : index
    %c0_308 = arith.constant 0 : index
    %558 = vector.load %arg11[%c5_306, %c0_307, %c0_308] : memref<6x1x16xf32, #tpu.memory_space<vmem>>, vector<1x1x16xf32>
    %559 = vector.shape_cast %558 : vector<1x1x16xf32> to vector<1x16xf32>
    %560 = vector.broadcast %559 : vector<1x16xf32> to vector<8x16xf32>
    %561 = arith.addf %557, %560 : vector<8x16xf32>
    %562 = arith.addf %282, %561 : vector<8x16xf32>
    %c0_309 = arith.constant 0 : index
    %c0_310 = arith.constant 0 : index
    %c0_311 = arith.constant 0 : index
    %563 = vector.load %arg14[%c0_309, %c0_310, %c0_311] : memref<1x8x16xf32, #tpu.memory_space<vmem>>, vector<1x8x16xf32>
    %564 = vector.shape_cast %563 : vector<1x8x16xf32> to vector<8x16xf32>
    %565 = vector.shape_cast %562 : vector<8x16xf32> to vector<1x8x16xf32>
    tpu.vector_store %arg14[%c0_309, %c0_310, %c0_311], %565 {strides = array<i32>} : memref<1x8x16xf32, #tpu.memory_space<vmem>>, vector<1x8x16xf32>,
    return
  }
  func.func @transform_0(%arg0: i32) -> (i32, i32, i32) {
    %c0_i32 = arith.constant 0 : i32
    %c0_i32_0 = arith.constant 0 : i32
    %c0_i32_1 = arith.constant 0 : i32
    return %arg0, %c0_i32, %c0_i32_0 : i32, i32, i32
  }
  func.func @transform_1(%arg0: i32) -> (i32, i32, i32) {
    %c0_i32 = arith.constant 0 : i32
    %c0_i32_0 = arith.constant 0 : i32
    %c0_i32_1 = arith.constant 0 : i32
    %c0_i32_2 = arith.constant 0 : i32
    return %c0_i32, %c0_i32_0, %c0_i32_1 : i32, i32, i32
  }
  func.func @transform_2(%arg0: i32) -> (i32, i32, i32) {
    %c0_i32 = arith.constant 0 : i32
    %c0_i32_0 = arith.constant 0 : i32
    %c0_i32_1 = arith.constant 0 : i32
    %c0_i32_2 = arith.constant 0 : i32
    return %c0_i32, %c0_i32_0, %c0_i32_1 : i32, i32, i32
  }
  func.func @transform_3(%arg0: i32) -> (i32, i32, i32) {
    %c0_i32 = arith.constant 0 : i32
    %c0_i32_0 = arith.constant 0 : i32
    %c0_i32_1 = arith.constant 0 : i32
    %c0_i32_2 = arith.constant 0 : i32
    return %c0_i32, %c0_i32_0, %c0_i32_1 : i32, i32, i32
  }
  func.func @transform_4(%arg0: i32) -> (i32, i32, i32) {
    %c0_i32 = arith.constant 0 : i32
    %c0_i32_0 = arith.constant 0 : i32
    %c0_i32_1 = arith.constant 0 : i32
    %c0_i32_2 = arith.constant 0 : i32
    return %c0_i32, %c0_i32_0, %c0_i32_1 : i32, i32, i32
  }
  func.func @transform_5(%arg0: i32) -> (i32, i32, i32) {
    %c0_i32 = arith.constant 0 : i32
    %c0_i32_0 = arith.constant 0 : i32
    %c0_i32_1 = arith.constant 0 : i32
    %c0_i32_2 = arith.constant 0 : i32
    return %c0_i32, %c0_i32_0, %c0_i32_1 : i32, i32, i32
  }
  func.func @transform_6(%arg0: i32) -> (i32, i32, i32) {
    %c0_i32 = arith.constant 0 : i32
    %c0_i32_0 = arith.constant 0 : i32
    %c0_i32_1 = arith.constant 0 : i32
    %c0_i32_2 = arith.constant 0 : i32
    return %c0_i32, %c0_i32_0, %c0_i32_1 : i32, i32, i32
  }
  func.func @transform_7(%arg0: i32) -> (i32, i32, i32) {
    %c0_i32 = arith.constant 0 : i32
    %c0_i32_0 = arith.constant 0 : i32
    %c0_i32_1 = arith.constant 0 : i32
    %c0_i32_2 = arith.constant 0 : i32
    return %c0_i32, %c0_i32_0, %c0_i32_1 : i32, i32, i32
  }
  func.func @transform_8(%arg0: i32) -> (i32, i32, i32) {
    %c0_i32 = arith.constant 0 : i32
    %c0_i32_0 = arith.constant 0 : i32
    %c0_i32_1 = arith.constant 0 : i32
    %c0_i32_2 = arith.constant 0 : i32
    return %c0_i32, %c0_i32_0, %c0_i32_1 : i32, i32, i32
  }
  func.func @transform_9(%arg0: i32) -> (i32, i32, i32) {
    %c0_i32 = arith.constant 0 : i32
    %c0_i32_0 = arith.constant 0 : i32
    %c0_i32_1 = arith.constant 0 : i32
    %c0_i32_2 = arith.constant 0 : i32
    return %c0_i32, %c0_i32_0, %c0_i32_1 : i32, i32, i32
  }
  func.func @transform_10(%arg0: i32) -> (i32, i32, i32) {
    %c0_i32 = arith.constant 0 : i32
    %c0_i32_0 = arith.constant 0 : i32
    %c0_i32_1 = arith.constant 0 : i32
    %c0_i32_2 = arith.constant 0 : i32
    return %c0_i32, %c0_i32_0, %c0_i32_1 : i32, i32, i32
  }
  func.func @transform_11(%arg0: i32) -> (i32, i32, i32) {
    %c0_i32 = arith.constant 0 : i32
    %c0_i32_0 = arith.constant 0 : i32
    %c0_i32_1 = arith.constant 0 : i32
    %c0_i32_2 = arith.constant 0 : i32
    return %c0_i32, %c0_i32_0, %c0_i32_1 : i32, i32, i32
  }
  func.func @transform_12(%arg0: i32) -> (i32, i32, i32) {
    %c0_i32 = arith.constant 0 : i32
    %c0_i32_0 = arith.constant 0 : i32
    %c0_i32_1 = arith.constant 0 : i32
    %c0_i32_2 = arith.constant 0 : i32
    return %c0_i32, %c0_i32_0, %c0_i32_1 : i32, i32, i32
  }
  func.func @transform_13(%arg0: i32) -> (i32, i32, i32) {
    %c0_i32 = arith.constant 0 : i32
    %c0_i32_0 = arith.constant 0 : i32
    %c0_i32_1 = arith.constant 0 : i32
    return %arg0, %c0_i32, %c0_i32_0 : i32, i32, i32
  }
}

module attributes {stable_mosaic.version = 11 : i64} {
  func.func @_conv_layer_kernel(%arg0: i32, %arg1: memref<1x8x64xf32, #tpu.memory_space<vmem>>, %arg2: memref<1x8x64xf32, #tpu.memory_space<vmem>>, %arg3: memref<128x16xbf16, #tpu.memory_space<vmem>>, %arg4: memref<128x16xbf16, #tpu.memory_space<vmem>>, %arg5: memref<1x16xf32, #tpu.memory_space<vmem>>, %arg6: memref<1x16xf32, #tpu.memory_space<vmem>>, %arg7: memref<1x16xf32, #tpu.memory_space<vmem>>, %arg8: memref<1x1xf32, #tpu.memory_space<vmem>>, %arg9: memref<1x8x16xf32, #tpu.memory_space<vmem>>) attributes {dimension_semantics = [#tpu.dimension_semantics<parallel>], iteration_bounds = array<i64: 2>, scalar_prefetch = 0 : i64, scratch_operands = 0 : i64, tpu.core_type = #tpu.core_type<tc>, window_params = [{transform_indices = @transform_0, window_bounds = array<i64: 1, 8, 64>}, {transform_indices = @transform_1, window_bounds = array<i64: 1, 8, 64>}, {pipeline_mode = #tpu.pipeline_mode<synchronous>, transform_indices = @transform_2, window_bounds = array<i64: 128, 16>}, {pipeline_mode = #tpu.pipeline_mode<synchronous>, transform_indices = @transform_3, window_bounds = array<i64: 128, 16>}, {pipeline_mode = #tpu.pipeline_mode<synchronous>, transform_indices = @transform_4, window_bounds = array<i64: 1, 16>}, {pipeline_mode = #tpu.pipeline_mode<synchronous>, transform_indices = @transform_5, window_bounds = array<i64: 1, 16>}, {pipeline_mode = #tpu.pipeline_mode<synchronous>, transform_indices = @transform_6, window_bounds = array<i64: 1, 16>}, {pipeline_mode = #tpu.pipeline_mode<synchronous>, transform_indices = @transform_7, window_bounds = array<i64: 1, 1>}, {transform_indices = @transform_8, window_bounds = array<i64: 1, 8, 16>}]} {
    %c0 = arith.constant 0 : index
    %c0_0 = arith.constant 0 : index
    %c0_1 = arith.constant 0 : index
    %0 = vector.load %arg1[%c0, %c0_0, %c0_1] : memref<1x8x64xf32, #tpu.memory_space<vmem>>, vector<1x8x64xf32>
    %1 = vector.shape_cast %0 : vector<1x8x64xf32> to vector<8x64xf32>
    %cst = arith.constant 0.000000e+00 : f32
    %2 = vector.broadcast %cst : f32 to vector<1x64xf32>
    %3 = tpu.concatenate %2, %1 in 0 : vector<1x64xf32>, vector<8x64xf32> -> vector<9x64xf32>
    %4 = vector.extract_strided_slice %3 {offsets = [0, 0], sizes = [8, 64], strides = [1, 1]} : vector<9x64xf32> to vector<8x64xf32>
    %5 = vector.extract_strided_slice %3 {offsets = [1, 0], sizes = [8, 64], strides = [1, 1]} : vector<9x64xf32> to vector<8x64xf32>
    %6 = tpu.concatenate %4, %5 in 1 : vector<8x64xf32>, vector<8x64xf32> -> vector<8x128xf32>
    %7 = arith.truncf %6 : vector<8x128xf32> to vector<8x128xbf16>
    %c0_2 = arith.constant 0 : index
    %c0_3 = arith.constant 0 : index
    %8 = vector.load %arg3[%c0_2, %c0_3] : memref<128x16xbf16, #tpu.memory_space<vmem>>, vector<128x16xbf16>
    %cst_4 = arith.constant dense<0.000000e+00> : vector<8x16xf32>
    %9 = tpu.matmul %7, %8, %cst_4 {dimension_numbers = #tpu.dot_dimension_numbers<[1], [0], [0], [1], [0, 0, 1, 1], [], []>} : vector<8x128xbf16>, vector<128x16xbf16>, vector<8x16xf32> -> vector<8x16xf32>
    %c0_5 = arith.constant 0 : index
    %c0_6 = arith.constant 0 : index
    %c0_7 = arith.constant 0 : index
    %10 = vector.load %arg2[%c0_5, %c0_6, %c0_7] : memref<1x8x64xf32, #tpu.memory_space<vmem>>, vector<1x8x64xf32>
    %11 = vector.shape_cast %10 : vector<1x8x64xf32> to vector<8x64xf32>
    %cst_8 = arith.constant 0.000000e+00 : f32
    %12 = vector.broadcast %cst_8 : f32 to vector<1x64xf32>
    %13 = tpu.concatenate %12, %11 in 0 : vector<1x64xf32>, vector<8x64xf32> -> vector<9x64xf32>
    %14 = vector.extract_strided_slice %13 {offsets = [0, 0], sizes = [8, 64], strides = [1, 1]} : vector<9x64xf32> to vector<8x64xf32>
    %15 = vector.extract_strided_slice %13 {offsets = [1, 0], sizes = [8, 64], strides = [1, 1]} : vector<9x64xf32> to vector<8x64xf32>
    %16 = tpu.concatenate %14, %15 in 1 : vector<8x64xf32>, vector<8x64xf32> -> vector<8x128xf32>
    %17 = arith.truncf %16 : vector<8x128xf32> to vector<8x128xbf16>
    %c0_9 = arith.constant 0 : index
    %c0_10 = arith.constant 0 : index
    %18 = vector.load %arg4[%c0_9, %c0_10] : memref<128x16xbf16, #tpu.memory_space<vmem>>, vector<128x16xbf16>
    %cst_11 = arith.constant dense<0.000000e+00> : vector<8x16xf32>
    %19 = tpu.matmul %17, %18, %cst_11 {dimension_numbers = #tpu.dot_dimension_numbers<[1], [0], [0], [1], [0, 0, 1, 1], [], []>} : vector<8x128xbf16>, vector<128x16xbf16>, vector<8x16xf32> -> vector<8x16xf32>
    %20 = arith.addf %9, %19 : vector<8x16xf32>
    %c0_12 = arith.constant 0 : index
    %c0_13 = arith.constant 0 : index
    %21 = vector.load %arg5[%c0_12, %c0_13] : memref<1x16xf32, #tpu.memory_space<vmem>>, vector<1x16xf32>
    %22 = vector.broadcast %21 : vector<1x16xf32> to vector<8x16xf32>
    %23 = arith.addf %20, %22 : vector<8x16xf32>
    %c0_14 = arith.constant 0 : index
    %c0_15 = arith.constant 0 : index
    %c0_16 = arith.constant 0 : index
    %24 = vector.load %arg9[%c0_14, %c0_15, %c0_16] : memref<1x8x16xf32, #tpu.memory_space<vmem>>, vector<1x8x16xf32>
    %25 = vector.shape_cast %24 : vector<1x8x16xf32> to vector<8x16xf32>
    %26 = vector.shape_cast %23 : vector<8x16xf32> to vector<1x8x16xf32>
    tpu.vector_store %arg9[%c0_14, %c0_15, %c0_16], %26 {strides = array<i32>} : memref<1x8x16xf32, #tpu.memory_space<vmem>>, vector<1x8x16xf32>,
    return
  }
  func.func @transform_0(%arg0: i32) -> (i32, i32, i32) {
    %c0_i32 = arith.constant 0 : i32
    %c0_i32_0 = arith.constant 0 : i32
    %c0_i32_1 = arith.constant 0 : i32
    return %arg0, %c0_i32, %c0_i32_0 : i32, i32, i32
  }
  func.func @transform_1(%arg0: i32) -> (i32, i32, i32) {
    %c0_i32 = arith.constant 0 : i32
    %c0_i32_0 = arith.constant 0 : i32
    %c0_i32_1 = arith.constant 0 : i32
    return %arg0, %c0_i32, %c0_i32_0 : i32, i32, i32
  }
  func.func @transform_2(%arg0: i32) -> (i32, i32) {
    %c0_i32 = arith.constant 0 : i32
    %c0_i32_0 = arith.constant 0 : i32
    %c0_i32_1 = arith.constant 0 : i32
    return %c0_i32, %c0_i32_0 : i32, i32
  }
  func.func @transform_3(%arg0: i32) -> (i32, i32) {
    %c0_i32 = arith.constant 0 : i32
    %c0_i32_0 = arith.constant 0 : i32
    %c0_i32_1 = arith.constant 0 : i32
    return %c0_i32, %c0_i32_0 : i32, i32
  }
  func.func @transform_4(%arg0: i32) -> (i32, i32) {
    %c0_i32 = arith.constant 0 : i32
    %c0_i32_0 = arith.constant 0 : i32
    %c0_i32_1 = arith.constant 0 : i32
    return %c0_i32, %c0_i32_0 : i32, i32
  }
  func.func @transform_5(%arg0: i32) -> (i32, i32) {
    %c0_i32 = arith.constant 0 : i32
    %c0_i32_0 = arith.constant 0 : i32
    %c0_i32_1 = arith.constant 0 : i32
    return %c0_i32, %c0_i32_0 : i32, i32
  }
  func.func @transform_6(%arg0: i32) -> (i32, i32) {
    %c0_i32 = arith.constant 0 : i32
    %c0_i32_0 = arith.constant 0 : i32
    %c0_i32_1 = arith.constant 0 : i32
    return %c0_i32, %c0_i32_0 : i32, i32
  }
  func.func @transform_7(%arg0: i32) -> (i32, i32) {
    %c0_i32 = arith.constant 0 : i32
    %c0_i32_0 = arith.constant 0 : i32
    %c0_i32_1 = arith.constant 0 : i32
    return %c0_i32, %c0_i32_0 : i32, i32
  }
  func.func @transform_8(%arg0: i32) -> (i32, i32, i32) {
    %c0_i32 = arith.constant 0 : i32
    %c0_i32_0 = arith.constant 0 : i32
    %c0_i32_1 = arith.constant 0 : i32
    return %arg0, %c0_i32, %c0_i32_0 : i32, i32, i32
  }
}

module attributes {stable_mosaic.version = 11 : i64} {
  func.func @_conv_layer_kernel(%arg0: i32, %arg1: memref<1x8x16xf32, #tpu.memory_space<vmem>>, %arg2: memref<1x8x16xf32, #tpu.memory_space<vmem>>, %arg3: memref<32x32xbf16, #tpu.memory_space<vmem>>, %arg4: memref<32x32xbf16, #tpu.memory_space<vmem>>, %arg5: memref<1x32xf32, #tpu.memory_space<vmem>>, %arg6: memref<1x32xf32, #tpu.memory_space<vmem>>, %arg7: memref<1x32xf32, #tpu.memory_space<vmem>>, %arg8: memref<1x1xf32, #tpu.memory_space<vmem>>, %arg9: memref<1x8x32xf32, #tpu.memory_space<vmem>>) attributes {dimension_semantics = [#tpu.dimension_semantics<parallel>], iteration_bounds = array<i64: 2>, scalar_prefetch = 0 : i64, scratch_operands = 0 : i64, tpu.core_type = #tpu.core_type<tc>, window_params = [{transform_indices = @transform_0, window_bounds = array<i64: 1, 8, 16>}, {transform_indices = @transform_1, window_bounds = array<i64: 1, 8, 16>}, {pipeline_mode = #tpu.pipeline_mode<synchronous>, transform_indices = @transform_2, window_bounds = array<i64: 32, 32>}, {pipeline_mode = #tpu.pipeline_mode<synchronous>, transform_indices = @transform_3, window_bounds = array<i64: 32, 32>}, {pipeline_mode = #tpu.pipeline_mode<synchronous>, transform_indices = @transform_4, window_bounds = array<i64: 1, 32>}, {pipeline_mode = #tpu.pipeline_mode<synchronous>, transform_indices = @transform_5, window_bounds = array<i64: 1, 32>}, {pipeline_mode = #tpu.pipeline_mode<synchronous>, transform_indices = @transform_6, window_bounds = array<i64: 1, 32>}, {pipeline_mode = #tpu.pipeline_mode<synchronous>, transform_indices = @transform_7, window_bounds = array<i64: 1, 1>}, {transform_indices = @transform_8, window_bounds = array<i64: 1, 8, 32>}]} {
    %c0 = arith.constant 0 : index
    %c0_0 = arith.constant 0 : index
    %c0_1 = arith.constant 0 : index
    %0 = vector.load %arg1[%c0, %c0_0, %c0_1] : memref<1x8x16xf32, #tpu.memory_space<vmem>>, vector<1x8x16xf32>
    %1 = vector.shape_cast %0 : vector<1x8x16xf32> to vector<8x16xf32>
    %cst = arith.constant 0.000000e+00 : f32
    %2 = vector.broadcast %cst : f32 to vector<1x16xf32>
    %3 = tpu.concatenate %2, %1 in 0 : vector<1x16xf32>, vector<8x16xf32> -> vector<9x16xf32>
    %4 = vector.extract_strided_slice %3 {offsets = [0, 0], sizes = [8, 16], strides = [1, 1]} : vector<9x16xf32> to vector<8x16xf32>
    %5 = vector.extract_strided_slice %3 {offsets = [1, 0], sizes = [8, 16], strides = [1, 1]} : vector<9x16xf32> to vector<8x16xf32>
    %6 = tpu.concatenate %4, %5 in 1 : vector<8x16xf32>, vector<8x16xf32> -> vector<8x32xf32>
    %7 = arith.truncf %6 : vector<8x32xf32> to vector<8x32xbf16>
    %c0_2 = arith.constant 0 : index
    %c0_3 = arith.constant 0 : index
    %8 = vector.load %arg3[%c0_2, %c0_3] : memref<32x32xbf16, #tpu.memory_space<vmem>>, vector<32x32xbf16>
    %cst_4 = arith.constant dense<0.000000e+00> : vector<8x32xf32>
    %9 = tpu.matmul %7, %8, %cst_4 {dimension_numbers = #tpu.dot_dimension_numbers<[1], [0], [0], [1], [0, 0, 1, 1], [], []>} : vector<8x32xbf16>, vector<32x32xbf16>, vector<8x32xf32> -> vector<8x32xf32>
    %c0_5 = arith.constant 0 : index
    %c0_6 = arith.constant 0 : index
    %c0_7 = arith.constant 0 : index
    %10 = vector.load %arg2[%c0_5, %c0_6, %c0_7] : memref<1x8x16xf32, #tpu.memory_space<vmem>>, vector<1x8x16xf32>
    %11 = vector.shape_cast %10 : vector<1x8x16xf32> to vector<8x16xf32>
    %cst_8 = arith.constant 0.000000e+00 : f32
    %12 = vector.broadcast %cst_8 : f32 to vector<1x16xf32>
    %13 = tpu.concatenate %12, %11 in 0 : vector<1x16xf32>, vector<8x16xf32> -> vector<9x16xf32>
    %14 = vector.extract_strided_slice %13 {offsets = [0, 0], sizes = [8, 16], strides = [1, 1]} : vector<9x16xf32> to vector<8x16xf32>
    %15 = vector.extract_strided_slice %13 {offsets = [1, 0], sizes = [8, 16], strides = [1, 1]} : vector<9x16xf32> to vector<8x16xf32>
    %16 = tpu.concatenate %14, %15 in 1 : vector<8x16xf32>, vector<8x16xf32> -> vector<8x32xf32>
    %17 = arith.truncf %16 : vector<8x32xf32> to vector<8x32xbf16>
    %c0_9 = arith.constant 0 : index
    %c0_10 = arith.constant 0 : index
    %18 = vector.load %arg4[%c0_9, %c0_10] : memref<32x32xbf16, #tpu.memory_space<vmem>>, vector<32x32xbf16>
    %cst_11 = arith.constant dense<0.000000e+00> : vector<8x32xf32>
    %19 = tpu.matmul %17, %18, %cst_11 {dimension_numbers = #tpu.dot_dimension_numbers<[1], [0], [0], [1], [0, 0, 1, 1], [], []>} : vector<8x32xbf16>, vector<32x32xbf16>, vector<8x32xf32> -> vector<8x32xf32>
    %20 = arith.addf %9, %19 : vector<8x32xf32>
    %c0_12 = arith.constant 0 : index
    %c0_13 = arith.constant 0 : index
    %21 = vector.load %arg5[%c0_12, %c0_13] : memref<1x32xf32, #tpu.memory_space<vmem>>, vector<1x32xf32>
    %22 = vector.broadcast %21 : vector<1x32xf32> to vector<8x32xf32>
    %23 = arith.addf %20, %22 : vector<8x32xf32>
    %cst_14 = arith.constant dense<0.000000e+00> : vector<32xf32>
    %24 = vector.multi_reduction <add>, %23, %cst_14 [0] : vector<8x32xf32> to vector<32xf32>
    %25 = vector.shape_cast %24 : vector<32xf32> to vector<1x32xf32>
    %26 = vector.extract_strided_slice %25 {offsets = [0, 0], sizes = [1, 8], strides = [1, 1]} : vector<1x32xf32> to vector<1x8xf32>
    %27 = vector.extract_strided_slice %25 {offsets = [0, 8], sizes = [1, 8], strides = [1, 1]} : vector<1x32xf32> to vector<1x8xf32>
    %28 = arith.addf %26, %27 : vector<1x8xf32>
    %29 = vector.extract_strided_slice %25 {offsets = [0, 16], sizes = [1, 8], strides = [1, 1]} : vector<1x32xf32> to vector<1x8xf32>
    %30 = arith.addf %28, %29 : vector<1x8xf32>
    %31 = vector.extract_strided_slice %25 {offsets = [0, 24], sizes = [1, 8], strides = [1, 1]} : vector<1x32xf32> to vector<1x8xf32>
    %32 = arith.addf %30, %31 : vector<1x8xf32>
    %cst_15 = arith.constant 3.125000e-02 : f32
    %33 = vector.broadcast %cst_15 : f32 to vector<1x8xf32>
    %34 = arith.mulf %32, %33 : vector<1x8xf32>
    %35 = tpu.concatenate %34, %34, %34, %34 in 1 : vector<1x8xf32>, vector<1x8xf32>, vector<1x8xf32>, vector<1x8xf32> -> vector<1x32xf32>
    %36 = vector.broadcast %35 : vector<1x32xf32> to vector<8x32xf32>
    %37 = arith.subf %23, %36 : vector<8x32xf32>
    %38 = arith.mulf %37, %37 : vector<8x32xf32>
    %cst_16 = arith.constant dense<0.000000e+00> : vector<32xf32>
    %39 = vector.multi_reduction <add>, %38, %cst_16 [0] : vector<8x32xf32> to vector<32xf32>
    %40 = vector.shape_cast %39 : vector<32xf32> to vector<1x32xf32>
    %41 = vector.extract_strided_slice %40 {offsets = [0, 0], sizes = [1, 8], strides = [1, 1]} : vector<1x32xf32> to vector<1x8xf32>
    %42 = vector.extract_strided_slice %40 {offsets = [0, 8], sizes = [1, 8], strides = [1, 1]} : vector<1x32xf32> to vector<1x8xf32>
    %43 = arith.addf %41, %42 : vector<1x8xf32>
    %44 = vector.extract_strided_slice %40 {offsets = [0, 16], sizes = [1, 8], strides = [1, 1]} : vector<1x32xf32> to vector<1x8xf32>
    %45 = arith.addf %43, %44 : vector<1x8xf32>
    %46 = vector.extract_strided_slice %40 {offsets = [0, 24], sizes = [1, 8], strides = [1, 1]} : vector<1x32xf32> to vector<1x8xf32>
    %47 = arith.addf %45, %46 : vector<1x8xf32>
    %cst_17 = arith.constant 3.125000e-02 : f32
    %48 = vector.broadcast %cst_17 : f32 to vector<1x8xf32>
    %49 = arith.mulf %47, %48 : vector<1x8xf32>
    %50 = tpu.concatenate %49, %49, %49, %49 in 1 : vector<1x8xf32>, vector<1x8xf32>, vector<1x8xf32>, vector<1x8xf32> -> vector<1x32xf32>
    %cst_18 = arith.constant 9.99999974E-6 : f32
    %51 = vector.broadcast %cst_18 : f32 to vector<1x32xf32>
    %52 = arith.addf %50, %51 : vector<1x32xf32>
    %53 = math.rsqrt %52 : vector<1x32xf32>
    %54 = vector.broadcast %53 : vector<1x32xf32> to vector<8x32xf32>
    %55 = arith.mulf %37, %54 : vector<8x32xf32>
    %c0_19 = arith.constant 0 : index
    %c0_20 = arith.constant 0 : index
    %56 = vector.load %arg6[%c0_19, %c0_20] : memref<1x32xf32, #tpu.memory_space<vmem>>, vector<1x32xf32>
    %57 = vector.broadcast %56 : vector<1x32xf32> to vector<8x32xf32>
    %58 = arith.mulf %55, %57 : vector<8x32xf32>
    %c0_21 = arith.constant 0 : index
    %c0_22 = arith.constant 0 : index
    %59 = vector.load %arg7[%c0_21, %c0_22] : memref<1x32xf32, #tpu.memory_space<vmem>>, vector<1x32xf32>
    %60 = vector.broadcast %59 : vector<1x32xf32> to vector<8x32xf32>
    %61 = arith.addf %58, %60 : vector<8x32xf32>
    %cst_23 = arith.constant 0.000000e+00 : f32
    %62 = vector.broadcast %cst_23 : f32 to vector<8x32xf32>
    %63 = arith.cmpf oge, %61, %62 : vector<8x32xf32>
    %c0_24 = arith.constant 0 : index
    %c0_25 = arith.constant 0 : index
    %64 = vector.load %arg8[%c0_24, %c0_25] : memref<1x1xf32, #tpu.memory_space<vmem>>, vector<1x1xf32>
    %65 = vector.broadcast %64 : vector<1x1xf32> to vector<8x32xf32>
    %66 = arith.mulf %65, %61 : vector<8x32xf32>
    %67 = arith.select %63, %61, %66 : vector<8x32xi1>, vector<8x32xf32>
    %c0_26 = arith.constant 0 : index
    %c0_27 = arith.constant 0 : index
    %c0_28 = arith.constant 0 : index
    %68 = vector.load %arg9[%c0_26, %c0_27, %c0_28] : memref<1x8x32xf32, #tpu.memory_space<vmem>>, vector<1x8x32xf32>
    %69 = vector.shape_cast %68 : vector<1x8x32xf32> to vector<8x32xf32>
    %70 = vector.shape_cast %67 : vector<8x32xf32> to vector<1x8x32xf32>
    tpu.vector_store %arg9[%c0_26, %c0_27, %c0_28], %70 {strides = array<i32>} : memref<1x8x32xf32, #tpu.memory_space<vmem>>, vector<1x8x32xf32>,
    return
  }
  func.func @transform_0(%arg0: i32) -> (i32, i32, i32) {
    %c0_i32 = arith.constant 0 : i32
    %c0_i32_0 = arith.constant 0 : i32
    %c0_i32_1 = arith.constant 0 : i32
    return %arg0, %c0_i32, %c0_i32_0 : i32, i32, i32
  }
  func.func @transform_1(%arg0: i32) -> (i32, i32, i32) {
    %c0_i32 = arith.constant 0 : i32
    %c0_i32_0 = arith.constant 0 : i32
    %c0_i32_1 = arith.constant 0 : i32
    return %arg0, %c0_i32, %c0_i32_0 : i32, i32, i32
  }
  func.func @transform_2(%arg0: i32) -> (i32, i32) {
    %c0_i32 = arith.constant 0 : i32
    %c0_i32_0 = arith.constant 0 : i32
    %c0_i32_1 = arith.constant 0 : i32
    return %c0_i32, %c0_i32_0 : i32, i32
  }
  func.func @transform_3(%arg0: i32) -> (i32, i32) {
    %c0_i32 = arith.constant 0 : i32
    %c0_i32_0 = arith.constant 0 : i32
    %c0_i32_1 = arith.constant 0 : i32
    return %c0_i32, %c0_i32_0 : i32, i32
  }
  func.func @transform_4(%arg0: i32) -> (i32, i32) {
    %c0_i32 = arith.constant 0 : i32
    %c0_i32_0 = arith.constant 0 : i32
    %c0_i32_1 = arith.constant 0 : i32
    return %c0_i32, %c0_i32_0 : i32, i32
  }
  func.func @transform_5(%arg0: i32) -> (i32, i32) {
    %c0_i32 = arith.constant 0 : i32
    %c0_i32_0 = arith.constant 0 : i32
    %c0_i32_1 = arith.constant 0 : i32
    return %c0_i32, %c0_i32_0 : i32, i32
  }
  func.func @transform_6(%arg0: i32) -> (i32, i32) {
    %c0_i32 = arith.constant 0 : i32
    %c0_i32_0 = arith.constant 0 : i32
    %c0_i32_1 = arith.constant 0 : i32
    return %c0_i32, %c0_i32_0 : i32, i32
  }
  func.func @transform_7(%arg0: i32) -> (i32, i32) {
    %c0_i32 = arith.constant 0 : i32
    %c0_i32_0 = arith.constant 0 : i32
    %c0_i32_1 = arith.constant 0 : i32
    return %c0_i32, %c0_i32_0 : i32, i32
  }
  func.func @transform_8(%arg0: i32) -> (i32, i32, i32) {
    %c0_i32 = arith.constant 0 : i32
    %c0_i32_0 = arith.constant 0 : i32
    %c0_i32_1 = arith.constant 0 : i32
    return %arg0, %c0_i32, %c0_i32_0 : i32, i32, i32
  }
}

module attributes {stable_mosaic.version = 11 : i64} {
  func.func @_conv_layer_kernel(%arg0: i32, %arg1: memref<1x8x32xf32, #tpu.memory_space<vmem>>, %arg2: memref<1x8x32xf32, #tpu.memory_space<vmem>>, %arg3: memref<64x64xbf16, #tpu.memory_space<vmem>>, %arg4: memref<64x64xbf16, #tpu.memory_space<vmem>>, %arg5: memref<1x64xf32, #tpu.memory_space<vmem>>, %arg6: memref<1x64xf32, #tpu.memory_space<vmem>>, %arg7: memref<1x64xf32, #tpu.memory_space<vmem>>, %arg8: memref<1x1xf32, #tpu.memory_space<vmem>>, %arg9: memref<1x8x64xf32, #tpu.memory_space<vmem>>) attributes {dimension_semantics = [#tpu.dimension_semantics<parallel>], iteration_bounds = array<i64: 2>, scalar_prefetch = 0 : i64, scratch_operands = 0 : i64, tpu.core_type = #tpu.core_type<tc>, window_params = [{transform_indices = @transform_0, window_bounds = array<i64: 1, 8, 32>}, {transform_indices = @transform_1, window_bounds = array<i64: 1, 8, 32>}, {pipeline_mode = #tpu.pipeline_mode<synchronous>, transform_indices = @transform_2, window_bounds = array<i64: 64, 64>}, {pipeline_mode = #tpu.pipeline_mode<synchronous>, transform_indices = @transform_3, window_bounds = array<i64: 64, 64>}, {pipeline_mode = #tpu.pipeline_mode<synchronous>, transform_indices = @transform_4, window_bounds = array<i64: 1, 64>}, {pipeline_mode = #tpu.pipeline_mode<synchronous>, transform_indices = @transform_5, window_bounds = array<i64: 1, 64>}, {pipeline_mode = #tpu.pipeline_mode<synchronous>, transform_indices = @transform_6, window_bounds = array<i64: 1, 64>}, {pipeline_mode = #tpu.pipeline_mode<synchronous>, transform_indices = @transform_7, window_bounds = array<i64: 1, 1>}, {transform_indices = @transform_8, window_bounds = array<i64: 1, 8, 64>}]} {
    %c0 = arith.constant 0 : index
    %c0_0 = arith.constant 0 : index
    %c0_1 = arith.constant 0 : index
    %0 = vector.load %arg1[%c0, %c0_0, %c0_1] : memref<1x8x32xf32, #tpu.memory_space<vmem>>, vector<1x8x32xf32>
    %1 = vector.shape_cast %0 : vector<1x8x32xf32> to vector<8x32xf32>
    %cst = arith.constant 0.000000e+00 : f32
    %2 = vector.broadcast %cst : f32 to vector<1x32xf32>
    %3 = tpu.concatenate %2, %1 in 0 : vector<1x32xf32>, vector<8x32xf32> -> vector<9x32xf32>
    %4 = vector.extract_strided_slice %3 {offsets = [0, 0], sizes = [8, 32], strides = [1, 1]} : vector<9x32xf32> to vector<8x32xf32>
    %5 = vector.extract_strided_slice %3 {offsets = [1, 0], sizes = [8, 32], strides = [1, 1]} : vector<9x32xf32> to vector<8x32xf32>
    %6 = tpu.concatenate %4, %5 in 1 : vector<8x32xf32>, vector<8x32xf32> -> vector<8x64xf32>
    %7 = arith.truncf %6 : vector<8x64xf32> to vector<8x64xbf16>
    %c0_2 = arith.constant 0 : index
    %c0_3 = arith.constant 0 : index
    %8 = vector.load %arg3[%c0_2, %c0_3] : memref<64x64xbf16, #tpu.memory_space<vmem>>, vector<64x64xbf16>
    %cst_4 = arith.constant dense<0.000000e+00> : vector<8x64xf32>
    %9 = tpu.matmul %7, %8, %cst_4 {dimension_numbers = #tpu.dot_dimension_numbers<[1], [0], [0], [1], [0, 0, 1, 1], [], []>} : vector<8x64xbf16>, vector<64x64xbf16>, vector<8x64xf32> -> vector<8x64xf32>
    %c0_5 = arith.constant 0 : index
    %c0_6 = arith.constant 0 : index
    %c0_7 = arith.constant 0 : index
    %10 = vector.load %arg2[%c0_5, %c0_6, %c0_7] : memref<1x8x32xf32, #tpu.memory_space<vmem>>, vector<1x8x32xf32>
    %11 = vector.shape_cast %10 : vector<1x8x32xf32> to vector<8x32xf32>
    %cst_8 = arith.constant 0.000000e+00 : f32
    %12 = vector.broadcast %cst_8 : f32 to vector<1x32xf32>
    %13 = tpu.concatenate %12, %11 in 0 : vector<1x32xf32>, vector<8x32xf32> -> vector<9x32xf32>
    %14 = vector.extract_strided_slice %13 {offsets = [0, 0], sizes = [8, 32], strides = [1, 1]} : vector<9x32xf32> to vector<8x32xf32>
    %15 = vector.extract_strided_slice %13 {offsets = [1, 0], sizes = [8, 32], strides = [1, 1]} : vector<9x32xf32> to vector<8x32xf32>
    %16 = tpu.concatenate %14, %15 in 1 : vector<8x32xf32>, vector<8x32xf32> -> vector<8x64xf32>
    %17 = arith.truncf %16 : vector<8x64xf32> to vector<8x64xbf16>
    %c0_9 = arith.constant 0 : index
    %c0_10 = arith.constant 0 : index
    %18 = vector.load %arg4[%c0_9, %c0_10] : memref<64x64xbf16, #tpu.memory_space<vmem>>, vector<64x64xbf16>
    %cst_11 = arith.constant dense<0.000000e+00> : vector<8x64xf32>
    %19 = tpu.matmul %17, %18, %cst_11 {dimension_numbers = #tpu.dot_dimension_numbers<[1], [0], [0], [1], [0, 0, 1, 1], [], []>} : vector<8x64xbf16>, vector<64x64xbf16>, vector<8x64xf32> -> vector<8x64xf32>
    %20 = arith.addf %9, %19 : vector<8x64xf32>
    %c0_12 = arith.constant 0 : index
    %c0_13 = arith.constant 0 : index
    %21 = vector.load %arg5[%c0_12, %c0_13] : memref<1x64xf32, #tpu.memory_space<vmem>>, vector<1x64xf32>
    %22 = vector.broadcast %21 : vector<1x64xf32> to vector<8x64xf32>
    %23 = arith.addf %20, %22 : vector<8x64xf32>
    %cst_14 = arith.constant dense<0.000000e+00> : vector<64xf32>
    %24 = vector.multi_reduction <add>, %23, %cst_14 [0] : vector<8x64xf32> to vector<64xf32>
    %25 = vector.shape_cast %24 : vector<64xf32> to vector<1x64xf32>
    %26 = vector.extract_strided_slice %25 {offsets = [0, 0], sizes = [1, 8], strides = [1, 1]} : vector<1x64xf32> to vector<1x8xf32>
    %27 = vector.extract_strided_slice %25 {offsets = [0, 8], sizes = [1, 8], strides = [1, 1]} : vector<1x64xf32> to vector<1x8xf32>
    %28 = arith.addf %26, %27 : vector<1x8xf32>
    %29 = vector.extract_strided_slice %25 {offsets = [0, 16], sizes = [1, 8], strides = [1, 1]} : vector<1x64xf32> to vector<1x8xf32>
    %30 = arith.addf %28, %29 : vector<1x8xf32>
    %31 = vector.extract_strided_slice %25 {offsets = [0, 24], sizes = [1, 8], strides = [1, 1]} : vector<1x64xf32> to vector<1x8xf32>
    %32 = arith.addf %30, %31 : vector<1x8xf32>
    %33 = vector.extract_strided_slice %25 {offsets = [0, 32], sizes = [1, 8], strides = [1, 1]} : vector<1x64xf32> to vector<1x8xf32>
    %34 = arith.addf %32, %33 : vector<1x8xf32>
    %35 = vector.extract_strided_slice %25 {offsets = [0, 40], sizes = [1, 8], strides = [1, 1]} : vector<1x64xf32> to vector<1x8xf32>
    %36 = arith.addf %34, %35 : vector<1x8xf32>
    %37 = vector.extract_strided_slice %25 {offsets = [0, 48], sizes = [1, 8], strides = [1, 1]} : vector<1x64xf32> to vector<1x8xf32>
    %38 = arith.addf %36, %37 : vector<1x8xf32>
    %39 = vector.extract_strided_slice %25 {offsets = [0, 56], sizes = [1, 8], strides = [1, 1]} : vector<1x64xf32> to vector<1x8xf32>
    %40 = arith.addf %38, %39 : vector<1x8xf32>
    %cst_15 = arith.constant 1.562500e-02 : f32
    %41 = vector.broadcast %cst_15 : f32 to vector<1x8xf32>
    %42 = arith.mulf %40, %41 : vector<1x8xf32>
    %43 = tpu.concatenate %42, %42, %42, %42, %42, %42, %42, %42 in 1 : vector<1x8xf32>, vector<1x8xf32>, vector<1x8xf32>, vector<1x8xf32>, vector<1x8xf32>, vector<1x8xf32>, vector<1x8xf32>, vector<1x8xf32> -> vector<1x64xf32>
    %44 = vector.broadcast %43 : vector<1x64xf32> to vector<8x64xf32>
    %45 = arith.subf %23, %44 : vector<8x64xf32>
    %46 = arith.mulf %45, %45 : vector<8x64xf32>
    %cst_16 = arith.constant dense<0.000000e+00> : vector<64xf32>
    %47 = vector.multi_reduction <add>, %46, %cst_16 [0] : vector<8x64xf32> to vector<64xf32>
    %48 = vector.shape_cast %47 : vector<64xf32> to vector<1x64xf32>
    %49 = vector.extract_strided_slice %48 {offsets = [0, 0], sizes = [1, 8], strides = [1, 1]} : vector<1x64xf32> to vector<1x8xf32>
    %50 = vector.extract_strided_slice %48 {offsets = [0, 8], sizes = [1, 8], strides = [1, 1]} : vector<1x64xf32> to vector<1x8xf32>
    %51 = arith.addf %49, %50 : vector<1x8xf32>
    %52 = vector.extract_strided_slice %48 {offsets = [0, 16], sizes = [1, 8], strides = [1, 1]} : vector<1x64xf32> to vector<1x8xf32>
    %53 = arith.addf %51, %52 : vector<1x8xf32>
    %54 = vector.extract_strided_slice %48 {offsets = [0, 24], sizes = [1, 8], strides = [1, 1]} : vector<1x64xf32> to vector<1x8xf32>
    %55 = arith.addf %53, %54 : vector<1x8xf32>
    %56 = vector.extract_strided_slice %48 {offsets = [0, 32], sizes = [1, 8], strides = [1, 1]} : vector<1x64xf32> to vector<1x8xf32>
    %57 = arith.addf %55, %56 : vector<1x8xf32>
    %58 = vector.extract_strided_slice %48 {offsets = [0, 40], sizes = [1, 8], strides = [1, 1]} : vector<1x64xf32> to vector<1x8xf32>
    %59 = arith.addf %57, %58 : vector<1x8xf32>
    %60 = vector.extract_strided_slice %48 {offsets = [0, 48], sizes = [1, 8], strides = [1, 1]} : vector<1x64xf32> to vector<1x8xf32>
    %61 = arith.addf %59, %60 : vector<1x8xf32>
    %62 = vector.extract_strided_slice %48 {offsets = [0, 56], sizes = [1, 8], strides = [1, 1]} : vector<1x64xf32> to vector<1x8xf32>
    %63 = arith.addf %61, %62 : vector<1x8xf32>
    %cst_17 = arith.constant 1.562500e-02 : f32
    %64 = vector.broadcast %cst_17 : f32 to vector<1x8xf32>
    %65 = arith.mulf %63, %64 : vector<1x8xf32>
    %66 = tpu.concatenate %65, %65, %65, %65, %65, %65, %65, %65 in 1 : vector<1x8xf32>, vector<1x8xf32>, vector<1x8xf32>, vector<1x8xf32>, vector<1x8xf32>, vector<1x8xf32>, vector<1x8xf32>, vector<1x8xf32> -> vector<1x64xf32>
    %cst_18 = arith.constant 9.99999974E-6 : f32
    %67 = vector.broadcast %cst_18 : f32 to vector<1x64xf32>
    %68 = arith.addf %66, %67 : vector<1x64xf32>
    %69 = math.rsqrt %68 : vector<1x64xf32>
    %70 = vector.broadcast %69 : vector<1x64xf32> to vector<8x64xf32>
    %71 = arith.mulf %45, %70 : vector<8x64xf32>
    %c0_19 = arith.constant 0 : index
    %c0_20 = arith.constant 0 : index
    %72 = vector.load %arg6[%c0_19, %c0_20] : memref<1x64xf32, #tpu.memory_space<vmem>>, vector<1x64xf32>
    %73 = vector.broadcast %72 : vector<1x64xf32> to vector<8x64xf32>
    %74 = arith.mulf %71, %73 : vector<8x64xf32>
    %c0_21 = arith.constant 0 : index
    %c0_22 = arith.constant 0 : index
    %75 = vector.load %arg7[%c0_21, %c0_22] : memref<1x64xf32, #tpu.memory_space<vmem>>, vector<1x64xf32>
    %76 = vector.broadcast %75 : vector<1x64xf32> to vector<8x64xf32>
    %77 = arith.addf %74, %76 : vector<8x64xf32>
    %cst_23 = arith.constant 0.000000e+00 : f32
    %78 = vector.broadcast %cst_23 : f32 to vector<8x64xf32>
    %79 = arith.cmpf oge, %77, %78 : vector<8x64xf32>
    %c0_24 = arith.constant 0 : index
    %c0_25 = arith.constant 0 : index
    %80 = vector.load %arg8[%c0_24, %c0_25] : memref<1x1xf32, #tpu.memory_space<vmem>>, vector<1x1xf32>
    %81 = vector.broadcast %80 : vector<1x1xf32> to vector<8x64xf32>
    %82 = arith.mulf %81, %77 : vector<8x64xf32>
    %83 = arith.select %79, %77, %82 : vector<8x64xi1>, vector<8x64xf32>
    %c0_26 = arith.constant 0 : index
    %c0_27 = arith.constant 0 : index
    %c0_28 = arith.constant 0 : index
    %84 = vector.load %arg9[%c0_26, %c0_27, %c0_28] : memref<1x8x64xf32, #tpu.memory_space<vmem>>, vector<1x8x64xf32>
    %85 = vector.shape_cast %84 : vector<1x8x64xf32> to vector<8x64xf32>
    %86 = vector.shape_cast %83 : vector<8x64xf32> to vector<1x8x64xf32>
    tpu.vector_store %arg9[%c0_26, %c0_27, %c0_28], %86 {strides = array<i32>} : memref<1x8x64xf32, #tpu.memory_space<vmem>>, vector<1x8x64xf32>,
    return
  }
  func.func @transform_0(%arg0: i32) -> (i32, i32, i32) {
    %c0_i32 = arith.constant 0 : i32
    %c0_i32_0 = arith.constant 0 : i32
    %c0_i32_1 = arith.constant 0 : i32
    return %arg0, %c0_i32, %c0_i32_0 : i32, i32, i32
  }
  func.func @transform_1(%arg0: i32) -> (i32, i32, i32) {
    %c0_i32 = arith.constant 0 : i32
    %c0_i32_0 = arith.constant 0 : i32
    %c0_i32_1 = arith.constant 0 : i32
    return %arg0, %c0_i32, %c0_i32_0 : i32, i32, i32
  }
  func.func @transform_2(%arg0: i32) -> (i32, i32) {
    %c0_i32 = arith.constant 0 : i32
    %c0_i32_0 = arith.constant 0 : i32
    %c0_i32_1 = arith.constant 0 : i32
    return %c0_i32, %c0_i32_0 : i32, i32
  }
  func.func @transform_3(%arg0: i32) -> (i32, i32) {
    %c0_i32 = arith.constant 0 : i32
    %c0_i32_0 = arith.constant 0 : i32
    %c0_i32_1 = arith.constant 0 : i32
    return %c0_i32, %c0_i32_0 : i32, i32
  }
  func.func @transform_4(%arg0: i32) -> (i32, i32) {
    %c0_i32 = arith.constant 0 : i32
    %c0_i32_0 = arith.constant 0 : i32
    %c0_i32_1 = arith.constant 0 : i32
    return %c0_i32, %c0_i32_0 : i32, i32
  }
  func.func @transform_5(%arg0: i32) -> (i32, i32) {
    %c0_i32 = arith.constant 0 : i32
    %c0_i32_0 = arith.constant 0 : i32
    %c0_i32_1 = arith.constant 0 : i32
    return %c0_i32, %c0_i32_0 : i32, i32
  }
  func.func @transform_6(%arg0: i32) -> (i32, i32) {
    %c0_i32 = arith.constant 0 : i32
    %c0_i32_0 = arith.constant 0 : i32
    %c0_i32_1 = arith.constant 0 : i32
    return %c0_i32, %c0_i32_0 : i32, i32
  }
  func.func @transform_7(%arg0: i32) -> (i32, i32) {
    %c0_i32 = arith.constant 0 : i32
    %c0_i32_0 = arith.constant 0 : i32
    %c0_i32_1 = arith.constant 0 : i32
    return %c0_i32, %c0_i32_0 : i32, i32
  }
  func.func @transform_8(%arg0: i32) -> (i32, i32, i32) {
    %c0_i32 = arith.constant 0 : i32
    %c0_i32_0 = arith.constant 0 : i32
    %c0_i32_1 = arith.constant 0 : i32
    return %arg0, %c0_i32, %c0_i32_0 : i32, i32, i32
  }
}

</mosaic_0001>

<llo_original>
// kernel: tcnn_forward.7
$region0: #{tcnn_forward.7}
  #allocation0 [shape = 'u32[]', space=smem, size = 0x4, offset = 0x4, fixed_abs, tag = 'smem constant byte address 0x4 - core index']
  #allocation1 [shape = 'u32[72,128]{1,0:T(1,128)}', space=vmem, size = 0x9000, scoped, tag = 'internal scratch']
  #allocation2 [shape = 'f32[1,1]{1,0:T(1,128)S(1)}', space=vmem, size = 0x200, scoped, tag = 'scoped memory for tcnn_forward.7']
  %s0 = inlined_call_operand.vmem [shape: f32[2,8,16], index: 0, kind: input, shape index: {}]
  %s1 = inlined_call_operand.vmem [shape: bf16[32,64], index: 1, kind: input, shape index: {}]
  %s2 = inlined_call_operand.vmem [shape: f32[1,64], index: 2, kind: input, shape index: {}]
  %s3 = inlined_call_operand.vmem [shape: f32[1,64], index: 3, kind: input, shape index: {}]
  %s4 = inlined_call_operand.vmem [shape: f32[1,64], index: 4, kind: input, shape index: {}]
  %s5 = inlined_call_operand.<no memory space> [shape: f32[1,1], index: 5, kind: input, shape index: {}]
  %s6 = inlined_call_operand.vmem [shape: f32[2,8,64], index: 6, kind: output, shape index: {}]
  %s7 = sld [smem:[#allocation0]]
  $region57: #{tcnn_forward.7} parent=0
    _
  %s9 = ssub.s32 1, %s7
  %s10 = scalar_select 0, %s9, %s7
  %v11 = vstv %s5
  %12 = vst [vmem:[#allocation2] sm:$0x1] %v11
  loop: start=0, step=1, limit=4
  $region2: #{tcnn_forward.7} parent=0 // loop_pre_header
    _
  $region3: #{tcnn_forward.7} parent=0 // loop_header
    %s14 = sphi 0, %s18
    %p15 = scmp.ge.s32.totalorder %s14, 4
    %s24 = sphi 0, %s26
    %s27 = sphi 0, %s24
    %s28 = sphi 0, %s27
    %s44 = sphi 0, %s28
    %s48 = sphi 0, %s48
    %s50 = sphi 0, %s48
    %s51 = sphi 0, %s50
    %s65 = sphi 0, %s51
    %s69 = sphi 0, %s69
    %s71 = sphi 0, %s69
    %s72 = sphi 0, %s71
    %s86 = sphi 0, %s72
    %s90 = sphi 0, %s90
    %s92 = sphi 0, %s90
    %s93 = sphi 0, %s92
    %s107 = sphi 0, %s93
    %s111 = sphi 0, %s111
    %s113 = sphi 0, %s111
    %s114 = sphi 0, %s113
    %s128 = sphi 0, %s114
    %s132 = sphi 0, %s132
    %s134 = sphi 0, %s132
    %s135 = sphi 0, %s134
    %s149 = sphi 0, %s135
    %s155 = sphi 0, %s157
    %s158 = sphi 0, %s155
    %s159 = sphi 0, %s158
    %s175 = sphi 0, %s159
  $region4: #{tcnn_forward.7} parent=0 // loop_header_branch
    %17 = sbr.rel (%p15) target = $region8
  $region5: #{tcnn_forward.7} parent=0 // loop_body
    %s19 = ssub.s32 %s14, 1
    %s20 = ssub.s32 %s14, 2
    %s21 = sadd.s32 %s14, 1
    %s22 = ssub.s32 %s14, %s21
    %p23 = scmp.eq.s32.totalorder %s22, 0
    %s25 = sadd.s32 %s24, 1
    %s26 = scalar_select %p23, %s24, %s25
    %p29 = pneg %p23
    %p30 = scmp.eq.s32.totalorder %s14, 1
    %p31 = por %p29, %p30
    %p32 = scmp.ne.s32.totalorder %s24, %s27
    %p33 = scmp.eq.s32.totalorder %s14, 0
    %p34 = por %p32, %p33
    %p35 = scmp.ne.s32.totalorder %s24, %s27
    %p36 = scmp.eq.s32.totalorder %s19, 1
    %p37 = por %p35, %p36
    %p38 = scmp.ne.s32.totalorder %s27, %s28
    %p39 = scmp.eq.s32.totalorder %s19, 0
    %p40 = por %p38, %p39
    %p41 = scmp.ne.s32.totalorder %s27, %s28
    %p42 = scmp.eq.s32.totalorder %s20, 1
    %p43 = por %p41, %p42
    %p45 = scmp.ne.s32.totalorder %s28, %s44
    %p46 = scmp.eq.s32.totalorder %s20, 0
    %p47 = por %p45, %p46
    %s49 = sadd.s32 %s48, 1
    %p52 = scmp.eq.s32.totalorder %s14, 1
    %p53 = scmp.ne.s32.totalorder %s48, %s50
    %p54 = scmp.eq.s32.totalorder %s14, 0
    %p55 = por %p53, %p54
    %p56 = scmp.ne.s32.totalorder %s48, %s50
    %p57 = scmp.eq.s32.totalorder %s19, 1
    %p58 = por %p56, %p57
    %p59 = scmp.ne.s32.totalorder %s50, %s51
    %p60 = scmp.eq.s32.totalorder %s19, 0
    %p61 = por %p59, %p60
    %p62 = scmp.ne.s32.totalorder %s50, %s51
    %p63 = scmp.eq.s32.totalorder %s20, 1
    %p64 = por %p62, %p63
    %p66 = scmp.ne.s32.totalorder %s51, %s65
    %p67 = scmp.eq.s32.totalorder %s20, 0
    %p68 = por %p66, %p67
    %s70 = sadd.s32 %s69, 1
    %p73 = scmp.eq.s32.totalorder %s14, 1
    %p74 = scmp.ne.s32.totalorder %s69, %s71
    %p75 = scmp.eq.s32.totalorder %s14, 0
    %p76 = por %p74, %p75
    %p77 = scmp.ne.s32.totalorder %s69, %s71
    %p78 = scmp.eq.s32.totalorder %s19, 1
    %p79 = por %p77, %p78
    %p80 = scmp.ne.s32.totalorder %s71, %s72
    %p81 = scmp.eq.s32.totalorder %s19, 0
    %p82 = por %p80, %p81
    %p83 = scmp.ne.s32.totalorder %s71, %s72
    %p84 = scmp.eq.s32.totalorder %s20, 1
    %p85 = por %p83, %p84
    %p87 = scmp.ne.s32.totalorder %s72, %s86
    %p88 = scmp.eq.s32.totalorder %s20, 0
    %p89 = por %p87, %p88
    %s91 = sadd.s32 %s90, 1
    %p94 = scmp.eq.s32.totalorder %s14, 1
    %p95 = scmp.ne.s32.totalorder %s90, %s92
    %p96 = scmp.eq.s32.totalorder %s14, 0
    %p97 = por %p95, %p96
    %p98 = scmp.ne.s32.totalorder %s90, %s92
    %p99 = scmp.eq.s32.totalorder %s19, 1
    %p100 = por %p98, %p99
    %p101 = scmp.ne.s32.totalorder %s92, %s93
    %p102 = scmp.eq.s32.totalorder %s19, 0
    %p103 = por %p101, %p102
    %p104 = scmp.ne.s32.totalorder %s92, %s93
    %p105 = scmp.eq.s32.totalorder %s20, 1
    %p106 = por %p104, %p105
    %p108 = scmp.ne.s32.totalorder %s93, %s107
    %p109 = scmp.eq.s32.totalorder %s20, 0
    %p110 = por %p108, %p109
    %s112 = sadd.s32 %s111, 1
    %p115 = scmp.eq.s32.totalorder %s14, 1
    %p116 = scmp.ne.s32.totalorder %s111, %s113
    %p117 = scmp.eq.s32.totalorder %s14, 0
    %p118 = por %p116, %p117
    %p119 = scmp.ne.s32.totalorder %s111, %s113
    %p120 = scmp.eq.s32.totalorder %s19, 1
    %p121 = por %p119, %p120
    %p122 = scmp.ne.s32.totalorder %s113, %s114
    %p123 = scmp.eq.s32.totalorder %s19, 0
    %p124 = por %p122, %p123
    %p125 = scmp.ne.s32.totalorder %s113, %s114
    %p126 = scmp.eq.s32.totalorder %s20, 1
    %p127 = por %p125, %p126
    %p129 = scmp.ne.s32.totalorder %s114, %s128
    %p130 = scmp.eq.s32.totalorder %s20, 0
    %p131 = por %p129, %p130
    %s133 = sadd.s32 %s132, 1
    %p136 = scmp.eq.s32.totalorder %s14, 1
    %p137 = scmp.ne.s32.totalorder %s132, %s134
    %p138 = scmp.eq.s32.totalorder %s14, 0
    %p139 = por %p137, %p138
    %p140 = scmp.ne.s32.totalorder %s132, %s134
    %p141 = scmp.eq.s32.totalorder %s19, 1
    %p142 = por %p140, %p141
    %p143 = scmp.ne.s32.totalorder %s134, %s135
    %p144 = scmp.eq.s32.totalorder %s19, 0
    %p145 = por %p143, %p144
    %p146 = scmp.ne.s32.totalorder %s134, %s135
    %p147 = scmp.eq.s32.totalorder %s20, 1
    %p148 = por %p146, %p147
    %p150 = scmp.ne.s32.totalorder %s135, %s149
    %p151 = scmp.eq.s32.totalorder %s20, 0
    %p152 = por %p150, %p151
    %s153 = ssub.s32 %s14, %s21
    %p154 = scmp.eq.s32.totalorder %s153, 0
    %s156 = sadd.s32 %s155, 1
    %s157 = scalar_select %p154, %s155, %s156
    %p160 = pneg %p154
    %p161 = scmp.eq.s32.totalorder %s14, 1
    %p162 = por %p160, %p161
    %p163 = scmp.ne.s32.totalorder %s155, %s158
    %p164 = scmp.eq.s32.totalorder %s14, 0
    %p165 = por %p163, %p164
    %p166 = scmp.ne.s32.totalorder %s155, %s158
    %p167 = scmp.eq.s32.totalorder %s19, 1
    %p168 = por %p166, %p167
    %p169 = scmp.ne.s32.totalorder %s158, %s159
    %p170 = scmp.eq.s32.totalorder %s19, 0
    %p171 = por %p169, %p170
    %p172 = scmp.ne.s32.totalorder %s158, %s159
    %p173 = scmp.eq.s32.totalorder %s20, 1
    %p174 = por %p172, %p173
    %p176 = scmp.ne.s32.totalorder %s159, %s175
    %p177 = scmp.eq.s32.totalorder %s20, 0
    %p178 = por %p176, %p177
    %p179 = scmp.le.s32.totalorder 1, %s14
    %p180 = scmp.lt.s32.totalorder %s14, 3
    %p181 = pnand %p179, %p180
    %p182 = pneg %p181
    // Predicated region
    $region9: #{tcnn_forward.7} parent=5 // pred_check
      _
    $region10: #{tcnn_forward.7} parent=5 // pred_check_branch
      %184 = sbr.rel (%p181) target = $region12
    $region11: #{tcnn_forward.7} parent=5 // pred_region
      %s185 = ssub.s32 %s14, 1
      // Predicated region
      $region13: #{tcnn_forward.7} parent=11 // pred_check
        %p186 = pneg %p61
      $region14: #{tcnn_forward.7} parent=11 // pred_check_branch
        %188 = sbr.rel (%p186) target = $region16
      $region15: #{tcnn_forward.7} parent=11 // pred_region
        _
      $region16: #{tcnn_forward.7} parent=11 // pred_fallthru
        _
      // Predicated region
      $region17: #{tcnn_forward.7} parent=11 // pred_check
        %p189 = pneg %p82
      $region18: #{tcnn_forward.7} parent=11 // pred_check_branch
        %191 = sbr.rel (%p189) target = $region20
      $region19: #{tcnn_forward.7} parent=11 // pred_region
        _
      $region20: #{tcnn_forward.7} parent=11 // pred_fallthru
        _
      // Predicated region
      $region21: #{tcnn_forward.7} parent=11 // pred_check
        %p192 = pneg %p103
      $region22: #{tcnn_forward.7} parent=11 // pred_check_branch
        %194 = sbr.rel (%p192) target = $region24
      $region23: #{tcnn_forward.7} parent=11 // pred_region
        _
      $region24: #{tcnn_forward.7} parent=11 // pred_fallthru
        _
      // Predicated region
      $region25: #{tcnn_forward.7} parent=11 // pred_check
        %p195 = pneg %p124
      $region26: #{tcnn_forward.7} parent=11 // pred_check_branch
        %197 = sbr.rel (%p195) target = $region28
      $region27: #{tcnn_forward.7} parent=11 // pred_region
        _
      $region28: #{tcnn_forward.7} parent=11 // pred_fallthru
        _
      // Predicated region
      $region29: #{tcnn_forward.7} parent=11 // pred_check
        %p198 = pneg %p145
      $region30: #{tcnn_forward.7} parent=11 // pred_check_branch
        %200 = sbr.rel (%p198) target = $region32
      $region31: #{tcnn_forward.7} parent=11 // pred_region
        _
      $region32: #{tcnn_forward.7} parent=11 // pred_fallthru
        _
    $region12: #{tcnn_forward.7} parent=5 // pred_fallthru
      _
    %p201 = scmp.lt.s32.totalorder %s14, 2
    // Predicated region
    $region33: #{tcnn_forward.7} parent=5 // pred_check
      %p202 = pneg %p201
    $region34: #{tcnn_forward.7} parent=5 // pred_check_branch
      %204 = sbr.rel (%p202) target = $region36
    $region35: #{tcnn_forward.7} parent=5 // pred_region
      // Predicated region
      $region37: #{tcnn_forward.7} parent=35 // pred_check
        %p205 = pneg %p34
      $region38: #{tcnn_forward.7} parent=35 // pred_check_branch
        %207 = sbr.rel (%p205) target = $region40
      $region39: #{tcnn_forward.7} parent=35 // pred_region
        %p208 = scmp.lt.s32.totalorder %s14, 1
        %s209 = scalar_select %p208, %s14, 1
        %s210 = smul.addr %s209, 8
        %s211 = scalar_lea.vmem %s0, %s210
      $region40: #{tcnn_forward.7} parent=35 // pred_fallthru
        _
    $region36: #{tcnn_forward.7} parent=5 // pred_fallthru
      _
    %p212 = scmp.le.s32.totalorder 1, %s14
    %p213 = scmp.lt.s32.totalorder %s14, 3
    %p214 = pnand %p212, %p213
    %p215 = pneg %p214
    // Predicated region
    $region41: #{tcnn_forward.7} parent=5 // pred_check
      _
    $region42: #{tcnn_forward.7} parent=5 // pred_check_branch
      %217 = sbr.rel (%p214) target = $region44
    $region43: #{tcnn_forward.7} parent=5 // pred_region
      %s218 = ssub.s32 %s14, 1
      %p219 = scmp.lt.s32.totalorder %s19, 1
      %s220 = scalar_select %p219, %s19, 1
      %s221 = smul.addr %s220, 8
      %s222 = scalar_lea.vmem %s0, %s221
      %p223 = pneg %p40
      %p224 = pneg %p37
      %p225 = pneg %p61
      %p226 = pneg %p58
      %p227 = pneg %p82
      %p228 = pneg %p79
      %p229 = pneg %p103
      %p230 = pneg %p100
      %p231 = pneg %p124
      %p232 = pneg %p121
      %p233 = pneg %p145
      %p234 = pneg %p142
      %p235 = pneg %p171
      %p236 = pneg %p168
      %p237 = scmp.lt.s32.totalorder %s19, 1
      %s238 = scalar_select %p237, %s19, 1
      %s239 = smul.addr %s238, 8
      %s240 = scalar_lea.vmem %s6, %s239
      %p241 = scmp.lt.s32.totalorder %s19, 1
      %s242 = scalar_select %p241, %s19, 1
      %s243 = smul.addr %s242, 8
      %s244 = scalar_lea.vmem %s0, %s243
      %p245 = scmp.lt.s32.totalorder %s19, 1
      %s246 = scalar_select %p245, %s19, 1
      %s247 = smul.addr %s246, 8
      %s248 = scalar_lea.vmem %s6, %s247
      %v250 = vld [vmem:[%s244] sm:$0xff]
      %v252 = vrot.slane %v250, 7
      %vm254 = vcmask 1040384
      %v255 = vsel %vm254, 0.0, %v252
      %vm257 = vcmask 1046528
      %v258 = vrot.slane %v255, 1
      %v259 = vrot.slane %v252, 1
      %v260 = vsel %vm257, %v258, %v259
      %261 = vrot.lane.b32.xlu0 %v260, 16
      %v262 = vpop.permute.xlu0 %261
      %vm264 = vcmask 130048
      %v265 = vsel %vm264, %v255, %v262
      %v266 = vpack.c.bf16 %v265, %v265
      %v267 = vld [vmem:[%s1] sm:$0xf]
      %v268 = vld [vmem:[%s1 + $0x4] sm:$0xf]
      %v269 = vld [vmem:[%s1 + $0x8] sm:$0xf]
      %v270 = vld [vmem:[%s1 + $0xc] sm:$0xf]
      %v271 = vld [vmem:[%s2] sm:$0x1]
      %v273 = vperm.slane %v271, 0
      %v279 = vunpack.c.l.b16 %v267
      %v280 = vunpack.c.l.b16 %v268
      %v281 = vunpack.c.l.b16 %v269
      %v282 = vunpack.c.l.b16 %v270
      %v283 = vpack.c.b16 %v280, %v279
      %v284 = vpack.c.b16 %v282, %v281
      %vm287 = vcmask 261120
      %v289 = vsel %vm287, %v266, 0
      %291 = vmatpush.bf16.msra.mxu0 0
      %292 = vmatpush.bf16.msra.mxu0 0
      %293 = vmatpush.bf16.msra.mxu0 0
      %294 = vmatpush.bf16.msra.mxu0 0
      %295 = vmatpush.bf16.msra.mxu0 0
      %296 = vmatpush.bf16.msra.mxu0 0
      %297 = vmatpush.bf16.msra.mxu0 %v284
      %298 = vmatpush.bf16.msra.mxu0 %v283
      %299 = vmatmul.bf16.gmra.mxu0 %v289
      %v300 = vpop.f32.mrf.mxu0
      %v301 = vadd.f32 %v273, %v300
      %v302 = vpop.f32.mrf.mxu0
      %303 = vdwg.mxu0
      %vm304 = vcmask 523264
      %v305 = vsel %vm304, %v301, 0.0
      %v306 = vrot.slane %v305, 4
      %v307 = vadd.f32 %v305, %v306
      %v308 = vrot.slane %v307, 2
      %v309 = vadd.f32 %v307, %v308
      %v310 = vrot.slane %v309, 1
      %v311 = vadd.f32 %v309, %v310
      %313 = vrot.lane.b32.xlu0 %v311, 120
      %v314 = vpop.permute.xlu0 %313
      %v316 = vadd.f32 %v311, %v314
      %317 = vrot.lane.b32.xlu0 %v311, 112
      %v318 = vpop.permute.xlu0 %317
      %v320 = vadd.f32 %v316, %v318
      %321 = vrot.lane.b32.xlu0 %v311, 104
      %v322 = vpop.permute.xlu0 %321
      %v324 = vadd.f32 %v320, %v322
      %325 = vrot.lane.b32.xlu0 %v311, 96
      %v326 = vpop.permute.xlu0 %325
      %v328 = vadd.f32 %v324, %v326
      %329 = vrot.lane.b32.xlu0 %v311, 88
      %v330 = vpop.permute.xlu0 %329
      %v332 = vadd.f32 %v328, %v330
      %333 = vrot.lane.b32.xlu0 %v311, 80
      %v334 = vpop.permute.xlu0 %333
      %v336 = vadd.f32 %v332, %v334
      %337 = vrot.lane.b32.xlu0 %v311, 72
      %v338 = vpop.permute.xlu0 %337
      %v340 = vadd.f32 %v336, %v338
      %v341 = vmul.f32 %v340, 0.015625
      %343 = vrot.lane.b32.xlu0 %v341, 8
      %v344 = vpop.permute.xlu0 %343
      %346 = vrot.lane.b32.xlu0 %v341, 16
      %v347 = vpop.permute.xlu0 %346
      %349 = vrot.lane.b32.xlu0 %v341, 24
      %v350 = vpop.permute.xlu0 %349
      %352 = vrot.lane.b32.xlu0 %v341, 32
      %v353 = vpop.permute.xlu0 %352
      %355 = vrot.lane.b32.xlu0 %v341, 40
      %v356 = vpop.permute.xlu0 %355
      %358 = vrot.lane.b32.xlu0 %v341, 48
      %v359 = vpop.permute.xlu0 %358
      %361 = vrot.lane.b32.xlu0 %v341, 56
      %v362 = vpop.permute.xlu0 %361
      %vm364 = vcmask 64512
      %v365 = vsel %vm364, %v341, %v344
      %v366 = vsel %vm264, %v365, %v347
      %vm367 = vcmask 195584
      %v368 = vsel %vm367, %v366, %v350
      %v369 = vsel %vm287, %v368, %v353
      %vm370 = vcmask 326656
      %v371 = vsel %vm370, %v369, %v356
      %vm372 = vcmask 392192
      %v373 = vsel %vm372, %v371, %v359
      %vm374 = vcmask 457728
      %v375 = vsel %vm374, %v373, %v362
      %v376 = vperm.slane %v375, 0
      %v377 = vsub.f32 %v301, %v376
      %v378 = vmul.f32 %v377, %v377
      %v379 = vsel %vm304, %v378, 0.0
      %v380 = vrot.slane %v379, 4
      %v381 = vadd.f32 %v379, %v380
      %v382 = vrot.slane %v381, 2
      %v383 = vadd.f32 %v381, %v382
      %v384 = vrot.slane %v383, 1
      %v385 = vadd.f32 %v383, %v384
      %387 = vrot.lane.b32.xlu0 %v385, 120
      %v388 = vpop.permute.xlu0 %387
      %v390 = vadd.f32 %v385, %v388
      %391 = vrot.lane.b32.xlu0 %v385, 112
      %v392 = vpop.permute.xlu0 %391
      %v394 = vadd.f32 %v390, %v392
      %395 = vrot.lane.b32.xlu0 %v385, 104
      %v396 = vpop.permute.xlu0 %395
      %v398 = vadd.f32 %v394, %v396
      %399 = vrot.lane.b32.xlu0 %v385, 96
      %v400 = vpop.permute.xlu0 %399
      %v402 = vadd.f32 %v398, %v400
      %403 = vrot.lane.b32.xlu0 %v385, 88
      %v404 = vpop.permute.xlu0 %403
      %v406 = vadd.f32 %v402, %v404
      %407 = vrot.lane.b32.xlu0 %v385, 80
      %v408 = vpop.permute.xlu0 %407
      %v410 = vadd.f32 %v406, %v408
      %411 = vrot.lane.b32.xlu0 %v385, 72
      %v412 = vpop.permute.xlu0 %411
      %v414 = vadd.f32 %v410, %v412
      %v415 = vmul.f32 %v414, 0.015625
      %417 = vrot.lane.b32.xlu0 %v415, 8
      %v418 = vpop.permute.xlu0 %417
      %420 = vrot.lane.b32.xlu0 %v415, 16
      %v421 = vpop.permute.xlu0 %420
      %423 = vrot.lane.b32.xlu0 %v415, 24
      %v424 = vpop.permute.xlu0 %423
      %426 = vrot.lane.b32.xlu0 %v415, 32
      %v427 = vpop.permute.xlu0 %426
      %429 = vrot.lane.b32.xlu0 %v415, 40
      %v430 = vpop.permute.xlu0 %429
      %432 = vrot.lane.b32.xlu0 %v415, 48
      %v433 = vpop.permute.xlu0 %432
      %435 = vrot.lane.b32.xlu0 %v415, 56
      %v436 = vpop.permute.xlu0 %435
      %v438 = vsel %vm364, %v415, %v418
      %v439 = vsel %vm264, %v438, %v421
      %v440 = vsel %vm367, %v439, %v424
      %v441 = vsel %vm287, %v440, %v427
      %v442 = vsel %vm370, %v441, %v430
      %v443 = vsel %vm372, %v442, %v433
      %v444 = vsel %vm374, %v443, %v436
      %v445 = vadd.f32 %v444, 1e-05
      %v446 = vrsqrt.pop %v445
      %v447 = vmul.f32 %v446, %v445
      %v448 = vmul.f32 %v447, %v446
      %v449 = vmul.f32 0.5, %v448
      %v450 = vsub.f32 1.5, %v449
      %v451 = vmul.f32 %v446, %v450
      %vm452 = vweird.f32 %v445
      %vm453 = vweird.f32 %v446
      %vm454 = vmor %vm452, %vm453
      %v455 = vsel %vm454, %v446, %v451
      %v456 = vperm.slane %v455, 0
      %v457 = vmul.f32 %v377, %v456
      %v458 = vld [vmem:[%s3] sm:$0x1]
      %v460 = vperm.slane %v458, 0
      %v462 = vmul.f32 %v457, %v460
      %v463 = vld [vmem:[%s4] sm:$0x1]
      %v465 = vperm.slane %v463, 0
      %v467 = vadd.f32 %v462, %v465
      %vm468 = vcmp.ge.f32.partialorder %v467, 0.0
      %v469 = vld [vmem:[#allocation2] sm:$0x1]
      %v471 = vperm.slane %v469, 0
      %472 = vset.pattern.permute.xlu0 0
      %473 = vperm.xlu0 %472, %v471
      %v474 = vpop.permute.xlu0 %473
      %v476 = vmul.f32 %v474, %v467
      %v477 = vsel %vm468, %v467, %v476
      %478 = vst.msk [vmem:[%s248] sm:$0xff] %vm304, %v477
      %p479 = scmp.lt.s32.totalorder %s19, 1
      %s480 = scalar_select %p479, %s19, 1
      %s481 = smul.addr %s480, 8
      %s482 = scalar_lea.vmem %s6, %s481
      // Predicated region
      $region45: #{tcnn_forward.7} parent=43 // pred_check
        %p483 = pneg %p168
      $region46: #{tcnn_forward.7} parent=43 // pred_check_branch
        %485 = sbr.rel (%p483) target = $region48
      $region47: #{tcnn_forward.7} parent=43 // pred_region
        _
      $region48: #{tcnn_forward.7} parent=43 // pred_fallthru
        _
    $region44: #{tcnn_forward.7} parent=5 // pred_fallthru
      _
    %p486 = scmp.le.s32.totalorder 2, %s14
    // Predicated region
    $region49: #{tcnn_forward.7} parent=5 // pred_check
      %p487 = pneg %p486
    $region50: #{tcnn_forward.7} parent=5 // pred_check_branch
      %489 = sbr.rel (%p487) target = $region52
    $region51: #{tcnn_forward.7} parent=5 // pred_region
      %s490 = ssub.s32 %s14, 2
      // Predicated region
      $region53: #{tcnn_forward.7} parent=51 // pred_check
        %p491 = pneg %p174
      $region54: #{tcnn_forward.7} parent=51 // pred_check_branch
        %493 = sbr.rel (%p491) target = $region56
      $region55: #{tcnn_forward.7} parent=51 // pred_region
        %p494 = scmp.lt.s32.totalorder %s20, 1
        %s495 = scalar_select %p494, %s20, 1
        %s496 = smul.addr %s495, 8
        %s497 = scalar_lea.vmem %s6, %s496
      $region56: #{tcnn_forward.7} parent=51 // pred_fallthru
        _
    $region52: #{tcnn_forward.7} parent=5 // pred_fallthru
      _
  $region6: #{tcnn_forward.7} parent=0 // loop_footer
    %s18 = sadd.s32 1, %s14
  $region7: #{tcnn_forward.7} parent=0 // loop_footer_branch
    %13 = sbr.rel target = $region3
  $region8: #{tcnn_forward.7} parent=0 // loop_exit
    _

// kernel: tcnn_forward.8
$region0: #{tcnn_forward.8}
  #allocation0 [shape = 'u32[]', space=smem, size = 0x4, offset = 0x4, fixed_abs, tag = 'smem constant byte address 0x4 - core index']
  #allocation1 [shape = 'u32[72,128]{1,0:T(1,128)}', space=vmem, size = 0x9000, scoped, tag = 'internal scratch']
  #allocation2 [shape = 'f32[1,1]{1,0:T(1,128)S(1)}', space=vmem, size = 0x200, scoped, tag = 'scoped memory for tcnn_forward.8']
  %s0 = inlined_call_operand.vmem [shape: f32[2,8,64], index: 0, kind: input, shape index: {}]
  %s1 = inlined_call_operand.hbm [shape: bf16[128,32], index: 1, kind: input, shape index: {}]
  %s2 = inlined_call_operand.vmem [shape: f32[1,32], index: 2, kind: input, shape index: {}]
  %s3 = inlined_call_operand.vmem [shape: f32[1,32], index: 3, kind: input, shape index: {}]
  %s4 = inlined_call_operand.vmem [shape: f32[1,32], index: 4, kind: input, shape index: {}]
  %s5 = inlined_call_operand.<no memory space> [shape: f32[1,1], index: 5, kind: input, shape index: {}]
  %s6 = inlined_call_operand.vmem [shape: f32[2,8,32], index: 6, kind: output, shape index: {}]
  %s7 = sld [smem:[#allocation0]]
  $region61: #{tcnn_forward.8} parent=0
    _
  %s9 = ssub.s32 1, %s7
  %s10 = scalar_select 0, %s9, %s7
  %v11 = vstv %s5
  %12 = vst [vmem:[#allocation2] sm:$0x1] %v11
  $region1: #{tcnn_forward.8} parent=0
    #allocation3 [shape = 'u8[32768]{0}', space=vmem, size = 0x8000, scoped, tag = 'input window, operand 1, single buffered']
    #allocation4 [shape = 's32[2]{0}', space=sflag, size = 0x8, scoped, tag = 'scoped memory for tcnn_forward.8']
    %13 = vsyncpa [#allocation4], 0
    loop: start=0, step=1, limit=4
    $region2: #{tcnn_forward.8} parent=1 // loop_pre_header
      _
    $region3: #{tcnn_forward.8} parent=1 // loop_header
      %s15 = sphi 0, %s19
      %p16 = scmp.ge.s32.totalorder %s15, 4
      %s25 = sphi 0, %s27
      %s28 = sphi 0, %s25
      %s29 = sphi 0, %s28
      %s45 = sphi 0, %s29
      %s49 = sphi 0, %s49
      %s51 = sphi 0, %s49
      %s52 = sphi 0, %s51
      %s66 = sphi 0, %s52
      %s70 = sphi 0, %s70
      %s72 = sphi 0, %s70
      %s73 = sphi 0, %s72
      %s87 = sphi 0, %s73
      %s91 = sphi 0, %s91
      %s93 = sphi 0, %s91
      %s94 = sphi 0, %s93
      %s108 = sphi 0, %s94
      %s112 = sphi 0, %s112
      %s114 = sphi 0, %s112
      %s115 = sphi 0, %s114
      %s129 = sphi 0, %s115
      %s133 = sphi 0, %s133
      %s135 = sphi 0, %s133
      %s136 = sphi 0, %s135
      %s150 = sphi 0, %s136
      %s156 = sphi 0, %s158
      %s159 = sphi 0, %s156
      %s160 = sphi 0, %s159
      %s176 = sphi 0, %s160
    $region4: #{tcnn_forward.8} parent=1 // loop_header_branch
      %18 = sbr.rel (%p16) target = $region8
    $region5: #{tcnn_forward.8} parent=1 // loop_body
      %s20 = ssub.s32 %s15, 1
      %s21 = ssub.s32 %s15, 2
      %s22 = sadd.s32 %s15, 1
      %s23 = ssub.s32 %s15, %s22
      %p24 = scmp.eq.s32.totalorder %s23, 0
      %s26 = sadd.s32 %s25, 1
      %s27 = scalar_select %p24, %s25, %s26
      %p30 = pneg %p24
      %p31 = scmp.eq.s32.totalorder %s15, 1
      %p32 = por %p30, %p31
      %p33 = scmp.ne.s32.totalorder %s25, %s28
      %p34 = scmp.eq.s32.totalorder %s15, 0
      %p35 = por %p33, %p34
      %p36 = scmp.ne.s32.totalorder %s25, %s28
      %p37 = scmp.eq.s32.totalorder %s20, 1
      %p38 = por %p36, %p37
      %p39 = scmp.ne.s32.totalorder %s28, %s29
      %p40 = scmp.eq.s32.totalorder %s20, 0
      %p41 = por %p39, %p40
      %p42 = scmp.ne.s32.totalorder %s28, %s29
      %p43 = scmp.eq.s32.totalorder %s21, 1
      %p44 = por %p42, %p43
      %p46 = scmp.ne.s32.totalorder %s29, %s45
      %p47 = scmp.eq.s32.totalorder %s21, 0
      %p48 = por %p46, %p47
      %s50 = sadd.s32 %s49, 1
      %p53 = scmp.eq.s32.totalorder %s15, 1
      %p54 = scmp.ne.s32.totalorder %s49, %s51
      %p55 = scmp.eq.s32.totalorder %s15, 0
      %p56 = por %p54, %p55
      %p57 = scmp.ne.s32.totalorder %s49, %s51
      %p58 = scmp.eq.s32.totalorder %s20, 1
      %p59 = por %p57, %p58
      %p60 = scmp.ne.s32.totalorder %s51, %s52
      %p61 = scmp.eq.s32.totalorder %s20, 0
      %p62 = por %p60, %p61
      %p63 = scmp.ne.s32.totalorder %s51, %s52
      %p64 = scmp.eq.s32.totalorder %s21, 1
      %p65 = por %p63, %p64
      %p67 = scmp.ne.s32.totalorder %s52, %s66
      %p68 = scmp.eq.s32.totalorder %s21, 0
      %p69 = por %p67, %p68
      %s71 = sadd.s32 %s70, 1
      %p74 = scmp.eq.s32.totalorder %s15, 1
      %p75 = scmp.ne.s32.totalorder %s70, %s72
      %p76 = scmp.eq.s32.totalorder %s15, 0
      %p77 = por %p75, %p76
      %p78 = scmp.ne.s32.totalorder %s70, %s72
      %p79 = scmp.eq.s32.totalorder %s20, 1
      %p80 = por %p78, %p79
      %p81 = scmp.ne.s32.totalorder %s72, %s73
      %p82 = scmp.eq.s32.totalorder %s20, 0
      %p83 = por %p81, %p82
      %p84 = scmp.ne.s32.totalorder %s72, %s73
      %p85 = scmp.eq.s32.totalorder %s21, 1
      %p86 = por %p84, %p85
      %p88 = scmp.ne.s32.totalorder %s73, %s87
      %p89 = scmp.eq.s32.totalorder %s21, 0
      %p90 = por %p88, %p89
      %s92 = sadd.s32 %s91, 1
      %p95 = scmp.eq.s32.totalorder %s15, 1
      %p96 = scmp.ne.s32.totalorder %s91, %s93
      %p97 = scmp.eq.s32.totalorder %s15, 0
      %p98 = por %p96, %p97
      %p99 = scmp.ne.s32.totalorder %s91, %s93
      %p100 = scmp.eq.s32.totalorder %s20, 1
      %p101 = por %p99, %p100
      %p102 = scmp.ne.s32.totalorder %s93, %s94
      %p103 = scmp.eq.s32.totalorder %s20, 0
      %p104 = por %p102, %p103
      %p105 = scmp.ne.s32.totalorder %s93, %s94
      %p106 = scmp.eq.s32.totalorder %s21, 1
      %p107 = por %p105, %p106
      %p109 = scmp.ne.s32.totalorder %s94, %s108
      %p110 = scmp.eq.s32.totalorder %s21, 0
      %p111 = por %p109, %p110
      %s113 = sadd.s32 %s112, 1
      %p116 = scmp.eq.s32.totalorder %s15, 1
      %p117 = scmp.ne.s32.totalorder %s112, %s114
      %p118 = scmp.eq.s32.totalorder %s15, 0
      %p119 = por %p117, %p118
      %p120 = scmp.ne.s32.totalorder %s112, %s114
      %p121 = scmp.eq.s32.totalorder %s20, 1
      %p122 = por %p120, %p121
      %p123 = scmp.ne.s32.totalorder %s114, %s115
      %p124 = scmp.eq.s32.totalorder %s20, 0
      %p125 = por %p123, %p124
      %p126 = scmp.ne.s32.totalorder %s114, %s115
      %p127 = scmp.eq.s32.totalorder %s21, 1
      %p128 = por %p126, %p127
      %p130 = scmp.ne.s32.totalorder %s115, %s129
      %p131 = scmp.eq.s32.totalorder %s21, 0
      %p132 = por %p130, %p131
      %s134 = sadd.s32 %s133, 1
      %p137 = scmp.eq.s32.totalorder %s15, 1
      %p138 = scmp.ne.s32.totalorder %s133, %s135
      %p139 = scmp.eq.s32.totalorder %s15, 0
      %p140 = por %p138, %p139
      %p141 = scmp.ne.s32.totalorder %s133, %s135
      %p142 = scmp.eq.s32.totalorder %s20, 1
      %p143 = por %p141, %p142
      %p144 = scmp.ne.s32.totalorder %s135, %s136
      %p145 = scmp.eq.s32.totalorder %s20, 0
      %p146 = por %p144, %p145
      %p147 = scmp.ne.s32.totalorder %s135, %s136
      %p148 = scmp.eq.s32.totalorder %s21, 1
      %p149 = por %p147, %p148
      %p151 = scmp.ne.s32.totalorder %s136, %s150
      %p152 = scmp.eq.s32.totalorder %s21, 0
      %p153 = por %p151, %p152
      %s154 = ssub.s32 %s15, %s22
      %p155 = scmp.eq.s32.totalorder %s154, 0
      %s157 = sadd.s32 %s156, 1
      %s158 = scalar_select %p155, %s156, %s157
      %p161 = pneg %p155
      %p162 = scmp.eq.s32.totalorder %s15, 1
      %p163 = por %p161, %p162
      %p164 = scmp.ne.s32.totalorder %s156, %s159
      %p165 = scmp.eq.s32.totalorder %s15, 0
      %p166 = por %p164, %p165
      %p167 = scmp.ne.s32.totalorder %s156, %s159
      %p168 = scmp.eq.s32.totalorder %s20, 1
      %p169 = por %p167, %p168
      %p170 = scmp.ne.s32.totalorder %s159, %s160
      %p171 = scmp.eq.s32.totalorder %s20, 0
      %p172 = por %p170, %p171
      %p173 = scmp.ne.s32.totalorder %s159, %s160
      %p174 = scmp.eq.s32.totalorder %s21, 1
      %p175 = por %p173, %p174
      %p177 = scmp.ne.s32.totalorder %s160, %s176
      %p178 = scmp.eq.s32.totalorder %s21, 0
      %p179 = por %p177, %p178
      %p180 = scmp.le.s32.totalorder 1, %s15
      %p181 = scmp.lt.s32.totalorder %s15, 3
      %p182 = pnand %p180, %p181
      %p183 = pneg %p182
      // Predicated region
      $region9: #{tcnn_forward.8} parent=5 // pred_check
        _
      $region10: #{tcnn_forward.8} parent=5 // pred_check_branch
        %185 = sbr.rel (%p182) target = $region12
      $region11: #{tcnn_forward.8} parent=5 // pred_region
        %s186 = ssub.s32 %s15, 1
        // Predicated region
        $region13: #{tcnn_forward.8} parent=11 // pred_check
          %p187 = pneg %p62
        $region14: #{tcnn_forward.8} parent=11 // pred_check_branch
          %189 = sbr.rel (%p187) target = $region16
        $region15: #{tcnn_forward.8} parent=11 // pred_region
          %191 = vsyncadd [#allocation4], 0
          %s192 = sshll.u32 %s1, 4
          %s193 = int_to_ptr.hbm [resolvable:$true] %s192
          %s194 = sshll.u32 [#allocation3], 4
          %s195 = int_to_ptr.vmem [resolvable:$true] %s194
          %200 = dma.hbm_to_vmem [thread:$0]  %s193, 1024, %s195, [#allocation4], 64, 64, 4
        $region16: #{tcnn_forward.8} parent=11 // pred_fallthru
          _
        // Predicated region
        $region17: #{tcnn_forward.8} parent=11 // pred_check
          %p201 = pneg %p83
        $region18: #{tcnn_forward.8} parent=11 // pred_check_branch
          %203 = sbr.rel (%p201) target = $region20
        $region19: #{tcnn_forward.8} parent=11 // pred_region
          _
        $region20: #{tcnn_forward.8} parent=11 // pred_fallthru
          _
        // Predicated region
        $region21: #{tcnn_forward.8} parent=11 // pred_check
          %p204 = pneg %p104
        $region22: #{tcnn_forward.8} parent=11 // pred_check_branch
          %206 = sbr.rel (%p204) target = $region24
        $region23: #{tcnn_forward.8} parent=11 // pred_region
          _
        $region24: #{tcnn_forward.8} parent=11 // pred_fallthru
          _
        // Predicated region
        $region25: #{tcnn_forward.8} parent=11 // pred_check
          %p207 = pneg %p125
        $region26: #{tcnn_forward.8} parent=11 // pred_check_branch
          %209 = sbr.rel (%p207) target = $region28
        $region27: #{tcnn_forward.8} parent=11 // pred_region
          _
        $region28: #{tcnn_forward.8} parent=11 // pred_fallthru
          _
        // Predicated region
        $region29: #{tcnn_forward.8} parent=11 // pred_check
          %p210 = pneg %p146
        $region30: #{tcnn_forward.8} parent=11 // pred_check_branch
          %212 = sbr.rel (%p210) target = $region32
        $region31: #{tcnn_forward.8} parent=11 // pred_region
          _
        $region32: #{tcnn_forward.8} parent=11 // pred_fallthru
          _
      $region12: #{tcnn_forward.8} parent=5 // pred_fallthru
        _
      %p213 = scmp.lt.s32.totalorder %s15, 2
      // Predicated region
      $region33: #{tcnn_forward.8} parent=5 // pred_check
        %p214 = pneg %p213
      $region34: #{tcnn_forward.8} parent=5 // pred_check_branch
        %216 = sbr.rel (%p214) target = $region36
      $region35: #{tcnn_forward.8} parent=5 // pred_region
        // Predicated region
        $region37: #{tcnn_forward.8} parent=35 // pred_check
          %p217 = pneg %p35
        $region38: #{tcnn_forward.8} parent=35 // pred_check_branch
          %219 = sbr.rel (%p217) target = $region40
        $region39: #{tcnn_forward.8} parent=35 // pred_region
          %p220 = scmp.lt.s32.totalorder %s15, 1
          %s221 = scalar_select %p220, %s15, 1
          %s222 = smul.addr %s221, 8
          %s223 = scalar_lea.vmem %s0, %s222
        $region40: #{tcnn_forward.8} parent=35 // pred_fallthru
          _
      $region36: #{tcnn_forward.8} parent=5 // pred_fallthru
        _
      %p224 = scmp.le.s32.totalorder 1, %s15
      %p225 = scmp.lt.s32.totalorder %s15, 3
      %p226 = pnand %p224, %p225
      %p227 = pneg %p226
      // Predicated region
      $region41: #{tcnn_forward.8} parent=5 // pred_check
        _
      $region42: #{tcnn_forward.8} parent=5 // pred_check_branch
        %229 = sbr.rel (%p226) target = $region44
      $region43: #{tcnn_forward.8} parent=5 // pred_region
        %s230 = ssub.s32 %s15, 1
        // Predicated region
        $region45: #{tcnn_forward.8} parent=43 // pred_check
          %p231 = pneg %p62
        $region46: #{tcnn_forward.8} parent=43 // pred_check_branch
          %233 = sbr.rel (%p231) target = $region48
        $region47: #{tcnn_forward.8} parent=43 // pred_region
          %235 = dma.done [#allocation4], 1024
        $region48: #{tcnn_forward.8} parent=43 // pred_fallthru
          _
        %p236 = scmp.lt.s32.totalorder %s20, 1
        %s237 = scalar_select %p236, %s20, 1
        %s238 = smul.addr %s237, 8
        %s239 = scalar_lea.vmem %s0, %s238
        %p240 = pneg %p41
        %p241 = pneg %p38
        %p242 = pneg %p62
        %p243 = pneg %p59
        %p244 = pneg %p83
        %p245 = pneg %p80
        %p246 = pneg %p104
        %p247 = pneg %p101
        %p248 = pneg %p125
        %p249 = pneg %p122
        %p250 = pneg %p146
        %p251 = pneg %p143
        %p252 = pneg %p172
        %p253 = pneg %p169
        %p254 = scmp.lt.s32.totalorder %s20, 1
        %s255 = scalar_select %p254, %s20, 1
        %s256 = smul.addr %s255, 8
        %s257 = scalar_lea.vmem %s6, %s256
        %p258 = scmp.lt.s32.totalorder %s20, 1
        %s259 = scalar_select %p258, %s20, 1
        %s260 = smul.addr %s259, 8
        %s261 = scalar_lea.vmem %s0, %s260
        %p262 = scmp.lt.s32.totalorder %s20, 1
        %s263 = scalar_select %p262, %s20, 1
        %s264 = smul.addr %s263, 8
        %s265 = scalar_lea.vmem %s6, %s264
        %v266 = vld [vmem:[%s261] sm:$0xff]
        %v268 = vrot.slane %v266, 7
        %vm270 = vcmask 1040384
        %v271 = vsel %vm270, 0.0, %v268
        %vm273 = vcmask 1046528
        %v274 = vrot.slane %v271, 1
        %v275 = vrot.slane %v268, 1
        %v276 = vsel %vm273, %v274, %v275
        %277 = vrot.lane.b32.xlu0 %v276, 64
        %v278 = vpop.permute.xlu0 %277
        %vm280 = vcmask 523264
        %v281 = vsel %vm280, %v271, %v278
        %v282 = vpack.c.bf16 %v281, %v281
        %v283 = vld [vmem:[#allocation3] sm:$0xf]
        %v284 = vld [vmem:[#allocation3 + $0x4] sm:$0xf]
        %v285 = vld [vmem:[#allocation3 + $0x8] sm:$0xf]
        %v286 = vld [vmem:[#allocation3 + $0xc] sm:$0xf]
        %v287 = vld [vmem:[#allocation3 + $0x10] sm:$0xf]
        %v288 = vld [vmem:[#allocation3 + $0x14] sm:$0xf]
        %v289 = vld [vmem:[#allocation3 + $0x18] sm:$0xf]
        %v290 = vld [vmem:[#allocation3 + $0x1c] sm:$0xf]
        %v291 = vld [vmem:[#allocation3 + $0x20] sm:$0xf]
        %v292 = vld [vmem:[#allocation3 + $0x24] sm:$0xf]
        %v293 = vld [vmem:[#allocation3 + $0x28] sm:$0xf]
        %v294 = vld [vmem:[#allocation3 + $0x2c] sm:$0xf]
        %v295 = vld [vmem:[#allocation3 + $0x30] sm:$0xf]
        %v296 = vld [vmem:[#allocation3 + $0x34] sm:$0xf]
        %v297 = vld [vmem:[#allocation3 + $0x38] sm:$0xf]
        %v298 = vld [vmem:[#allocation3 + $0x3c] sm:$0xf]
        %v299 = vld [vmem:[%s2] sm:$0x1]
        %v301 = vperm.slane %v299, 0
        %v319 = vunpack.c.l.b16 %v283
        %v320 = vunpack.c.l.b16 %v284
        %v321 = vunpack.c.l.b16 %v285
        %v322 = vunpack.c.l.b16 %v286
        %v323 = vunpack.c.l.b16 %v287
        %v324 = vunpack.c.l.b16 %v288
        %v325 = vunpack.c.l.b16 %v289
        %v326 = vunpack.c.l.b16 %v290
        %v327 = vunpack.c.l.b16 %v291
        %v328 = vunpack.c.l.b16 %v292
        %v329 = vunpack.c.l.b16 %v293
        %v330 = vunpack.c.l.b16 %v294
        %v331 = vunpack.c.l.b16 %v295
        %v332 = vunpack.c.l.b16 %v296
        %v333 = vunpack.c.l.b16 %v297
        %v334 = vunpack.c.l.b16 %v298
        %v335 = vpack.c.b16 %v320, %v319
        %v336 = vpack.c.b16 %v322, %v321
        %v337 = vpack.c.b16 %v324, %v323
        %v338 = vpack.c.b16 %v326, %v325
        %v339 = vpack.c.b16 %v328, %v327
        %v340 = vpack.c.b16 %v330, %v329
        %v341 = vpack.c.b16 %v332, %v331
        %v342 = vpack.c.b16 %v334, %v333
        %351 = vmatpush.bf16.msra.mxu0 %v342
        %352 = vmatpush.bf16.msra.mxu0 %v341
        %353 = vmatpush.bf16.msra.mxu0 %v340
        %354 = vmatpush.bf16.msra.mxu0 %v339
        %355 = vmatpush.bf16.msra.mxu0 %v338
        %356 = vmatpush.bf16.msra.mxu0 %v337
        %357 = vmatpush.bf16.msra.mxu0 %v336
        %358 = vmatpush.bf16.msra.mxu0 %v335
        %359 = vmatmul.bf16.gmra.mxu0 %v282
        %v360 = vpop.f32.mrf.mxu0
        %v361 = vadd.f32 %v301, %v360
        %v362 = vpop.f32.mrf.mxu0
        %363 = vdwg.mxu0
        %vm364 = vcmask 261120
        %v365 = vsel %vm364, %v361, 0.0
        %v366 = vrot.slane %v365, 4
        %v367 = vadd.f32 %v365, %v366
        %v368 = vrot.slane %v367, 2
        %v369 = vadd.f32 %v367, %v368
        %v370 = vrot.slane %v369, 1
        %v371 = vadd.f32 %v369, %v370
        %373 = vrot.lane.b32.xlu0 %v371, 120
        %v374 = vpop.permute.xlu0 %373
        %v376 = vadd.f32 %v371, %v374
        %377 = vrot.lane.b32.xlu0 %v371, 112
        %v378 = vpop.permute.xlu0 %377
        %v380 = vadd.f32 %v376, %v378
        %381 = vrot.lane.b32.xlu0 %v371, 104
        %v382 = vpop.permute.xlu0 %381
        %v384 = vadd.f32 %v380, %v382
        %v385 = vmul.f32 %v384, 0.03125
        %387 = vrot.lane.b32.xlu0 %v385, 8
        %v388 = vpop.permute.xlu0 %387
        %390 = vrot.lane.b32.xlu0 %v385, 16
        %v391 = vpop.permute.xlu0 %390
        %393 = vrot.lane.b32.xlu0 %v385, 24
        %v394 = vpop.permute.xlu0 %393
        %vm396 = vcmask 64512
        %v397 = vsel %vm396, %v385, %v388
        %vm398 = vcmask 130048
        %v399 = vsel %vm398, %v397, %v391
        %vm400 = vcmask 195584
        %v401 = vsel %vm400, %v399, %v394
        %v402 = vperm.slane %v401, 0
        %v403 = vsub.f32 %v361, %v402
        %v404 = vmul.f32 %v403, %v403
        %v405 = vsel %vm364, %v404, 0.0
        %v406 = vrot.slane %v405, 4
        %v407 = vadd.f32 %v405, %v406
        %v408 = vrot.slane %v407, 2
        %v409 = vadd.f32 %v407, %v408
        %v410 = vrot.slane %v409, 1
        %v411 = vadd.f32 %v409, %v410
        %413 = vrot.lane.b32.xlu0 %v411, 120
        %v414 = vpop.permute.xlu0 %413
        %v416 = vadd.f32 %v411, %v414
        %417 = vrot.lane.b32.xlu0 %v411, 112
        %v418 = vpop.permute.xlu0 %417
        %v420 = vadd.f32 %v416, %v418
        %421 = vrot.lane.b32.xlu0 %v411, 104
        %v422 = vpop.permute.xlu0 %421
        %v424 = vadd.f32 %v420, %v422
        %v425 = vmul.f32 %v424, 0.03125
        %427 = vrot.lane.b32.xlu0 %v425, 8
        %v428 = vpop.permute.xlu0 %427
        %430 = vrot.lane.b32.xlu0 %v425, 16
        %v431 = vpop.permute.xlu0 %430
        %433 = vrot.lane.b32.xlu0 %v425, 24
        %v434 = vpop.permute.xlu0 %433
        %v436 = vsel %vm396, %v425, %v428
        %v437 = vsel %vm398, %v436, %v431
        %v438 = vsel %vm400, %v437, %v434
        %v439 = vadd.f32 %v438, 1e-05
        %v440 = vrsqrt.pop %v439
        %v441 = vmul.f32 %v440, %v439
        %v442 = vmul.f32 %v441, %v440
        %v443 = vmul.f32 0.5, %v442
        %v444 = vsub.f32 1.5, %v443
        %v445 = vmul.f32 %v440, %v444
        %vm446 = vweird.f32 %v439
        %vm447 = vweird.f32 %v440
        %vm448 = vmor %vm446, %vm447
        %v449 = vsel %vm448, %v440, %v445
        %v450 = vperm.slane %v449, 0
        %v451 = vmul.f32 %v403, %v450
        %v452 = vld [vmem:[%s3] sm:$0x1]
        %v454 = vperm.slane %v452, 0
        %v456 = vmul.f32 %v451, %v454
        %v457 = vld [vmem:[%s4] sm:$0x1]
        %v459 = vperm.slane %v457, 0
        %v461 = vadd.f32 %v456, %v459
        %vm462 = vcmp.ge.f32.partialorder %v461, 0.0
        %v463 = vld [vmem:[#allocation2] sm:$0x1]
        %v465 = vperm.slane %v463, 0
        %466 = vset.pattern.permute.xlu0 0
        %467 = vperm.xlu0 %466, %v465
        %v468 = vpop.permute.xlu0 %467
        %v470 = vmul.f32 %v468, %v461
        %v471 = vsel %vm462, %v461, %v470
        %472 = vst.msk [vmem:[%s265] sm:$0xff] %vm364, %v471
        %p473 = scmp.lt.s32.totalorder %s20, 1
        %s474 = scalar_select %p473, %s20, 1
        %s475 = smul.addr %s474, 8
        %s476 = scalar_lea.vmem %s6, %s475
        // Predicated region
        $region49: #{tcnn_forward.8} parent=43 // pred_check
          %p477 = pneg %p169
        $region50: #{tcnn_forward.8} parent=43 // pred_check_branch
          %479 = sbr.rel (%p477) target = $region52
        $region51: #{tcnn_forward.8} parent=43 // pred_region
          _
        $region52: #{tcnn_forward.8} parent=43 // pred_fallthru
          _
      $region44: #{tcnn_forward.8} parent=5 // pred_fallthru
        _
      %p480 = scmp.le.s32.totalorder 2, %s15
      // Predicated region
      $region53: #{tcnn_forward.8} parent=5 // pred_check
        %p481 = pneg %p480
      $region54: #{tcnn_forward.8} parent=5 // pred_check_branch
        %483 = sbr.rel (%p481) target = $region56
      $region55: #{tcnn_forward.8} parent=5 // pred_region
        %s484 = ssub.s32 %s15, 2
        // Predicated region
        $region57: #{tcnn_forward.8} parent=55 // pred_check
          %p485 = pneg %p175
        $region58: #{tcnn_forward.8} parent=55 // pred_check_branch
          %487 = sbr.rel (%p485) target = $region60
        $region59: #{tcnn_forward.8} parent=55 // pred_region
          %p488 = scmp.lt.s32.totalorder %s21, 1
          %s489 = scalar_select %p488, %s21, 1
          %s490 = smul.addr %s489, 8
          %s491 = scalar_lea.vmem %s6, %s490
        $region60: #{tcnn_forward.8} parent=55 // pred_fallthru
          _
      $region56: #{tcnn_forward.8} parent=5 // pred_fallthru
        _
    $region6: #{tcnn_forward.8} parent=1 // loop_footer
      %s19 = sadd.s32 1, %s15
    $region7: #{tcnn_forward.8} parent=1 // loop_footer_branch
      %14 = sbr.rel target = $region3
    $region8: #{tcnn_forward.8} parent=1 // loop_exit
      _
    %492 = vsyncpa [#allocation4], 1
    %s493 = scalar_lea.sflag [#allocation4], 1
    %494 = vsyncpa %s493, 1

// kernel: tcnn_forward.9
$region0: #{tcnn_forward.9}
  #allocation0 [shape = 'u32[]', space=smem, size = 0x4, offset = 0x4, fixed_abs, tag = 'smem constant byte address 0x4 - core index']
  #allocation1 [shape = 'u32[72,128]{1,0:T(1,128)}', space=vmem, size = 0x9000, scoped, tag = 'internal scratch']
  #allocation2 [shape = 'f32[1,1]{1,0:T(1,128)S(1)}', space=vmem, size = 0x200, scoped, tag = 'scoped memory for tcnn_forward.9']
  %s0 = inlined_call_operand.vmem [shape: f32[2,8,32], index: 0, kind: input, shape index: {}]
  %s1 = inlined_call_operand.hbm [shape: bf16[64,16], index: 1, kind: input, shape index: {}]
  %s2 = inlined_call_operand.vmem [shape: f32[1,16], index: 2, kind: input, shape index: {}]
  %s3 = inlined_call_operand.vmem [shape: f32[1,16], index: 3, kind: input, shape index: {}]
  %s4 = inlined_call_operand.vmem [shape: f32[1,16], index: 4, kind: input, shape index: {}]
  %s5 = inlined_call_operand.<no memory space> [shape: f32[1,1], index: 5, kind: input, shape index: {}]
  %s6 = inlined_call_operand.vmem [shape: f32[2,8,16], index: 6, kind: output, shape index: {}]
  %s7 = sld [smem:[#allocation0]]
  $region61: #{tcnn_forward.9} parent=0
    _
  %s9 = ssub.s32 1, %s7
  %s10 = scalar_select 0, %s9, %s7
  %v11 = vstv %s5
  %12 = vst [vmem:[#allocation2] sm:$0x1] %v11
  $region1: #{tcnn_forward.9} parent=0
    #allocation3 [shape = 'u8[16384]{0}', space=vmem, size = 0x4000, scoped, tag = 'input window, operand 1, single buffered']
    #allocation4 [shape = 's32[2]{0}', space=sflag, size = 0x8, scoped, tag = 'scoped memory for tcnn_forward.9']
    %13 = vsyncpa [#allocation4], 0
    loop: start=0, step=1, limit=4
    $region2: #{tcnn_forward.9} parent=1 // loop_pre_header
      _
    $region3: #{tcnn_forward.9} parent=1 // loop_header
      %s15 = sphi 0, %s19
      %p16 = scmp.ge.s32.totalorder %s15, 4
      %s25 = sphi 0, %s27
      %s28 = sphi 0, %s25
      %s29 = sphi 0, %s28
      %s45 = sphi 0, %s29
      %s49 = sphi 0, %s49
      %s51 = sphi 0, %s49
      %s52 = sphi 0, %s51
      %s66 = sphi 0, %s52
      %s70 = sphi 0, %s70
      %s72 = sphi 0, %s70
      %s73 = sphi 0, %s72
      %s87 = sphi 0, %s73
      %s91 = sphi 0, %s91
      %s93 = sphi 0, %s91
      %s94 = sphi 0, %s93
      %s108 = sphi 0, %s94
      %s112 = sphi 0, %s112
      %s114 = sphi 0, %s112
      %s115 = sphi 0, %s114
      %s129 = sphi 0, %s115
      %s133 = sphi 0, %s133
      %s135 = sphi 0, %s133
      %s136 = sphi 0, %s135
      %s150 = sphi 0, %s136
      %s156 = sphi 0, %s158
      %s159 = sphi 0, %s156
      %s160 = sphi 0, %s159
      %s176 = sphi 0, %s160
    $region4: #{tcnn_forward.9} parent=1 // loop_header_branch
      %18 = sbr.rel (%p16) target = $region8
    $region5: #{tcnn_forward.9} parent=1 // loop_body
      %s20 = ssub.s32 %s15, 1
      %s21 = ssub.s32 %s15, 2
      %s22 = sadd.s32 %s15, 1
      %s23 = ssub.s32 %s15, %s22
      %p24 = scmp.eq.s32.totalorder %s23, 0
      %s26 = sadd.s32 %s25, 1
      %s27 = scalar_select %p24, %s25, %s26
      %p30 = pneg %p24
      %p31 = scmp.eq.s32.totalorder %s15, 1
      %p32 = por %p30, %p31
      %p33 = scmp.ne.s32.totalorder %s25, %s28
      %p34 = scmp.eq.s32.totalorder %s15, 0
      %p35 = por %p33, %p34
      %p36 = scmp.ne.s32.totalorder %s25, %s28
      %p37 = scmp.eq.s32.totalorder %s20, 1
      %p38 = por %p36, %p37
      %p39 = scmp.ne.s32.totalorder %s28, %s29
      %p40 = scmp.eq.s32.totalorder %s20, 0
      %p41 = por %p39, %p40
      %p42 = scmp.ne.s32.totalorder %s28, %s29
      %p43 = scmp.eq.s32.totalorder %s21, 1
      %p44 = por %p42, %p43
      %p46 = scmp.ne.s32.totalorder %s29, %s45
      %p47 = scmp.eq.s32.totalorder %s21, 0
      %p48 = por %p46, %p47
      %s50 = sadd.s32 %s49, 1
      %p53 = scmp.eq.s32.totalorder %s15, 1
      %p54 = scmp.ne.s32.totalorder %s49, %s51
      %p55 = scmp.eq.s32.totalorder %s15, 0
      %p56 = por %p54, %p55
      %p57 = scmp.ne.s32.totalorder %s49, %s51
      %p58 = scmp.eq.s32.totalorder %s20, 1
      %p59 = por %p57, %p58
      %p60 = scmp.ne.s32.totalorder %s51, %s52
      %p61 = scmp.eq.s32.totalorder %s20, 0
      %p62 = por %p60, %p61
      %p63 = scmp.ne.s32.totalorder %s51, %s52
      %p64 = scmp.eq.s32.totalorder %s21, 1
      %p65 = por %p63, %p64
      %p67 = scmp.ne.s32.totalorder %s52, %s66
      %p68 = scmp.eq.s32.totalorder %s21, 0
      %p69 = por %p67, %p68
      %s71 = sadd.s32 %s70, 1
      %p74 = scmp.eq.s32.totalorder %s15, 1
      %p75 = scmp.ne.s32.totalorder %s70, %s72
      %p76 = scmp.eq.s32.totalorder %s15, 0
      %p77 = por %p75, %p76
      %p78 = scmp.ne.s32.totalorder %s70, %s72
      %p79 = scmp.eq.s32.totalorder %s20, 1
      %p80 = por %p78, %p79
      %p81 = scmp.ne.s32.totalorder %s72, %s73
      %p82 = scmp.eq.s32.totalorder %s20, 0
      %p83 = por %p81, %p82
      %p84 = scmp.ne.s32.totalorder %s72, %s73
      %p85 = scmp.eq.s32.totalorder %s21, 1
      %p86 = por %p84, %p85
      %p88 = scmp.ne.s32.totalorder %s73, %s87
      %p89 = scmp.eq.s32.totalorder %s21, 0
      %p90 = por %p88, %p89
      %s92 = sadd.s32 %s91, 1
      %p95 = scmp.eq.s32.totalorder %s15, 1
      %p96 = scmp.ne.s32.totalorder %s91, %s93
      %p97 = scmp.eq.s32.totalorder %s15, 0
      %p98 = por %p96, %p97
      %p99 = scmp.ne.s32.totalorder %s91, %s93
      %p100 = scmp.eq.s32.totalorder %s20, 1
      %p101 = por %p99, %p100
      %p102 = scmp.ne.s32.totalorder %s93, %s94
      %p103 = scmp.eq.s32.totalorder %s20, 0
      %p104 = por %p102, %p103
      %p105 = scmp.ne.s32.totalorder %s93, %s94
      %p106 = scmp.eq.s32.totalorder %s21, 1
      %p107 = por %p105, %p106
      %p109 = scmp.ne.s32.totalorder %s94, %s108
      %p110 = scmp.eq.s32.totalorder %s21, 0
      %p111 = por %p109, %p110
      %s113 = sadd.s32 %s112, 1
      %p116 = scmp.eq.s32.totalorder %s15, 1
      %p117 = scmp.ne.s32.totalorder %s112, %s114
      %p118 = scmp.eq.s32.totalorder %s15, 0
      %p119 = por %p117, %p118
      %p120 = scmp.ne.s32.totalorder %s112, %s114
      %p121 = scmp.eq.s32.totalorder %s20, 1
      %p122 = por %p120, %p121
      %p123 = scmp.ne.s32.totalorder %s114, %s115
      %p124 = scmp.eq.s32.totalorder %s20, 0
      %p125 = por %p123, %p124
      %p126 = scmp.ne.s32.totalorder %s114, %s115
      %p127 = scmp.eq.s32.totalorder %s21, 1
      %p128 = por %p126, %p127
      %p130 = scmp.ne.s32.totalorder %s115, %s129
      %p131 = scmp.eq.s32.totalorder %s21, 0
      %p132 = por %p130, %p131
      %s134 = sadd.s32 %s133, 1
      %p137 = scmp.eq.s32.totalorder %s15, 1
      %p138 = scmp.ne.s32.totalorder %s133, %s135
      %p139 = scmp.eq.s32.totalorder %s15, 0
      %p140 = por %p138, %p139
      %p141 = scmp.ne.s32.totalorder %s133, %s135
      %p142 = scmp.eq.s32.totalorder %s20, 1
      %p143 = por %p141, %p142
      %p144 = scmp.ne.s32.totalorder %s135, %s136
      %p145 = scmp.eq.s32.totalorder %s20, 0
      %p146 = por %p144, %p145
      %p147 = scmp.ne.s32.totalorder %s135, %s136
      %p148 = scmp.eq.s32.totalorder %s21, 1
      %p149 = por %p147, %p148
      %p151 = scmp.ne.s32.totalorder %s136, %s150
      %p152 = scmp.eq.s32.totalorder %s21, 0
      %p153 = por %p151, %p152
      %s154 = ssub.s32 %s15, %s22
      %p155 = scmp.eq.s32.totalorder %s154, 0
      %s157 = sadd.s32 %s156, 1
      %s158 = scalar_select %p155, %s156, %s157
      %p161 = pneg %p155
      %p162 = scmp.eq.s32.totalorder %s15, 1
      %p163 = por %p161, %p162
      %p164 = scmp.ne.s32.totalorder %s156, %s159
      %p165 = scmp.eq.s32.totalorder %s15, 0
      %p166 = por %p164, %p165
      %p167 = scmp.ne.s32.totalorder %s156, %s159
      %p168 = scmp.eq.s32.totalorder %s20, 1
      %p169 = por %p167, %p168
      %p170 = scmp.ne.s32.totalorder %s159, %s160
      %p171 = scmp.eq.s32.totalorder %s20, 0
      %p172 = por %p170, %p171
      %p173 = scmp.ne.s32.totalorder %s159, %s160
      %p174 = scmp.eq.s32.totalorder %s21, 1
      %p175 = por %p173, %p174
      %p177 = scmp.ne.s32.totalorder %s160, %s176
      %p178 = scmp.eq.s32.totalorder %s21, 0
      %p179 = por %p177, %p178
      %p180 = scmp.le.s32.totalorder 1, %s15
      %p181 = scmp.lt.s32.totalorder %s15, 3
      %p182 = pnand %p180, %p181
      %p183 = pneg %p182
      // Predicated region
      $region9: #{tcnn_forward.9} parent=5 // pred_check
        _
      $region10: #{tcnn_forward.9} parent=5 // pred_check_branch
        %185 = sbr.rel (%p182) target = $region12
      $region11: #{tcnn_forward.9} parent=5 // pred_region
        %s186 = ssub.s32 %s15, 1
        // Predicated region
        $region13: #{tcnn_forward.9} parent=11 // pred_check
          %p187 = pneg %p62
        $region14: #{tcnn_forward.9} parent=11 // pred_check_branch
          %189 = sbr.rel (%p187) target = $region16
        $region15: #{tcnn_forward.9} parent=11 // pred_region
          %191 = vsyncadd [#allocation4], 0
          %s192 = sshll.u32 %s1, 4
          %s193 = int_to_ptr.hbm [resolvable:$true] %s192
          %s194 = sshll.u32 [#allocation3], 4
          %s195 = int_to_ptr.vmem [resolvable:$true] %s194
          %200 = dma.hbm_to_vmem [thread:$0]  %s193, 512, %s195, [#allocation4], 64, 64, 4
        $region16: #{tcnn_forward.9} parent=11 // pred_fallthru
          _
        // Predicated region
        $region17: #{tcnn_forward.9} parent=11 // pred_check
          %p201 = pneg %p83
        $region18: #{tcnn_forward.9} parent=11 // pred_check_branch
          %203 = sbr.rel (%p201) target = $region20
        $region19: #{tcnn_forward.9} parent=11 // pred_region
          _
        $region20: #{tcnn_forward.9} parent=11 // pred_fallthru
          _
        // Predicated region
        $region21: #{tcnn_forward.9} parent=11 // pred_check
          %p204 = pneg %p104
        $region22: #{tcnn_forward.9} parent=11 // pred_check_branch
          %206 = sbr.rel (%p204) target = $region24
        $region23: #{tcnn_forward.9} parent=11 // pred_region
          _
        $region24: #{tcnn_forward.9} parent=11 // pred_fallthru
          _
        // Predicated region
        $region25: #{tcnn_forward.9} parent=11 // pred_check
          %p207 = pneg %p125
        $region26: #{tcnn_forward.9} parent=11 // pred_check_branch
          %209 = sbr.rel (%p207) target = $region28
        $region27: #{tcnn_forward.9} parent=11 // pred_region
          _
        $region28: #{tcnn_forward.9} parent=11 // pred_fallthru
          _
        // Predicated region
        $region29: #{tcnn_forward.9} parent=11 // pred_check
          %p210 = pneg %p146
        $region30: #{tcnn_forward.9} parent=11 // pred_check_branch
          %212 = sbr.rel (%p210) target = $region32
        $region31: #{tcnn_forward.9} parent=11 // pred_region
          _
        $region32: #{tcnn_forward.9} parent=11 // pred_fallthru
          _
      $region12: #{tcnn_forward.9} parent=5 // pred_fallthru
        _
      %p213 = scmp.lt.s32.totalorder %s15, 2
      // Predicated region
      $region33: #{tcnn_forward.9} parent=5 // pred_check
        %p214 = pneg %p213
      $region34: #{tcnn_forward.9} parent=5 // pred_check_branch
        %216 = sbr.rel (%p214) target = $region36
      $region35: #{tcnn_forward.9} parent=5 // pred_region
        // Predicated region
        $region37: #{tcnn_forward.9} parent=35 // pred_check
          %p217 = pneg %p35
        $region38: #{tcnn_forward.9} parent=35 // pred_check_branch
          %219 = sbr.rel (%p217) target = $region40
        $region39: #{tcnn_forward.9} parent=35 // pred_region
          %p220 = scmp.lt.s32.totalorder %s15, 1
          %s221 = scalar_select %p220, %s15, 1
          %s222 = smul.addr %s221, 8
          %s223 = scalar_lea.vmem %s0, %s222
        $region40: #{tcnn_forward.9} parent=35 // pred_fallthru
          _
      $region36: #{tcnn_forward.9} parent=5 // pred_fallthru
        _
      %p224 = scmp.le.s32.totalorder 1, %s15
      %p225 = scmp.lt.s32.totalorder %s15, 3
      %p226 = pnand %p224, %p225
      %p227 = pneg %p226
      // Predicated region
      $region41: #{tcnn_forward.9} parent=5 // pred_check
        _
      $region42: #{tcnn_forward.9} parent=5 // pred_check_branch
        %229 = sbr.rel (%p226) target = $region44
      $region43: #{tcnn_forward.9} parent=5 // pred_region
        %s230 = ssub.s32 %s15, 1
        // Predicated region
        $region45: #{tcnn_forward.9} parent=43 // pred_check
          %p231 = pneg %p62
        $region46: #{tcnn_forward.9} parent=43 // pred_check_branch
          %233 = sbr.rel (%p231) target = $region48
        $region47: #{tcnn_forward.9} parent=43 // pred_region
          %235 = dma.done [#allocation4], 512
        $region48: #{tcnn_forward.9} parent=43 // pred_fallthru
          _
        %p236 = scmp.lt.s32.totalorder %s20, 1
        %s237 = scalar_select %p236, %s20, 1
        %s238 = smul.addr %s237, 8
        %s239 = scalar_lea.vmem %s0, %s238
        %p240 = pneg %p41
        %p241 = pneg %p38
        %p242 = pneg %p62
        %p243 = pneg %p59
        %p244 = pneg %p83
        %p245 = pneg %p80
        %p246 = pneg %p104
        %p247 = pneg %p101
        %p248 = pneg %p125
        %p249 = pneg %p122
        %p250 = pneg %p146
        %p251 = pneg %p143
        %p252 = pneg %p172
        %p253 = pneg %p169
        %p254 = scmp.lt.s32.totalorder %s20, 1
        %s255 = scalar_select %p254, %s20, 1
        %s256 = smul.addr %s255, 8
        %s257 = scalar_lea.vmem %s6, %s256
        %p258 = scmp.lt.s32.totalorder %s20, 1
        %s259 = scalar_select %p258, %s20, 1
        %s260 = smul.addr %s259, 8
        %s261 = scalar_lea.vmem %s0, %s260
        %p262 = scmp.lt.s32.totalorder %s20, 1
        %s263 = scalar_select %p262, %s20, 1
        %s264 = smul.addr %s263, 8
        %s265 = scalar_lea.vmem %s6, %s264
        %v267 = vld [vmem:[%s261] sm:$0xff]
        %v269 = vrot.slane %v267, 7
        %vm271 = vcmask 1040384
        %v272 = vsel %vm271, 0.0, %v269
        %vm274 = vcmask 1046528
        %v275 = vrot.slane %v272, 1
        %v276 = vrot.slane %v269, 1
        %v277 = vsel %vm274, %v275, %v276
        %278 = vrot.lane.b32.xlu0 %v277, 32
        %v279 = vpop.permute.xlu0 %278
        %vm281 = vcmask 261120
        %v282 = vsel %vm281, %v272, %v279
        %v283 = vpack.c.bf16 %v282, %v282
        %v284 = vld [vmem:[#allocation3] sm:$0xf]
        %v285 = vld [vmem:[#allocation3 + $0x4] sm:$0xf]
        %v286 = vld [vmem:[#allocation3 + $0x8] sm:$0xf]
        %v287 = vld [vmem:[#allocation3 + $0xc] sm:$0xf]
        %v288 = vld [vmem:[#allocation3 + $0x10] sm:$0xf]
        %v289 = vld [vmem:[#allocation3 + $0x14] sm:$0xf]
        %v290 = vld [vmem:[#allocation3 + $0x18] sm:$0xf]
        %v291 = vld [vmem:[#allocation3 + $0x1c] sm:$0xf]
        %v292 = vld [vmem:[%s2] sm:$0x1]
        %v294 = vperm.slane %v292, 0
        %v304 = vunpack.c.l.b16 %v284
        %v305 = vunpack.c.l.b16 %v285
        %v306 = vunpack.c.l.b16 %v286
        %v307 = vunpack.c.l.b16 %v287
        %v308 = vunpack.c.l.b16 %v288
        %v309 = vunpack.c.l.b16 %v289
        %v310 = vunpack.c.l.b16 %v290
        %v311 = vunpack.c.l.b16 %v291
        %v312 = vpack.c.b16 %v305, %v304
        %v313 = vpack.c.b16 %v307, %v306
        %v314 = vpack.c.b16 %v309, %v308
        %v315 = vpack.c.b16 %v311, %v310
        %vm320 = vcmask 523264
        %v322 = vsel %vm320, %v283, 0
        %324 = vmatpush.bf16.msra.mxu0 0
        %325 = vmatpush.bf16.msra.mxu0 0
        %326 = vmatpush.bf16.msra.mxu0 0
        %327 = vmatpush.bf16.msra.mxu0 0
        %328 = vmatpush.bf16.msra.mxu0 %v315
        %329 = vmatpush.bf16.msra.mxu0 %v314
        %330 = vmatpush.bf16.msra.mxu0 %v313
        %331 = vmatpush.bf16.msra.mxu0 %v312
        %332 = vmatmul.bf16.gmra.mxu0 %v322
        %v333 = vpop.f32.mrf.mxu0
        %v334 = vadd.f32 %v294, %v333
        %v335 = vpop.f32.mrf.mxu0
        %336 = vdwg.mxu0
        %vm337 = vcmask 130048
        %v338 = vsel %vm337, %v334, 0.0
        %v339 = vrot.slane %v338, 4
        %v340 = vadd.f32 %v338, %v339
        %v341 = vrot.slane %v340, 2
        %v342 = vadd.f32 %v340, %v341
        %v343 = vrot.slane %v342, 1
        %v344 = vadd.f32 %v342, %v343
        %346 = vrot.lane.b32.xlu0 %v344, 120
        %v347 = vpop.permute.xlu0 %346
        %v349 = vadd.f32 %v344, %v347
        %v350 = vmul.f32 %v349, 0.0625
        %352 = vrot.lane.b32.xlu0 %v350, 8
        %v353 = vpop.permute.xlu0 %352
        %vm355 = vcmask 64512
        %v356 = vsel %vm355, %v350, %v353
        %v357 = vperm.slane %v356, 0
        %v358 = vsub.f32 %v334, %v357
        %v359 = vmul.f32 %v358, %v358
        %v360 = vsel %vm337, %v359, 0.0
        %v361 = vrot.slane %v360, 4
        %v362 = vadd.f32 %v360, %v361
        %v363 = vrot.slane %v362, 2
        %v364 = vadd.f32 %v362, %v363
        %v365 = vrot.slane %v364, 1
        %v366 = vadd.f32 %v364, %v365
        %368 = vrot.lane.b32.xlu0 %v366, 120
        %v369 = vpop.permute.xlu0 %368
        %v371 = vadd.f32 %v366, %v369
        %v372 = vmul.f32 %v371, 0.0625
        %374 = vrot.lane.b32.xlu0 %v372, 8
        %v375 = vpop.permute.xlu0 %374
        %v377 = vsel %vm355, %v372, %v375
        %v378 = vadd.f32 %v377, 1e-05
        %v379 = vrsqrt.pop %v378
        %v380 = vmul.f32 %v379, %v378
        %v381 = vmul.f32 %v380, %v379
        %v382 = vmul.f32 0.5, %v381
        %v383 = vsub.f32 1.5, %v382
        %v384 = vmul.f32 %v379, %v383
        %vm385 = vweird.f32 %v378
        %vm386 = vweird.f32 %v379
        %vm387 = vmor %vm385, %vm386
        %v388 = vsel %vm387, %v379, %v384
        %v389 = vperm.slane %v388, 0
        %v390 = vmul.f32 %v358, %v389
        %v391 = vld [vmem:[%s3] sm:$0x1]
        %v393 = vperm.slane %v391, 0
        %v395 = vmul.f32 %v390, %v393
        %v396 = vld [vmem:[%s4] sm:$0x1]
        %v398 = vperm.slane %v396, 0
        %v400 = vadd.f32 %v395, %v398
        %vm401 = vcmp.ge.f32.partialorder %v400, 0.0
        %v402 = vld [vmem:[#allocation2] sm:$0x1]
        %v404 = vperm.slane %v402, 0
        %405 = vset.pattern.permute.xlu0 0
        %406 = vperm.xlu0 %405, %v404
        %v407 = vpop.permute.xlu0 %406
        %v409 = vmul.f32 %v407, %v400
        %v410 = vsel %vm401, %v400, %v409
        %411 = vst.msk [vmem:[%s265] sm:$0xff] %vm337, %v410
        %p412 = scmp.lt.s32.totalorder %s20, 1
        %s413 = scalar_select %p412, %s20, 1
        %s414 = smul.addr %s413, 8
        %s415 = scalar_lea.vmem %s6, %s414
        // Predicated region
        $region49: #{tcnn_forward.9} parent=43 // pred_check
          %p416 = pneg %p169
        $region50: #{tcnn_forward.9} parent=43 // pred_check_branch
          %418 = sbr.rel (%p416) target = $region52
        $region51: #{tcnn_forward.9} parent=43 // pred_region
          _
        $region52: #{tcnn_forward.9} parent=43 // pred_fallthru
          _
      $region44: #{tcnn_forward.9} parent=5 // pred_fallthru
        _
      %p419 = scmp.le.s32.totalorder 2, %s15
      // Predicated region
      $region53: #{tcnn_forward.9} parent=5 // pred_check
        %p420 = pneg %p419
      $region54: #{tcnn_forward.9} parent=5 // pred_check_branch
        %422 = sbr.rel (%p420) target = $region56
      $region55: #{tcnn_forward.9} parent=5 // pred_region
        %s423 = ssub.s32 %s15, 2
        // Predicated region
        $region57: #{tcnn_forward.9} parent=55 // pred_check
          %p424 = pneg %p175
        $region58: #{tcnn_forward.9} parent=55 // pred_check_branch
          %426 = sbr.rel (%p424) target = $region60
        $region59: #{tcnn_forward.9} parent=55 // pred_region
          %p427 = scmp.lt.s32.totalorder %s21, 1
          %s428 = scalar_select %p427, %s21, 1
          %s429 = smul.addr %s428, 8
          %s430 = scalar_lea.vmem %s6, %s429
        $region60: #{tcnn_forward.9} parent=55 // pred_fallthru
          _
      $region56: #{tcnn_forward.9} parent=5 // pred_fallthru
        _
    $region6: #{tcnn_forward.9} parent=1 // loop_footer
      %s19 = sadd.s32 1, %s15
    $region7: #{tcnn_forward.9} parent=1 // loop_footer_branch
      %14 = sbr.rel target = $region3
    $region8: #{tcnn_forward.9} parent=1 // loop_exit
      _
    %431 = vsyncpa [#allocation4], 1
    %s432 = scalar_lea.sflag [#allocation4], 1
    %433 = vsyncpa %s432, 1

// kernel: tcnn_forward.13
$region0: #{tcnn_forward.13}
  #allocation0 [shape = 'u32[]', space=smem, size = 0x4, offset = 0x4, fixed_abs, tag = 'smem constant byte address 0x4 - core index']
  #allocation1 [shape = 'u32[72,128]{1,0:T(1,128)}', space=vmem, size = 0x9000, scoped, tag = 'internal scratch']
  #allocation2 [shape = 'f32[1,1]{1,0:T(1,128)S(1)}', space=vmem, size = 0x200, scoped, tag = 'scoped memory for tcnn_forward.13']
  %s0 = inlined_call_operand.vmem [shape: f32[2,8,64], index: 0, kind: input, shape index: {}]
  %s1 = inlined_call_operand.vmem [shape: f32[2,8,64], index: 1, kind: input, shape index: {}]
  %s2 = inlined_call_operand.hbm [shape: bf16[128,16], index: 2, kind: input, shape index: {}]
  %s3 = inlined_call_operand.hbm [shape: bf16[128,16], index: 3, kind: input, shape index: {}]
  %s4 = inlined_call_operand.vmem [shape: f32[1,16], index: 4, kind: input, shape index: {}]
  %s5 = inlined_call_operand.vmem [shape: f32[1,16], index: 5, kind: input, shape index: {}]
  %s6 = inlined_call_operand.vmem [shape: f32[1,16], index: 6, kind: input, shape index: {}]
  %s7 = inlined_call_operand.<no memory space> [shape: f32[1,1], index: 7, kind: input, shape index: {}]
  %s8 = inlined_call_operand.hbm [shape: f32[2,8,16], index: 8, kind: output, shape index: {}]
  %s9 = sld [smem:[#allocation0]]
  $region73: #{tcnn_forward.13} parent=0
    _
  %s11 = ssub.s32 1, %s9
  %s12 = scalar_select 0, %s11, %s9
  %v13 = vstv %s7
  %14 = vst [vmem:[#allocation2] sm:$0x1] %v13
  $region1: #{tcnn_forward.13} parent=0
    #allocation3 [shape = 'u8[32768]{0}', space=vmem, size = 0x8000, scoped, tag = 'input window, operand 2, single buffered']
    #allocation4 [shape = 's32[2]{0}', space=sflag, size = 0x8, scoped, tag = 'scoped memory for tcnn_forward.13']
    #allocation5 [shape = 's32[2]{0}', space=sflag, size = 0x8, scoped, tag = 'scoped memory for tcnn_forward.13']
    #allocation6 [shape = 'u8[32768]{0}', space=vmem, size = 0x8000, scoped, tag = 'input window, operand 3, single buffered']
    #allocation7 [shape = 's32[1]{0}', space=sflag, size = 0x4, scoped, tag = 'scoped memory for tcnn_forward.13']
    #allocation8 [shape = 'u8[8192]{0}', space=vmem, size = 0x2000, scoped, tag = 'output window, operand 0']
    %15 = vsyncpa [#allocation4], 0
    %16 = vsyncpa [#allocation7], 0
    %17 = vsyncpa [#allocation5], 0
    %s18 = scalar_lea.sflag [#allocation5], 1
    %19 = vsyncpa %s18, 0
    loop: start=0, step=1, limit=4
    $region2: #{tcnn_forward.13} parent=1 // loop_pre_header
      _
    $region3: #{tcnn_forward.13} parent=1 // loop_header
      %s21 = sphi 0, %s25
      %p22 = scmp.ge.s32.totalorder %s21, 4
      %s31 = sphi 0, %s33
      %s34 = sphi 0, %s31
      %s35 = sphi 0, %s34
      %s51 = sphi 0, %s35
      %s57 = sphi 0, %s59
      %s60 = sphi 0, %s57
      %s61 = sphi 0, %s60
      %s77 = sphi 0, %s61
      %s81 = sphi 0, %s81
      %s83 = sphi 0, %s81
      %s84 = sphi 0, %s83
      %s98 = sphi 0, %s84
      %s102 = sphi 0, %s102
      %s104 = sphi 0, %s102
      %s105 = sphi 0, %s104
      %s119 = sphi 0, %s105
      %s123 = sphi 0, %s123
      %s125 = sphi 0, %s123
      %s126 = sphi 0, %s125
      %s140 = sphi 0, %s126
      %s144 = sphi 0, %s144
      %s146 = sphi 0, %s144
      %s147 = sphi 0, %s146
      %s161 = sphi 0, %s147
      %s165 = sphi 0, %s165
      %s167 = sphi 0, %s165
      %s168 = sphi 0, %s167
      %s182 = sphi 0, %s168
      %s186 = sphi 0, %s186
      %s188 = sphi 0, %s186
      %s189 = sphi 0, %s188
      %s203 = sphi 0, %s189
      %s209 = sphi 0, %s211
      %s212 = sphi 0, %s209
      %s213 = sphi 0, %s212
      %s229 = sphi 0, %s213
    $region4: #{tcnn_forward.13} parent=1 // loop_header_branch
      %24 = sbr.rel (%p22) target = $region8
    $region5: #{tcnn_forward.13} parent=1 // loop_body
      %s26 = ssub.s32 %s21, 1
      %s27 = ssub.s32 %s21, 2
      %s28 = sadd.s32 %s21, 1
      %s29 = ssub.s32 %s21, %s28
      %p30 = scmp.eq.s32.totalorder %s29, 0
      %s32 = sadd.s32 %s31, 1
      %s33 = scalar_select %p30, %s31, %s32
      %p36 = pneg %p30
      %p37 = scmp.eq.s32.totalorder %s21, 1
      %p38 = por %p36, %p37
      %p39 = scmp.ne.s32.totalorder %s31, %s34
      %p40 = scmp.eq.s32.totalorder %s21, 0
      %p41 = por %p39, %p40
      %p42 = scmp.ne.s32.totalorder %s31, %s34
      %p43 = scmp.eq.s32.totalorder %s26, 1
      %p44 = por %p42, %p43
      %p45 = scmp.ne.s32.totalorder %s34, %s35
      %p46 = scmp.eq.s32.totalorder %s26, 0
      %p47 = por %p45, %p46
      %p48 = scmp.ne.s32.totalorder %s34, %s35
      %p49 = scmp.eq.s32.totalorder %s27, 1
      %p50 = por %p48, %p49
      %p52 = scmp.ne.s32.totalorder %s35, %s51
      %p53 = scmp.eq.s32.totalorder %s27, 0
      %p54 = por %p52, %p53
      %s55 = ssub.s32 %s21, %s28
      %p56 = scmp.eq.s32.totalorder %s55, 0
      %s58 = sadd.s32 %s57, 1
      %s59 = scalar_select %p56, %s57, %s58
      %p62 = pneg %p56
      %p63 = scmp.eq.s32.totalorder %s21, 1
      %p64 = por %p62, %p63
      %p65 = scmp.ne.s32.totalorder %s57, %s60
      %p66 = scmp.eq.s32.totalorder %s21, 0
      %p67 = por %p65, %p66
      %p68 = scmp.ne.s32.totalorder %s57, %s60
      %p69 = scmp.eq.s32.totalorder %s26, 1
      %p70 = por %p68, %p69
      %p71 = scmp.ne.s32.totalorder %s60, %s61
      %p72 = scmp.eq.s32.totalorder %s26, 0
      %p73 = por %p71, %p72
      %p74 = scmp.ne.s32.totalorder %s60, %s61
      %p75 = scmp.eq.s32.totalorder %s27, 1
      %p76 = por %p74, %p75
      %p78 = scmp.ne.s32.totalorder %s61, %s77
      %p79 = scmp.eq.s32.totalorder %s27, 0
      %p80 = por %p78, %p79
      %s82 = sadd.s32 %s81, 1
      %p85 = scmp.eq.s32.totalorder %s21, 1
      %p86 = scmp.ne.s32.totalorder %s81, %s83
      %p87 = scmp.eq.s32.totalorder %s21, 0
      %p88 = por %p86, %p87
      %p89 = scmp.ne.s32.totalorder %s81, %s83
      %p90 = scmp.eq.s32.totalorder %s26, 1
      %p91 = por %p89, %p90
      %p92 = scmp.ne.s32.totalorder %s83, %s84
      %p93 = scmp.eq.s32.totalorder %s26, 0
      %p94 = por %p92, %p93
      %p95 = scmp.ne.s32.totalorder %s83, %s84
      %p96 = scmp.eq.s32.totalorder %s27, 1
      %p97 = por %p95, %p96
      %p99 = scmp.ne.s32.totalorder %s84, %s98
      %p100 = scmp.eq.s32.totalorder %s27, 0
      %p101 = por %p99, %p100
      %s103 = sadd.s32 %s102, 1
      %p106 = scmp.eq.s32.totalorder %s21, 1
      %p107 = scmp.ne.s32.totalorder %s102, %s104
      %p108 = scmp.eq.s32.totalorder %s21, 0
      %p109 = por %p107, %p108
      %p110 = scmp.ne.s32.totalorder %s102, %s104
      %p111 = scmp.eq.s32.totalorder %s26, 1
      %p112 = por %p110, %p111
      %p113 = scmp.ne.s32.totalorder %s104, %s105
      %p114 = scmp.eq.s32.totalorder %s26, 0
      %p115 = por %p113, %p114
      %p116 = scmp.ne.s32.totalorder %s104, %s105
      %p117 = scmp.eq.s32.totalorder %s27, 1
      %p118 = por %p116, %p117
      %p120 = scmp.ne.s32.totalorder %s105, %s119
      %p121 = scmp.eq.s32.totalorder %s27, 0
      %p122 = por %p120, %p121
      %s124 = sadd.s32 %s123, 1
      %p127 = scmp.eq.s32.totalorder %s21, 1
      %p128 = scmp.ne.s32.totalorder %s123, %s125
      %p129 = scmp.eq.s32.totalorder %s21, 0
      %p130 = por %p128, %p129
      %p131 = scmp.ne.s32.totalorder %s123, %s125
      %p132 = scmp.eq.s32.totalorder %s26, 1
      %p133 = por %p131, %p132
      %p134 = scmp.ne.s32.totalorder %s125, %s126
      %p135 = scmp.eq.s32.totalorder %s26, 0
      %p136 = por %p134, %p135
      %p137 = scmp.ne.s32.totalorder %s125, %s126
      %p138 = scmp.eq.s32.totalorder %s27, 1
      %p139 = por %p137, %p138
      %p141 = scmp.ne.s32.totalorder %s126, %s140
      %p142 = scmp.eq.s32.totalorder %s27, 0
      %p143 = por %p141, %p142
      %s145 = sadd.s32 %s144, 1
      %p148 = scmp.eq.s32.totalorder %s21, 1
      %p149 = scmp.ne.s32.totalorder %s144, %s146
      %p150 = scmp.eq.s32.totalorder %s21, 0
      %p151 = por %p149, %p150
      %p152 = scmp.ne.s32.totalorder %s144, %s146
      %p153 = scmp.eq.s32.totalorder %s26, 1
      %p154 = por %p152, %p153
      %p155 = scmp.ne.s32.totalorder %s146, %s147
      %p156 = scmp.eq.s32.totalorder %s26, 0
      %p157 = por %p155, %p156
      %p158 = scmp.ne.s32.totalorder %s146, %s147
      %p159 = scmp.eq.s32.totalorder %s27, 1
      %p160 = por %p158, %p159
      %p162 = scmp.ne.s32.totalorder %s147, %s161
      %p163 = scmp.eq.s32.totalorder %s27, 0
      %p164 = por %p162, %p163
      %s166 = sadd.s32 %s165, 1
      %p169 = scmp.eq.s32.totalorder %s21, 1
      %p170 = scmp.ne.s32.totalorder %s165, %s167
      %p171 = scmp.eq.s32.totalorder %s21, 0
      %p172 = por %p170, %p171
      %p173 = scmp.ne.s32.totalorder %s165, %s167
      %p174 = scmp.eq.s32.totalorder %s26, 1
      %p175 = por %p173, %p174
      %p176 = scmp.ne.s32.totalorder %s167, %s168
      %p177 = scmp.eq.s32.totalorder %s26, 0
      %p178 = por %p176, %p177
      %p179 = scmp.ne.s32.totalorder %s167, %s168
      %p180 = scmp.eq.s32.totalorder %s27, 1
      %p181 = por %p179, %p180
      %p183 = scmp.ne.s32.totalorder %s168, %s182
      %p184 = scmp.eq.s32.totalorder %s27, 0
      %p185 = por %p183, %p184
      %s187 = sadd.s32 %s186, 1
      %p190 = scmp.eq.s32.totalorder %s21, 1
      %p191 = scmp.ne.s32.totalorder %s186, %s188
      %p192 = scmp.eq.s32.totalorder %s21, 0
      %p193 = por %p191, %p192
      %p194 = scmp.ne.s32.totalorder %s186, %s188
      %p195 = scmp.eq.s32.totalorder %s26, 1
      %p196 = por %p194, %p195
      %p197 = scmp.ne.s32.totalorder %s188, %s189
      %p198 = scmp.eq.s32.totalorder %s26, 0
      %p199 = por %p197, %p198
      %p200 = scmp.ne.s32.totalorder %s188, %s189
      %p201 = scmp.eq.s32.totalorder %s27, 1
      %p202 = por %p200, %p201
      %p204 = scmp.ne.s32.totalorder %s189, %s203
      %p205 = scmp.eq.s32.totalorder %s27, 0
      %p206 = por %p204, %p205
      %s207 = ssub.s32 %s21, %s28
      %p208 = scmp.eq.s32.totalorder %s207, 0
      %s210 = sadd.s32 %s209, 1
      %s211 = scalar_select %p208, %s209, %s210
      %p214 = pneg %p208
      %p215 = scmp.eq.s32.totalorder %s21, 1
      %p216 = por %p214, %p215
      %p217 = scmp.ne.s32.totalorder %s209, %s212
      %p218 = scmp.eq.s32.totalorder %s21, 0
      %p219 = por %p217, %p218
      %p220 = scmp.ne.s32.totalorder %s209, %s212
      %p221 = scmp.eq.s32.totalorder %s26, 1
      %p222 = por %p220, %p221
      %p223 = scmp.ne.s32.totalorder %s212, %s213
      %p224 = scmp.eq.s32.totalorder %s26, 0
      %p225 = por %p223, %p224
      %p226 = scmp.ne.s32.totalorder %s212, %s213
      %p227 = scmp.eq.s32.totalorder %s27, 1
      %p228 = por %p226, %p227
      %p230 = scmp.ne.s32.totalorder %s213, %s229
      %p231 = scmp.eq.s32.totalorder %s27, 0
      %p232 = por %p230, %p231
      %p233 = scmp.le.s32.totalorder 1, %s21
      %p234 = scmp.lt.s32.totalorder %s21, 3
      %p235 = pnand %p233, %p234
      %p236 = pneg %p235
      // Predicated region
      $region9: #{tcnn_forward.13} parent=5 // pred_check
        _
      $region10: #{tcnn_forward.13} parent=5 // pred_check_branch
        %238 = sbr.rel (%p235) target = $region12
      $region11: #{tcnn_forward.13} parent=5 // pred_region
        %s239 = ssub.s32 %s21, 1
        // Predicated region
        $region13: #{tcnn_forward.13} parent=11 // pred_check
          %p240 = pneg %p94
        $region14: #{tcnn_forward.13} parent=11 // pred_check_branch
          %242 = sbr.rel (%p240) target = $region16
        $region15: #{tcnn_forward.13} parent=11 // pred_region
          %244 = vsyncadd [#allocation4], 0
          %s245 = sshll.u32 %s2, 4
          %s246 = int_to_ptr.hbm [resolvable:$true] %s245
          %s247 = sshll.u32 [#allocation3], 4
          %s248 = int_to_ptr.vmem [resolvable:$true] %s247
          %253 = dma.hbm_to_vmem [thread:$0]  %s246, 1024, %s248, [#allocation4], 64, 64, 4
        $region16: #{tcnn_forward.13} parent=11 // pred_fallthru
          _
        // Predicated region
        $region17: #{tcnn_forward.13} parent=11 // pred_check
          %p254 = pneg %p115
        $region18: #{tcnn_forward.13} parent=11 // pred_check_branch
          %256 = sbr.rel (%p254) target = $region20
        $region19: #{tcnn_forward.13} parent=11 // pred_region
          %258 = vsyncadd [#allocation7], 0
          %s259 = sshll.u32 %s3, 4
          %s260 = int_to_ptr.hbm [resolvable:$true] %s259
          %s261 = sshll.u32 [#allocation6], 4
          %s262 = int_to_ptr.vmem [resolvable:$true] %s261
          %267 = dma.hbm_to_vmem [thread:$0]  %s260, 1024, %s262, [#allocation7], 64, 64, 4
        $region20: #{tcnn_forward.13} parent=11 // pred_fallthru
          _
        // Predicated region
        $region21: #{tcnn_forward.13} parent=11 // pred_check
          %p268 = pneg %p136
        $region22: #{tcnn_forward.13} parent=11 // pred_check_branch
          %270 = sbr.rel (%p268) target = $region24
        $region23: #{tcnn_forward.13} parent=11 // pred_region
          _
        $region24: #{tcnn_forward.13} parent=11 // pred_fallthru
          _
        // Predicated region
        $region25: #{tcnn_forward.13} parent=11 // pred_check
          %p271 = pneg %p157
        $region26: #{tcnn_forward.13} parent=11 // pred_check_branch
          %273 = sbr.rel (%p271) target = $region28
        $region27: #{tcnn_forward.13} parent=11 // pred_region
          _
        $region28: #{tcnn_forward.13} parent=11 // pred_fallthru
          _
        // Predicated region
        $region29: #{tcnn_forward.13} parent=11 // pred_check
          %p274 = pneg %p178
        $region30: #{tcnn_forward.13} parent=11 // pred_check_branch
          %276 = sbr.rel (%p274) target = $region32
        $region31: #{tcnn_forward.13} parent=11 // pred_region
          _
        $region32: #{tcnn_forward.13} parent=11 // pred_fallthru
          _
        // Predicated region
        $region33: #{tcnn_forward.13} parent=11 // pred_check
          %p277 = pneg %p199
        $region34: #{tcnn_forward.13} parent=11 // pred_check_branch
          %279 = sbr.rel (%p277) target = $region36
        $region35: #{tcnn_forward.13} parent=11 // pred_region
          _
        $region36: #{tcnn_forward.13} parent=11 // pred_fallthru
          _
      $region12: #{tcnn_forward.13} parent=5 // pred_fallthru
        _
      %p280 = scmp.lt.s32.totalorder %s21, 2
      // Predicated region
      $region37: #{tcnn_forward.13} parent=5 // pred_check
        %p281 = pneg %p280
      $region38: #{tcnn_forward.13} parent=5 // pred_check_branch
        %283 = sbr.rel (%p281) target = $region40
      $region39: #{tcnn_forward.13} parent=5 // pred_region
        // Predicated region
        $region41: #{tcnn_forward.13} parent=39 // pred_check
          %p284 = pneg %p41
        $region42: #{tcnn_forward.13} parent=39 // pred_check_branch
          %286 = sbr.rel (%p284) target = $region44
        $region43: #{tcnn_forward.13} parent=39 // pred_region
          %p287 = scmp.lt.s32.totalorder %s21, 1
          %s288 = scalar_select %p287, %s21, 1
          %s289 = smul.addr %s288, 8
          %s290 = scalar_lea.vmem %s0, %s289
        $region44: #{tcnn_forward.13} parent=39 // pred_fallthru
          _
        // Predicated region
        $region45: #{tcnn_forward.13} parent=39 // pred_check
          %p291 = pneg %p67
        $region46: #{tcnn_forward.13} parent=39 // pred_check_branch
          %293 = sbr.rel (%p291) target = $region48
        $region47: #{tcnn_forward.13} parent=39 // pred_region
          %p294 = scmp.lt.s32.totalorder %s21, 1
          %s295 = scalar_select %p294, %s21, 1
          %s296 = smul.addr %s295, 8
          %s297 = scalar_lea.vmem %s1, %s296
        $region48: #{tcnn_forward.13} parent=39 // pred_fallthru
          _
      $region40: #{tcnn_forward.13} parent=5 // pred_fallthru
        _
      %p298 = scmp.le.s32.totalorder 1, %s21
      %p299 = scmp.lt.s32.totalorder %s21, 3
      %p300 = pnand %p298, %p299
      %p301 = pneg %p300
      // Predicated region
      $region49: #{tcnn_forward.13} parent=5 // pred_check
        _
      $region50: #{tcnn_forward.13} parent=5 // pred_check_branch
        %303 = sbr.rel (%p300) target = $region52
      $region51: #{tcnn_forward.13} parent=5 // pred_region
        %s304 = ssub.s32 %s21, 1
        // Predicated region
        $region53: #{tcnn_forward.13} parent=51 // pred_check
          %p305 = pneg %p94
        $region54: #{tcnn_forward.13} parent=51 // pred_check_branch
          %307 = sbr.rel (%p305) target = $region56
        $region55: #{tcnn_forward.13} parent=51 // pred_region
          %309 = dma.done [#allocation4], 1024
        $region56: #{tcnn_forward.13} parent=51 // pred_fallthru
          _
        // Predicated region
        $region57: #{tcnn_forward.13} parent=51 // pred_check
          %p310 = pneg %p115
        $region58: #{tcnn_forward.13} parent=51 // pred_check_branch
          %312 = sbr.rel (%p310) target = $region60
        $region59: #{tcnn_forward.13} parent=51 // pred_region
          %314 = dma.done [#allocation7], 1024
        $region60: #{tcnn_forward.13} parent=51 // pred_fallthru
          _
        %p315 = scmp.lt.s32.totalorder %s26, 1
        %s316 = scalar_select %p315, %s26, 1
        %s317 = smul.addr %s316, 8
        %s318 = scalar_lea.vmem %s0, %s317
        %p319 = pneg %p47
        %p320 = pneg %p44
        %p321 = scmp.lt.s32.totalorder %s26, 1
        %s322 = scalar_select %p321, %s26, 1
        %s323 = smul.addr %s322, 8
        %s324 = scalar_lea.vmem %s1, %s323
        %p325 = pneg %p73
        %p326 = pneg %p70
        %p327 = pneg %p94
        %p328 = pneg %p91
        %p329 = pneg %p115
        %p330 = pneg %p112
        %p331 = pneg %p136
        %p332 = pneg %p133
        %p333 = pneg %p157
        %p334 = pneg %p154
        %p335 = pneg %p178
        %p336 = pneg %p175
        %p337 = pneg %p199
        %p338 = pneg %p196
        %p339 = pneg %p225
        %p340 = pneg %p222
        %s341 = sand.u32 %s212, 1
        %s342 = scalar_lea.sflag [#allocation5], %s341
        %s343 = sand.u32 %s212, 1
        %s344 = smul.addr %s343, 8
        %s345 = scalar_lea.vmem [#allocation8], %s344
        %p346 = scmp.lt.s32.totalorder %s26, 1
        %s347 = scalar_select %p346, %s26, 1
        %s348 = smul.addr %s347, 8
        %s349 = scalar_lea.vmem %s0, %s348
        %p350 = scmp.lt.s32.totalorder %s26, 1
        %s351 = scalar_select %p350, %s26, 1
        %s352 = smul.addr %s351, 8
        %s353 = scalar_lea.vmem %s1, %s352
        %v354 = vld [vmem:[%s349] sm:$0xff]
        %v356 = vrot.slane %v354, 7
        %vm358 = vcmask 1040384
        %v359 = vsel %vm358, 0.0, %v356
        %vm361 = vcmask 1046528
        %v362 = vrot.slane %v359, 1
        %v363 = vrot.slane %v356, 1
        %v364 = vsel %vm361, %v362, %v363
        %365 = vrot.lane.b32.xlu0 %v364, 64
        %v366 = vpop.permute.xlu0 %365
        %vm368 = vcmask 523264
        %v369 = vsel %vm368, %v359, %v366
        %v370 = vpack.c.bf16 %v369, %v369
        %v371 = vld [vmem:[#allocation3] sm:$0xf]
        %v372 = vld [vmem:[#allocation3 + $0x4] sm:$0xf]
        %v373 = vld [vmem:[#allocation3 + $0x8] sm:$0xf]
        %v374 = vld [vmem:[#allocation3 + $0xc] sm:$0xf]
        %v375 = vld [vmem:[#allocation3 + $0x10] sm:$0xf]
        %v376 = vld [vmem:[#allocation3 + $0x14] sm:$0xf]
        %v377 = vld [vmem:[#allocation3 + $0x18] sm:$0xf]
        %v378 = vld [vmem:[#allocation3 + $0x1c] sm:$0xf]
        %v379 = vld [vmem:[#allocation3 + $0x20] sm:$0xf]
        %v380 = vld [vmem:[#allocation3 + $0x24] sm:$0xf]
        %v381 = vld [vmem:[#allocation3 + $0x28] sm:$0xf]
        %v382 = vld [vmem:[#allocation3 + $0x2c] sm:$0xf]
        %v383 = vld [vmem:[#allocation3 + $0x30] sm:$0xf]
        %v384 = vld [vmem:[#allocation3 + $0x34] sm:$0xf]
        %v385 = vld [vmem:[#allocation3 + $0x38] sm:$0xf]
        %v386 = vld [vmem:[#allocation3 + $0x3c] sm:$0xf]
        %v387 = vld [vmem:[%s353] sm:$0xff]
        %v389 = vrot.slane %v387, 7
        %v391 = vsel %vm358, 0.0, %v389
        %v393 = vrot.slane %v391, 1
        %v394 = vrot.slane %v389, 1
        %v395 = vsel %vm361, %v393, %v394
        %396 = vrot.lane.b32.xlu0 %v395, 64
        %v397 = vpop.permute.xlu0 %396
        %v399 = vsel %vm368, %v391, %v397
        %v400 = vpack.c.bf16 %v399, %v399
        %v401 = vld [vmem:[#allocation6] sm:$0xf]
        %v402 = vld [vmem:[#allocation6 + $0x4] sm:$0xf]
        %v403 = vld [vmem:[#allocation6 + $0x8] sm:$0xf]
        %v404 = vld [vmem:[#allocation6 + $0xc] sm:$0xf]
        %v405 = vld [vmem:[#allocation6 + $0x10] sm:$0xf]
        %v406 = vld [vmem:[#allocation6 + $0x14] sm:$0xf]
        %v407 = vld [vmem:[#allocation6 + $0x18] sm:$0xf]
        %v408 = vld [vmem:[#allocation6 + $0x1c] sm:$0xf]
        %v409 = vld [vmem:[#allocation6 + $0x20] sm:$0xf]
        %v410 = vld [vmem:[#allocation6 + $0x24] sm:$0xf]
        %v411 = vld [vmem:[#allocation6 + $0x28] sm:$0xf]
        %v412 = vld [vmem:[#allocation6 + $0x2c] sm:$0xf]
        %v413 = vld [vmem:[#allocation6 + $0x30] sm:$0xf]
        %v414 = vld [vmem:[#allocation6 + $0x34] sm:$0xf]
        %v415 = vld [vmem:[#allocation6 + $0x38] sm:$0xf]
        %v416 = vld [vmem:[#allocation6 + $0x3c] sm:$0xf]
        %v433 = vunpack.c.l.b16 %v401
        %v434 = vunpack.c.l.b16 %v402
        %v435 = vunpack.c.l.b16 %v403
        %v436 = vunpack.c.l.b16 %v404
        %v437 = vunpack.c.l.b16 %v405
        %v438 = vunpack.c.l.b16 %v406
        %v439 = vunpack.c.l.b16 %v407
        %v440 = vunpack.c.l.b16 %v408
        %v441 = vunpack.c.l.b16 %v409
        %v442 = vunpack.c.l.b16 %v410
        %v443 = vunpack.c.l.b16 %v411
        %v444 = vunpack.c.l.b16 %v412
        %v445 = vunpack.c.l.b16 %v413
        %v446 = vunpack.c.l.b16 %v414
        %v447 = vunpack.c.l.b16 %v415
        %v448 = vunpack.c.l.b16 %v416
        %v449 = vpack.c.b16 %v434, %v433
        %v450 = vpack.c.b16 %v436, %v435
        %v451 = vpack.c.b16 %v438, %v437
        %v452 = vpack.c.b16 %v440, %v439
        %v453 = vpack.c.b16 %v442, %v441
        %v454 = vpack.c.b16 %v444, %v443
        %v455 = vpack.c.b16 %v446, %v445
        %v456 = vpack.c.b16 %v448, %v447
        %465 = vmatpush.bf16.msra.mxu0 %v456
        %466 = vmatpush.bf16.msra.mxu0 %v455
        %467 = vmatpush.bf16.msra.mxu0 %v454
        %468 = vmatpush.bf16.msra.mxu0 %v453
        %469 = vmatpush.bf16.msra.mxu0 %v452
        %470 = vmatpush.bf16.msra.mxu0 %v451
        %471 = vmatpush.bf16.msra.mxu0 %v450
        %472 = vmatpush.bf16.msra.mxu0 %v449
        %473 = vmatmul.bf16.gmra.mxu0 %v400
        %v474 = vpop.f32.mrf.mxu0
        %v475 = vadd.f32 0.0, %v474
        %v476 = vpop.f32.mrf.mxu0
        %477 = vdwg.mxu0
        %v494 = vunpack.c.l.b16 %v371
        %v495 = vunpack.c.l.b16 %v372
        %v496 = vunpack.c.l.b16 %v373
        %v497 = vunpack.c.l.b16 %v374
        %v498 = vunpack.c.l.b16 %v375
        %v499 = vunpack.c.l.b16 %v376
        %v500 = vunpack.c.l.b16 %v377
        %v501 = vunpack.c.l.b16 %v378
        %v502 = vunpack.c.l.b16 %v379
        %v503 = vunpack.c.l.b16 %v380
        %v504 = vunpack.c.l.b16 %v381
        %v505 = vunpack.c.l.b16 %v382
        %v506 = vunpack.c.l.b16 %v383
        %v507 = vunpack.c.l.b16 %v384
        %v508 = vunpack.c.l.b16 %v385
        %v509 = vunpack.c.l.b16 %v386
        %v510 = vpack.c.b16 %v495, %v494
        %v511 = vpack.c.b16 %v497, %v496
        %v512 = vpack.c.b16 %v499, %v498
        %v513 = vpack.c.b16 %v501, %v500
        %v514 = vpack.c.b16 %v503, %v502
        %v515 = vpack.c.b16 %v505, %v504
        %v516 = vpack.c.b16 %v507, %v506
        %v517 = vpack.c.b16 %v509, %v508
        %526 = vmatpush.bf16.msra.mxu0 %v517
        %527 = vmatpush.bf16.msra.mxu0 %v516
        %528 = vmatpush.bf16.msra.mxu0 %v515
        %529 = vmatpush.bf16.msra.mxu0 %v514
        %530 = vmatpush.bf16.msra.mxu0 %v513
        %531 = vmatpush.bf16.msra.mxu0 %v512
        %532 = vmatpush.bf16.msra.mxu0 %v511
        %533 = vmatpush.bf16.msra.mxu0 %v510
        %534 = vmatmul.bf16.gmra.mxu0 %v370
        %v535 = vpop.f32.mrf.mxu0
        %v536 = vadd.f32 %v475, %v535
        %v537 = vpop.f32.mrf.mxu0
        %538 = vdwg.mxu0
        %v539 = vld [vmem:[%s4] sm:$0x1]
        %v541 = vperm.slane %v539, 0
        %v543 = vadd.f32 %v536, %v541
        %vm544 = vcmask 130048
        %545 = vst.msk [vmem:[%s345] sm:$0xff] %vm544, %v543
        %s546 = sand.u32 %s212, 1
        %s547 = scalar_lea.sflag [#allocation5], %s546
        %s548 = sand.u32 %s212, 1
        %s549 = smul.addr %s548, 8
        %s550 = scalar_lea.vmem [#allocation8], %s549
        // Predicated region
        $region61: #{tcnn_forward.13} parent=51 // pred_check
          %p551 = pneg %p222
        $region62: #{tcnn_forward.13} parent=51 // pred_check_branch
          %553 = sbr.rel (%p551) target = $region64
        $region63: #{tcnn_forward.13} parent=51 // pred_region
          %555 = vsyncadd %s547, 0
          %s556 = smul.addr %s26, 8
          %s557 = scalar_lea.hbm %s8, %s556
          %s559 = sshll.u32 %s550, 4
          %s560 = int_to_ptr.vmem [resolvable:$true] %s559
          %s561 = sshll.u32 %s557, 4
          %s562 = int_to_ptr.hbm [resolvable:$true] %s561
          %564 = dma.vmem_to_hbm [thread:$0]  %s560, 128, %s562, %s547
        $region64: #{tcnn_forward.13} parent=51 // pred_fallthru
          _
      $region52: #{tcnn_forward.13} parent=5 // pred_fallthru
        _
      %p565 = scmp.le.s32.totalorder 2, %s21
      // Predicated region
      $region65: #{tcnn_forward.13} parent=5 // pred_check
        %p566 = pneg %p565
      $region66: #{tcnn_forward.13} parent=5 // pred_check_branch
        %568 = sbr.rel (%p566) target = $region68
      $region67: #{tcnn_forward.13} parent=5 // pred_region
        %s569 = ssub.s32 %s21, 2
        // Predicated region
        $region69: #{tcnn_forward.13} parent=67 // pred_check
          %p570 = pneg %p228
        $region70: #{tcnn_forward.13} parent=67 // pred_check_branch
          %572 = sbr.rel (%p570) target = $region72
        $region71: #{tcnn_forward.13} parent=67 // pred_region
          %s573 = sand.u32 %s213, 1
          %s574 = scalar_lea.sflag [#allocation5], %s573
          %s575 = sand.u32 %s213, 1
          %s576 = smul.addr %s575, 8
          %s577 = scalar_lea.vmem [#allocation8], %s576
          %579 = dma.done %s574, 128
        $region72: #{tcnn_forward.13} parent=67 // pred_fallthru
          _
      $region68: #{tcnn_forward.13} parent=5 // pred_fallthru
        _
    $region6: #{tcnn_forward.13} parent=1 // loop_footer
      %s25 = sadd.s32 1, %s21
    $region7: #{tcnn_forward.13} parent=1 // loop_footer_branch
      %20 = sbr.rel target = $region3
    $region8: #{tcnn_forward.13} parent=1 // loop_exit
      _
    %580 = vsyncpa [#allocation4], 1
    %s581 = scalar_lea.sflag [#allocation4], 1
    %582 = vsyncpa %s581, 1
    %583 = vsyncpa [#allocation7], 1
    %584 = vsyncpa [#allocation5], 1
    %s585 = scalar_lea.sflag [#allocation5], 1
    %586 = vsyncpa %s585, 1

// kernel: tcnn_forward.11
$region0: #{tcnn_forward.11}
  #allocation0 [shape = 'u32[]', space=smem, size = 0x4, offset = 0x4, fixed_abs, tag = 'smem constant byte address 0x4 - core index']
  #allocation1 [shape = 'u32[72,128]{1,0:T(1,128)}', space=vmem, size = 0x9000, scoped, tag = 'internal scratch']
  #allocation2 [shape = 'f32[1,1]{1,0:T(1,128)S(1)}', space=vmem, size = 0x200, scoped, tag = 'scoped memory for tcnn_forward.11']
  %s0 = inlined_call_operand.vmem [shape: f32[2,8,16], index: 0, kind: input, shape index: {}]
  %s1 = inlined_call_operand.vmem [shape: f32[2,8,16], index: 1, kind: input, shape index: {}]
  %s2 = inlined_call_operand.hbm [shape: bf16[32,32], index: 2, kind: input, shape index: {}]
  %s3 = inlined_call_operand.hbm [shape: bf16[32,32], index: 3, kind: input, shape index: {}]
  %s4 = inlined_call_operand.vmem [shape: f32[1,32], index: 4, kind: input, shape index: {}]
  %s5 = inlined_call_operand.vmem [shape: f32[1,32], index: 5, kind: input, shape index: {}]
  %s6 = inlined_call_operand.vmem [shape: f32[1,32], index: 6, kind: input, shape index: {}]
  %s7 = inlined_call_operand.<no memory space> [shape: f32[1,1], index: 7, kind: input, shape index: {}]
  %s8 = inlined_call_operand.vmem [shape: f32[2,8,32], index: 8, kind: output, shape index: {}]
  %s9 = sld [smem:[#allocation0]]
  $region73: #{tcnn_forward.11} parent=0
    _
  %s11 = ssub.s32 1, %s9
  %s12 = scalar_select 0, %s11, %s9
  %v13 = vstv %s7
  %14 = vst [vmem:[#allocation2] sm:$0x1] %v13
  $region1: #{tcnn_forward.11} parent=0
    #allocation3 [shape = 'u8[8192]{0}', space=vmem, size = 0x2000, scoped, tag = 'input window, operand 2, single buffered']
    #allocation4 [shape = 's32[2]{0}', space=sflag, size = 0x8, scoped, tag = 'scoped memory for tcnn_forward.11']
    #allocation5 [shape = 'u8[8192]{0}', space=vmem, size = 0x2000, scoped, tag = 'input window, operand 3, single buffered']
    #allocation6 [shape = 's32[1]{0}', space=sflag, size = 0x4, scoped, tag = 'scoped memory for tcnn_forward.11']
    %15 = vsyncpa [#allocation4], 0
    %16 = vsyncpa [#allocation6], 0
    loop: start=0, step=1, limit=4
    $region2: #{tcnn_forward.11} parent=1 // loop_pre_header
      _
    $region3: #{tcnn_forward.11} parent=1 // loop_header
      %s18 = sphi 0, %s22
      %p19 = scmp.ge.s32.totalorder %s18, 4
      %s28 = sphi 0, %s30
      %s31 = sphi 0, %s28
      %s32 = sphi 0, %s31
      %s48 = sphi 0, %s32
      %s54 = sphi 0, %s56
      %s57 = sphi 0, %s54
      %s58 = sphi 0, %s57
      %s74 = sphi 0, %s58
      %s78 = sphi 0, %s78
      %s80 = sphi 0, %s78
      %s81 = sphi 0, %s80
      %s95 = sphi 0, %s81
      %s99 = sphi 0, %s99
      %s101 = sphi 0, %s99
      %s102 = sphi 0, %s101
      %s116 = sphi 0, %s102
      %s120 = sphi 0, %s120
      %s122 = sphi 0, %s120
      %s123 = sphi 0, %s122
      %s137 = sphi 0, %s123
      %s141 = sphi 0, %s141
      %s143 = sphi 0, %s141
      %s144 = sphi 0, %s143
      %s158 = sphi 0, %s144
      %s162 = sphi 0, %s162
      %s164 = sphi 0, %s162
      %s165 = sphi 0, %s164
      %s179 = sphi 0, %s165
      %s183 = sphi 0, %s183
      %s185 = sphi 0, %s183
      %s186 = sphi 0, %s185
      %s200 = sphi 0, %s186
      %s206 = sphi 0, %s208
      %s209 = sphi 0, %s206
      %s210 = sphi 0, %s209
      %s226 = sphi 0, %s210
    $region4: #{tcnn_forward.11} parent=1 // loop_header_branch
      %21 = sbr.rel (%p19) target = $region8
    $region5: #{tcnn_forward.11} parent=1 // loop_body
      %s23 = ssub.s32 %s18, 1
      %s24 = ssub.s32 %s18, 2
      %s25 = sadd.s32 %s18, 1
      %s26 = ssub.s32 %s18, %s25
      %p27 = scmp.eq.s32.totalorder %s26, 0
      %s29 = sadd.s32 %s28, 1
      %s30 = scalar_select %p27, %s28, %s29
      %p33 = pneg %p27
      %p34 = scmp.eq.s32.totalorder %s18, 1
      %p35 = por %p33, %p34
      %p36 = scmp.ne.s32.totalorder %s28, %s31
      %p37 = scmp.eq.s32.totalorder %s18, 0
      %p38 = por %p36, %p37
      %p39 = scmp.ne.s32.totalorder %s28, %s31
      %p40 = scmp.eq.s32.totalorder %s23, 1
      %p41 = por %p39, %p40
      %p42 = scmp.ne.s32.totalorder %s31, %s32
      %p43 = scmp.eq.s32.totalorder %s23, 0
      %p44 = por %p42, %p43
      %p45 = scmp.ne.s32.totalorder %s31, %s32
      %p46 = scmp.eq.s32.totalorder %s24, 1
      %p47 = por %p45, %p46
      %p49 = scmp.ne.s32.totalorder %s32, %s48
      %p50 = scmp.eq.s32.totalorder %s24, 0
      %p51 = por %p49, %p50
      %s52 = ssub.s32 %s18, %s25
      %p53 = scmp.eq.s32.totalorder %s52, 0
      %s55 = sadd.s32 %s54, 1
      %s56 = scalar_select %p53, %s54, %s55
      %p59 = pneg %p53
      %p60 = scmp.eq.s32.totalorder %s18, 1
      %p61 = por %p59, %p60
      %p62 = scmp.ne.s32.totalorder %s54, %s57
      %p63 = scmp.eq.s32.totalorder %s18, 0
      %p64 = por %p62, %p63
      %p65 = scmp.ne.s32.totalorder %s54, %s57
      %p66 = scmp.eq.s32.totalorder %s23, 1
      %p67 = por %p65, %p66
      %p68 = scmp.ne.s32.totalorder %s57, %s58
      %p69 = scmp.eq.s32.totalorder %s23, 0
      %p70 = por %p68, %p69
      %p71 = scmp.ne.s32.totalorder %s57, %s58
      %p72 = scmp.eq.s32.totalorder %s24, 1
      %p73 = por %p71, %p72
      %p75 = scmp.ne.s32.totalorder %s58, %s74
      %p76 = scmp.eq.s32.totalorder %s24, 0
      %p77 = por %p75, %p76
      %s79 = sadd.s32 %s78, 1
      %p82 = scmp.eq.s32.totalorder %s18, 1
      %p83 = scmp.ne.s32.totalorder %s78, %s80
      %p84 = scmp.eq.s32.totalorder %s18, 0
      %p85 = por %p83, %p84
      %p86 = scmp.ne.s32.totalorder %s78, %s80
      %p87 = scmp.eq.s32.totalorder %s23, 1
      %p88 = por %p86, %p87
      %p89 = scmp.ne.s32.totalorder %s80, %s81
      %p90 = scmp.eq.s32.totalorder %s23, 0
      %p91 = por %p89, %p90
      %p92 = scmp.ne.s32.totalorder %s80, %s81
      %p93 = scmp.eq.s32.totalorder %s24, 1
      %p94 = por %p92, %p93
      %p96 = scmp.ne.s32.totalorder %s81, %s95
      %p97 = scmp.eq.s32.totalorder %s24, 0
      %p98 = por %p96, %p97
      %s100 = sadd.s32 %s99, 1
      %p103 = scmp.eq.s32.totalorder %s18, 1
      %p104 = scmp.ne.s32.totalorder %s99, %s101
      %p105 = scmp.eq.s32.totalorder %s18, 0
      %p106 = por %p104, %p105
      %p107 = scmp.ne.s32.totalorder %s99, %s101
      %p108 = scmp.eq.s32.totalorder %s23, 1
      %p109 = por %p107, %p108
      %p110 = scmp.ne.s32.totalorder %s101, %s102
      %p111 = scmp.eq.s32.totalorder %s23, 0
      %p112 = por %p110, %p111
      %p113 = scmp.ne.s32.totalorder %s101, %s102
      %p114 = scmp.eq.s32.totalorder %s24, 1
      %p115 = por %p113, %p114
      %p117 = scmp.ne.s32.totalorder %s102, %s116
      %p118 = scmp.eq.s32.totalorder %s24, 0
      %p119 = por %p117, %p118
      %s121 = sadd.s32 %s120, 1
      %p124 = scmp.eq.s32.totalorder %s18, 1
      %p125 = scmp.ne.s32.totalorder %s120, %s122
      %p126 = scmp.eq.s32.totalorder %s18, 0
      %p127 = por %p125, %p126
      %p128 = scmp.ne.s32.totalorder %s120, %s122
      %p129 = scmp.eq.s32.totalorder %s23, 1
      %p130 = por %p128, %p129
      %p131 = scmp.ne.s32.totalorder %s122, %s123
      %p132 = scmp.eq.s32.totalorder %s23, 0
      %p133 = por %p131, %p132
      %p134 = scmp.ne.s32.totalorder %s122, %s123
      %p135 = scmp.eq.s32.totalorder %s24, 1
      %p136 = por %p134, %p135
      %p138 = scmp.ne.s32.totalorder %s123, %s137
      %p139 = scmp.eq.s32.totalorder %s24, 0
      %p140 = por %p138, %p139
      %s142 = sadd.s32 %s141, 1
      %p145 = scmp.eq.s32.totalorder %s18, 1
      %p146 = scmp.ne.s32.totalorder %s141, %s143
      %p147 = scmp.eq.s32.totalorder %s18, 0
      %p148 = por %p146, %p147
      %p149 = scmp.ne.s32.totalorder %s141, %s143
      %p150 = scmp.eq.s32.totalorder %s23, 1
      %p151 = por %p149, %p150
      %p152 = scmp.ne.s32.totalorder %s143, %s144
      %p153 = scmp.eq.s32.totalorder %s23, 0
      %p154 = por %p152, %p153
      %p155 = scmp.ne.s32.totalorder %s143, %s144
      %p156 = scmp.eq.s32.totalorder %s24, 1
      %p157 = por %p155, %p156
      %p159 = scmp.ne.s32.totalorder %s144, %s158
      %p160 = scmp.eq.s32.totalorder %s24, 0
      %p161 = por %p159, %p160
      %s163 = sadd.s32 %s162, 1
      %p166 = scmp.eq.s32.totalorder %s18, 1
      %p167 = scmp.ne.s32.totalorder %s162, %s164
      %p168 = scmp.eq.s32.totalorder %s18, 0
      %p169 = por %p167, %p168
      %p170 = scmp.ne.s32.totalorder %s162, %s164
      %p171 = scmp.eq.s32.totalorder %s23, 1
      %p172 = por %p170, %p171
      %p173 = scmp.ne.s32.totalorder %s164, %s165
      %p174 = scmp.eq.s32.totalorder %s23, 0
      %p175 = por %p173, %p174
      %p176 = scmp.ne.s32.totalorder %s164, %s165
      %p177 = scmp.eq.s32.totalorder %s24, 1
      %p178 = por %p176, %p177
      %p180 = scmp.ne.s32.totalorder %s165, %s179
      %p181 = scmp.eq.s32.totalorder %s24, 0
      %p182 = por %p180, %p181
      %s184 = sadd.s32 %s183, 1
      %p187 = scmp.eq.s32.totalorder %s18, 1
      %p188 = scmp.ne.s32.totalorder %s183, %s185
      %p189 = scmp.eq.s32.totalorder %s18, 0
      %p190 = por %p188, %p189
      %p191 = scmp.ne.s32.totalorder %s183, %s185
      %p192 = scmp.eq.s32.totalorder %s23, 1
      %p193 = por %p191, %p192
      %p194 = scmp.ne.s32.totalorder %s185, %s186
      %p195 = scmp.eq.s32.totalorder %s23, 0
      %p196 = por %p194, %p195
      %p197 = scmp.ne.s32.totalorder %s185, %s186
      %p198 = scmp.eq.s32.totalorder %s24, 1
      %p199 = por %p197, %p198
      %p201 = scmp.ne.s32.totalorder %s186, %s200
      %p202 = scmp.eq.s32.totalorder %s24, 0
      %p203 = por %p201, %p202
      %s204 = ssub.s32 %s18, %s25
      %p205 = scmp.eq.s32.totalorder %s204, 0
      %s207 = sadd.s32 %s206, 1
      %s208 = scalar_select %p205, %s206, %s207
      %p211 = pneg %p205
      %p212 = scmp.eq.s32.totalorder %s18, 1
      %p213 = por %p211, %p212
      %p214 = scmp.ne.s32.totalorder %s206, %s209
      %p215 = scmp.eq.s32.totalorder %s18, 0
      %p216 = por %p214, %p215
      %p217 = scmp.ne.s32.totalorder %s206, %s209
      %p218 = scmp.eq.s32.totalorder %s23, 1
      %p219 = por %p217, %p218
      %p220 = scmp.ne.s32.totalorder %s209, %s210
      %p221 = scmp.eq.s32.totalorder %s23, 0
      %p222 = por %p220, %p221
      %p223 = scmp.ne.s32.totalorder %s209, %s210
      %p224 = scmp.eq.s32.totalorder %s24, 1
      %p225 = por %p223, %p224
      %p227 = scmp.ne.s32.totalorder %s210, %s226
      %p228 = scmp.eq.s32.totalorder %s24, 0
      %p229 = por %p227, %p228
      %p230 = scmp.le.s32.totalorder 1, %s18
      %p231 = scmp.lt.s32.totalorder %s18, 3
      %p232 = pnand %p230, %p231
      %p233 = pneg %p232
      // Predicated region
      $region9: #{tcnn_forward.11} parent=5 // pred_check
        _
      $region10: #{tcnn_forward.11} parent=5 // pred_check_branch
        %235 = sbr.rel (%p232) target = $region12
      $region11: #{tcnn_forward.11} parent=5 // pred_region
        %s236 = ssub.s32 %s18, 1
        // Predicated region
        $region13: #{tcnn_forward.11} parent=11 // pred_check
          %p237 = pneg %p91
        $region14: #{tcnn_forward.11} parent=11 // pred_check_branch
          %239 = sbr.rel (%p237) target = $region16
        $region15: #{tcnn_forward.11} parent=11 // pred_region
          %241 = vsyncadd [#allocation4], 0
          %s242 = sshll.u32 %s2, 4
          %s243 = int_to_ptr.hbm [resolvable:$true] %s242
          %s244 = sshll.u32 [#allocation3], 4
          %s245 = int_to_ptr.vmem [resolvable:$true] %s244
          %250 = dma.hbm_to_vmem [thread:$0]  %s243, 256, %s245, [#allocation4], 64, 64, 4
        $region16: #{tcnn_forward.11} parent=11 // pred_fallthru
          _
        // Predicated region
        $region17: #{tcnn_forward.11} parent=11 // pred_check
          %p251 = pneg %p112
        $region18: #{tcnn_forward.11} parent=11 // pred_check_branch
          %253 = sbr.rel (%p251) target = $region20
        $region19: #{tcnn_forward.11} parent=11 // pred_region
          %255 = vsyncadd [#allocation6], 0
          %s256 = sshll.u32 %s3, 4
          %s257 = int_to_ptr.hbm [resolvable:$true] %s256
          %s258 = sshll.u32 [#allocation5], 4
          %s259 = int_to_ptr.vmem [resolvable:$true] %s258
          %264 = dma.hbm_to_vmem [thread:$0]  %s257, 256, %s259, [#allocation6], 64, 64, 4
        $region20: #{tcnn_forward.11} parent=11 // pred_fallthru
          _
        // Predicated region
        $region21: #{tcnn_forward.11} parent=11 // pred_check
          %p265 = pneg %p133
        $region22: #{tcnn_forward.11} parent=11 // pred_check_branch
          %267 = sbr.rel (%p265) target = $region24
        $region23: #{tcnn_forward.11} parent=11 // pred_region
          _
        $region24: #{tcnn_forward.11} parent=11 // pred_fallthru
          _
        // Predicated region
        $region25: #{tcnn_forward.11} parent=11 // pred_check
          %p268 = pneg %p154
        $region26: #{tcnn_forward.11} parent=11 // pred_check_branch
          %270 = sbr.rel (%p268) target = $region28
        $region27: #{tcnn_forward.11} parent=11 // pred_region
          _
        $region28: #{tcnn_forward.11} parent=11 // pred_fallthru
          _
        // Predicated region
        $region29: #{tcnn_forward.11} parent=11 // pred_check
          %p271 = pneg %p175
        $region30: #{tcnn_forward.11} parent=11 // pred_check_branch
          %273 = sbr.rel (%p271) target = $region32
        $region31: #{tcnn_forward.11} parent=11 // pred_region
          _
        $region32: #{tcnn_forward.11} parent=11 // pred_fallthru
          _
        // Predicated region
        $region33: #{tcnn_forward.11} parent=11 // pred_check
          %p274 = pneg %p196
        $region34: #{tcnn_forward.11} parent=11 // pred_check_branch
          %276 = sbr.rel (%p274) target = $region36
        $region35: #{tcnn_forward.11} parent=11 // pred_region
          _
        $region36: #{tcnn_forward.11} parent=11 // pred_fallthru
          _
      $region12: #{tcnn_forward.11} parent=5 // pred_fallthru
        _
      %p277 = scmp.lt.s32.totalorder %s18, 2
      // Predicated region
      $region37: #{tcnn_forward.11} parent=5 // pred_check
        %p278 = pneg %p277
      $region38: #{tcnn_forward.11} parent=5 // pred_check_branch
        %280 = sbr.rel (%p278) target = $region40
      $region39: #{tcnn_forward.11} parent=5 // pred_region
        // Predicated region
        $region41: #{tcnn_forward.11} parent=39 // pred_check
          %p281 = pneg %p38
        $region42: #{tcnn_forward.11} parent=39 // pred_check_branch
          %283 = sbr.rel (%p281) target = $region44
        $region43: #{tcnn_forward.11} parent=39 // pred_region
          %p284 = scmp.lt.s32.totalorder %s18, 1
          %s285 = scalar_select %p284, %s18, 1
          %s286 = smul.addr %s285, 8
          %s287 = scalar_lea.vmem %s0, %s286
        $region44: #{tcnn_forward.11} parent=39 // pred_fallthru
          _
        // Predicated region
        $region45: #{tcnn_forward.11} parent=39 // pred_check
          %p288 = pneg %p64
        $region46: #{tcnn_forward.11} parent=39 // pred_check_branch
          %290 = sbr.rel (%p288) target = $region48
        $region47: #{tcnn_forward.11} parent=39 // pred_region
          %p291 = scmp.lt.s32.totalorder %s18, 1
          %s292 = scalar_select %p291, %s18, 1
          %s293 = smul.addr %s292, 8
          %s294 = scalar_lea.vmem %s1, %s293
        $region48: #{tcnn_forward.11} parent=39 // pred_fallthru
          _
      $region40: #{tcnn_forward.11} parent=5 // pred_fallthru
        _
      %p295 = scmp.le.s32.totalorder 1, %s18
      %p296 = scmp.lt.s32.totalorder %s18, 3
      %p297 = pnand %p295, %p296
      %p298 = pneg %p297
      // Predicated region
      $region49: #{tcnn_forward.11} parent=5 // pred_check
        _
      $region50: #{tcnn_forward.11} parent=5 // pred_check_branch
        %300 = sbr.rel (%p297) target = $region52
      $region51: #{tcnn_forward.11} parent=5 // pred_region
        %s301 = ssub.s32 %s18, 1
        // Predicated region
        $region53: #{tcnn_forward.11} parent=51 // pred_check
          %p302 = pneg %p91
        $region54: #{tcnn_forward.11} parent=51 // pred_check_branch
          %304 = sbr.rel (%p302) target = $region56
        $region55: #{tcnn_forward.11} parent=51 // pred_region
          %306 = dma.done [#allocation4], 256
        $region56: #{tcnn_forward.11} parent=51 // pred_fallthru
          _
        // Predicated region
        $region57: #{tcnn_forward.11} parent=51 // pred_check
          %p307 = pneg %p112
        $region58: #{tcnn_forward.11} parent=51 // pred_check_branch
          %309 = sbr.rel (%p307) target = $region60
        $region59: #{tcnn_forward.11} parent=51 // pred_region
          %311 = dma.done [#allocation6], 256
        $region60: #{tcnn_forward.11} parent=51 // pred_fallthru
          _
        %p312 = scmp.lt.s32.totalorder %s23, 1
        %s313 = scalar_select %p312, %s23, 1
        %s314 = smul.addr %s313, 8
        %s315 = scalar_lea.vmem %s0, %s314
        %p316 = pneg %p44
        %p317 = pneg %p41
        %p318 = scmp.lt.s32.totalorder %s23, 1
        %s319 = scalar_select %p318, %s23, 1
        %s320 = smul.addr %s319, 8
        %s321 = scalar_lea.vmem %s1, %s320
        %p322 = pneg %p70
        %p323 = pneg %p67
        %p324 = pneg %p91
        %p325 = pneg %p88
        %p326 = pneg %p112
        %p327 = pneg %p109
        %p328 = pneg %p133
        %p329 = pneg %p130
        %p330 = pneg %p154
        %p331 = pneg %p151
        %p332 = pneg %p175
        %p333 = pneg %p172
        %p334 = pneg %p196
        %p335 = pneg %p193
        %p336 = pneg %p222
        %p337 = pneg %p219
        %p338 = scmp.lt.s32.totalorder %s23, 1
        %s339 = scalar_select %p338, %s23, 1
        %s340 = smul.addr %s339, 8
        %s341 = scalar_lea.vmem %s8, %s340
        %p342 = scmp.lt.s32.totalorder %s23, 1
        %s343 = scalar_select %p342, %s23, 1
        %s344 = smul.addr %s343, 8
        %s345 = scalar_lea.vmem %s0, %s344
        %p346 = scmp.lt.s32.totalorder %s23, 1
        %s347 = scalar_select %p346, %s23, 1
        %s348 = smul.addr %s347, 8
        %s349 = scalar_lea.vmem %s1, %s348
        %p350 = scmp.lt.s32.totalorder %s23, 1
        %s351 = scalar_select %p350, %s23, 1
        %s352 = smul.addr %s351, 8
        %s353 = scalar_lea.vmem %s8, %s352
        %v355 = vld [vmem:[%s345] sm:$0xff]
        %v357 = vrot.slane %v355, 7
        %vm359 = vcmask 1040384
        %v360 = vsel %vm359, 0.0, %v357
        %vm362 = vcmask 1046528
        %v363 = vrot.slane %v360, 1
        %v364 = vrot.slane %v357, 1
        %v365 = vsel %vm362, %v363, %v364
        %366 = vrot.lane.b32.xlu0 %v365, 16
        %v367 = vpop.permute.xlu0 %366
        %vm369 = vcmask 130048
        %v370 = vsel %vm369, %v360, %v367
        %v371 = vpack.c.bf16 %v370, %v370
        %v372 = vld [vmem:[#allocation3] sm:$0xf]
        %v373 = vld [vmem:[#allocation3 + $0x4] sm:$0xf]
        %v374 = vld [vmem:[#allocation3 + $0x8] sm:$0xf]
        %v375 = vld [vmem:[#allocation3 + $0xc] sm:$0xf]
        %v376 = vld [vmem:[%s349] sm:$0xff]
        %v378 = vrot.slane %v376, 7
        %v380 = vsel %vm359, 0.0, %v378
        %v382 = vrot.slane %v380, 1
        %v383 = vrot.slane %v378, 1
        %v384 = vsel %vm362, %v382, %v383
        %385 = vrot.lane.b32.xlu0 %v384, 16
        %v386 = vpop.permute.xlu0 %385
        %v388 = vsel %vm369, %v380, %v386
        %v389 = vpack.c.bf16 %v388, %v388
        %v390 = vld [vmem:[#allocation5] sm:$0xf]
        %v391 = vld [vmem:[#allocation5 + $0x4] sm:$0xf]
        %v392 = vld [vmem:[#allocation5 + $0x8] sm:$0xf]
        %v393 = vld [vmem:[#allocation5 + $0xc] sm:$0xf]
        %v398 = vunpack.c.l.b16 %v390
        %v399 = vunpack.c.l.b16 %v391
        %v400 = vunpack.c.l.b16 %v392
        %v401 = vunpack.c.l.b16 %v393
        %v402 = vpack.c.b16 %v399, %v398
        %v403 = vpack.c.b16 %v401, %v400
        %vm406 = vcmask 261120
        %v408 = vsel %vm406, %v389, 0
        %410 = vmatpush.bf16.msra.mxu0 0
        %411 = vmatpush.bf16.msra.mxu0 0
        %412 = vmatpush.bf16.msra.mxu0 0
        %413 = vmatpush.bf16.msra.mxu0 0
        %414 = vmatpush.bf16.msra.mxu0 0
        %415 = vmatpush.bf16.msra.mxu0 0
        %416 = vmatpush.bf16.msra.mxu0 %v403
        %417 = vmatpush.bf16.msra.mxu0 %v402
        %418 = vmatmul.bf16.gmra.mxu0 %v408
        %v419 = vpop.f32.mrf.mxu0
        %v420 = vadd.f32 0.0, %v419
        %v421 = vpop.f32.mrf.mxu0
        %422 = vdwg.mxu0
        %v427 = vunpack.c.l.b16 %v372
        %v428 = vunpack.c.l.b16 %v373
        %v429 = vunpack.c.l.b16 %v374
        %v430 = vunpack.c.l.b16 %v375
        %v431 = vpack.c.b16 %v428, %v427
        %v432 = vpack.c.b16 %v430, %v429
        %v436 = vsel %vm406, %v371, 0
        %438 = vmatpush.bf16.msra.mxu0 0
        %439 = vmatpush.bf16.msra.mxu0 0
        %440 = vmatpush.bf16.msra.mxu0 0
        %441 = vmatpush.bf16.msra.mxu0 0
        %442 = vmatpush.bf16.msra.mxu0 0
        %443 = vmatpush.bf16.msra.mxu0 0
        %444 = vmatpush.bf16.msra.mxu0 %v432
        %445 = vmatpush.bf16.msra.mxu0 %v431
        %446 = vmatmul.bf16.gmra.mxu0 %v436
        %v447 = vpop.f32.mrf.mxu0
        %v448 = vadd.f32 %v420, %v447
        %v449 = vpop.f32.mrf.mxu0
        %450 = vdwg.mxu0
        %v451 = vld [vmem:[%s4] sm:$0x1]
        %v453 = vperm.slane %v451, 0
        %v455 = vadd.f32 %v448, %v453
        %v456 = vsel %vm406, %v455, 0.0
        %v457 = vrot.slane %v456, 4
        %v458 = vadd.f32 %v456, %v457
        %v459 = vrot.slane %v458, 2
        %v460 = vadd.f32 %v458, %v459
        %v461 = vrot.slane %v460, 1
        %v462 = vadd.f32 %v460, %v461
        %464 = vrot.lane.b32.xlu0 %v462, 120
        %v465 = vpop.permute.xlu0 %464
        %v467 = vadd.f32 %v462, %v465
        %468 = vrot.lane.b32.xlu0 %v462, 112
        %v469 = vpop.permute.xlu0 %468
        %v471 = vadd.f32 %v467, %v469
        %472 = vrot.lane.b32.xlu0 %v462, 104
        %v473 = vpop.permute.xlu0 %472
        %v475 = vadd.f32 %v471, %v473
        %v476 = vmul.f32 %v475, 0.03125
        %478 = vrot.lane.b32.xlu0 %v476, 8
        %v479 = vpop.permute.xlu0 %478
        %481 = vrot.lane.b32.xlu0 %v476, 16
        %v482 = vpop.permute.xlu0 %481
        %484 = vrot.lane.b32.xlu0 %v476, 24
        %v485 = vpop.permute.xlu0 %484
        %vm487 = vcmask 64512
        %v488 = vsel %vm487, %v476, %v479
        %v489 = vsel %vm369, %v488, %v482
        %vm490 = vcmask 195584
        %v491 = vsel %vm490, %v489, %v485
        %v492 = vperm.slane %v491, 0
        %v493 = vsub.f32 %v455, %v492
        %v494 = vmul.f32 %v493, %v493
        %v495 = vsel %vm406, %v494, 0.0
        %v496 = vrot.slane %v495, 4
        %v497 = vadd.f32 %v495, %v496
        %v498 = vrot.slane %v497, 2
        %v499 = vadd.f32 %v497, %v498
        %v500 = vrot.slane %v499, 1
        %v501 = vadd.f32 %v499, %v500
        %503 = vrot.lane.b32.xlu0 %v501, 120
        %v504 = vpop.permute.xlu0 %503
        %v506 = vadd.f32 %v501, %v504
        %507 = vrot.lane.b32.xlu0 %v501, 112
        %v508 = vpop.permute.xlu0 %507
        %v510 = vadd.f32 %v506, %v508
        %511 = vrot.lane.b32.xlu0 %v501, 104
        %v512 = vpop.permute.xlu0 %511
        %v514 = vadd.f32 %v510, %v512
        %v515 = vmul.f32 %v514, 0.03125
        %517 = vrot.lane.b32.xlu0 %v515, 8
        %v518 = vpop.permute.xlu0 %517
        %520 = vrot.lane.b32.xlu0 %v515, 16
        %v521 = vpop.permute.xlu0 %520
        %523 = vrot.lane.b32.xlu0 %v515, 24
        %v524 = vpop.permute.xlu0 %523
        %v526 = vsel %vm487, %v515, %v518
        %v527 = vsel %vm369, %v526, %v521
        %v528 = vsel %vm490, %v527, %v524
        %v529 = vadd.f32 %v528, 1e-05
        %v530 = vrsqrt.pop %v529
        %v531 = vmul.f32 %v530, %v529
        %v532 = vmul.f32 %v531, %v530
        %v533 = vmul.f32 0.5, %v532
        %v534 = vsub.f32 1.5, %v533
        %v535 = vmul.f32 %v530, %v534
        %vm536 = vweird.f32 %v529
        %vm537 = vweird.f32 %v530
        %vm538 = vmor %vm536, %vm537
        %v539 = vsel %vm538, %v530, %v535
        %v540 = vperm.slane %v539, 0
        %v541 = vmul.f32 %v493, %v540
        %v542 = vld [vmem:[%s5] sm:$0x1]
        %v544 = vperm.slane %v542, 0
        %v546 = vmul.f32 %v541, %v544
        %v547 = vld [vmem:[%s6] sm:$0x1]
        %v549 = vperm.slane %v547, 0
        %v551 = vadd.f32 %v546, %v549
        %vm552 = vcmp.ge.f32.partialorder %v551, 0.0
        %v553 = vld [vmem:[#allocation2] sm:$0x1]
        %v555 = vperm.slane %v553, 0
        %556 = vset.pattern.permute.xlu0 0
        %557 = vperm.xlu0 %556, %v555
        %v558 = vpop.permute.xlu0 %557
        %v560 = vmul.f32 %v558, %v551
        %v561 = vsel %vm552, %v551, %v560
        %562 = vst.msk [vmem:[%s353] sm:$0xff] %vm406, %v561
        %p563 = scmp.lt.s32.totalorder %s23, 1
        %s564 = scalar_select %p563, %s23, 1
        %s565 = smul.addr %s564, 8
        %s566 = scalar_lea.vmem %s8, %s565
        // Predicated region
        $region61: #{tcnn_forward.11} parent=51 // pred_check
          %p567 = pneg %p219
        $region62: #{tcnn_forward.11} parent=51 // pred_check_branch
          %569 = sbr.rel (%p567) target = $region64
        $region63: #{tcnn_forward.11} parent=51 // pred_region
          _
        $region64: #{tcnn_forward.11} parent=51 // pred_fallthru
          _
      $region52: #{tcnn_forward.11} parent=5 // pred_fallthru
        _
      %p570 = scmp.le.s32.totalorder 2, %s18
      // Predicated region
      $region65: #{tcnn_forward.11} parent=5 // pred_check
        %p571 = pneg %p570
      $region66: #{tcnn_forward.11} parent=5 // pred_check_branch
        %573 = sbr.rel (%p571) target = $region68
      $region67: #{tcnn_forward.11} parent=5 // pred_region
        %s574 = ssub.s32 %s18, 2
        // Predicated region
        $region69: #{tcnn_forward.11} parent=67 // pred_check
          %p575 = pneg %p225
        $region70: #{tcnn_forward.11} parent=67 // pred_check_branch
          %577 = sbr.rel (%p575) target = $region72
        $region71: #{tcnn_forward.11} parent=67 // pred_region
          %p578 = scmp.lt.s32.totalorder %s24, 1
          %s579 = scalar_select %p578, %s24, 1
          %s580 = smul.addr %s579, 8
          %s581 = scalar_lea.vmem %s8, %s580
        $region72: #{tcnn_forward.11} parent=67 // pred_fallthru
          _
      $region68: #{tcnn_forward.11} parent=5 // pred_fallthru
        _
    $region6: #{tcnn_forward.11} parent=1 // loop_footer
      %s22 = sadd.s32 1, %s18
    $region7: #{tcnn_forward.11} parent=1 // loop_footer_branch
      %17 = sbr.rel target = $region3
    $region8: #{tcnn_forward.11} parent=1 // loop_exit
      _
    %582 = vsyncpa [#allocation4], 1
    %s583 = scalar_lea.sflag [#allocation4], 1
    %584 = vsyncpa %s583, 1
    %585 = vsyncpa [#allocation6], 1

// kernel: tcnn_forward.12
$region0: #{tcnn_forward.12}
  #allocation0 [shape = 'u32[]', space=smem, size = 0x4, offset = 0x4, fixed_abs, tag = 'smem constant byte address 0x4 - core index']
  #allocation1 [shape = 'u32[72,128]{1,0:T(1,128)}', space=vmem, size = 0x9000, scoped, tag = 'internal scratch']
  #allocation2 [shape = 'f32[1,1]{1,0:T(1,128)S(1)}', space=vmem, size = 0x200, scoped, tag = 'scoped memory for tcnn_forward.12']
  %s0 = inlined_call_operand.vmem [shape: f32[2,8,32], index: 0, kind: input, shape index: {}]
  %s1 = inlined_call_operand.vmem [shape: f32[2,8,32], index: 1, kind: input, shape index: {}]
  %s2 = inlined_call_operand.vmem [shape: bf16[64,64], index: 2, kind: input, shape index: {}]
  %s3 = inlined_call_operand.hbm [shape: bf16[64,64], index: 3, kind: input, shape index: {}]
  %s4 = inlined_call_operand.vmem [shape: f32[1,64], index: 4, kind: input, shape index: {}]
  %s5 = inlined_call_operand.vmem [shape: f32[1,64], index: 5, kind: input, shape index: {}]
  %s6 = inlined_call_operand.vmem [shape: f32[1,64], index: 6, kind: input, shape index: {}]
  %s7 = inlined_call_operand.<no memory space> [shape: f32[1,1], index: 7, kind: input, shape index: {}]
  %s8 = inlined_call_operand.vmem [shape: f32[2,8,64], index: 8, kind: output, shape index: {}]
  %s9 = sld [smem:[#allocation0]]
  $region69: #{tcnn_forward.12} parent=0
    _
  %s11 = ssub.s32 1, %s9
  %s12 = scalar_select 0, %s11, %s9
  %v13 = vstv %s7
  %14 = vst [vmem:[#allocation2] sm:$0x1] %v13
  $region1: #{tcnn_forward.12} parent=0
    #allocation3 [shape = 'u8[16384]{0}', space=vmem, size = 0x4000, scoped, tag = 'input window, operand 3, single buffered']
    #allocation4 [shape = 's32[2]{0}', space=sflag, size = 0x8, scoped, tag = 'scoped memory for tcnn_forward.12']
    %15 = vsyncpa [#allocation4], 0
    loop: start=0, step=1, limit=4
    $region2: #{tcnn_forward.12} parent=1 // loop_pre_header
      _
    $region3: #{tcnn_forward.12} parent=1 // loop_header
      %s17 = sphi 0, %s21
      %p18 = scmp.ge.s32.totalorder %s17, 4
      %s27 = sphi 0, %s29
      %s30 = sphi 0, %s27
      %s31 = sphi 0, %s30
      %s47 = sphi 0, %s31
      %s53 = sphi 0, %s55
      %s56 = sphi 0, %s53
      %s57 = sphi 0, %s56
      %s73 = sphi 0, %s57
      %s77 = sphi 0, %s77
      %s79 = sphi 0, %s77
      %s80 = sphi 0, %s79
      %s94 = sphi 0, %s80
      %s98 = sphi 0, %s98
      %s100 = sphi 0, %s98
      %s101 = sphi 0, %s100
      %s115 = sphi 0, %s101
      %s119 = sphi 0, %s119
      %s121 = sphi 0, %s119
      %s122 = sphi 0, %s121
      %s136 = sphi 0, %s122
      %s140 = sphi 0, %s140
      %s142 = sphi 0, %s140
      %s143 = sphi 0, %s142
      %s157 = sphi 0, %s143
      %s161 = sphi 0, %s161
      %s163 = sphi 0, %s161
      %s164 = sphi 0, %s163
      %s178 = sphi 0, %s164
      %s182 = sphi 0, %s182
      %s184 = sphi 0, %s182
      %s185 = sphi 0, %s184
      %s199 = sphi 0, %s185
      %s205 = sphi 0, %s207
      %s208 = sphi 0, %s205
      %s209 = sphi 0, %s208
      %s225 = sphi 0, %s209
    $region4: #{tcnn_forward.12} parent=1 // loop_header_branch
      %20 = sbr.rel (%p18) target = $region8
    $region5: #{tcnn_forward.12} parent=1 // loop_body
      %s22 = ssub.s32 %s17, 1
      %s23 = ssub.s32 %s17, 2
      %s24 = sadd.s32 %s17, 1
      %s25 = ssub.s32 %s17, %s24
      %p26 = scmp.eq.s32.totalorder %s25, 0
      %s28 = sadd.s32 %s27, 1
      %s29 = scalar_select %p26, %s27, %s28
      %p32 = pneg %p26
      %p33 = scmp.eq.s32.totalorder %s17, 1
      %p34 = por %p32, %p33
      %p35 = scmp.ne.s32.totalorder %s27, %s30
      %p36 = scmp.eq.s32.totalorder %s17, 0
      %p37 = por %p35, %p36
      %p38 = scmp.ne.s32.totalorder %s27, %s30
      %p39 = scmp.eq.s32.totalorder %s22, 1
      %p40 = por %p38, %p39
      %p41 = scmp.ne.s32.totalorder %s30, %s31
      %p42 = scmp.eq.s32.totalorder %s22, 0
      %p43 = por %p41, %p42
      %p44 = scmp.ne.s32.totalorder %s30, %s31
      %p45 = scmp.eq.s32.totalorder %s23, 1
      %p46 = por %p44, %p45
      %p48 = scmp.ne.s32.totalorder %s31, %s47
      %p49 = scmp.eq.s32.totalorder %s23, 0
      %p50 = por %p48, %p49
      %s51 = ssub.s32 %s17, %s24
      %p52 = scmp.eq.s32.totalorder %s51, 0
      %s54 = sadd.s32 %s53, 1
      %s55 = scalar_select %p52, %s53, %s54
      %p58 = pneg %p52
      %p59 = scmp.eq.s32.totalorder %s17, 1
      %p60 = por %p58, %p59
      %p61 = scmp.ne.s32.totalorder %s53, %s56
      %p62 = scmp.eq.s32.totalorder %s17, 0
      %p63 = por %p61, %p62
      %p64 = scmp.ne.s32.totalorder %s53, %s56
      %p65 = scmp.eq.s32.totalorder %s22, 1
      %p66 = por %p64, %p65
      %p67 = scmp.ne.s32.totalorder %s56, %s57
      %p68 = scmp.eq.s32.totalorder %s22, 0
      %p69 = por %p67, %p68
      %p70 = scmp.ne.s32.totalorder %s56, %s57
      %p71 = scmp.eq.s32.totalorder %s23, 1
      %p72 = por %p70, %p71
      %p74 = scmp.ne.s32.totalorder %s57, %s73
      %p75 = scmp.eq.s32.totalorder %s23, 0
      %p76 = por %p74, %p75
      %s78 = sadd.s32 %s77, 1
      %p81 = scmp.eq.s32.totalorder %s17, 1
      %p82 = scmp.ne.s32.totalorder %s77, %s79
      %p83 = scmp.eq.s32.totalorder %s17, 0
      %p84 = por %p82, %p83
      %p85 = scmp.ne.s32.totalorder %s77, %s79
      %p86 = scmp.eq.s32.totalorder %s22, 1
      %p87 = por %p85, %p86
      %p88 = scmp.ne.s32.totalorder %s79, %s80
      %p89 = scmp.eq.s32.totalorder %s22, 0
      %p90 = por %p88, %p89
      %p91 = scmp.ne.s32.totalorder %s79, %s80
      %p92 = scmp.eq.s32.totalorder %s23, 1
      %p93 = por %p91, %p92
      %p95 = scmp.ne.s32.totalorder %s80, %s94
      %p96 = scmp.eq.s32.totalorder %s23, 0
      %p97 = por %p95, %p96
      %s99 = sadd.s32 %s98, 1
      %p102 = scmp.eq.s32.totalorder %s17, 1
      %p103 = scmp.ne.s32.totalorder %s98, %s100
      %p104 = scmp.eq.s32.totalorder %s17, 0
      %p105 = por %p103, %p104
      %p106 = scmp.ne.s32.totalorder %s98, %s100
      %p107 = scmp.eq.s32.totalorder %s22, 1
      %p108 = por %p106, %p107
      %p109 = scmp.ne.s32.totalorder %s100, %s101
      %p110 = scmp.eq.s32.totalorder %s22, 0
      %p111 = por %p109, %p110
      %p112 = scmp.ne.s32.totalorder %s100, %s101
      %p113 = scmp.eq.s32.totalorder %s23, 1
      %p114 = por %p112, %p113
      %p116 = scmp.ne.s32.totalorder %s101, %s115
      %p117 = scmp.eq.s32.totalorder %s23, 0
      %p118 = por %p116, %p117
      %s120 = sadd.s32 %s119, 1
      %p123 = scmp.eq.s32.totalorder %s17, 1
      %p124 = scmp.ne.s32.totalorder %s119, %s121
      %p125 = scmp.eq.s32.totalorder %s17, 0
      %p126 = por %p124, %p125
      %p127 = scmp.ne.s32.totalorder %s119, %s121
      %p128 = scmp.eq.s32.totalorder %s22, 1
      %p129 = por %p127, %p128
      %p130 = scmp.ne.s32.totalorder %s121, %s122
      %p131 = scmp.eq.s32.totalorder %s22, 0
      %p132 = por %p130, %p131
      %p133 = scmp.ne.s32.totalorder %s121, %s122
      %p134 = scmp.eq.s32.totalorder %s23, 1
      %p135 = por %p133, %p134
      %p137 = scmp.ne.s32.totalorder %s122, %s136
      %p138 = scmp.eq.s32.totalorder %s23, 0
      %p139 = por %p137, %p138
      %s141 = sadd.s32 %s140, 1
      %p144 = scmp.eq.s32.totalorder %s17, 1
      %p145 = scmp.ne.s32.totalorder %s140, %s142
      %p146 = scmp.eq.s32.totalorder %s17, 0
      %p147 = por %p145, %p146
      %p148 = scmp.ne.s32.totalorder %s140, %s142
      %p149 = scmp.eq.s32.totalorder %s22, 1
      %p150 = por %p148, %p149
      %p151 = scmp.ne.s32.totalorder %s142, %s143
      %p152 = scmp.eq.s32.totalorder %s22, 0
      %p153 = por %p151, %p152
      %p154 = scmp.ne.s32.totalorder %s142, %s143
      %p155 = scmp.eq.s32.totalorder %s23, 1
      %p156 = por %p154, %p155
      %p158 = scmp.ne.s32.totalorder %s143, %s157
      %p159 = scmp.eq.s32.totalorder %s23, 0
      %p160 = por %p158, %p159
      %s162 = sadd.s32 %s161, 1
      %p165 = scmp.eq.s32.totalorder %s17, 1
      %p166 = scmp.ne.s32.totalorder %s161, %s163
      %p167 = scmp.eq.s32.totalorder %s17, 0
      %p168 = por %p166, %p167
      %p169 = scmp.ne.s32.totalorder %s161, %s163
      %p170 = scmp.eq.s32.totalorder %s22, 1
      %p171 = por %p169, %p170
      %p172 = scmp.ne.s32.totalorder %s163, %s164
      %p173 = scmp.eq.s32.totalorder %s22, 0
      %p174 = por %p172, %p173
      %p175 = scmp.ne.s32.totalorder %s163, %s164
      %p176 = scmp.eq.s32.totalorder %s23, 1
      %p177 = por %p175, %p176
      %p179 = scmp.ne.s32.totalorder %s164, %s178
      %p180 = scmp.eq.s32.totalorder %s23, 0
      %p181 = por %p179, %p180
      %s183 = sadd.s32 %s182, 1
      %p186 = scmp.eq.s32.totalorder %s17, 1
      %p187 = scmp.ne.s32.totalorder %s182, %s184
      %p188 = scmp.eq.s32.totalorder %s17, 0
      %p189 = por %p187, %p188
      %p190 = scmp.ne.s32.totalorder %s182, %s184
      %p191 = scmp.eq.s32.totalorder %s22, 1
      %p192 = por %p190, %p191
      %p193 = scmp.ne.s32.totalorder %s184, %s185
      %p194 = scmp.eq.s32.totalorder %s22, 0
      %p195 = por %p193, %p194
      %p196 = scmp.ne.s32.totalorder %s184, %s185
      %p197 = scmp.eq.s32.totalorder %s23, 1
      %p198 = por %p196, %p197
      %p200 = scmp.ne.s32.totalorder %s185, %s199
      %p201 = scmp.eq.s32.totalorder %s23, 0
      %p202 = por %p200, %p201
      %s203 = ssub.s32 %s17, %s24
      %p204 = scmp.eq.s32.totalorder %s203, 0
      %s206 = sadd.s32 %s205, 1
      %s207 = scalar_select %p204, %s205, %s206
      %p210 = pneg %p204
      %p211 = scmp.eq.s32.totalorder %s17, 1
      %p212 = por %p210, %p211
      %p213 = scmp.ne.s32.totalorder %s205, %s208
      %p214 = scmp.eq.s32.totalorder %s17, 0
      %p215 = por %p213, %p214
      %p216 = scmp.ne.s32.totalorder %s205, %s208
      %p217 = scmp.eq.s32.totalorder %s22, 1
      %p218 = por %p216, %p217
      %p219 = scmp.ne.s32.totalorder %s208, %s209
      %p220 = scmp.eq.s32.totalorder %s22, 0
      %p221 = por %p219, %p220
      %p222 = scmp.ne.s32.totalorder %s208, %s209
      %p223 = scmp.eq.s32.totalorder %s23, 1
      %p224 = por %p222, %p223
      %p226 = scmp.ne.s32.totalorder %s209, %s225
      %p227 = scmp.eq.s32.totalorder %s23, 0
      %p228 = por %p226, %p227
      %p229 = scmp.le.s32.totalorder 1, %s17
      %p230 = scmp.lt.s32.totalorder %s17, 3
      %p231 = pnand %p229, %p230
      %p232 = pneg %p231
      // Predicated region
      $region9: #{tcnn_forward.12} parent=5 // pred_check
        _
      $region10: #{tcnn_forward.12} parent=5 // pred_check_branch
        %234 = sbr.rel (%p231) target = $region12
      $region11: #{tcnn_forward.12} parent=5 // pred_region
        %s235 = ssub.s32 %s17, 1
        // Predicated region
        $region13: #{tcnn_forward.12} parent=11 // pred_check
          %p236 = pneg %p90
        $region14: #{tcnn_forward.12} parent=11 // pred_check_branch
          %238 = sbr.rel (%p236) target = $region16
        $region15: #{tcnn_forward.12} parent=11 // pred_region
          _
        $region16: #{tcnn_forward.12} parent=11 // pred_fallthru
          _
        // Predicated region
        $region17: #{tcnn_forward.12} parent=11 // pred_check
          %p239 = pneg %p111
        $region18: #{tcnn_forward.12} parent=11 // pred_check_branch
          %241 = sbr.rel (%p239) target = $region20
        $region19: #{tcnn_forward.12} parent=11 // pred_region
          %243 = vsyncadd [#allocation4], 0
          %s244 = sshll.u32 %s3, 4
          %s245 = int_to_ptr.hbm [resolvable:$true] %s244
          %s246 = sshll.u32 [#allocation3], 4
          %s247 = int_to_ptr.vmem [resolvable:$true] %s246
          %252 = dma.hbm_to_vmem [thread:$0]  %s245, 512, %s247, [#allocation4], 64, 64, 4
        $region20: #{tcnn_forward.12} parent=11 // pred_fallthru
          _
        // Predicated region
        $region21: #{tcnn_forward.12} parent=11 // pred_check
          %p253 = pneg %p132
        $region22: #{tcnn_forward.12} parent=11 // pred_check_branch
          %255 = sbr.rel (%p253) target = $region24
        $region23: #{tcnn_forward.12} parent=11 // pred_region
          _
        $region24: #{tcnn_forward.12} parent=11 // pred_fallthru
          _
        // Predicated region
        $region25: #{tcnn_forward.12} parent=11 // pred_check
          %p256 = pneg %p153
        $region26: #{tcnn_forward.12} parent=11 // pred_check_branch
          %258 = sbr.rel (%p256) target = $region28
        $region27: #{tcnn_forward.12} parent=11 // pred_region
          _
        $region28: #{tcnn_forward.12} parent=11 // pred_fallthru
          _
        // Predicated region
        $region29: #{tcnn_forward.12} parent=11 // pred_check
          %p259 = pneg %p174
        $region30: #{tcnn_forward.12} parent=11 // pred_check_branch
          %261 = sbr.rel (%p259) target = $region32
        $region31: #{tcnn_forward.12} parent=11 // pred_region
          _
        $region32: #{tcnn_forward.12} parent=11 // pred_fallthru
          _
        // Predicated region
        $region33: #{tcnn_forward.12} parent=11 // pred_check
          %p262 = pneg %p195
        $region34: #{tcnn_forward.12} parent=11 // pred_check_branch
          %264 = sbr.rel (%p262) target = $region36
        $region35: #{tcnn_forward.12} parent=11 // pred_region
          _
        $region36: #{tcnn_forward.12} parent=11 // pred_fallthru
          _
      $region12: #{tcnn_forward.12} parent=5 // pred_fallthru
        _
      %p265 = scmp.lt.s32.totalorder %s17, 2
      // Predicated region
      $region37: #{tcnn_forward.12} parent=5 // pred_check
        %p266 = pneg %p265
      $region38: #{tcnn_forward.12} parent=5 // pred_check_branch
        %268 = sbr.rel (%p266) target = $region40
      $region39: #{tcnn_forward.12} parent=5 // pred_region
        // Predicated region
        $region41: #{tcnn_forward.12} parent=39 // pred_check
          %p269 = pneg %p37
        $region42: #{tcnn_forward.12} parent=39 // pred_check_branch
          %271 = sbr.rel (%p269) target = $region44
        $region43: #{tcnn_forward.12} parent=39 // pred_region
          %p272 = scmp.lt.s32.totalorder %s17, 1
          %s273 = scalar_select %p272, %s17, 1
          %s274 = smul.addr %s273, 8
          %s275 = scalar_lea.vmem %s0, %s274
        $region44: #{tcnn_forward.12} parent=39 // pred_fallthru
          _
        // Predicated region
        $region45: #{tcnn_forward.12} parent=39 // pred_check
          %p276 = pneg %p63
        $region46: #{tcnn_forward.12} parent=39 // pred_check_branch
          %278 = sbr.rel (%p276) target = $region48
        $region47: #{tcnn_forward.12} parent=39 // pred_region
          %p279 = scmp.lt.s32.totalorder %s17, 1
          %s280 = scalar_select %p279, %s17, 1
          %s281 = smul.addr %s280, 8
          %s282 = scalar_lea.vmem %s1, %s281
        $region48: #{tcnn_forward.12} parent=39 // pred_fallthru
          _
      $region40: #{tcnn_forward.12} parent=5 // pred_fallthru
        _
      %p283 = scmp.le.s32.totalorder 1, %s17
      %p284 = scmp.lt.s32.totalorder %s17, 3
      %p285 = pnand %p283, %p284
      %p286 = pneg %p285
      // Predicated region
      $region49: #{tcnn_forward.12} parent=5 // pred_check
        _
      $region50: #{tcnn_forward.12} parent=5 // pred_check_branch
        %288 = sbr.rel (%p285) target = $region52
      $region51: #{tcnn_forward.12} parent=5 // pred_region
        %s289 = ssub.s32 %s17, 1
        // Predicated region
        $region53: #{tcnn_forward.12} parent=51 // pred_check
          %p290 = pneg %p111
        $region54: #{tcnn_forward.12} parent=51 // pred_check_branch
          %292 = sbr.rel (%p290) target = $region56
        $region55: #{tcnn_forward.12} parent=51 // pred_region
          %294 = dma.done [#allocation4], 512
        $region56: #{tcnn_forward.12} parent=51 // pred_fallthru
          _
        %p295 = scmp.lt.s32.totalorder %s22, 1
        %s296 = scalar_select %p295, %s22, 1
        %s297 = smul.addr %s296, 8
        %s298 = scalar_lea.vmem %s0, %s297
        %p299 = pneg %p43
        %p300 = pneg %p40
        %p301 = scmp.lt.s32.totalorder %s22, 1
        %s302 = scalar_select %p301, %s22, 1
        %s303 = smul.addr %s302, 8
        %s304 = scalar_lea.vmem %s1, %s303
        %p305 = pneg %p69
        %p306 = pneg %p66
        %p307 = pneg %p90
        %p308 = pneg %p87
        %p309 = pneg %p111
        %p310 = pneg %p108
        %p311 = pneg %p132
        %p312 = pneg %p129
        %p313 = pneg %p153
        %p314 = pneg %p150
        %p315 = pneg %p174
        %p316 = pneg %p171
        %p317 = pneg %p195
        %p318 = pneg %p192
        %p319 = pneg %p221
        %p320 = pneg %p218
        %p321 = scmp.lt.s32.totalorder %s22, 1
        %s322 = scalar_select %p321, %s22, 1
        %s323 = smul.addr %s322, 8
        %s324 = scalar_lea.vmem %s8, %s323
        %p325 = scmp.lt.s32.totalorder %s22, 1
        %s326 = scalar_select %p325, %s22, 1
        %s327 = smul.addr %s326, 8
        %s328 = scalar_lea.vmem %s0, %s327
        %p329 = scmp.lt.s32.totalorder %s22, 1
        %s330 = scalar_select %p329, %s22, 1
        %s331 = smul.addr %s330, 8
        %s332 = scalar_lea.vmem %s1, %s331
        %p333 = scmp.lt.s32.totalorder %s22, 1
        %s334 = scalar_select %p333, %s22, 1
        %s335 = smul.addr %s334, 8
        %s336 = scalar_lea.vmem %s8, %s335
        %v338 = vld [vmem:[%s328] sm:$0xff]
        %v340 = vrot.slane %v338, 7
        %vm342 = vcmask 1040384
        %v343 = vsel %vm342, 0.0, %v340
        %vm345 = vcmask 1046528
        %v346 = vrot.slane %v343, 1
        %v347 = vrot.slane %v340, 1
        %v348 = vsel %vm345, %v346, %v347
        %349 = vrot.lane.b32.xlu0 %v348, 32
        %v350 = vpop.permute.xlu0 %349
        %vm352 = vcmask 261120
        %v353 = vsel %vm352, %v343, %v350
        %v354 = vpack.c.bf16 %v353, %v353
        %v355 = vld [vmem:[%s2] sm:$0xf]
        %v356 = vld [vmem:[%s2 + $0x4] sm:$0xf]
        %v357 = vld [vmem:[%s2 + $0x8] sm:$0xf]
        %v358 = vld [vmem:[%s2 + $0xc] sm:$0xf]
        %v359 = vld [vmem:[%s2 + $0x10] sm:$0xf]
        %v360 = vld [vmem:[%s2 + $0x14] sm:$0xf]
        %v361 = vld [vmem:[%s2 + $0x18] sm:$0xf]
        %v362 = vld [vmem:[%s2 + $0x1c] sm:$0xf]
        %v363 = vld [vmem:[%s332] sm:$0xff]
        %v365 = vrot.slane %v363, 7
        %v367 = vsel %vm342, 0.0, %v365
        %v369 = vrot.slane %v367, 1
        %v370 = vrot.slane %v365, 1
        %v371 = vsel %vm345, %v369, %v370
        %372 = vrot.lane.b32.xlu0 %v371, 32
        %v373 = vpop.permute.xlu0 %372
        %v375 = vsel %vm352, %v367, %v373
        %v376 = vpack.c.bf16 %v375, %v375
        %v377 = vld [vmem:[#allocation3] sm:$0xf]
        %v378 = vld [vmem:[#allocation3 + $0x4] sm:$0xf]
        %v379 = vld [vmem:[#allocation3 + $0x8] sm:$0xf]
        %v380 = vld [vmem:[#allocation3 + $0xc] sm:$0xf]
        %v381 = vld [vmem:[#allocation3 + $0x10] sm:$0xf]
        %v382 = vld [vmem:[#allocation3 + $0x14] sm:$0xf]
        %v383 = vld [vmem:[#allocation3 + $0x18] sm:$0xf]
        %v384 = vld [vmem:[#allocation3 + $0x1c] sm:$0xf]
        %v393 = vunpack.c.l.b16 %v377
        %v394 = vunpack.c.l.b16 %v378
        %v395 = vunpack.c.l.b16 %v379
        %v396 = vunpack.c.l.b16 %v380
        %v397 = vunpack.c.l.b16 %v381
        %v398 = vunpack.c.l.b16 %v382
        %v399 = vunpack.c.l.b16 %v383
        %v400 = vunpack.c.l.b16 %v384
        %v401 = vpack.c.b16 %v394, %v393
        %v402 = vpack.c.b16 %v396, %v395
        %v403 = vpack.c.b16 %v398, %v397
        %v404 = vpack.c.b16 %v400, %v399
        %vm409 = vcmask 523264
        %v411 = vsel %vm409, %v376, 0
        %413 = vmatpush.bf16.msra.mxu0 0
        %414 = vmatpush.bf16.msra.mxu0 0
        %415 = vmatpush.bf16.msra.mxu0 0
        %416 = vmatpush.bf16.msra.mxu0 0
        %417 = vmatpush.bf16.msra.mxu0 %v404
        %418 = vmatpush.bf16.msra.mxu0 %v403
        %419 = vmatpush.bf16.msra.mxu0 %v402
        %420 = vmatpush.bf16.msra.mxu0 %v401
        %421 = vmatmul.bf16.gmra.mxu0 %v411
        %v422 = vpop.f32.mrf.mxu0
        %v423 = vadd.f32 0.0, %v422
        %v424 = vpop.f32.mrf.mxu0
        %425 = vdwg.mxu0
        %v434 = vunpack.c.l.b16 %v355
        %v435 = vunpack.c.l.b16 %v356
        %v436 = vunpack.c.l.b16 %v357
        %v437 = vunpack.c.l.b16 %v358
        %v438 = vunpack.c.l.b16 %v359
        %v439 = vunpack.c.l.b16 %v360
        %v440 = vunpack.c.l.b16 %v361
        %v441 = vunpack.c.l.b16 %v362
        %v442 = vpack.c.b16 %v435, %v434
        %v443 = vpack.c.b16 %v437, %v436
        %v444 = vpack.c.b16 %v439, %v438
        %v445 = vpack.c.b16 %v441, %v440
        %v451 = vsel %vm409, %v354, 0
        %453 = vmatpush.bf16.msra.mxu0 0
        %454 = vmatpush.bf16.msra.mxu0 0
        %455 = vmatpush.bf16.msra.mxu0 0
        %456 = vmatpush.bf16.msra.mxu0 0
        %457 = vmatpush.bf16.msra.mxu0 %v445
        %458 = vmatpush.bf16.msra.mxu0 %v444
        %459 = vmatpush.bf16.msra.mxu0 %v443
        %460 = vmatpush.bf16.msra.mxu0 %v442
        %461 = vmatmul.bf16.gmra.mxu0 %v451
        %v462 = vpop.f32.mrf.mxu0
        %v463 = vadd.f32 %v423, %v462
        %v464 = vpop.f32.mrf.mxu0
        %465 = vdwg.mxu0
        %v466 = vld [vmem:[%s4] sm:$0x1]
        %v468 = vperm.slane %v466, 0
        %v470 = vadd.f32 %v463, %v468
        %v471 = vsel %vm409, %v470, 0.0
        %v472 = vrot.slane %v471, 4
        %v473 = vadd.f32 %v471, %v472
        %v474 = vrot.slane %v473, 2
        %v475 = vadd.f32 %v473, %v474
        %v476 = vrot.slane %v475, 1
        %v477 = vadd.f32 %v475, %v476
        %479 = vrot.lane.b32.xlu0 %v477, 120
        %v480 = vpop.permute.xlu0 %479
        %v482 = vadd.f32 %v477, %v480
        %483 = vrot.lane.b32.xlu0 %v477, 112
        %v484 = vpop.permute.xlu0 %483
        %v486 = vadd.f32 %v482, %v484
        %487 = vrot.lane.b32.xlu0 %v477, 104
        %v488 = vpop.permute.xlu0 %487
        %v490 = vadd.f32 %v486, %v488
        %491 = vrot.lane.b32.xlu0 %v477, 96
        %v492 = vpop.permute.xlu0 %491
        %v494 = vadd.f32 %v490, %v492
        %495 = vrot.lane.b32.xlu0 %v477, 88
        %v496 = vpop.permute.xlu0 %495
        %v498 = vadd.f32 %v494, %v496
        %499 = vrot.lane.b32.xlu0 %v477, 80
        %v500 = vpop.permute.xlu0 %499
        %v502 = vadd.f32 %v498, %v500
        %503 = vrot.lane.b32.xlu0 %v477, 72
        %v504 = vpop.permute.xlu0 %503
        %v506 = vadd.f32 %v502, %v504
        %v507 = vmul.f32 %v506, 0.015625
        %509 = vrot.lane.b32.xlu0 %v507, 8
        %v510 = vpop.permute.xlu0 %509
        %512 = vrot.lane.b32.xlu0 %v507, 16
        %v513 = vpop.permute.xlu0 %512
        %515 = vrot.lane.b32.xlu0 %v507, 24
        %v516 = vpop.permute.xlu0 %515
        %518 = vrot.lane.b32.xlu0 %v507, 32
        %v519 = vpop.permute.xlu0 %518
        %521 = vrot.lane.b32.xlu0 %v507, 40
        %v522 = vpop.permute.xlu0 %521
        %524 = vrot.lane.b32.xlu0 %v507, 48
        %v525 = vpop.permute.xlu0 %524
        %527 = vrot.lane.b32.xlu0 %v507, 56
        %v528 = vpop.permute.xlu0 %527
        %vm530 = vcmask 64512
        %v531 = vsel %vm530, %v507, %v510
        %vm532 = vcmask 130048
        %v533 = vsel %vm532, %v531, %v513
        %vm534 = vcmask 195584
        %v535 = vsel %vm534, %v533, %v516
        %v536 = vsel %vm352, %v535, %v519
        %vm537 = vcmask 326656
        %v538 = vsel %vm537, %v536, %v522
        %vm539 = vcmask 392192
        %v540 = vsel %vm539, %v538, %v525
        %vm541 = vcmask 457728
        %v542 = vsel %vm541, %v540, %v528
        %v543 = vperm.slane %v542, 0
        %v544 = vsub.f32 %v470, %v543
        %v545 = vmul.f32 %v544, %v544
        %v546 = vsel %vm409, %v545, 0.0
        %v547 = vrot.slane %v546, 4
        %v548 = vadd.f32 %v546, %v547
        %v549 = vrot.slane %v548, 2
        %v550 = vadd.f32 %v548, %v549
        %v551 = vrot.slane %v550, 1
        %v552 = vadd.f32 %v550, %v551
        %554 = vrot.lane.b32.xlu0 %v552, 120
        %v555 = vpop.permute.xlu0 %554
        %v557 = vadd.f32 %v552, %v555
        %558 = vrot.lane.b32.xlu0 %v552, 112
        %v559 = vpop.permute.xlu0 %558
        %v561 = vadd.f32 %v557, %v559
        %562 = vrot.lane.b32.xlu0 %v552, 104
        %v563 = vpop.permute.xlu0 %562
        %v565 = vadd.f32 %v561, %v563
        %566 = vrot.lane.b32.xlu0 %v552, 96
        %v567 = vpop.permute.xlu0 %566
        %v569 = vadd.f32 %v565, %v567
        %570 = vrot.lane.b32.xlu0 %v552, 88
        %v571 = vpop.permute.xlu0 %570
        %v573 = vadd.f32 %v569, %v571
        %574 = vrot.lane.b32.xlu0 %v552, 80
        %v575 = vpop.permute.xlu0 %574
        %v577 = vadd.f32 %v573, %v575
        %578 = vrot.lane.b32.xlu0 %v552, 72
        %v579 = vpop.permute.xlu0 %578
        %v581 = vadd.f32 %v577, %v579
        %v582 = vmul.f32 %v581, 0.015625
        %584 = vrot.lane.b32.xlu0 %v582, 8
        %v585 = vpop.permute.xlu0 %584
        %587 = vrot.lane.b32.xlu0 %v582, 16
        %v588 = vpop.permute.xlu0 %587
        %590 = vrot.lane.b32.xlu0 %v582, 24
        %v591 = vpop.permute.xlu0 %590
        %593 = vrot.lane.b32.xlu0 %v582, 32
        %v594 = vpop.permute.xlu0 %593
        %596 = vrot.lane.b32.xlu0 %v582, 40
        %v597 = vpop.permute.xlu0 %596
        %599 = vrot.lane.b32.xlu0 %v582, 48
        %v600 = vpop.permute.xlu0 %599
        %602 = vrot.lane.b32.xlu0 %v582, 56
        %v603 = vpop.permute.xlu0 %602
        %v605 = vsel %vm530, %v582, %v585
        %v606 = vsel %vm532, %v605, %v588
        %v607 = vsel %vm534, %v606, %v591
        %v608 = vsel %vm352, %v607, %v594
        %v609 = vsel %vm537, %v608, %v597
        %v610 = vsel %vm539, %v609, %v600
        %v611 = vsel %vm541, %v610, %v603
        %v612 = vadd.f32 %v611, 1e-05
        %v613 = vrsqrt.pop %v612
        %v614 = vmul.f32 %v613, %v612
        %v615 = vmul.f32 %v614, %v613
        %v616 = vmul.f32 0.5, %v615
        %v617 = vsub.f32 1.5, %v616
        %v618 = vmul.f32 %v613, %v617
        %vm619 = vweird.f32 %v612
        %vm620 = vweird.f32 %v613
        %vm621 = vmor %vm619, %vm620
        %v622 = vsel %vm621, %v613, %v618
        %v623 = vperm.slane %v622, 0
        %v624 = vmul.f32 %v544, %v623
        %v625 = vld [vmem:[%s5] sm:$0x1]
        %v627 = vperm.slane %v625, 0
        %v629 = vmul.f32 %v624, %v627
        %v630 = vld [vmem:[%s6] sm:$0x1]
        %v632 = vperm.slane %v630, 0
        %v634 = vadd.f32 %v629, %v632
        %vm635 = vcmp.ge.f32.partialorder %v634, 0.0
        %v636 = vld [vmem:[#allocation2] sm:$0x1]
        %v638 = vperm.slane %v636, 0
        %639 = vset.pattern.permute.xlu0 0
        %640 = vperm.xlu0 %639, %v638
        %v641 = vpop.permute.xlu0 %640
        %v643 = vmul.f32 %v641, %v634
        %v644 = vsel %vm635, %v634, %v643
        %645 = vst.msk [vmem:[%s336] sm:$0xff] %vm409, %v644
        %p646 = scmp.lt.s32.totalorder %s22, 1
        %s647 = scalar_select %p646, %s22, 1
        %s648 = smul.addr %s647, 8
        %s649 = scalar_lea.vmem %s8, %s648
        // Predicated region
        $region57: #{tcnn_forward.12} parent=51 // pred_check
          %p650 = pneg %p218
        $region58: #{tcnn_forward.12} parent=51 // pred_check_branch
          %652 = sbr.rel (%p650) target = $region60
        $region59: #{tcnn_forward.12} parent=51 // pred_region
          _
        $region60: #{tcnn_forward.12} parent=51 // pred_fallthru
          _
      $region52: #{tcnn_forward.12} parent=5 // pred_fallthru
        _
      %p653 = scmp.le.s32.totalorder 2, %s17
      // Predicated region
      $region61: #{tcnn_forward.12} parent=5 // pred_check
        %p654 = pneg %p653
      $region62: #{tcnn_forward.12} parent=5 // pred_check_branch
        %656 = sbr.rel (%p654) target = $region64
      $region63: #{tcnn_forward.12} parent=5 // pred_region
        %s657 = ssub.s32 %s17, 2
        // Predicated region
        $region65: #{tcnn_forward.12} parent=63 // pred_check
          %p658 = pneg %p224
        $region66: #{tcnn_forward.12} parent=63 // pred_check_branch
          %660 = sbr.rel (%p658) target = $region68
        $region67: #{tcnn_forward.12} parent=63 // pred_region
          %p661 = scmp.lt.s32.totalorder %s23, 1
          %s662 = scalar_select %p661, %s23, 1
          %s663 = smul.addr %s662, 8
          %s664 = scalar_lea.vmem %s8, %s663
        $region68: #{tcnn_forward.12} parent=63 // pred_fallthru
          _
      $region64: #{tcnn_forward.12} parent=5 // pred_fallthru
        _
    $region6: #{tcnn_forward.12} parent=1 // loop_footer
      %s21 = sadd.s32 1, %s17
    $region7: #{tcnn_forward.12} parent=1 // loop_footer_branch
      %16 = sbr.rel target = $region3
    $region8: #{tcnn_forward.12} parent=1 // loop_exit
      _
    %665 = vsyncpa [#allocation4], 1
    %s666 = scalar_lea.sflag [#allocation4], 1
    %667 = vsyncpa %s666, 1

// kernel: tcnn_forward.10
$region0: #{tcnn_forward.10}
  #allocation0 [shape = 'u32[]', space=smem, size = 0x4, offset = 0x4, fixed_abs, tag = 'smem constant byte address 0x4 - core index']
  #allocation1 [shape = 'u32[72,128]{1,0:T(1,128)}', space=vmem, size = 0x9000, scoped, tag = 'internal scratch']
  %s0 = inlined_call_operand.vmem [shape: f32[2,8,16], index: 0, kind: input, shape index: {}]
  %s1 = inlined_call_operand.hbm [shape: bf16[6,16,16], index: 1, kind: input, shape index: {}]
  %s2 = inlined_call_operand.vmem [shape: f32[6,1,16], index: 2, kind: input, shape index: {}]
  %s3 = inlined_call_operand.vmem [shape: f32[6,1,16], index: 3, kind: input, shape index: {}, may-alias: {3,7}]
  %s4 = inlined_call_operand.vmem [shape: f32[6,1,16], index: 4, kind: input, shape index: {}, may-alias: {4,8}]
  %s5 = inlined_call_operand.hbm [shape: bf16[6,48,16], index: 5, kind: input, shape index: {}]
  %s6 = inlined_call_operand.vmem [shape: f32[6,1,16], index: 6, kind: input, shape index: {}]
  %s7 = inlined_call_operand.vmem [shape: f32[6,1,16], index: 7, kind: input, shape index: {}, may-alias: {3,7}]
  %s8 = inlined_call_operand.vmem [shape: f32[6,1,16], index: 8, kind: input, shape index: {}, may-alias: {4,8}]
  %s9 = inlined_call_operand.hbm [shape: bf16[6,16,16], index: 9, kind: input, shape index: {}]
  %s10 = inlined_call_operand.vmem [shape: f32[6,1,16], index: 10, kind: input, shape index: {}]
  %s11 = inlined_call_operand.vmem [shape: f32[6,1,1], index: 11, kind: input, shape index: {}, may-alias: {11,12}]
  %s12 = inlined_call_operand.vmem [shape: f32[6,1,1], index: 12, kind: input, shape index: {}, may-alias: {11,12}]
  %s13 = inlined_call_operand.vmem [shape: f32[2,8,16], index: 13, kind: output, shape index: {}]
  %s14 = sld [smem:[#allocation0]]
  $region97: #{tcnn_forward.10} parent=0
    _
  %s16 = ssub.s32 1, %s14
  %s17 = scalar_select 0, %s16, %s14
  $region1: #{tcnn_forward.10} parent=0
    #allocation2 [shape = 'u8[24576]{0}', space=vmem, size = 0x6000, scoped, tag = 'input window, operand 1, single buffered']
    #allocation3 [shape = 's32[2]{0}', space=sflag, size = 0x8, scoped, tag = 'scoped memory for tcnn_forward.10']
    #allocation4 [shape = 'u8[73728]{0}', space=vmem, size = 0x12000, scoped, tag = 'input window, operand 5, single buffered']
    #allocation5 [shape = 's32[1]{0}', space=sflag, size = 0x4, scoped, tag = 'scoped memory for tcnn_forward.10']
    #allocation6 [shape = 'u8[24576]{0}', space=vmem, size = 0x6000, scoped, tag = 'input window, operand 9, single buffered']
    %18 = vsyncpa [#allocation3], 0
    %19 = vsyncpa [#allocation5], 0
    loop: start=0, step=1, limit=4
    $region2: #{tcnn_forward.10} parent=1 // loop_pre_header
      _
    $region3: #{tcnn_forward.10} parent=1 // loop_header
      %s21 = sphi 0, %s25
      %p22 = scmp.ge.s32.totalorder %s21, 4
      %s31 = sphi 0, %s33
      %s34 = sphi 0, %s31
      %s35 = sphi 0, %s34
      %s51 = sphi 0, %s35
      %s55 = sphi 0, %s55
      %s57 = sphi 0, %s55
      %s58 = sphi 0, %s57
      %s72 = sphi 0, %s58
      %s76 = sphi 0, %s76
      %s78 = sphi 0, %s76
      %s79 = sphi 0, %s78
      %s93 = sphi 0, %s79
      %s97 = sphi 0, %s97
      %s99 = sphi 0, %s97
      %s100 = sphi 0, %s99
      %s114 = sphi 0, %s100
      %s118 = sphi 0, %s118
      %s120 = sphi 0, %s118
      %s121 = sphi 0, %s120
      %s135 = sphi 0, %s121
      %s139 = sphi 0, %s139
      %s141 = sphi 0, %s139
      %s142 = sphi 0, %s141
      %s156 = sphi 0, %s142
      %s160 = sphi 0, %s160
      %s162 = sphi 0, %s160
      %s163 = sphi 0, %s162
      %s177 = sphi 0, %s163
      %s181 = sphi 0, %s181
      %s183 = sphi 0, %s181
      %s184 = sphi 0, %s183
      %s198 = sphi 0, %s184
      %s202 = sphi 0, %s202
      %s204 = sphi 0, %s202
      %s205 = sphi 0, %s204
      %s219 = sphi 0, %s205
      %s223 = sphi 0, %s223
      %s225 = sphi 0, %s223
      %s226 = sphi 0, %s225
      %s240 = sphi 0, %s226
      %s244 = sphi 0, %s244
      %s246 = sphi 0, %s244
      %s247 = sphi 0, %s246
      %s261 = sphi 0, %s247
      %s265 = sphi 0, %s265
      %s267 = sphi 0, %s265
      %s268 = sphi 0, %s267
      %s282 = sphi 0, %s268
      %s286 = sphi 0, %s286
      %s288 = sphi 0, %s286
      %s289 = sphi 0, %s288
      %s303 = sphi 0, %s289
      %s309 = sphi 0, %s311
      %s312 = sphi 0, %s309
      %s313 = sphi 0, %s312
      %s329 = sphi 0, %s313
    $region4: #{tcnn_forward.10} parent=1 // loop_header_branch
      %24 = sbr.rel (%p22) target = $region8
    $region5: #{tcnn_forward.10} parent=1 // loop_body
      %s26 = ssub.s32 %s21, 1
      %s27 = ssub.s32 %s21, 2
      %s28 = sadd.s32 %s21, 1
      %s29 = ssub.s32 %s21, %s28
      %p30 = scmp.eq.s32.totalorder %s29, 0
      %s32 = sadd.s32 %s31, 1
      %s33 = scalar_select %p30, %s31, %s32
      %p36 = pneg %p30
      %p37 = scmp.eq.s32.totalorder %s21, 1
      %p38 = por %p36, %p37
      %p39 = scmp.ne.s32.totalorder %s31, %s34
      %p40 = scmp.eq.s32.totalorder %s21, 0
      %p41 = por %p39, %p40
      %p42 = scmp.ne.s32.totalorder %s31, %s34
      %p43 = scmp.eq.s32.totalorder %s26, 1
      %p44 = por %p42, %p43
      %p45 = scmp.ne.s32.totalorder %s34, %s35
      %p46 = scmp.eq.s32.totalorder %s26, 0
      %p47 = por %p45, %p46
      %p48 = scmp.ne.s32.totalorder %s34, %s35
      %p49 = scmp.eq.s32.totalorder %s27, 1
      %p50 = por %p48, %p49
      %p52 = scmp.ne.s32.totalorder %s35, %s51
      %p53 = scmp.eq.s32.totalorder %s27, 0
      %p54 = por %p52, %p53
      %s56 = sadd.s32 %s55, 1
      %p59 = scmp.eq.s32.totalorder %s21, 1
      %p60 = scmp.ne.s32.totalorder %s55, %s57
      %p61 = scmp.eq.s32.totalorder %s21, 0
      %p62 = por %p60, %p61
      %p63 = scmp.ne.s32.totalorder %s55, %s57
      %p64 = scmp.eq.s32.totalorder %s26, 1
      %p65 = por %p63, %p64
      %p66 = scmp.ne.s32.totalorder %s57, %s58
      %p67 = scmp.eq.s32.totalorder %s26, 0
      %p68 = por %p66, %p67
      %p69 = scmp.ne.s32.totalorder %s57, %s58
      %p70 = scmp.eq.s32.totalorder %s27, 1
      %p71 = por %p69, %p70
      %p73 = scmp.ne.s32.totalorder %s58, %s72
      %p74 = scmp.eq.s32.totalorder %s27, 0
      %p75 = por %p73, %p74
      %s77 = sadd.s32 %s76, 1
      %p80 = scmp.eq.s32.totalorder %s21, 1
      %p81 = scmp.ne.s32.totalorder %s76, %s78
      %p82 = scmp.eq.s32.totalorder %s21, 0
      %p83 = por %p81, %p82
      %p84 = scmp.ne.s32.totalorder %s76, %s78
      %p85 = scmp.eq.s32.totalorder %s26, 1
      %p86 = por %p84, %p85
      %p87 = scmp.ne.s32.totalorder %s78, %s79
      %p88 = scmp.eq.s32.totalorder %s26, 0
      %p89 = por %p87, %p88
      %p90 = scmp.ne.s32.totalorder %s78, %s79
      %p91 = scmp.eq.s32.totalorder %s27, 1
      %p92 = por %p90, %p91
      %p94 = scmp.ne.s32.totalorder %s79, %s93
      %p95 = scmp.eq.s32.totalorder %s27, 0
      %p96 = por %p94, %p95
      %s98 = sadd.s32 %s97, 1
      %p101 = scmp.eq.s32.totalorder %s21, 1
      %p102 = scmp.ne.s32.totalorder %s97, %s99
      %p103 = scmp.eq.s32.totalorder %s21, 0
      %p104 = por %p102, %p103
      %p105 = scmp.ne.s32.totalorder %s97, %s99
      %p106 = scmp.eq.s32.totalorder %s26, 1
      %p107 = por %p105, %p106
      %p108 = scmp.ne.s32.totalorder %s99, %s100
      %p109 = scmp.eq.s32.totalorder %s26, 0
      %p110 = por %p108, %p109
      %p111 = scmp.ne.s32.totalorder %s99, %s100
      %p112 = scmp.eq.s32.totalorder %s27, 1
      %p113 = por %p111, %p112
      %p115 = scmp.ne.s32.totalorder %s100, %s114
      %p116 = scmp.eq.s32.totalorder %s27, 0
      %p117 = por %p115, %p116
      %s119 = sadd.s32 %s118, 1
      %p122 = scmp.eq.s32.totalorder %s21, 1
      %p123 = scmp.ne.s32.totalorder %s118, %s120
      %p124 = scmp.eq.s32.totalorder %s21, 0
      %p125 = por %p123, %p124
      %p126 = scmp.ne.s32.totalorder %s118, %s120
      %p127 = scmp.eq.s32.totalorder %s26, 1
      %p128 = por %p126, %p127
      %p129 = scmp.ne.s32.totalorder %s120, %s121
      %p130 = scmp.eq.s32.totalorder %s26, 0
      %p131 = por %p129, %p130
      %p132 = scmp.ne.s32.totalorder %s120, %s121
      %p133 = scmp.eq.s32.totalorder %s27, 1
      %p134 = por %p132, %p133
      %p136 = scmp.ne.s32.totalorder %s121, %s135
      %p137 = scmp.eq.s32.totalorder %s27, 0
      %p138 = por %p136, %p137
      %s140 = sadd.s32 %s139, 1
      %p143 = scmp.eq.s32.totalorder %s21, 1
      %p144 = scmp.ne.s32.totalorder %s139, %s141
      %p145 = scmp.eq.s32.totalorder %s21, 0
      %p146 = por %p144, %p145
      %p147 = scmp.ne.s32.totalorder %s139, %s141
      %p148 = scmp.eq.s32.totalorder %s26, 1
      %p149 = por %p147, %p148
      %p150 = scmp.ne.s32.totalorder %s141, %s142
      %p151 = scmp.eq.s32.totalorder %s26, 0
      %p152 = por %p150, %p151
      %p153 = scmp.ne.s32.totalorder %s141, %s142
      %p154 = scmp.eq.s32.totalorder %s27, 1
      %p155 = por %p153, %p154
      %p157 = scmp.ne.s32.totalorder %s142, %s156
      %p158 = scmp.eq.s32.totalorder %s27, 0
      %p159 = por %p157, %p158
      %s161 = sadd.s32 %s160, 1
      %p164 = scmp.eq.s32.totalorder %s21, 1
      %p165 = scmp.ne.s32.totalorder %s160, %s162
      %p166 = scmp.eq.s32.totalorder %s21, 0
      %p167 = por %p165, %p166
      %p168 = scmp.ne.s32.totalorder %s160, %s162
      %p169 = scmp.eq.s32.totalorder %s26, 1
      %p170 = por %p168, %p169
      %p171 = scmp.ne.s32.totalorder %s162, %s163
      %p172 = scmp.eq.s32.totalorder %s26, 0
      %p173 = por %p171, %p172
      %p174 = scmp.ne.s32.totalorder %s162, %s163
      %p175 = scmp.eq.s32.totalorder %s27, 1
      %p176 = por %p174, %p175
      %p178 = scmp.ne.s32.totalorder %s163, %s177
      %p179 = scmp.eq.s32.totalorder %s27, 0
      %p180 = por %p178, %p179
      %s182 = sadd.s32 %s181, 1
      %p185 = scmp.eq.s32.totalorder %s21, 1
      %p186 = scmp.ne.s32.totalorder %s181, %s183
      %p187 = scmp.eq.s32.totalorder %s21, 0
      %p188 = por %p186, %p187
      %p189 = scmp.ne.s32.totalorder %s181, %s183
      %p190 = scmp.eq.s32.totalorder %s26, 1
      %p191 = por %p189, %p190
      %p192 = scmp.ne.s32.totalorder %s183, %s184
      %p193 = scmp.eq.s32.totalorder %s26, 0
      %p194 = por %p192, %p193
      %p195 = scmp.ne.s32.totalorder %s183, %s184
      %p196 = scmp.eq.s32.totalorder %s27, 1
      %p197 = por %p195, %p196
      %p199 = scmp.ne.s32.totalorder %s184, %s198
      %p200 = scmp.eq.s32.totalorder %s27, 0
      %p201 = por %p199, %p200
      %s203 = sadd.s32 %s202, 1
      %p206 = scmp.eq.s32.totalorder %s21, 1
      %p207 = scmp.ne.s32.totalorder %s202, %s204
      %p208 = scmp.eq.s32.totalorder %s21, 0
      %p209 = por %p207, %p208
      %p210 = scmp.ne.s32.totalorder %s202, %s204
      %p211 = scmp.eq.s32.totalorder %s26, 1
      %p212 = por %p210, %p211
      %p213 = scmp.ne.s32.totalorder %s204, %s205
      %p214 = scmp.eq.s32.totalorder %s26, 0
      %p215 = por %p213, %p214
      %p216 = scmp.ne.s32.totalorder %s204, %s205
      %p217 = scmp.eq.s32.totalorder %s27, 1
      %p218 = por %p216, %p217
      %p220 = scmp.ne.s32.totalorder %s205, %s219
      %p221 = scmp.eq.s32.totalorder %s27, 0
      %p222 = por %p220, %p221
      %s224 = sadd.s32 %s223, 1
      %p227 = scmp.eq.s32.totalorder %s21, 1
      %p228 = scmp.ne.s32.totalorder %s223, %s225
      %p229 = scmp.eq.s32.totalorder %s21, 0
      %p230 = por %p228, %p229
      %p231 = scmp.ne.s32.totalorder %s223, %s225
      %p232 = scmp.eq.s32.totalorder %s26, 1
      %p233 = por %p231, %p232
      %p234 = scmp.ne.s32.totalorder %s225, %s226
      %p235 = scmp.eq.s32.totalorder %s26, 0
      %p236 = por %p234, %p235
      %p237 = scmp.ne.s32.totalorder %s225, %s226
      %p238 = scmp.eq.s32.totalorder %s27, 1
      %p239 = por %p237, %p238
      %p241 = scmp.ne.s32.totalorder %s226, %s240
      %p242 = scmp.eq.s32.totalorder %s27, 0
      %p243 = por %p241, %p242
      %s245 = sadd.s32 %s244, 1
      %p248 = scmp.eq.s32.totalorder %s21, 1
      %p249 = scmp.ne.s32.totalorder %s244, %s246
      %p250 = scmp.eq.s32.totalorder %s21, 0
      %p251 = por %p249, %p250
      %p252 = scmp.ne.s32.totalorder %s244, %s246
      %p253 = scmp.eq.s32.totalorder %s26, 1
      %p254 = por %p252, %p253
      %p255 = scmp.ne.s32.totalorder %s246, %s247
      %p256 = scmp.eq.s32.totalorder %s26, 0
      %p257 = por %p255, %p256
      %p258 = scmp.ne.s32.totalorder %s246, %s247
      %p259 = scmp.eq.s32.totalorder %s27, 1
      %p260 = por %p258, %p259
      %p262 = scmp.ne.s32.totalorder %s247, %s261
      %p263 = scmp.eq.s32.totalorder %s27, 0
      %p264 = por %p262, %p263
      %s266 = sadd.s32 %s265, 1
      %p269 = scmp.eq.s32.totalorder %s21, 1
      %p270 = scmp.ne.s32.totalorder %s265, %s267
      %p271 = scmp.eq.s32.totalorder %s21, 0
      %p272 = por %p270, %p271
      %p273 = scmp.ne.s32.totalorder %s265, %s267
      %p274 = scmp.eq.s32.totalorder %s26, 1
      %p275 = por %p273, %p274
      %p276 = scmp.ne.s32.totalorder %s267, %s268
      %p277 = scmp.eq.s32.totalorder %s26, 0
      %p278 = por %p276, %p277
      %p279 = scmp.ne.s32.totalorder %s267, %s268
      %p280 = scmp.eq.s32.totalorder %s27, 1
      %p281 = por %p279, %p280
      %p283 = scmp.ne.s32.totalorder %s268, %s282
      %p284 = scmp.eq.s32.totalorder %s27, 0
      %p285 = por %p283, %p284
      %s287 = sadd.s32 %s286, 1
      %p290 = scmp.eq.s32.totalorder %s21, 1
      %p291 = scmp.ne.s32.totalorder %s286, %s288
      %p292 = scmp.eq.s32.totalorder %s21, 0
      %p293 = por %p291, %p292
      %p294 = scmp.ne.s32.totalorder %s286, %s288
      %p295 = scmp.eq.s32.totalorder %s26, 1
      %p296 = por %p294, %p295
      %p297 = scmp.ne.s32.totalorder %s288, %s289
      %p298 = scmp.eq.s32.totalorder %s26, 0
      %p299 = por %p297, %p298
      %p300 = scmp.ne.s32.totalorder %s288, %s289
      %p301 = scmp.eq.s32.totalorder %s27, 1
      %p302 = por %p300, %p301
      %p304 = scmp.ne.s32.totalorder %s289, %s303
      %p305 = scmp.eq.s32.totalorder %s27, 0
      %p306 = por %p304, %p305
      %s307 = ssub.s32 %s21, %s28
      %p308 = scmp.eq.s32.totalorder %s307, 0
      %s310 = sadd.s32 %s309, 1
      %s311 = scalar_select %p308, %s309, %s310
      %p314 = pneg %p308
      %p315 = scmp.eq.s32.totalorder %s21, 1
      %p316 = por %p314, %p315
      %p317 = scmp.ne.s32.totalorder %s309, %s312
      %p318 = scmp.eq.s32.totalorder %s21, 0
      %p319 = por %p317, %p318
      %p320 = scmp.ne.s32.totalorder %s309, %s312
      %p321 = scmp.eq.s32.totalorder %s26, 1
      %p322 = por %p320, %p321
      %p323 = scmp.ne.s32.totalorder %s312, %s313
      %p324 = scmp.eq.s32.totalorder %s26, 0
      %p325 = por %p323, %p324
      %p326 = scmp.ne.s32.totalorder %s312, %s313
      %p327 = scmp.eq.s32.totalorder %s27, 1
      %p328 = por %p326, %p327
      %p330 = scmp.ne.s32.totalorder %s313, %s329
      %p331 = scmp.eq.s32.totalorder %s27, 0
      %p332 = por %p330, %p331
      %p333 = scmp.le.s32.totalorder 1, %s21
      %p334 = scmp.lt.s32.totalorder %s21, 3
      %p335 = pnand %p333, %p334
      %p336 = pneg %p335
      // Predicated region
      $region9: #{tcnn_forward.10} parent=5 // pred_check
        _
      $region10: #{tcnn_forward.10} parent=5 // pred_check_branch
        %338 = sbr.rel (%p335) target = $region12
      $region11: #{tcnn_forward.10} parent=5 // pred_region
        %s339 = ssub.s32 %s21, 1
        // Predicated region
        $region13: #{tcnn_forward.10} parent=11 // pred_check
          %p340 = pneg %p68
        $region14: #{tcnn_forward.10} parent=11 // pred_check_branch
          %342 = sbr.rel (%p340) target = $region16
        $region15: #{tcnn_forward.10} parent=11 // pred_region
          %344 = vsyncadd [#allocation3], 0
          %s345 = sshll.u32 %s1, 4
          %s346 = int_to_ptr.hbm [resolvable:$true] %s345
          %s347 = sshll.u32 [#allocation2], 4
          %s348 = int_to_ptr.vmem [resolvable:$true] %s347
          %353 = dma.hbm_to_vmem [thread:$0]  %s346, 768, %s348, [#allocation3], 64, 64, 4
        $region16: #{tcnn_forward.10} parent=11 // pred_fallthru
          _
        // Predicated region
        $region17: #{tcnn_forward.10} parent=11 // pred_check
          %p354 = pneg %p89
        $region18: #{tcnn_forward.10} parent=11 // pred_check_branch
          %356 = sbr.rel (%p354) target = $region20
        $region19: #{tcnn_forward.10} parent=11 // pred_region
          _
        $region20: #{tcnn_forward.10} parent=11 // pred_fallthru
          _
        // Predicated region
        $region21: #{tcnn_forward.10} parent=11 // pred_check
          %p357 = pneg %p110
        $region22: #{tcnn_forward.10} parent=11 // pred_check_branch
          %359 = sbr.rel (%p357) target = $region24
        $region23: #{tcnn_forward.10} parent=11 // pred_region
          _
        $region24: #{tcnn_forward.10} parent=11 // pred_fallthru
          _
        // Predicated region
        $region25: #{tcnn_forward.10} parent=11 // pred_check
          %p360 = pneg %p131
        $region26: #{tcnn_forward.10} parent=11 // pred_check_branch
          %362 = sbr.rel (%p360) target = $region28
        $region27: #{tcnn_forward.10} parent=11 // pred_region
          _
        $region28: #{tcnn_forward.10} parent=11 // pred_fallthru
          _
        // Predicated region
        $region29: #{tcnn_forward.10} parent=11 // pred_check
          %p363 = pneg %p152
        $region30: #{tcnn_forward.10} parent=11 // pred_check_branch
          %365 = sbr.rel (%p363) target = $region32
        $region31: #{tcnn_forward.10} parent=11 // pred_region
          %367 = vsyncadd [#allocation5], 0
          %s368 = sshll.u32 %s5, 4
          %s369 = int_to_ptr.hbm [resolvable:$true] %s368
          %s370 = sshll.u32 [#allocation4], 4
          %s371 = int_to_ptr.vmem [resolvable:$true] %s370
          %376 = dma.hbm_to_vmem [thread:$0]  %s369, 2304, %s371, [#allocation5], 64, 64, 4
        $region32: #{tcnn_forward.10} parent=11 // pred_fallthru
          _
        // Predicated region
        $region33: #{tcnn_forward.10} parent=11 // pred_check
          %p377 = pneg %p173
        $region34: #{tcnn_forward.10} parent=11 // pred_check_branch
          %379 = sbr.rel (%p377) target = $region36
        $region35: #{tcnn_forward.10} parent=11 // pred_region
          _
        $region36: #{tcnn_forward.10} parent=11 // pred_fallthru
          _
        // Predicated region
        $region37: #{tcnn_forward.10} parent=11 // pred_check
          %p380 = pneg %p194
        $region38: #{tcnn_forward.10} parent=11 // pred_check_branch
          %382 = sbr.rel (%p380) target = $region40
        $region39: #{tcnn_forward.10} parent=11 // pred_region
          _
        $region40: #{tcnn_forward.10} parent=11 // pred_fallthru
          _
        // Predicated region
        $region41: #{tcnn_forward.10} parent=11 // pred_check
          %p383 = pneg %p215
        $region42: #{tcnn_forward.10} parent=11 // pred_check_branch
          %385 = sbr.rel (%p383) target = $region44
        $region43: #{tcnn_forward.10} parent=11 // pred_region
          _
        $region44: #{tcnn_forward.10} parent=11 // pred_fallthru
          _
        // Predicated region
        $region45: #{tcnn_forward.10} parent=11 // pred_check
          %p386 = pneg %p236
        $region46: #{tcnn_forward.10} parent=11 // pred_check_branch
          %388 = sbr.rel (%p386) target = $region48
        $region47: #{tcnn_forward.10} parent=11 // pred_region
          %390 = vsyncadd [#allocation5], 0
          %s391 = sshll.u32 %s9, 4
          %s392 = int_to_ptr.hbm [resolvable:$true] %s391
          %s393 = sshll.u32 [#allocation6], 4
          %s394 = int_to_ptr.vmem [resolvable:$true] %s393
          %399 = dma.hbm_to_vmem [thread:$0]  %s392, 768, %s394, [#allocation5], 64, 64, 4
        $region48: #{tcnn_forward.10} parent=11 // pred_fallthru
          _
        // Predicated region
        $region49: #{tcnn_forward.10} parent=11 // pred_check
          %p400 = pneg %p257
        $region50: #{tcnn_forward.10} parent=11 // pred_check_branch
          %402 = sbr.rel (%p400) target = $region52
        $region51: #{tcnn_forward.10} parent=11 // pred_region
          _
        $region52: #{tcnn_forward.10} parent=11 // pred_fallthru
          _
        // Predicated region
        $region53: #{tcnn_forward.10} parent=11 // pred_check
          %p403 = pneg %p278
        $region54: #{tcnn_forward.10} parent=11 // pred_check_branch
          %405 = sbr.rel (%p403) target = $region56
        $region55: #{tcnn_forward.10} parent=11 // pred_region
          _
        $region56: #{tcnn_forward.10} parent=11 // pred_fallthru
          _
        // Predicated region
        $region57: #{tcnn_forward.10} parent=11 // pred_check
          %p406 = pneg %p299
        $region58: #{tcnn_forward.10} parent=11 // pred_check_branch
          %408 = sbr.rel (%p406) target = $region60
        $region59: #{tcnn_forward.10} parent=11 // pred_region
          _
        $region60: #{tcnn_forward.10} parent=11 // pred_fallthru
          _
      $region12: #{tcnn_forward.10} parent=5 // pred_fallthru
        _
      %p409 = scmp.lt.s32.totalorder %s21, 2
      // Predicated region
      $region61: #{tcnn_forward.10} parent=5 // pred_check
        %p410 = pneg %p409
      $region62: #{tcnn_forward.10} parent=5 // pred_check_branch
        %412 = sbr.rel (%p410) target = $region64
      $region63: #{tcnn_forward.10} parent=5 // pred_region
        // Predicated region
        $region65: #{tcnn_forward.10} parent=63 // pred_check
          %p413 = pneg %p41
        $region66: #{tcnn_forward.10} parent=63 // pred_check_branch
          %415 = sbr.rel (%p413) target = $region68
        $region67: #{tcnn_forward.10} parent=63 // pred_region
          %p416 = scmp.lt.s32.totalorder %s21, 1
          %s417 = scalar_select %p416, %s21, 1
          %s418 = smul.addr %s417, 8
          %s419 = scalar_lea.vmem %s0, %s418
        $region68: #{tcnn_forward.10} parent=63 // pred_fallthru
          _
      $region64: #{tcnn_forward.10} parent=5 // pred_fallthru
        _
      %p420 = scmp.le.s32.totalorder 1, %s21
      %p421 = scmp.lt.s32.totalorder %s21, 3
      %p422 = pnand %p420, %p421
      %p423 = pneg %p422
      // Predicated region
      $region69: #{tcnn_forward.10} parent=5 // pred_check
        _
      $region70: #{tcnn_forward.10} parent=5 // pred_check_branch
        %425 = sbr.rel (%p422) target = $region72
      $region71: #{tcnn_forward.10} parent=5 // pred_region
        %s426 = ssub.s32 %s21, 1
        // Predicated region
        $region73: #{tcnn_forward.10} parent=71 // pred_check
          %p427 = pneg %p68
        $region74: #{tcnn_forward.10} parent=71 // pred_check_branch
          %429 = sbr.rel (%p427) target = $region76
        $region75: #{tcnn_forward.10} parent=71 // pred_region
          %431 = dma.done [#allocation3], 768
        $region76: #{tcnn_forward.10} parent=71 // pred_fallthru
          _
        // Predicated region
        $region77: #{tcnn_forward.10} parent=71 // pred_check
          %p432 = pneg %p152
        $region78: #{tcnn_forward.10} parent=71 // pred_check_branch
          %434 = sbr.rel (%p432) target = $region80
        $region79: #{tcnn_forward.10} parent=71 // pred_region
          %436 = dma.done [#allocation5], 2304
        $region80: #{tcnn_forward.10} parent=71 // pred_fallthru
          _
        // Predicated region
        $region81: #{tcnn_forward.10} parent=71 // pred_check
          %p437 = pneg %p236
        $region82: #{tcnn_forward.10} parent=71 // pred_check_branch
          %439 = sbr.rel (%p437) target = $region84
        $region83: #{tcnn_forward.10} parent=71 // pred_region
          %441 = dma.done [#allocation5], 768
        $region84: #{tcnn_forward.10} parent=71 // pred_fallthru
          _
        %p442 = scmp.lt.s32.totalorder %s26, 1
        %s443 = scalar_select %p442, %s26, 1
        %s444 = smul.addr %s443, 8
        %s445 = scalar_lea.vmem %s0, %s444
        %p446 = pneg %p47
        %p447 = pneg %p44
        %p448 = pneg %p68
        %p449 = pneg %p65
        %p450 = pneg %p89
        %p451 = pneg %p86
        %p452 = pneg %p110
        %p453 = pneg %p107
        %p454 = pneg %p131
        %p455 = pneg %p128
        %p456 = pneg %p152
        %p457 = pneg %p149
        %p458 = pneg %p173
        %p459 = pneg %p170
        %p460 = pneg %p194
        %p461 = pneg %p191
        %p462 = pneg %p215
        %p463 = pneg %p212
        %p464 = pneg %p236
        %p465 = pneg %p233
        %p466 = pneg %p257
        %p467 = pneg %p254
        %p468 = pneg %p278
        %p469 = pneg %p275
        %p470 = pneg %p299
        %p471 = pneg %p296
        %p472 = pneg %p325
        %p473 = pneg %p322
        %p474 = scmp.lt.s32.totalorder %s26, 1
        %s475 = scalar_select %p474, %s26, 1
        %s476 = smul.addr %s475, 8
        %s477 = scalar_lea.vmem %s13, %s476
        %p478 = scmp.lt.s32.totalorder %s26, 1
        %s479 = scalar_select %p478, %s26, 1
        %s480 = smul.addr %s479, 8
        %s481 = scalar_lea.vmem %s0, %s480
        %p482 = scmp.lt.s32.totalorder %s26, 1
        %s483 = scalar_select %p482, %s26, 1
        %s484 = smul.addr %s483, 8
        %s485 = scalar_lea.vmem %s13, %s484
        %v487 = vld [vmem:[%s481] sm:$0xff]
        %v488 = vpack.c.bf16 %v487, %v487
        %v489 = vld [vmem:[#allocation2] sm:$0xf]
        %v490 = vld [vmem:[#allocation2 + $0x4] sm:$0xf]
        %v491 = vld [vmem:[%s2] sm:$0x1]
        %v493 = vperm.slane %v491, 0
        %v497 = vunpack.c.l.b16 %v489
        %v498 = vunpack.c.l.b16 %v490
        %v499 = vpack.c.b16 %v498, %v497
        %vm501 = vcmask 130048
        %v503 = vsel %vm501, %v488, 0
        %505 = vmatpush.bf16.msra.mxu0 0
        %506 = vmatpush.bf16.msra.mxu0 0
        %507 = vmatpush.bf16.msra.mxu0 0
        %508 = vmatpush.bf16.msra.mxu0 0
        %509 = vmatpush.bf16.msra.mxu0 0
        %510 = vmatpush.bf16.msra.mxu0 0
        %511 = vmatpush.bf16.msra.mxu0 0
        %512 = vmatpush.bf16.msra.mxu0 %v499
        %513 = vmatmul.bf16.gmra.mxu0 %v503
        %v514 = vpop.f32.mrf.mxu0
        %v515 = vadd.f32 %v493, %v514
        %v516 = vpop.f32.mrf.mxu0
        %517 = vdwg.mxu0
        %v518 = vld [vmem:[%s3] sm:$0x1]
        %v519 = vld [vmem:[%s4] sm:$0x1]
        %v520 = vld [vmem:[%s11] sm:$0x1]
        %v521 = vsel %vm501, %v515, 0.0
        %v522 = vrot.slane %v521, 4
        %v523 = vadd.f32 %v521, %v522
        %v524 = vrot.slane %v523, 2
        %v525 = vadd.f32 %v523, %v524
        %v526 = vrot.slane %v525, 1
        %v527 = vadd.f32 %v525, %v526
        %v528 = vmul.f32 %v527, 0.125
        %v529 = vsub.f32 %v515, %v528
        %v530 = vmul.f32 %v529, %v529
        %v531 = vsel %vm501, %v530, 0.0
        %v532 = vrot.slane %v531, 4
        %v533 = vadd.f32 %v531, %v532
        %v534 = vrot.slane %v533, 2
        %v535 = vadd.f32 %v533, %v534
        %v536 = vrot.slane %v535, 1
        %v537 = vadd.f32 %v535, %v536
        %v538 = vmul.f32 %v537, 0.125
        %v539 = vadd.f32 %v538, 1e-05
        %v540 = vrsqrt.pop %v539
        %v541 = vmul.f32 %v540, %v539
        %v542 = vmul.f32 %v541, %v540
        %v543 = vmul.f32 0.5, %v542
        %v544 = vsub.f32 1.5, %v543
        %v545 = vmul.f32 %v540, %v544
        %vm546 = vweird.f32 %v539
        %vm547 = vweird.f32 %v540
        %vm548 = vmor %vm546, %vm547
        %v549 = vsel %vm548, %v540, %v545
        %v550 = vmul.f32 %v529, %v549
        %v552 = vperm.slane %v518, 0
        %v554 = vmul.f32 %v550, %v552
        %v556 = vperm.slane %v519, 0
        %v558 = vadd.f32 %v554, %v556
        %vm559 = vcmp.ge.f32.partialorder %v558, 0.0
        %v561 = vperm.slane %v520, 0
        %562 = vset.pattern.permute.xlu0 0
        %563 = vperm.xlu0 %562, %v561
        %v564 = vpop.permute.xlu0 %563
        %v566 = vmul.f32 %v564, %v558
        %v567 = vsel %vm559, %v558, %v566
        %v569 = vrot.slane %v567, 6
        %vm571 = vcmask 1041408
        %v572 = vsel %vm571, 0.0, %v569
        %vm574 = vcmask 1046528
        %v575 = vrot.slane %v572, 1
        %v576 = vrot.slane %v569, 1
        %v577 = vsel %vm574, %v575, %v576
        %578 = vrot.lane.b32.xlu0 %v577, 16
        %v579 = vpop.permute.xlu0 %578
        %vm581 = vcmask 1045504
        %v582 = vrot.slane %v572, 2
        %v583 = vrot.slane %v569, 2
        %v584 = vsel %vm581, %v582, %v583
        %585 = vrot.lane.b32.xlu0 %v584, 32
        %v586 = vpop.permute.xlu0 %585
        %v588 = vsel %vm501, %v572, %v579
        %vm589 = vcmask 261120
        %v590 = vsel %vm589, %v588, %v586
        %v591 = vpack.c.bf16 %v590, %v590
        %v592 = vld [vmem:[#allocation4] sm:$0xf]
        %v593 = vld [vmem:[#allocation4 + $0x4] sm:$0xf]
        %v594 = vld [vmem:[#allocation4 + $0x8] sm:$0xf]
        %v595 = vld [vmem:[#allocation4 + $0xc] sm:$0xf]
        %v596 = vld [vmem:[#allocation4 + $0x10] sm:$0xf]
        %v597 = vld [vmem:[#allocation4 + $0x14] sm:$0xf]
        %v598 = vld [vmem:[%s6] sm:$0x1]
        %v600 = vperm.slane %v598, 0
        %v608 = vunpack.c.l.b16 %v592
        %v609 = vunpack.c.l.b16 %v593
        %v610 = vunpack.c.l.b16 %v594
        %v611 = vunpack.c.l.b16 %v595
        %v612 = vunpack.c.l.b16 %v596
        %v613 = vunpack.c.l.b16 %v597
        %v614 = vpack.c.b16 %v609, %v608
        %v615 = vpack.c.b16 %v611, %v610
        %v616 = vpack.c.b16 %v613, %v612
        %vm620 = vcmask 392192
        %v622 = vsel %vm620, %v591, 0
        %624 = vmatpush.bf16.msra.mxu0 0
        %625 = vmatpush.bf16.msra.mxu0 0
        %626 = vmatpush.bf16.msra.mxu0 0
        %627 = vmatpush.bf16.msra.mxu0 0
        %628 = vmatpush.bf16.msra.mxu0 0
        %629 = vmatpush.bf16.msra.mxu0 %v616
        %630 = vmatpush.bf16.msra.mxu0 %v615
        %631 = vmatpush.bf16.msra.mxu0 %v614
        %632 = vmatmul.bf16.gmra.mxu0 %v622
        %v633 = vpop.f32.mrf.mxu0
        %v634 = vadd.f32 %v600, %v633
        %v635 = vpop.f32.mrf.mxu0
        %636 = vdwg.mxu0
        %v637 = vld [vmem:[%s7] sm:$0x1]
        %v638 = vld [vmem:[%s8] sm:$0x1]
        %v639 = vld [vmem:[%s12] sm:$0x1]
        %v640 = vsel %vm501, %v634, 0.0
        %v641 = vrot.slane %v640, 4
        %v642 = vadd.f32 %v640, %v641
        %v643 = vrot.slane %v642, 2
        %v644 = vadd.f32 %v642, %v643
        %v645 = vrot.slane %v644, 1
        %v646 = vadd.f32 %v644, %v645
        %v647 = vmul.f32 %v646, 0.125
        %v648 = vsub.f32 %v634, %v647
        %v649 = vmul.f32 %v648, %v648
        %v650 = vsel %vm501, %v649, 0.0
        %v651 = vrot.slane %v650, 4
        %v652 = vadd.f32 %v650, %v651
        %v653 = vrot.slane %v652, 2
        %v654 = vadd.f32 %v652, %v653
        %v655 = vrot.slane %v654, 1
        %v656 = vadd.f32 %v654, %v655
        %v657 = vmul.f32 %v656, 0.125
        %v658 = vadd.f32 %v657, 1e-05
        %v659 = vrsqrt.pop %v658
        %v660 = vmul.f32 %v659, %v658
        %v661 = vmul.f32 %v660, %v659
        %v662 = vmul.f32 0.5, %v661
        %v663 = vsub.f32 1.5, %v662
        %v664 = vmul.f32 %v659, %v663
        %vm665 = vweird.f32 %v658
        %vm666 = vweird.f32 %v659
        %vm667 = vmor %vm665, %vm666
        %v668 = vsel %vm667, %v659, %v664
        %v669 = vmul.f32 %v648, %v668
        %v671 = vperm.slane %v637, 0
        %v673 = vmul.f32 %v669, %v671
        %v675 = vperm.slane %v638, 0
        %v677 = vadd.f32 %v673, %v675
        %vm678 = vcmp.ge.f32.partialorder %v677, 0.0
        %v680 = vperm.slane %v639, 0
        %681 = vset.pattern.permute.xlu0 0
        %682 = vperm.xlu0 %681, %v680
        %v683 = vpop.permute.xlu0 %682
        %v685 = vmul.f32 %v683, %v677
        %v686 = vsel %vm678, %v677, %v685
        %v687 = vpack.c.bf16 %v686, %v686
        %v688 = vld [vmem:[#allocation6] sm:$0xf]
        %v689 = vld [vmem:[#allocation6 + $0x4] sm:$0xf]
        %v692 = vunpack.c.l.b16 %v688
        %v693 = vunpack.c.l.b16 %v689
        %v694 = vpack.c.b16 %v693, %v692
        %v697 = vsel %vm501, %v687, 0
        %699 = vmatpush.bf16.msra.mxu0 0
        %700 = vmatpush.bf16.msra.mxu0 0
        %701 = vmatpush.bf16.msra.mxu0 0
        %702 = vmatpush.bf16.msra.mxu0 0
        %703 = vmatpush.bf16.msra.mxu0 0
        %704 = vmatpush.bf16.msra.mxu0 0
        %705 = vmatpush.bf16.msra.mxu0 0
        %706 = vmatpush.bf16.msra.mxu0 %v694
        %707 = vmatmul.bf16.gmra.mxu0 %v697
        %v708 = vpop.f32.mrf.mxu0
        %v709 = vadd.f32 0.0, %v708
        %v710 = vpop.f32.mrf.mxu0
        %711 = vdwg.mxu0
        %v712 = vadd.f32 %v487, %v709
        %v713 = vld [vmem:[%s10] sm:$0x1]
        %v715 = vperm.slane %v713, 0
        %v717 = vadd.f32 %v712, %v715
        %v718 = vpack.c.bf16 %v717, %v717
        %s719 = scalar_lea.vmem [#allocation2], 8
        %v720 = vld [vmem:[%s719] sm:$0xf]
        %v721 = vld [vmem:[%s719 + $0x4] sm:$0xf]
        %s722 = scalar_lea.vmem %s2, 1
        %v723 = vld [vmem:[%s722] sm:$0x1]
        %v725 = vperm.slane %v723, 0
        %v729 = vunpack.c.l.b16 %v720
        %v730 = vunpack.c.l.b16 %v721
        %v731 = vpack.c.b16 %v730, %v729
        %v734 = vsel %vm501, %v718, 0
        %736 = vmatpush.bf16.msra.mxu0 0
        %737 = vmatpush.bf16.msra.mxu0 0
        %738 = vmatpush.bf16.msra.mxu0 0
        %739 = vmatpush.bf16.msra.mxu0 0
        %740 = vmatpush.bf16.msra.mxu0 0
        %741 = vmatpush.bf16.msra.mxu0 0
        %742 = vmatpush.bf16.msra.mxu0 0
        %743 = vmatpush.bf16.msra.mxu0 %v731
        %744 = vmatmul.bf16.gmra.mxu0 %v734
        %v745 = vpop.f32.mrf.mxu0
        %v746 = vadd.f32 %v725, %v745
        %v747 = vpop.f32.mrf.mxu0
        %748 = vdwg.mxu0
        %s749 = scalar_lea.vmem %s3, 1
        %v750 = vld [vmem:[%s749] sm:$0x1]
        %s751 = scalar_lea.vmem %s4, 1
        %v752 = vld [vmem:[%s751] sm:$0x1]
        %s753 = scalar_lea.vmem %s11, 1
        %v754 = vld [vmem:[%s753] sm:$0x1]
        %v755 = vsel %vm501, %v746, 0.0
        %v756 = vrot.slane %v755, 4
        %v757 = vadd.f32 %v755, %v756
        %v758 = vrot.slane %v757, 2
        %v759 = vadd.f32 %v757, %v758
        %v760 = vrot.slane %v759, 1
        %v761 = vadd.f32 %v759, %v760
        %v762 = vmul.f32 %v761, 0.125
        %v763 = vsub.f32 %v746, %v762
        %v764 = vmul.f32 %v763, %v763
        %v765 = vsel %vm501, %v764, 0.0
        %v766 = vrot.slane %v765, 4
        %v767 = vadd.f32 %v765, %v766
        %v768 = vrot.slane %v767, 2
        %v769 = vadd.f32 %v767, %v768
        %v770 = vrot.slane %v769, 1
        %v771 = vadd.f32 %v769, %v770
        %v772 = vmul.f32 %v771, 0.125
        %v773 = vadd.f32 %v772, 1e-05
        %v774 = vrsqrt.pop %v773
        %v775 = vmul.f32 %v774, %v773
        %v776 = vmul.f32 %v775, %v774
        %v777 = vmul.f32 0.5, %v776
        %v778 = vsub.f32 1.5, %v777
        %v779 = vmul.f32 %v774, %v778
        %vm780 = vweird.f32 %v773
        %vm781 = vweird.f32 %v774
        %vm782 = vmor %vm780, %vm781
        %v783 = vsel %vm782, %v774, %v779
        %v784 = vmul.f32 %v763, %v783
        %v786 = vperm.slane %v750, 0
        %v788 = vmul.f32 %v784, %v786
        %v790 = vperm.slane %v752, 0
        %v792 = vadd.f32 %v788, %v790
        %vm793 = vcmp.ge.f32.partialorder %v792, 0.0
        %v795 = vperm.slane %v754, 0
        %796 = vset.pattern.permute.xlu0 0
        %797 = vperm.xlu0 %796, %v795
        %v798 = vpop.permute.xlu0 %797
        %v800 = vmul.f32 %v798, %v792
        %v801 = vsel %vm793, %v792, %v800
        %v803 = vrot.slane %v801, 4
        %vm805 = vcmask 1043456
        %v806 = vsel %vm805, 0.0, %v803
        %v808 = vrot.slane %v806, 2
        %v809 = vrot.slane %v803, 2
        %v810 = vsel %vm581, %v808, %v809
        %811 = vrot.lane.b32.xlu0 %v810, 16
        %v812 = vpop.permute.xlu0 %811
        %v814 = vrot.slane %v806, 4
        %v815 = vrot.slane %v803, 4
        %v816 = vsel %vm805, %v814, %v815
        %817 = vrot.lane.b32.xlu0 %v816, 32
        %v818 = vpop.permute.xlu0 %817
        %v820 = vsel %vm501, %v806, %v812
        %v821 = vsel %vm589, %v820, %v818
        %v822 = vpack.c.bf16 %v821, %v821
        %s823 = scalar_lea.vmem [#allocation4], 24
        %v824 = vld [vmem:[%s823] sm:$0xf]
        %v825 = vld [vmem:[%s823 + $0x4] sm:$0xf]
        %v826 = vld [vmem:[%s823 + $0x8] sm:$0xf]
        %v827 = vld [vmem:[%s823 + $0xc] sm:$0xf]
        %v828 = vld [vmem:[%s823 + $0x10] sm:$0xf]
        %v829 = vld [vmem:[%s823 + $0x14] sm:$0xf]
        %s830 = scalar_lea.vmem %s6, 1
        %v831 = vld [vmem:[%s830] sm:$0x1]
        %v833 = vperm.slane %v831, 0
        %v841 = vunpack.c.l.b16 %v824
        %v842 = vunpack.c.l.b16 %v825
        %v843 = vunpack.c.l.b16 %v826
        %v844 = vunpack.c.l.b16 %v827
        %v845 = vunpack.c.l.b16 %v828
        %v846 = vunpack.c.l.b16 %v829
        %v847 = vpack.c.b16 %v842, %v841
        %v848 = vpack.c.b16 %v844, %v843
        %v849 = vpack.c.b16 %v846, %v845
        %v854 = vsel %vm620, %v822, 0
        %856 = vmatpush.bf16.msra.mxu0 0
        %857 = vmatpush.bf16.msra.mxu0 0
        %858 = vmatpush.bf16.msra.mxu0 0
        %859 = vmatpush.bf16.msra.mxu0 0
        %860 = vmatpush.bf16.msra.mxu0 0
        %861 = vmatpush.bf16.msra.mxu0 %v849
        %862 = vmatpush.bf16.msra.mxu0 %v848
        %863 = vmatpush.bf16.msra.mxu0 %v847
        %864 = vmatmul.bf16.gmra.mxu0 %v854
        %v865 = vpop.f32.mrf.mxu0
        %v866 = vadd.f32 %v833, %v865
        %v867 = vpop.f32.mrf.mxu0
        %868 = vdwg.mxu0
        %s869 = scalar_lea.vmem %s7, 1
        %v870 = vld [vmem:[%s869] sm:$0x1]
        %s871 = scalar_lea.vmem %s8, 1
        %v872 = vld [vmem:[%s871] sm:$0x1]
        %s873 = scalar_lea.vmem %s12, 1
        %v874 = vld [vmem:[%s873] sm:$0x1]
        %v875 = vsel %vm501, %v866, 0.0
        %v876 = vrot.slane %v875, 4
        %v877 = vadd.f32 %v875, %v876
        %v878 = vrot.slane %v877, 2
        %v879 = vadd.f32 %v877, %v878
        %v880 = vrot.slane %v879, 1
        %v881 = vadd.f32 %v879, %v880
        %v882 = vmul.f32 %v881, 0.125
        %v883 = vsub.f32 %v866, %v882
        %v884 = vmul.f32 %v883, %v883
        %v885 = vsel %vm501, %v884, 0.0
        %v886 = vrot.slane %v885, 4
        %v887 = vadd.f32 %v885, %v886
        %v888 = vrot.slane %v887, 2
        %v889 = vadd.f32 %v887, %v888
        %v890 = vrot.slane %v889, 1
        %v891 = vadd.f32 %v889, %v890
        %v892 = vmul.f32 %v891, 0.125
        %v893 = vadd.f32 %v892, 1e-05
        %v894 = vrsqrt.pop %v893
        %v895 = vmul.f32 %v894, %v893
        %v896 = vmul.f32 %v895, %v894
        %v897 = vmul.f32 0.5, %v896
        %v898 = vsub.f32 1.5, %v897
        %v899 = vmul.f32 %v894, %v898
        %vm900 = vweird.f32 %v893
        %vm901 = vweird.f32 %v894
        %vm902 = vmor %vm900, %vm901
        %v903 = vsel %vm902, %v894, %v899
        %v904 = vmul.f32 %v883, %v903
        %v906 = vperm.slane %v870, 0
        %v908 = vmul.f32 %v904, %v906
        %v910 = vperm.slane %v872, 0
        %v912 = vadd.f32 %v908, %v910
        %vm913 = vcmp.ge.f32.partialorder %v912, 0.0
        %v915 = vperm.slane %v874, 0
        %916 = vset.pattern.permute.xlu0 0
        %917 = vperm.xlu0 %916, %v915
        %v918 = vpop.permute.xlu0 %917
        %v920 = vmul.f32 %v918, %v912
        %v921 = vsel %vm913, %v912, %v920
        %v922 = vpack.c.bf16 %v921, %v921
        %s923 = scalar_lea.vmem [#allocation6], 8
        %v924 = vld [vmem:[%s923] sm:$0xf]
        %v925 = vld [vmem:[%s923 + $0x4] sm:$0xf]
        %v928 = vunpack.c.l.b16 %v924
        %v929 = vunpack.c.l.b16 %v925
        %v930 = vpack.c.b16 %v929, %v928
        %v933 = vsel %vm501, %v922, 0
        %935 = vmatpush.bf16.msra.mxu0 0
        %936 = vmatpush.bf16.msra.mxu0 0
        %937 = vmatpush.bf16.msra.mxu0 0
        %938 = vmatpush.bf16.msra.mxu0 0
        %939 = vmatpush.bf16.msra.mxu0 0
        %940 = vmatpush.bf16.msra.mxu0 0
        %941 = vmatpush.bf16.msra.mxu0 0
        %942 = vmatpush.bf16.msra.mxu0 %v930
        %943 = vmatmul.bf16.gmra.mxu0 %v933
        %v944 = vpop.f32.mrf.mxu0
        %v945 = vadd.f32 0.0, %v944
        %v946 = vpop.f32.mrf.mxu0
        %947 = vdwg.mxu0
        %v948 = vadd.f32 %v717, %v945
        %s949 = scalar_lea.vmem %s10, 1
        %v950 = vld [vmem:[%s949] sm:$0x1]
        %v952 = vperm.slane %v950, 0
        %v954 = vadd.f32 %v948, %v952
        %v955 = vpack.c.bf16 %v954, %v954
        %s956 = scalar_lea.vmem [#allocation2], 16
        %v957 = vld [vmem:[%s956] sm:$0xf]
        %v958 = vld [vmem:[%s956 + $0x4] sm:$0xf]
        %s959 = scalar_lea.vmem %s2, 2
        %v960 = vld [vmem:[%s959] sm:$0x1]
        %v962 = vperm.slane %v960, 0
        %v966 = vunpack.c.l.b16 %v957
        %v967 = vunpack.c.l.b16 %v958
        %v968 = vpack.c.b16 %v967, %v966
        %v971 = vsel %vm501, %v955, 0
        %973 = vmatpush.bf16.msra.mxu0 0
        %974 = vmatpush.bf16.msra.mxu0 0
        %975 = vmatpush.bf16.msra.mxu0 0
        %976 = vmatpush.bf16.msra.mxu0 0
        %977 = vmatpush.bf16.msra.mxu0 0
        %978 = vmatpush.bf16.msra.mxu0 0
        %979 = vmatpush.bf16.msra.mxu0 0
        %980 = vmatpush.bf16.msra.mxu0 %v968
        %981 = vmatmul.bf16.gmra.mxu0 %v971
        %v982 = vpop.f32.mrf.mxu0
        %v983 = vadd.f32 %v962, %v982
        %v984 = vpop.f32.mrf.mxu0
        %985 = vdwg.mxu0
        %s986 = scalar_lea.vmem %s3, 2
        %v987 = vld [vmem:[%s986] sm:$0x1]
        %s988 = scalar_lea.vmem %s4, 2
        %v989 = vld [vmem:[%s988] sm:$0x1]
        %s990 = scalar_lea.vmem %s11, 2
        %v991 = vld [vmem:[%s990] sm:$0x1]
        %v992 = vsel %vm501, %v983, 0.0
        %v993 = vrot.slane %v992, 4
        %v994 = vadd.f32 %v992, %v993
        %v995 = vrot.slane %v994, 2
        %v996 = vadd.f32 %v994, %v995
        %v997 = vrot.slane %v996, 1
        %v998 = vadd.f32 %v996, %v997
        %v999 = vmul.f32 %v998, 0.125
        %v1000 = vsub.f32 %v983, %v999
        %v1001 = vmul.f32 %v1000, %v1000
        %v1002 = vsel %vm501, %v1001, 0.0
        %v1003 = vrot.slane %v1002, 4
        %v1004 = vadd.f32 %v1002, %v1003
        %v1005 = vrot.slane %v1004, 2
        %v1006 = vadd.f32 %v1004, %v1005
        %v1007 = vrot.slane %v1006, 1
        %v1008 = vadd.f32 %v1006, %v1007
        %v1009 = vmul.f32 %v1008, 0.125
        %v1010 = vadd.f32 %v1009, 1e-05
        %v1011 = vrsqrt.pop %v1010
        %v1012 = vmul.f32 %v1011, %v1010
        %v1013 = vmul.f32 %v1012, %v1011
        %v1014 = vmul.f32 0.5, %v1013
        %v1015 = vsub.f32 1.5, %v1014
        %v1016 = vmul.f32 %v1011, %v1015
        %vm1017 = vweird.f32 %v1010
        %vm1018 = vweird.f32 %v1011
        %vm1019 = vmor %vm1017, %vm1018
        %v1020 = vsel %vm1019, %v1011, %v1016
        %v1021 = vmul.f32 %v1000, %v1020
        %v1023 = vperm.slane %v987, 0
        %v1025 = vmul.f32 %v1021, %v1023
        %v1027 = vperm.slane %v989, 0
        %v1029 = vadd.f32 %v1025, %v1027
        %vm1030 = vcmp.ge.f32.partialorder %v1029, 0.0
        %v1032 = vperm.slane %v991, 0
        %1033 = vset.pattern.permute.xlu0 0
        %1034 = vperm.xlu0 %1033, %v1032
        %v1035 = vpop.permute.xlu0 %1034
        %v1037 = vmul.f32 %v1035, %v1029
        %v1038 = vsel %vm1030, %v1029, %v1037
        %v1041 = vrot.slane 0.0, 4
        %v1042 = vrot.slane %v1038, 4
        %v1043 = vsel %vm805, %v1041, %v1042
        %1044 = vrot.lane.b32.xlu0 %v1043, 16
        %v1045 = vpop.permute.xlu0 %1044
        %1047 = vrot.lane.b32.xlu0 %v1038, 32
        %v1048 = vpop.permute.xlu0 %1047
        %v1050 = vsel %vm501, 0.0, %v1045
        %v1051 = vsel %vm589, %v1050, %v1048
        %v1052 = vpack.c.bf16 %v1051, %v1051
        %s1053 = scalar_lea.vmem [#allocation4], 48
        %v1054 = vld [vmem:[%s1053] sm:$0xf]
        %v1055 = vld [vmem:[%s1053 + $0x4] sm:$0xf]
        %v1056 = vld [vmem:[%s1053 + $0x8] sm:$0xf]
        %v1057 = vld [vmem:[%s1053 + $0xc] sm:$0xf]
        %v1058 = vld [vmem:[%s1053 + $0x10] sm:$0xf]
        %v1059 = vld [vmem:[%s1053 + $0x14] sm:$0xf]
        %s1060 = scalar_lea.vmem %s6, 2
        %v1061 = vld [vmem:[%s1060] sm:$0x1]
        %v1063 = vperm.slane %v1061, 0
        %v1071 = vunpack.c.l.b16 %v1054
        %v1072 = vunpack.c.l.b16 %v1055
        %v1073 = vunpack.c.l.b16 %v1056
        %v1074 = vunpack.c.l.b16 %v1057
        %v1075 = vunpack.c.l.b16 %v1058
        %v1076 = vunpack.c.l.b16 %v1059
        %v1077 = vpack.c.b16 %v1072, %v1071
        %v1078 = vpack.c.b16 %v1074, %v1073
        %v1079 = vpack.c.b16 %v1076, %v1075
        %v1084 = vsel %vm620, %v1052, 0
        %1086 = vmatpush.bf16.msra.mxu0 0
        %1087 = vmatpush.bf16.msra.mxu0 0
        %1088 = vmatpush.bf16.msra.mxu0 0
        %1089 = vmatpush.bf16.msra.mxu0 0
        %1090 = vmatpush.bf16.msra.mxu0 0
        %1091 = vmatpush.bf16.msra.mxu0 %v1079
        %1092 = vmatpush.bf16.msra.mxu0 %v1078
        %1093 = vmatpush.bf16.msra.mxu0 %v1077
        %1094 = vmatmul.bf16.gmra.mxu0 %v1084
        %v1095 = vpop.f32.mrf.mxu0
        %v1096 = vadd.f32 %v1063, %v1095
        %v1097 = vpop.f32.mrf.mxu0
        %1098 = vdwg.mxu0
        %s1099 = scalar_lea.vmem %s7, 2
        %v1100 = vld [vmem:[%s1099] sm:$0x1]
        %s1101 = scalar_lea.vmem %s8, 2
        %v1102 = vld [vmem:[%s1101] sm:$0x1]
        %s1103 = scalar_lea.vmem %s12, 2
        %v1104 = vld [vmem:[%s1103] sm:$0x1]
        %v1105 = vsel %vm501, %v1096, 0.0
        %v1106 = vrot.slane %v1105, 4
        %v1107 = vadd.f32 %v1105, %v1106
        %v1108 = vrot.slane %v1107, 2
        %v1109 = vadd.f32 %v1107, %v1108
        %v1110 = vrot.slane %v1109, 1
        %v1111 = vadd.f32 %v1109, %v1110
        %v1112 = vmul.f32 %v1111, 0.125
        %v1113 = vsub.f32 %v1096, %v1112
        %v1114 = vmul.f32 %v1113, %v1113
        %v1115 = vsel %vm501, %v1114, 0.0
        %v1116 = vrot.slane %v1115, 4
        %v1117 = vadd.f32 %v1115, %v1116
        %v1118 = vrot.slane %v1117, 2
        %v1119 = vadd.f32 %v1117, %v1118
        %v1120 = vrot.slane %v1119, 1
        %v1121 = vadd.f32 %v1119, %v1120
        %v1122 = vmul.f32 %v1121, 0.125
        %v1123 = vadd.f32 %v1122, 1e-05
        %v1124 = vrsqrt.pop %v1123
        %v1125 = vmul.f32 %v1124, %v1123
        %v1126 = vmul.f32 %v1125, %v1124
        %v1127 = vmul.f32 0.5, %v1126
        %v1128 = vsub.f32 1.5, %v1127
        %v1129 = vmul.f32 %v1124, %v1128
        %vm1130 = vweird.f32 %v1123
        %vm1131 = vweird.f32 %v1124
        %vm1132 = vmor %vm1130, %vm1131
        %v1133 = vsel %vm1132, %v1124, %v1129
        %v1134 = vmul.f32 %v1113, %v1133
        %v1136 = vperm.slane %v1100, 0
        %v1138 = vmul.f32 %v1134, %v1136
        %v1140 = vperm.slane %v1102, 0
        %v1142 = vadd.f32 %v1138, %v1140
        %vm1143 = vcmp.ge.f32.partialorder %v1142, 0.0
        %v1145 = vperm.slane %v1104, 0
        %1146 = vset.pattern.permute.xlu0 0
        %1147 = vperm.xlu0 %1146, %v1145
        %v1148 = vpop.permute.xlu0 %1147
        %v1150 = vmul.f32 %v1148, %v1142
        %v1151 = vsel %vm1143, %v1142, %v1150
        %v1152 = vpack.c.bf16 %v1151, %v1151
        %s1153 = scalar_lea.vmem [#allocation6], 16
        %v1154 = vld [vmem:[%s1153] sm:$0xf]
        %v1155 = vld [vmem:[%s1153 + $0x4] sm:$0xf]
        %v1158 = vunpack.c.l.b16 %v1154
        %v1159 = vunpack.c.l.b16 %v1155
        %v1160 = vpack.c.b16 %v1159, %v1158
        %v1163 = vsel %vm501, %v1152, 0
        %1165 = vmatpush.bf16.msra.mxu0 0
        %1166 = vmatpush.bf16.msra.mxu0 0
        %1167 = vmatpush.bf16.msra.mxu0 0
        %1168 = vmatpush.bf16.msra.mxu0 0
        %1169 = vmatpush.bf16.msra.mxu0 0
        %1170 = vmatpush.bf16.msra.mxu0 0
        %1171 = vmatpush.bf16.msra.mxu0 0
        %1172 = vmatpush.bf16.msra.mxu0 %v1160
        %1173 = vmatmul.bf16.gmra.mxu0 %v1163
        %v1174 = vpop.f32.mrf.mxu0
        %v1175 = vadd.f32 0.0, %v1174
        %v1176 = vpop.f32.mrf.mxu0
        %1177 = vdwg.mxu0
        %v1178 = vadd.f32 %v954, %v1175
        %s1179 = scalar_lea.vmem %s10, 2
        %v1180 = vld [vmem:[%s1179] sm:$0x1]
        %v1182 = vperm.slane %v1180, 0
        %v1184 = vadd.f32 %v1178, %v1182
        %v1185 = vadd.f32 %v1184, 0.0
        %v1186 = vpack.c.bf16 %v1184, %v1184
        %s1187 = scalar_lea.vmem [#allocation2], 24
        %v1188 = vld [vmem:[%s1187] sm:$0xf]
        %v1189 = vld [vmem:[%s1187 + $0x4] sm:$0xf]
        %s1190 = scalar_lea.vmem %s2, 3
        %v1191 = vld [vmem:[%s1190] sm:$0x1]
        %v1193 = vperm.slane %v1191, 0
        %v1197 = vunpack.c.l.b16 %v1188
        %v1198 = vunpack.c.l.b16 %v1189
        %v1199 = vpack.c.b16 %v1198, %v1197
        %v1202 = vsel %vm501, %v1186, 0
        %1204 = vmatpush.bf16.msra.mxu0 0
        %1205 = vmatpush.bf16.msra.mxu0 0
        %1206 = vmatpush.bf16.msra.mxu0 0
        %1207 = vmatpush.bf16.msra.mxu0 0
        %1208 = vmatpush.bf16.msra.mxu0 0
        %1209 = vmatpush.bf16.msra.mxu0 0
        %1210 = vmatpush.bf16.msra.mxu0 0
        %1211 = vmatpush.bf16.msra.mxu0 %v1199
        %1212 = vmatmul.bf16.gmra.mxu0 %v1202
        %v1213 = vpop.f32.mrf.mxu0
        %v1214 = vadd.f32 %v1193, %v1213
        %v1215 = vpop.f32.mrf.mxu0
        %1216 = vdwg.mxu0
        %s1217 = scalar_lea.vmem %s3, 3
        %v1218 = vld [vmem:[%s1217] sm:$0x1]
        %s1219 = scalar_lea.vmem %s4, 3
        %v1220 = vld [vmem:[%s1219] sm:$0x1]
        %s1221 = scalar_lea.vmem %s11, 3
        %v1222 = vld [vmem:[%s1221] sm:$0x1]
        %v1223 = vsel %vm501, %v1214, 0.0
        %v1224 = vrot.slane %v1223, 4
        %v1225 = vadd.f32 %v1223, %v1224
        %v1226 = vrot.slane %v1225, 2
        %v1227 = vadd.f32 %v1225, %v1226
        %v1228 = vrot.slane %v1227, 1
        %v1229 = vadd.f32 %v1227, %v1228
        %v1230 = vmul.f32 %v1229, 0.125
        %v1231 = vsub.f32 %v1214, %v1230
        %v1232 = vmul.f32 %v1231, %v1231
        %v1233 = vsel %vm501, %v1232, 0.0
        %v1234 = vrot.slane %v1233, 4
        %v1235 = vadd.f32 %v1233, %v1234
        %v1236 = vrot.slane %v1235, 2
        %v1237 = vadd.f32 %v1235, %v1236
        %v1238 = vrot.slane %v1237, 1
        %v1239 = vadd.f32 %v1237, %v1238
        %v1240 = vmul.f32 %v1239, 0.125
        %v1241 = vadd.f32 %v1240, 1e-05
        %v1242 = vrsqrt.pop %v1241
        %v1243 = vmul.f32 %v1242, %v1241
        %v1244 = vmul.f32 %v1243, %v1242
        %v1245 = vmul.f32 0.5, %v1244
        %v1246 = vsub.f32 1.5, %v1245
        %v1247 = vmul.f32 %v1242, %v1246
        %vm1248 = vweird.f32 %v1241
        %vm1249 = vweird.f32 %v1242
        %vm1250 = vmor %vm1248, %vm1249
        %v1251 = vsel %vm1250, %v1242, %v1247
        %v1252 = vmul.f32 %v1231, %v1251
        %v1254 = vperm.slane %v1218, 0
        %v1256 = vmul.f32 %v1252, %v1254
        %v1258 = vperm.slane %v1220, 0
        %v1260 = vadd.f32 %v1256, %v1258
        %vm1261 = vcmp.ge.f32.partialorder %v1260, 0.0
        %v1263 = vperm.slane %v1222, 0
        %1264 = vset.pattern.permute.xlu0 0
        %1265 = vperm.xlu0 %1264, %v1263
        %v1266 = vpop.permute.xlu0 %1265
        %v1268 = vmul.f32 %v1266, %v1260
        %v1269 = vsel %vm1261, %v1260, %v1268
        %v1271 = vrot.slane %v1269, 6
        %v1273 = vsel %vm571, 0.0, %v1271
        %v1275 = vrot.slane %v1273, 1
        %v1276 = vrot.slane %v1271, 1
        %v1277 = vsel %vm574, %v1275, %v1276
        %1278 = vrot.lane.b32.xlu0 %v1277, 16
        %v1279 = vpop.permute.xlu0 %1278
        %v1281 = vrot.slane %v1273, 2
        %v1282 = vrot.slane %v1271, 2
        %v1283 = vsel %vm581, %v1281, %v1282
        %1284 = vrot.lane.b32.xlu0 %v1283, 32
        %v1285 = vpop.permute.xlu0 %1284
        %v1287 = vsel %vm501, %v1273, %v1279
        %v1288 = vsel %vm589, %v1287, %v1285
        %v1289 = vpack.c.bf16 %v1288, %v1288
        %s1290 = scalar_lea.vmem [#allocation4], 72
        %v1291 = vld [vmem:[%s1290] sm:$0xf]
        %v1292 = vld [vmem:[%s1290 + $0x4] sm:$0xf]
        %v1293 = vld [vmem:[%s1290 + $0x8] sm:$0xf]
        %v1294 = vld [vmem:[%s1290 + $0xc] sm:$0xf]
        %v1295 = vld [vmem:[%s1290 + $0x10] sm:$0xf]
        %v1296 = vld [vmem:[%s1290 + $0x14] sm:$0xf]
        %s1297 = scalar_lea.vmem %s6, 3
        %v1298 = vld [vmem:[%s1297] sm:$0x1]
        %v1300 = vperm.slane %v1298, 0
        %v1308 = vunpack.c.l.b16 %v1291
        %v1309 = vunpack.c.l.b16 %v1292
        %v1310 = vunpack.c.l.b16 %v1293
        %v1311 = vunpack.c.l.b16 %v1294
        %v1312 = vunpack.c.l.b16 %v1295
        %v1313 = vunpack.c.l.b16 %v1296
        %v1314 = vpack.c.b16 %v1309, %v1308
        %v1315 = vpack.c.b16 %v1311, %v1310
        %v1316 = vpack.c.b16 %v1313, %v1312
        %v1321 = vsel %vm620, %v1289, 0
        %1323 = vmatpush.bf16.msra.mxu0 0
        %1324 = vmatpush.bf16.msra.mxu0 0
        %1325 = vmatpush.bf16.msra.mxu0 0
        %1326 = vmatpush.bf16.msra.mxu0 0
        %1327 = vmatpush.bf16.msra.mxu0 0
        %1328 = vmatpush.bf16.msra.mxu0 %v1316
        %1329 = vmatpush.bf16.msra.mxu0 %v1315
        %1330 = vmatpush.bf16.msra.mxu0 %v1314
        %1331 = vmatmul.bf16.gmra.mxu0 %v1321
        %v1332 = vpop.f32.mrf.mxu0
        %v1333 = vadd.f32 %v1300, %v1332
        %v1334 = vpop.f32.mrf.mxu0
        %1335 = vdwg.mxu0
        %s1336 = scalar_lea.vmem %s7, 3
        %v1337 = vld [vmem:[%s1336] sm:$0x1]
        %s1338 = scalar_lea.vmem %s8, 3
        %v1339 = vld [vmem:[%s1338] sm:$0x1]
        %s1340 = scalar_lea.vmem %s12, 3
        %v1341 = vld [vmem:[%s1340] sm:$0x1]
        %v1342 = vsel %vm501, %v1333, 0.0
        %v1343 = vrot.slane %v1342, 4
        %v1344 = vadd.f32 %v1342, %v1343
        %v1345 = vrot.slane %v1344, 2
        %v1346 = vadd.f32 %v1344, %v1345
        %v1347 = vrot.slane %v1346, 1
        %v1348 = vadd.f32 %v1346, %v1347
        %v1349 = vmul.f32 %v1348, 0.125
        %v1350 = vsub.f32 %v1333, %v1349
        %v1351 = vmul.f32 %v1350, %v1350
        %v1352 = vsel %vm501, %v1351, 0.0
        %v1353 = vrot.slane %v1352, 4
        %v1354 = vadd.f32 %v1352, %v1353
        %v1355 = vrot.slane %v1354, 2
        %v1356 = vadd.f32 %v1354, %v1355
        %v1357 = vrot.slane %v1356, 1
        %v1358 = vadd.f32 %v1356, %v1357
        %v1359 = vmul.f32 %v1358, 0.125
        %v1360 = vadd.f32 %v1359, 1e-05
        %v1361 = vrsqrt.pop %v1360
        %v1362 = vmul.f32 %v1361, %v1360
        %v1363 = vmul.f32 %v1362, %v1361
        %v1364 = vmul.f32 0.5, %v1363
        %v1365 = vsub.f32 1.5, %v1364
        %v1366 = vmul.f32 %v1361, %v1365
        %vm1367 = vweird.f32 %v1360
        %vm1368 = vweird.f32 %v1361
        %vm1369 = vmor %vm1367, %vm1368
        %v1370 = vsel %vm1369, %v1361, %v1366
        %v1371 = vmul.f32 %v1350, %v1370
        %v1373 = vperm.slane %v1337, 0
        %v1375 = vmul.f32 %v1371, %v1373
        %v1377 = vperm.slane %v1339, 0
        %v1379 = vadd.f32 %v1375, %v1377
        %vm1380 = vcmp.ge.f32.partialorder %v1379, 0.0
        %v1382 = vperm.slane %v1341, 0
        %1383 = vset.pattern.permute.xlu0 0
        %1384 = vperm.xlu0 %1383, %v1382
        %v1385 = vpop.permute.xlu0 %1384
        %v1387 = vmul.f32 %v1385, %v1379
        %v1388 = vsel %vm1380, %v1379, %v1387
        %v1389 = vpack.c.bf16 %v1388, %v1388
        %s1390 = scalar_lea.vmem [#allocation6], 24
        %v1391 = vld [vmem:[%s1390] sm:$0xf]
        %v1392 = vld [vmem:[%s1390 + $0x4] sm:$0xf]
        %v1395 = vunpack.c.l.b16 %v1391
        %v1396 = vunpack.c.l.b16 %v1392
        %v1397 = vpack.c.b16 %v1396, %v1395
        %v1400 = vsel %vm501, %v1389, 0
        %1402 = vmatpush.bf16.msra.mxu0 0
        %1403 = vmatpush.bf16.msra.mxu0 0
        %1404 = vmatpush.bf16.msra.mxu0 0
        %1405 = vmatpush.bf16.msra.mxu0 0
        %1406 = vmatpush.bf16.msra.mxu0 0
        %1407 = vmatpush.bf16.msra.mxu0 0
        %1408 = vmatpush.bf16.msra.mxu0 0
        %1409 = vmatpush.bf16.msra.mxu0 %v1397
        %1410 = vmatmul.bf16.gmra.mxu0 %v1400
        %v1411 = vpop.f32.mrf.mxu0
        %v1412 = vadd.f32 0.0, %v1411
        %v1413 = vpop.f32.mrf.mxu0
        %1414 = vdwg.mxu0
        %v1415 = vadd.f32 %v1184, %v1412
        %s1416 = scalar_lea.vmem %s10, 3
        %v1417 = vld [vmem:[%s1416] sm:$0x1]
        %v1419 = vperm.slane %v1417, 0
        %v1421 = vadd.f32 %v1415, %v1419
        %v1422 = vpack.c.bf16 %v1421, %v1421
        %s1423 = scalar_lea.vmem [#allocation2], 32
        %v1424 = vld [vmem:[%s1423] sm:$0xf]
        %v1425 = vld [vmem:[%s1423 + $0x4] sm:$0xf]
        %s1426 = scalar_lea.vmem %s2, 4
        %v1427 = vld [vmem:[%s1426] sm:$0x1]
        %v1429 = vperm.slane %v1427, 0
        %v1433 = vunpack.c.l.b16 %v1424
        %v1434 = vunpack.c.l.b16 %v1425
        %v1435 = vpack.c.b16 %v1434, %v1433
        %v1438 = vsel %vm501, %v1422, 0
        %1440 = vmatpush.bf16.msra.mxu0 0
        %1441 = vmatpush.bf16.msra.mxu0 0
        %1442 = vmatpush.bf16.msra.mxu0 0
        %1443 = vmatpush.bf16.msra.mxu0 0
        %1444 = vmatpush.bf16.msra.mxu0 0
        %1445 = vmatpush.bf16.msra.mxu0 0
        %1446 = vmatpush.bf16.msra.mxu0 0
        %1447 = vmatpush.bf16.msra.mxu0 %v1435
        %1448 = vmatmul.bf16.gmra.mxu0 %v1438
        %v1449 = vpop.f32.mrf.mxu0
        %v1450 = vadd.f32 %v1429, %v1449
        %v1451 = vpop.f32.mrf.mxu0
        %1452 = vdwg.mxu0
        %s1453 = scalar_lea.vmem %s3, 4
        %v1454 = vld [vmem:[%s1453] sm:$0x1]
        %s1455 = scalar_lea.vmem %s4, 4
        %v1456 = vld [vmem:[%s1455] sm:$0x1]
        %s1457 = scalar_lea.vmem %s11, 4
        %v1458 = vld [vmem:[%s1457] sm:$0x1]
        %v1459 = vsel %vm501, %v1450, 0.0
        %v1460 = vrot.slane %v1459, 4
        %v1461 = vadd.f32 %v1459, %v1460
        %v1462 = vrot.slane %v1461, 2
        %v1463 = vadd.f32 %v1461, %v1462
        %v1464 = vrot.slane %v1463, 1
        %v1465 = vadd.f32 %v1463, %v1464
        %v1466 = vmul.f32 %v1465, 0.125
        %v1467 = vsub.f32 %v1450, %v1466
        %v1468 = vmul.f32 %v1467, %v1467
        %v1469 = vsel %vm501, %v1468, 0.0
        %v1470 = vrot.slane %v1469, 4
        %v1471 = vadd.f32 %v1469, %v1470
        %v1472 = vrot.slane %v1471, 2
        %v1473 = vadd.f32 %v1471, %v1472
        %v1474 = vrot.slane %v1473, 1
        %v1475 = vadd.f32 %v1473, %v1474
        %v1476 = vmul.f32 %v1475, 0.125
        %v1477 = vadd.f32 %v1476, 1e-05
        %v1478 = vrsqrt.pop %v1477
        %v1479 = vmul.f32 %v1478, %v1477
        %v1480 = vmul.f32 %v1479, %v1478
        %v1481 = vmul.f32 0.5, %v1480
        %v1482 = vsub.f32 1.5, %v1481
        %v1483 = vmul.f32 %v1478, %v1482
        %vm1484 = vweird.f32 %v1477
        %vm1485 = vweird.f32 %v1478
        %vm1486 = vmor %vm1484, %vm1485
        %v1487 = vsel %vm1486, %v1478, %v1483
        %v1488 = vmul.f32 %v1467, %v1487
        %v1490 = vperm.slane %v1454, 0
        %v1492 = vmul.f32 %v1488, %v1490
        %v1494 = vperm.slane %v1456, 0
        %v1496 = vadd.f32 %v1492, %v1494
        %vm1497 = vcmp.ge.f32.partialorder %v1496, 0.0
        %v1499 = vperm.slane %v1458, 0
        %1500 = vset.pattern.permute.xlu0 0
        %1501 = vperm.xlu0 %1500, %v1499
        %v1502 = vpop.permute.xlu0 %1501
        %v1504 = vmul.f32 %v1502, %v1496
        %v1505 = vsel %vm1497, %v1496, %v1504
        %v1507 = vrot.slane %v1505, 4
        %v1509 = vsel %vm805, 0.0, %v1507
        %v1511 = vrot.slane %v1509, 2
        %v1512 = vrot.slane %v1507, 2
        %v1513 = vsel %vm581, %v1511, %v1512
        %1514 = vrot.lane.b32.xlu0 %v1513, 16
        %v1515 = vpop.permute.xlu0 %1514
        %v1517 = vrot.slane %v1509, 4
        %v1518 = vrot.slane %v1507, 4
        %v1519 = vsel %vm805, %v1517, %v1518
        %1520 = vrot.lane.b32.xlu0 %v1519, 32
        %v1521 = vpop.permute.xlu0 %1520
        %v1523 = vsel %vm501, %v1509, %v1515
        %v1524 = vsel %vm589, %v1523, %v1521
        %v1525 = vpack.c.bf16 %v1524, %v1524
        %s1526 = scalar_lea.vmem [#allocation4], 96
        %v1527 = vld [vmem:[%s1526] sm:$0xf]
        %v1528 = vld [vmem:[%s1526 + $0x4] sm:$0xf]
        %v1529 = vld [vmem:[%s1526 + $0x8] sm:$0xf]
        %v1530 = vld [vmem:[%s1526 + $0xc] sm:$0xf]
        %v1531 = vld [vmem:[%s1526 + $0x10] sm:$0xf]
        %v1532 = vld [vmem:[%s1526 + $0x14] sm:$0xf]
        %s1533 = scalar_lea.vmem %s6, 4
        %v1534 = vld [vmem:[%s1533] sm:$0x1]
        %v1536 = vperm.slane %v1534, 0
        %v1544 = vunpack.c.l.b16 %v1527
        %v1545 = vunpack.c.l.b16 %v1528
        %v1546 = vunpack.c.l.b16 %v1529
        %v1547 = vunpack.c.l.b16 %v1530
        %v1548 = vunpack.c.l.b16 %v1531
        %v1549 = vunpack.c.l.b16 %v1532
        %v1550 = vpack.c.b16 %v1545, %v1544
        %v1551 = vpack.c.b16 %v1547, %v1546
        %v1552 = vpack.c.b16 %v1549, %v1548
        %v1557 = vsel %vm620, %v1525, 0
        %1559 = vmatpush.bf16.msra.mxu0 0
        %1560 = vmatpush.bf16.msra.mxu0 0
        %1561 = vmatpush.bf16.msra.mxu0 0
        %1562 = vmatpush.bf16.msra.mxu0 0
        %1563 = vmatpush.bf16.msra.mxu0 0
        %1564 = vmatpush.bf16.msra.mxu0 %v1552
        %1565 = vmatpush.bf16.msra.mxu0 %v1551
        %1566 = vmatpush.bf16.msra.mxu0 %v1550
        %1567 = vmatmul.bf16.gmra.mxu0 %v1557
        %v1568 = vpop.f32.mrf.mxu0
        %v1569 = vadd.f32 %v1536, %v1568
        %v1570 = vpop.f32.mrf.mxu0
        %1571 = vdwg.mxu0
        %s1572 = scalar_lea.vmem %s7, 4
        %v1573 = vld [vmem:[%s1572] sm:$0x1]
        %s1574 = scalar_lea.vmem %s8, 4
        %v1575 = vld [vmem:[%s1574] sm:$0x1]
        %s1576 = scalar_lea.vmem %s12, 4
        %v1577 = vld [vmem:[%s1576] sm:$0x1]
        %v1578 = vsel %vm501, %v1569, 0.0
        %v1579 = vrot.slane %v1578, 4
        %v1580 = vadd.f32 %v1578, %v1579
        %v1581 = vrot.slane %v1580, 2
        %v1582 = vadd.f32 %v1580, %v1581
        %v1583 = vrot.slane %v1582, 1
        %v1584 = vadd.f32 %v1582, %v1583
        %v1585 = vmul.f32 %v1584, 0.125
        %v1586 = vsub.f32 %v1569, %v1585
        %v1587 = vmul.f32 %v1586, %v1586
        %v1588 = vsel %vm501, %v1587, 0.0
        %v1589 = vrot.slane %v1588, 4
        %v1590 = vadd.f32 %v1588, %v1589
        %v1591 = vrot.slane %v1590, 2
        %v1592 = vadd.f32 %v1590, %v1591
        %v1593 = vrot.slane %v1592, 1
        %v1594 = vadd.f32 %v1592, %v1593
        %v1595 = vmul.f32 %v1594, 0.125
        %v1596 = vadd.f32 %v1595, 1e-05
        %v1597 = vrsqrt.pop %v1596
        %v1598 = vmul.f32 %v1597, %v1596
        %v1599 = vmul.f32 %v1598, %v1597
        %v1600 = vmul.f32 0.5, %v1599
        %v1601 = vsub.f32 1.5, %v1600
        %v1602 = vmul.f32 %v1597, %v1601
        %vm1603 = vweird.f32 %v1596
        %vm1604 = vweird.f32 %v1597
        %vm1605 = vmor %vm1603, %vm1604
        %v1606 = vsel %vm1605, %v1597, %v1602
        %v1607 = vmul.f32 %v1586, %v1606
        %v1609 = vperm.slane %v1573, 0
        %v1611 = vmul.f32 %v1607, %v1609
        %v1613 = vperm.slane %v1575, 0
        %v1615 = vadd.f32 %v1611, %v1613
        %vm1616 = vcmp.ge.f32.partialorder %v1615, 0.0
        %v1618 = vperm.slane %v1577, 0
        %1619 = vset.pattern.permute.xlu0 0
        %1620 = vperm.xlu0 %1619, %v1618
        %v1621 = vpop.permute.xlu0 %1620
        %v1623 = vmul.f32 %v1621, %v1615
        %v1624 = vsel %vm1616, %v1615, %v1623
        %v1625 = vpack.c.bf16 %v1624, %v1624
        %s1626 = scalar_lea.vmem [#allocation6], 32
        %v1627 = vld [vmem:[%s1626] sm:$0xf]
        %v1628 = vld [vmem:[%s1626 + $0x4] sm:$0xf]
        %v1631 = vunpack.c.l.b16 %v1627
        %v1632 = vunpack.c.l.b16 %v1628
        %v1633 = vpack.c.b16 %v1632, %v1631
        %v1636 = vsel %vm501, %v1625, 0
        %1638 = vmatpush.bf16.msra.mxu0 0
        %1639 = vmatpush.bf16.msra.mxu0 0
        %1640 = vmatpush.bf16.msra.mxu0 0
        %1641 = vmatpush.bf16.msra.mxu0 0
        %1642 = vmatpush.bf16.msra.mxu0 0
        %1643 = vmatpush.bf16.msra.mxu0 0
        %1644 = vmatpush.bf16.msra.mxu0 0
        %1645 = vmatpush.bf16.msra.mxu0 %v1633
        %1646 = vmatmul.bf16.gmra.mxu0 %v1636
        %v1647 = vpop.f32.mrf.mxu0
        %v1648 = vadd.f32 0.0, %v1647
        %v1649 = vpop.f32.mrf.mxu0
        %1650 = vdwg.mxu0
        %v1651 = vadd.f32 %v1421, %v1648
        %s1652 = scalar_lea.vmem %s10, 4
        %v1653 = vld [vmem:[%s1652] sm:$0x1]
        %v1655 = vperm.slane %v1653, 0
        %v1657 = vadd.f32 %v1651, %v1655
        %v1658 = vpack.c.bf16 %v1657, %v1657
        %s1659 = scalar_lea.vmem [#allocation2], 40
        %v1660 = vld [vmem:[%s1659] sm:$0xf]
        %v1661 = vld [vmem:[%s1659 + $0x4] sm:$0xf]
        %s1662 = scalar_lea.vmem %s2, 5
        %v1663 = vld [vmem:[%s1662] sm:$0x1]
        %v1665 = vperm.slane %v1663, 0
        %v1669 = vunpack.c.l.b16 %v1660
        %v1670 = vunpack.c.l.b16 %v1661
        %v1671 = vpack.c.b16 %v1670, %v1669
        %v1674 = vsel %vm501, %v1658, 0
        %1676 = vmatpush.bf16.msra.mxu0 0
        %1677 = vmatpush.bf16.msra.mxu0 0
        %1678 = vmatpush.bf16.msra.mxu0 0
        %1679 = vmatpush.bf16.msra.mxu0 0
        %1680 = vmatpush.bf16.msra.mxu0 0
        %1681 = vmatpush.bf16.msra.mxu0 0
        %1682 = vmatpush.bf16.msra.mxu0 0
        %1683 = vmatpush.bf16.msra.mxu0 %v1671
        %1684 = vmatmul.bf16.gmra.mxu0 %v1674
        %v1685 = vpop.f32.mrf.mxu0
        %v1686 = vadd.f32 %v1665, %v1685
        %v1687 = vpop.f32.mrf.mxu0
        %1688 = vdwg.mxu0
        %s1689 = scalar_lea.vmem %s3, 5
        %v1690 = vld [vmem:[%s1689] sm:$0x1]
        %s1691 = scalar_lea.vmem %s4, 5
        %v1692 = vld [vmem:[%s1691] sm:$0x1]
        %s1693 = scalar_lea.vmem %s11, 5
        %v1694 = vld [vmem:[%s1693] sm:$0x1]
        %v1695 = vsel %vm501, %v1686, 0.0
        %v1696 = vrot.slane %v1695, 4
        %v1697 = vadd.f32 %v1695, %v1696
        %v1698 = vrot.slane %v1697, 2
        %v1699 = vadd.f32 %v1697, %v1698
        %v1700 = vrot.slane %v1699, 1
        %v1701 = vadd.f32 %v1699, %v1700
        %v1702 = vmul.f32 %v1701, 0.125
        %v1703 = vsub.f32 %v1686, %v1702
        %v1704 = vmul.f32 %v1703, %v1703
        %v1705 = vsel %vm501, %v1704, 0.0
        %v1706 = vrot.slane %v1705, 4
        %v1707 = vadd.f32 %v1705, %v1706
        %v1708 = vrot.slane %v1707, 2
        %v1709 = vadd.f32 %v1707, %v1708
        %v1710 = vrot.slane %v1709, 1
        %v1711 = vadd.f32 %v1709, %v1710
        %v1712 = vmul.f32 %v1711, 0.125
        %v1713 = vadd.f32 %v1712, 1e-05
        %v1714 = vrsqrt.pop %v1713
        %v1715 = vmul.f32 %v1714, %v1713
        %v1716 = vmul.f32 %v1715, %v1714
        %v1717 = vmul.f32 0.5, %v1716
        %v1718 = vsub.f32 1.5, %v1717
        %v1719 = vmul.f32 %v1714, %v1718
        %vm1720 = vweird.f32 %v1713
        %vm1721 = vweird.f32 %v1714
        %vm1722 = vmor %vm1720, %vm1721
        %v1723 = vsel %vm1722, %v1714, %v1719
        %v1724 = vmul.f32 %v1703, %v1723
        %v1726 = vperm.slane %v1690, 0
        %v1728 = vmul.f32 %v1724, %v1726
        %v1730 = vperm.slane %v1692, 0
        %v1732 = vadd.f32 %v1728, %v1730
        %vm1733 = vcmp.ge.f32.partialorder %v1732, 0.0
        %v1735 = vperm.slane %v1694, 0
        %1736 = vset.pattern.permute.xlu0 0
        %1737 = vperm.xlu0 %1736, %v1735
        %v1738 = vpop.permute.xlu0 %1737
        %v1740 = vmul.f32 %v1738, %v1732
        %v1741 = vsel %vm1733, %v1732, %v1740
        %v1743 = vrot.slane %v1741, 4
        %v1744 = vsel %vm805, %v1041, %v1743
        %1745 = vrot.lane.b32.xlu0 %v1744, 16
        %v1746 = vpop.permute.xlu0 %1745
        %1748 = vrot.lane.b32.xlu0 %v1741, 32
        %v1749 = vpop.permute.xlu0 %1748
        %v1751 = vsel %vm501, 0.0, %v1746
        %v1752 = vsel %vm589, %v1751, %v1749
        %v1753 = vpack.c.bf16 %v1752, %v1752
        %s1754 = scalar_lea.vmem [#allocation4], 120
        %v1755 = vld [vmem:[%s1754] sm:$0xf]
        %v1756 = vld [vmem:[%s1754 + $0x4] sm:$0xf]
        %v1757 = vld [vmem:[%s1754 + $0x8] sm:$0xf]
        %v1758 = vld [vmem:[%s1754 + $0xc] sm:$0xf]
        %v1759 = vld [vmem:[%s1754 + $0x10] sm:$0xf]
        %v1760 = vld [vmem:[%s1754 + $0x14] sm:$0xf]
        %s1761 = scalar_lea.vmem %s6, 5
        %v1762 = vld [vmem:[%s1761] sm:$0x1]
        %v1764 = vperm.slane %v1762, 0
        %v1772 = vunpack.c.l.b16 %v1755
        %v1773 = vunpack.c.l.b16 %v1756
        %v1774 = vunpack.c.l.b16 %v1757
        %v1775 = vunpack.c.l.b16 %v1758
        %v1776 = vunpack.c.l.b16 %v1759
        %v1777 = vunpack.c.l.b16 %v1760
        %v1778 = vpack.c.b16 %v1773, %v1772
        %v1779 = vpack.c.b16 %v1775, %v1774
        %v1780 = vpack.c.b16 %v1777, %v1776
        %v1785 = vsel %vm620, %v1753, 0
        %1787 = vmatpush.bf16.msra.mxu0 0
        %1788 = vmatpush.bf16.msra.mxu0 0
        %1789 = vmatpush.bf16.msra.mxu0 0
        %1790 = vmatpush.bf16.msra.mxu0 0
        %1791 = vmatpush.bf16.msra.mxu0 0
        %1792 = vmatpush.bf16.msra.mxu0 %v1780
        %1793 = vmatpush.bf16.msra.mxu0 %v1779
        %1794 = vmatpush.bf16.msra.mxu0 %v1778
        %1795 = vmatmul.bf16.gmra.mxu0 %v1785
        %v1796 = vpop.f32.mrf.mxu0
        %v1797 = vadd.f32 %v1764, %v1796
        %v1798 = vpop.f32.mrf.mxu0
        %1799 = vdwg.mxu0
        %s1800 = scalar_lea.vmem %s7, 5
        %v1801 = vld [vmem:[%s1800] sm:$0x1]
        %s1802 = scalar_lea.vmem %s8, 5
        %v1803 = vld [vmem:[%s1802] sm:$0x1]
        %s1804 = scalar_lea.vmem %s12, 5
        %v1805 = vld [vmem:[%s1804] sm:$0x1]
        %v1806 = vsel %vm501, %v1797, 0.0
        %v1807 = vrot.slane %v1806, 4
        %v1808 = vadd.f32 %v1806, %v1807
        %v1809 = vrot.slane %v1808, 2
        %v1810 = vadd.f32 %v1808, %v1809
        %v1811 = vrot.slane %v1810, 1
        %v1812 = vadd.f32 %v1810, %v1811
        %v1813 = vmul.f32 %v1812, 0.125
        %v1814 = vsub.f32 %v1797, %v1813
        %v1815 = vmul.f32 %v1814, %v1814
        %v1816 = vsel %vm501, %v1815, 0.0
        %v1817 = vrot.slane %v1816, 4
        %v1818 = vadd.f32 %v1816, %v1817
        %v1819 = vrot.slane %v1818, 2
        %v1820 = vadd.f32 %v1818, %v1819
        %v1821 = vrot.slane %v1820, 1
        %v1822 = vadd.f32 %v1820, %v1821
        %v1823 = vmul.f32 %v1822, 0.125
        %v1824 = vadd.f32 %v1823, 1e-05
        %v1825 = vrsqrt.pop %v1824
        %v1826 = vmul.f32 %v1825, %v1824
        %v1827 = vmul.f32 %v1826, %v1825
        %v1828 = vmul.f32 0.5, %v1827
        %v1829 = vsub.f32 1.5, %v1828
        %v1830 = vmul.f32 %v1825, %v1829
        %vm1831 = vweird.f32 %v1824
        %vm1832 = vweird.f32 %v1825
        %vm1833 = vmor %vm1831, %vm1832
        %v1834 = vsel %vm1833, %v1825, %v1830
        %v1835 = vmul.f32 %v1814, %v1834
        %v1837 = vperm.slane %v1801, 0
        %v1839 = vmul.f32 %v1835, %v1837
        %v1841 = vperm.slane %v1803, 0
        %v1843 = vadd.f32 %v1839, %v1841
        %vm1844 = vcmp.ge.f32.partialorder %v1843, 0.0
        %v1846 = vperm.slane %v1805, 0
        %1847 = vset.pattern.permute.xlu0 0
        %1848 = vperm.xlu0 %1847, %v1846
        %v1849 = vpop.permute.xlu0 %1848
        %v1851 = vmul.f32 %v1849, %v1843
        %v1852 = vsel %vm1844, %v1843, %v1851
        %v1853 = vpack.c.bf16 %v1852, %v1852
        %s1854 = scalar_lea.vmem [#allocation6], 40
        %v1855 = vld [vmem:[%s1854] sm:$0xf]
        %v1856 = vld [vmem:[%s1854 + $0x4] sm:$0xf]
        %v1859 = vunpack.c.l.b16 %v1855
        %v1860 = vunpack.c.l.b16 %v1856
        %v1861 = vpack.c.b16 %v1860, %v1859
        %v1864 = vsel %vm501, %v1853, 0
        %1866 = vmatpush.bf16.msra.mxu0 0
        %1867 = vmatpush.bf16.msra.mxu0 0
        %1868 = vmatpush.bf16.msra.mxu0 0
        %1869 = vmatpush.bf16.msra.mxu0 0
        %1870 = vmatpush.bf16.msra.mxu0 0
        %1871 = vmatpush.bf16.msra.mxu0 0
        %1872 = vmatpush.bf16.msra.mxu0 0
        %1873 = vmatpush.bf16.msra.mxu0 %v1861
        %1874 = vmatmul.bf16.gmra.mxu0 %v1864
        %v1875 = vpop.f32.mrf.mxu0
        %v1876 = vadd.f32 0.0, %v1875
        %v1877 = vpop.f32.mrf.mxu0
        %1878 = vdwg.mxu0
        %v1879 = vadd.f32 %v1657, %v1876
        %s1880 = scalar_lea.vmem %s10, 5
        %v1881 = vld [vmem:[%s1880] sm:$0x1]
        %v1883 = vperm.slane %v1881, 0
        %v1885 = vadd.f32 %v1879, %v1883
        %v1886 = vadd.f32 %v1185, %v1885
        %1887 = vst.msk [vmem:[%s485] sm:$0xff] %vm501, %v1886
        %p1888 = scmp.lt.s32.totalorder %s26, 1
        %s1889 = scalar_select %p1888, %s26, 1
        %s1890 = smul.addr %s1889, 8
        %s1891 = scalar_lea.vmem %s13, %s1890
        // Predicated region
        $region85: #{tcnn_forward.10} parent=71 // pred_check
          %p1892 = pneg %p322
        $region86: #{tcnn_forward.10} parent=71 // pred_check_branch
          %1894 = sbr.rel (%p1892) target = $region88
        $region87: #{tcnn_forward.10} parent=71 // pred_region
          _
        $region88: #{tcnn_forward.10} parent=71 // pred_fallthru
          _
      $region72: #{tcnn_forward.10} parent=5 // pred_fallthru
        _
      %p1895 = scmp.le.s32.totalorder 2, %s21
      // Predicated region
      $region89: #{tcnn_forward.10} parent=5 // pred_check
        %p1896 = pneg %p1895
      $region90: #{tcnn_forward.10} parent=5 // pred_check_branch
        %1898 = sbr.rel (%p1896) target = $region92
      $region91: #{tcnn_forward.10} parent=5 // pred_region
        %s1899 = ssub.s32 %s21, 2
        // Predicated region
        $region93: #{tcnn_forward.10} parent=91 // pred_check
          %p1900 = pneg %p328
        $region94: #{tcnn_forward.10} parent=91 // pred_check_branch
          %1902 = sbr.rel (%p1900) target = $region96
        $region95: #{tcnn_forward.10} parent=91 // pred_region
          %p1903 = scmp.lt.s32.totalorder %s27, 1
          %s1904 = scalar_select %p1903, %s27, 1
          %s1905 = smul.addr %s1904, 8
          %s1906 = scalar_lea.vmem %s13, %s1905
        $region96: #{tcnn_forward.10} parent=91 // pred_fallthru
          _
      $region92: #{tcnn_forward.10} parent=5 // pred_fallthru
        _
    $region6: #{tcnn_forward.10} parent=1 // loop_footer
      %s25 = sadd.s32 1, %s21
    $region7: #{tcnn_forward.10} parent=1 // loop_footer_branch
      %20 = sbr.rel target = $region3
    $region8: #{tcnn_forward.10} parent=1 // loop_exit
      _
    %1907 = vsyncpa [#allocation3], 1
    %s1908 = scalar_lea.sflag [#allocation3], 1
    %1909 = vsyncpa %s1908, 1
    %1910 = vsyncpa [#allocation5], 1

</llo_original>
